<compile_context>
chip_gen: v7x
topology: tpu7x:2x2x1
jax: 0.10.0
libtpu: 0.0.40
codegen_flags: <defaults>
</compile_context>

<pallas_src>
import functools

import jax
import jax.numpy as jnp
from jax.experimental import pallas as pl
from jax.experimental.pallas import tpu as pltpu


def _residual_stack_kernel(x_ref, w1_ref, w2_ref, o_ref, xpad_ref, ydense_ref, *,
                           B, H, W, C, Cres, L, compute_dtype):
    # x_ref      : (B, H, W*C)       lane-dense input activations
    # w1_ref     : (L, 9, C, Cres)   3x3 conv weights, j = ky*3 + kx
    # w2_ref     : (L, Cres, C)      1x1 conv weights
    # o_ref      : (B, H, W*C)       lane-dense output
    # xpad_ref   : (B, W+2, H+2, C)  W-major zero-padded relu(act) (compute dtype)
    # ydense_ref : (B, H, W*C) f32   lane-dense residual-branch output scratch
    M = B * W * H

    # Zero the padded buffer once per grid step.  Per layer only the interior
    # planes/rows xpad[:, 1:W+1, 1:H+1, :] are rewritten, so the 1-pixel
    # border stays zero (== "SAME" zero padding; relu(0) == 0 so
    # relu(pad(x)) == pad(relu(x))).
    xpad_ref[...] = jnp.zeros_like(xpad_ref)

    # Residual-path activation, kept lane-dense in f32.
    act = x_ref[...].astype(jnp.float32)                      # (B, H, W*C)

    for l in range(L):                                        # static unroll (L small)
        # Leading ReLU; a single f32 -> compute_dtype cast per layer.  Written
        # into the padded buffer one pixel-column (plane) at a time:
        #   xpad[b, w+1, h+1, :] = relu(act)[b, h, w*C:(w+1)*C]
        r = jnp.maximum(act, 0.0).astype(compute_dtype)       # (B, H, W*C)
        for w in range(W):
            xpad_ref[:, w + 1, 1:H + 1, :] = r[:, :, w * C:(w + 1) * C]

        # 3x3 "SAME" conv as 9 shifted-window matmuls, accumulated in f32.
        # Matmul rows are ordered (b, w, h).
        z = None
        for ky in range(3):
            for kx in range(3):
                patch = xpad_ref[:, kx:kx + W, ky:ky + H, :]  # (B, W, H, C)
                d = jnp.dot(patch.reshape(M, C), w1_ref[l, ky * 3 + kx],
                            preferred_element_type=jnp.float32)   # (M, Cres)
                z = d if z is None else z + d
        z = jnp.maximum(z, 0.0)                               # mid ReLU, f32

        # 1x1 conv: (M, Cres) @ (Cres, C), f32 accumulation.
        y = jnp.dot(z.astype(compute_dtype), w2_ref[l],
                    preferred_element_type=jnp.float32)       # (M, C)
        y4 = y.reshape(B, W, H, C)                            # leading-dim split only

        # Scatter the (b, w, h, c)-ordered conv output back to the lane-dense
        # (b, h, w*C + c) layout, then do the residual add at full vreg width.
        for w in range(W):
            ydense_ref[:, :, w * C:(w + 1) * C] = y4[:, w, :, :]
        act = act + ydense_ref[...]

    # Trailing F.relu of ResidualStack; dense, unmasked full-width store.
    o_ref[...] = jnp.maximum(act, 0.0).astype(o_ref.dtype)


def _pick_images_per_block(N):
    # Keep >= 2 parallel grid steps (both v7x TensorCores busy) while folding
    # the rest of the batch into the matmul M dim (amortises per-step overhead
    # on single-TC v5e/v6e).
    if N <= 2:
        return 1
    b = N // 2
    while N % b:
        b -= 1
    return b


def residual_stack(x, params, *, compute_dtype=jnp.bfloat16, images_per_block=None):
    """Fused ResidualStack forward.

    x      : (N, H, W, C) NHWC activations (C == num_hiddens == in_channels).
    params : list of (w1, w2) per layer, w1: (3, 3, C, Cres) HWIO, w2: (Cres, C).
    compute_dtype: dtype of the MXU matmul operands (accumulation is f32).
    """
    N, H, W, C = x.shape
    L = len(params)
    Cres = params[0][0].shape[-1]

    B = images_per_block if images_per_block is not None else _pick_images_per_block(N)
    assert N % B == 0, "batch must be divisible by images_per_block"
    num_blocks = N // B

    # Stack + reorder weights once; they stay resident in VMEM across the grid.
    w1_all = jnp.stack([w1.reshape(9, C, Cres) for w1, _ in params]
                       ).astype(compute_dtype)                 # (L, 9, C, Cres)
    w2_all = jnp.stack([w2 for _, w2 in params]).astype(compute_dtype)  # (L, Cres, C)

    # Lane-dense HBM layout for activations (free relabel of a row-major array).
    x_dense = x.reshape(N, H, W * C)

    kernel = functools.partial(_residual_stack_kernel, B=B, H=H, W=W, C=C,
                               Cres=Cres, L=L, compute_dtype=compute_dtype)

    itemsize = jnp.dtype(compute_dtype).itemsize
    flops = 2 * N * L * H * W * (9 * C * Cres + Cres * C)
    bytes_accessed = (2 * x.size * x.dtype.itemsize            # in + out
                      + w1_all.size * itemsize + w2_all.size * itemsize)

    out_dense = pl.pallas_call(
        kernel,
        out_shape=jax.ShapeDtypeStruct((N, H, W * C), x.dtype),
        grid_spec=pltpu.PrefetchScalarGridSpec(
            num_scalar_prefetch=0,
            grid=(num_blocks,),
            in_specs=[
                pl.BlockSpec((B, H, W * C), lambda n: (n, 0, 0)),
                pl.BlockSpec((L, 9, C, Cres), lambda n: (0, 0, 0, 0)),
                pl.BlockSpec((L, Cres, C), lambda n: (0, 0, 0)),
            ],
            out_specs=pl.BlockSpec((B, H, W * C), lambda n: (n, 0, 0)),
            scratch_shapes=[
                pltpu.VMEM((B, W + 2, H + 2, C), compute_dtype),  # padded relu(x)
                pltpu.VMEM((B, H, W * C), jnp.float32),           # lane-dense y
            ],
        ),
        compiler_params=pltpu.CompilerParams(
            dimension_semantics=("parallel",)),                   # shards blocks on v7x TCs
        cost_estimate=pl.CostEstimate(flops=flops, transcendentals=0,
                                      bytes_accessed=bytes_accessed),
    )(x_dense, w1_all, w2_all)

    return out_dense.reshape(N, H, W, C)


# ---------- pure-JAX reference (for correctness check only) ----------
def residual_stack_ref(x, params):
    for w1, w2 in params:
        h = jax.nn.relu(x)
        h = jax.lax.conv_general_dilated(
            h, w1, window_strides=(1, 1), padding="SAME",
            dimension_numbers=("NHWC", "HWIO", "NHWC"),
            precision=jax.lax.Precision.HIGHEST)
        h = jax.nn.relu(h)
        h = jax.lax.conv_general_dilated(
            h, w2[None, None], window_strides=(1, 1), padding="SAME",
            dimension_numbers=("NHWC", "HWIO", "NHWC"),
            precision=jax.lax.Precision.HIGHEST)
        x = x + h
    return jax.nn.relu(x)


if __name__ == "__main__":
    # Small shapes consistent with the module: in_channels == num_hiddens.
    N, H, W = 2, 16, 16
    num_hiddens = 32
    num_residual_hiddens = 16
    num_residual_layers = 2

    key = jax.random.PRNGKey(0)
    kx_, *kws = jax.random.split(key, 1 + 2 * num_residual_layers)

    x = jax.random.normal(kx_, (N, H, W, num_hiddens), dtype=jnp.float32)

    # Deterministic synthetic weights (kaiming-like scale).
    params = []
    for i in range(num_residual_layers):
        w1 = jax.random.normal(
            kws[2 * i], (3, 3, num_hiddens, num_residual_hiddens),
            dtype=jnp.float32) * (2.0 / (9 * num_hiddens)) ** 0.5
        w2 = jax.random.normal(
            kws[2 * i + 1], (num_residual_hiddens, num_hiddens),
            dtype=jnp.float32) * (2.0 / num_residual_hiddens) ** 0.5
        params.append((w1, w2))

    ref = jax.block_until_ready(residual_stack_ref(x, params))

    # f32 MXU operands: tight check against the reference.
    out_f32 = jax.block_until_ready(
        residual_stack(x, params, compute_dtype=jnp.float32))
    assert out_f32.shape == (N, H, W, num_hiddens)
    assert jnp.allclose(out_f32, ref, atol=1e-4, rtol=1e-4), "f32 mismatch vs reference"

    # bf16 MXU operands, f32 accumulation: the fast path on v6e/v7x.
    out_bf16 = jax.block_until_ready(
        residual_stack(x, params, compute_dtype=jnp.bfloat16))
    rel_err = jnp.linalg.norm(out_bf16 - ref) / jnp.linalg.norm(ref)
    assert rel_err < 5e-2, f"bf16 path relative error too high: {rel_err}"

    print("KERNEL_OK")
</pallas_src>

<mosaic_0001>
module attributes {stable_mosaic.version = 11 : i64} {
  func.func @_residual_stack_kernel(%arg0: i32, %arg1: memref<1x16x512xf32, #tpu.memory_space<vmem>>, %arg2: memref<2x9x32x16xf32, #tpu.memory_space<vmem>>, %arg3: memref<2x16x32xf32, #tpu.memory_space<vmem>>, %arg4: memref<1x16x512xf32, #tpu.memory_space<vmem>>, %arg5: memref<1x18x18x32xf32, #tpu.memory_space<vmem>>, %arg6: memref<1x16x512xf32, #tpu.memory_space<vmem>>) attributes {dimension_semantics = [#tpu.dimension_semantics<parallel>], iteration_bounds = array<i64: 2>, scalar_prefetch = 0 : i64, scratch_operands = 2 : i64, tpu.core_type = #tpu.core_type<tc>, window_params = [{transform_indices = @transform_0, window_bounds = array<i64: 1, 16, 512>}, {pipeline_mode = #tpu.pipeline_mode<synchronous>, transform_indices = @transform_1, window_bounds = array<i64: 2, 9, 32, 16>}, {pipeline_mode = #tpu.pipeline_mode<synchronous>, transform_indices = @transform_2, window_bounds = array<i64: 2, 16, 32>}, {transform_indices = @transform_3, window_bounds = array<i64: 1, 16, 512>}]} {
    %cst = arith.constant 0.000000e+00 : f32
    %0 = vector.broadcast %cst : f32 to vector<1x18x18x32xf32>
    %c0 = arith.constant 0 : index
    %c0_0 = arith.constant 0 : index
    %c0_1 = arith.constant 0 : index
    %c0_2 = arith.constant 0 : index
    %1 = vector.load %arg5[%c0, %c0_0, %c0_1, %c0_2] : memref<1x18x18x32xf32, #tpu.memory_space<vmem>>, vector<1x18x18x32xf32>
    tpu.vector_store %arg5[%c0, %c0_0, %c0_1, %c0_2], %0 {strides = array<i32>} : memref<1x18x18x32xf32, #tpu.memory_space<vmem>>, vector<1x18x18x32xf32>,
    %c0_3 = arith.constant 0 : index
    %c0_4 = arith.constant 0 : index
    %c0_5 = arith.constant 0 : index
    %2 = vector.load %arg1[%c0_3, %c0_4, %c0_5] : memref<1x16x512xf32, #tpu.memory_space<vmem>>, vector<1x16x512xf32>
    %cst_6 = arith.constant 0.000000e+00 : f32
    %3 = vector.broadcast %cst_6 : f32 to vector<1x16x512xf32>
    %4 = arith.maximumf %2, %3 : vector<1x16x512xf32>
    %5 = vector.extract_strided_slice %4 {offsets = [0, 0, 0], sizes = [1, 16, 32], strides = [1, 1, 1]} : vector<1x16x512xf32> to vector<1x16x32xf32>
    %c0_7 = arith.constant 0 : index
    %c1 = arith.constant 1 : index
    %c1_8 = arith.constant 1 : index
    %c0_9 = arith.constant 0 : index
    %6 = vector.load %arg5[%c0_7, %c1, %c1_8, %c0_9] : memref<1x18x18x32xf32, #tpu.memory_space<vmem>>, vector<1x1x16x32xf32>
    %7 = vector.shape_cast %6 : vector<1x1x16x32xf32> to vector<1x16x32xf32>
    %8 = vector.shape_cast %5 : vector<1x16x32xf32> to vector<1x1x16x32xf32>
    tpu.vector_store %arg5[%c0_7, %c1, %c1_8, %c0_9], %8 {strides = array<i32>} : memref<1x18x18x32xf32, #tpu.memory_space<vmem>>, vector<1x1x16x32xf32>,
    %9 = vector.extract_strided_slice %4 {offsets = [0, 0, 32], sizes = [1, 16, 32], strides = [1, 1, 1]} : vector<1x16x512xf32> to vector<1x16x32xf32>
    %c0_10 = arith.constant 0 : index
    %c2 = arith.constant 2 : index
    %c1_11 = arith.constant 1 : index
    %c0_12 = arith.constant 0 : index
    %10 = vector.load %arg5[%c0_10, %c2, %c1_11, %c0_12] : memref<1x18x18x32xf32, #tpu.memory_space<vmem>>, vector<1x1x16x32xf32>
    %11 = vector.shape_cast %10 : vector<1x1x16x32xf32> to vector<1x16x32xf32>
    %12 = vector.shape_cast %9 : vector<1x16x32xf32> to vector<1x1x16x32xf32>
    tpu.vector_store %arg5[%c0_10, %c2, %c1_11, %c0_12], %12 {strides = array<i32>} : memref<1x18x18x32xf32, #tpu.memory_space<vmem>>, vector<1x1x16x32xf32>,
    %13 = vector.extract_strided_slice %4 {offsets = [0, 0, 64], sizes = [1, 16, 32], strides = [1, 1, 1]} : vector<1x16x512xf32> to vector<1x16x32xf32>
    %c0_13 = arith.constant 0 : index
    %c3 = arith.constant 3 : index
    %c1_14 = arith.constant 1 : index
    %c0_15 = arith.constant 0 : index
    %14 = vector.load %arg5[%c0_13, %c3, %c1_14, %c0_15] : memref<1x18x18x32xf32, #tpu.memory_space<vmem>>, vector<1x1x16x32xf32>
    %15 = vector.shape_cast %14 : vector<1x1x16x32xf32> to vector<1x16x32xf32>
    %16 = vector.shape_cast %13 : vector<1x16x32xf32> to vector<1x1x16x32xf32>
    tpu.vector_store %arg5[%c0_13, %c3, %c1_14, %c0_15], %16 {strides = array<i32>} : memref<1x18x18x32xf32, #tpu.memory_space<vmem>>, vector<1x1x16x32xf32>,
    %17 = vector.extract_strided_slice %4 {offsets = [0, 0, 96], sizes = [1, 16, 32], strides = [1, 1, 1]} : vector<1x16x512xf32> to vector<1x16x32xf32>
    %c0_16 = arith.constant 0 : index
    %c4 = arith.constant 4 : index
    %c1_17 = arith.constant 1 : index
    %c0_18 = arith.constant 0 : index
    %18 = vector.load %arg5[%c0_16, %c4, %c1_17, %c0_18] : memref<1x18x18x32xf32, #tpu.memory_space<vmem>>, vector<1x1x16x32xf32>
    %19 = vector.shape_cast %18 : vector<1x1x16x32xf32> to vector<1x16x32xf32>
    %20 = vector.shape_cast %17 : vector<1x16x32xf32> to vector<1x1x16x32xf32>
    tpu.vector_store %arg5[%c0_16, %c4, %c1_17, %c0_18], %20 {strides = array<i32>} : memref<1x18x18x32xf32, #tpu.memory_space<vmem>>, vector<1x1x16x32xf32>,
    %21 = vector.extract_strided_slice %4 {offsets = [0, 0, 128], sizes = [1, 16, 32], strides = [1, 1, 1]} : vector<1x16x512xf32> to vector<1x16x32xf32>
    %c0_19 = arith.constant 0 : index
    %c5 = arith.constant 5 : index
    %c1_20 = arith.constant 1 : index
    %c0_21 = arith.constant 0 : index
    %22 = vector.load %arg5[%c0_19, %c5, %c1_20, %c0_21] : memref<1x18x18x32xf32, #tpu.memory_space<vmem>>, vector<1x1x16x32xf32>
    %23 = vector.shape_cast %22 : vector<1x1x16x32xf32> to vector<1x16x32xf32>
    %24 = vector.shape_cast %21 : vector<1x16x32xf32> to vector<1x1x16x32xf32>
    tpu.vector_store %arg5[%c0_19, %c5, %c1_20, %c0_21], %24 {strides = array<i32>} : memref<1x18x18x32xf32, #tpu.memory_space<vmem>>, vector<1x1x16x32xf32>,
    %25 = vector.extract_strided_slice %4 {offsets = [0, 0, 160], sizes = [1, 16, 32], strides = [1, 1, 1]} : vector<1x16x512xf32> to vector<1x16x32xf32>
    %c0_22 = arith.constant 0 : index
    %c6 = arith.constant 6 : index
    %c1_23 = arith.constant 1 : index
    %c0_24 = arith.constant 0 : index
    %26 = vector.load %arg5[%c0_22, %c6, %c1_23, %c0_24] : memref<1x18x18x32xf32, #tpu.memory_space<vmem>>, vector<1x1x16x32xf32>
    %27 = vector.shape_cast %26 : vector<1x1x16x32xf32> to vector<1x16x32xf32>
    %28 = vector.shape_cast %25 : vector<1x16x32xf32> to vector<1x1x16x32xf32>
    tpu.vector_store %arg5[%c0_22, %c6, %c1_23, %c0_24], %28 {strides = array<i32>} : memref<1x18x18x32xf32, #tpu.memory_space<vmem>>, vector<1x1x16x32xf32>,
    %29 = vector.extract_strided_slice %4 {offsets = [0, 0, 192], sizes = [1, 16, 32], strides = [1, 1, 1]} : vector<1x16x512xf32> to vector<1x16x32xf32>
    %c0_25 = arith.constant 0 : index
    %c7 = arith.constant 7 : index
    %c1_26 = arith.constant 1 : index
    %c0_27 = arith.constant 0 : index
    %30 = vector.load %arg5[%c0_25, %c7, %c1_26, %c0_27] : memref<1x18x18x32xf32, #tpu.memory_space<vmem>>, vector<1x1x16x32xf32>
    %31 = vector.shape_cast %30 : vector<1x1x16x32xf32> to vector<1x16x32xf32>
    %32 = vector.shape_cast %29 : vector<1x16x32xf32> to vector<1x1x16x32xf32>
    tpu.vector_store %arg5[%c0_25, %c7, %c1_26, %c0_27], %32 {strides = array<i32>} : memref<1x18x18x32xf32, #tpu.memory_space<vmem>>, vector<1x1x16x32xf32>,
    %33 = vector.extract_strided_slice %4 {offsets = [0, 0, 224], sizes = [1, 16, 32], strides = [1, 1, 1]} : vector<1x16x512xf32> to vector<1x16x32xf32>
    %c0_28 = arith.constant 0 : index
    %c8 = arith.constant 8 : index
    %c1_29 = arith.constant 1 : index
    %c0_30 = arith.constant 0 : index
    %34 = vector.load %arg5[%c0_28, %c8, %c1_29, %c0_30] : memref<1x18x18x32xf32, #tpu.memory_space<vmem>>, vector<1x1x16x32xf32>
    %35 = vector.shape_cast %34 : vector<1x1x16x32xf32> to vector<1x16x32xf32>
    %36 = vector.shape_cast %33 : vector<1x16x32xf32> to vector<1x1x16x32xf32>
    tpu.vector_store %arg5[%c0_28, %c8, %c1_29, %c0_30], %36 {strides = array<i32>} : memref<1x18x18x32xf32, #tpu.memory_space<vmem>>, vector<1x1x16x32xf32>,
    %37 = vector.extract_strided_slice %4 {offsets = [0, 0, 256], sizes = [1, 16, 32], strides = [1, 1, 1]} : vector<1x16x512xf32> to vector<1x16x32xf32>
    %c0_31 = arith.constant 0 : index
    %c9 = arith.constant 9 : index
    %c1_32 = arith.constant 1 : index
    %c0_33 = arith.constant 0 : index
    %38 = vector.load %arg5[%c0_31, %c9, %c1_32, %c0_33] : memref<1x18x18x32xf32, #tpu.memory_space<vmem>>, vector<1x1x16x32xf32>
    %39 = vector.shape_cast %38 : vector<1x1x16x32xf32> to vector<1x16x32xf32>
    %40 = vector.shape_cast %37 : vector<1x16x32xf32> to vector<1x1x16x32xf32>
    tpu.vector_store %arg5[%c0_31, %c9, %c1_32, %c0_33], %40 {strides = array<i32>} : memref<1x18x18x32xf32, #tpu.memory_space<vmem>>, vector<1x1x16x32xf32>,
    %41 = vector.extract_strided_slice %4 {offsets = [0, 0, 288], sizes = [1, 16, 32], strides = [1, 1, 1]} : vector<1x16x512xf32> to vector<1x16x32xf32>
    %c0_34 = arith.constant 0 : index
    %c10 = arith.constant 10 : index
    %c1_35 = arith.constant 1 : index
    %c0_36 = arith.constant 0 : index
    %42 = vector.load %arg5[%c0_34, %c10, %c1_35, %c0_36] : memref<1x18x18x32xf32, #tpu.memory_space<vmem>>, vector<1x1x16x32xf32>
    %43 = vector.shape_cast %42 : vector<1x1x16x32xf32> to vector<1x16x32xf32>
    %44 = vector.shape_cast %41 : vector<1x16x32xf32> to vector<1x1x16x32xf32>
    tpu.vector_store %arg5[%c0_34, %c10, %c1_35, %c0_36], %44 {strides = array<i32>} : memref<1x18x18x32xf32, #tpu.memory_space<vmem>>, vector<1x1x16x32xf32>,
    %45 = vector.extract_strided_slice %4 {offsets = [0, 0, 320], sizes = [1, 16, 32], strides = [1, 1, 1]} : vector<1x16x512xf32> to vector<1x16x32xf32>
    %c0_37 = arith.constant 0 : index
    %c11 = arith.constant 11 : index
    %c1_38 = arith.constant 1 : index
    %c0_39 = arith.constant 0 : index
    %46 = vector.load %arg5[%c0_37, %c11, %c1_38, %c0_39] : memref<1x18x18x32xf32, #tpu.memory_space<vmem>>, vector<1x1x16x32xf32>
    %47 = vector.shape_cast %46 : vector<1x1x16x32xf32> to vector<1x16x32xf32>
    %48 = vector.shape_cast %45 : vector<1x16x32xf32> to vector<1x1x16x32xf32>
    tpu.vector_store %arg5[%c0_37, %c11, %c1_38, %c0_39], %48 {strides = array<i32>} : memref<1x18x18x32xf32, #tpu.memory_space<vmem>>, vector<1x1x16x32xf32>,
    %49 = vector.extract_strided_slice %4 {offsets = [0, 0, 352], sizes = [1, 16, 32], strides = [1, 1, 1]} : vector<1x16x512xf32> to vector<1x16x32xf32>
    %c0_40 = arith.constant 0 : index
    %c12 = arith.constant 12 : index
    %c1_41 = arith.constant 1 : index
    %c0_42 = arith.constant 0 : index
    %50 = vector.load %arg5[%c0_40, %c12, %c1_41, %c0_42] : memref<1x18x18x32xf32, #tpu.memory_space<vmem>>, vector<1x1x16x32xf32>
    %51 = vector.shape_cast %50 : vector<1x1x16x32xf32> to vector<1x16x32xf32>
    %52 = vector.shape_cast %49 : vector<1x16x32xf32> to vector<1x1x16x32xf32>
    tpu.vector_store %arg5[%c0_40, %c12, %c1_41, %c0_42], %52 {strides = array<i32>} : memref<1x18x18x32xf32, #tpu.memory_space<vmem>>, vector<1x1x16x32xf32>,
    %53 = vector.extract_strided_slice %4 {offsets = [0, 0, 384], sizes = [1, 16, 32], strides = [1, 1, 1]} : vector<1x16x512xf32> to vector<1x16x32xf32>
    %c0_43 = arith.constant 0 : index
    %c13 = arith.constant 13 : index
    %c1_44 = arith.constant 1 : index
    %c0_45 = arith.constant 0 : index
    %54 = vector.load %arg5[%c0_43, %c13, %c1_44, %c0_45] : memref<1x18x18x32xf32, #tpu.memory_space<vmem>>, vector<1x1x16x32xf32>
    %55 = vector.shape_cast %54 : vector<1x1x16x32xf32> to vector<1x16x32xf32>
    %56 = vector.shape_cast %53 : vector<1x16x32xf32> to vector<1x1x16x32xf32>
    tpu.vector_store %arg5[%c0_43, %c13, %c1_44, %c0_45], %56 {strides = array<i32>} : memref<1x18x18x32xf32, #tpu.memory_space<vmem>>, vector<1x1x16x32xf32>,
    %57 = vector.extract_strided_slice %4 {offsets = [0, 0, 416], sizes = [1, 16, 32], strides = [1, 1, 1]} : vector<1x16x512xf32> to vector<1x16x32xf32>
    %c0_46 = arith.constant 0 : index
    %c14 = arith.constant 14 : index
    %c1_47 = arith.constant 1 : index
    %c0_48 = arith.constant 0 : index
    %58 = vector.load %arg5[%c0_46, %c14, %c1_47, %c0_48] : memref<1x18x18x32xf32, #tpu.memory_space<vmem>>, vector<1x1x16x32xf32>
    %59 = vector.shape_cast %58 : vector<1x1x16x32xf32> to vector<1x16x32xf32>
    %60 = vector.shape_cast %57 : vector<1x16x32xf32> to vector<1x1x16x32xf32>
    tpu.vector_store %arg5[%c0_46, %c14, %c1_47, %c0_48], %60 {strides = array<i32>} : memref<1x18x18x32xf32, #tpu.memory_space<vmem>>, vector<1x1x16x32xf32>,
    %61 = vector.extract_strided_slice %4 {offsets = [0, 0, 448], sizes = [1, 16, 32], strides = [1, 1, 1]} : vector<1x16x512xf32> to vector<1x16x32xf32>
    %c0_49 = arith.constant 0 : index
    %c15 = arith.constant 15 : index
    %c1_50 = arith.constant 1 : index
    %c0_51 = arith.constant 0 : index
    %62 = vector.load %arg5[%c0_49, %c15, %c1_50, %c0_51] : memref<1x18x18x32xf32, #tpu.memory_space<vmem>>, vector<1x1x16x32xf32>
    %63 = vector.shape_cast %62 : vector<1x1x16x32xf32> to vector<1x16x32xf32>
    %64 = vector.shape_cast %61 : vector<1x16x32xf32> to vector<1x1x16x32xf32>
    tpu.vector_store %arg5[%c0_49, %c15, %c1_50, %c0_51], %64 {strides = array<i32>} : memref<1x18x18x32xf32, #tpu.memory_space<vmem>>, vector<1x1x16x32xf32>,
    %65 = vector.extract_strided_slice %4 {offsets = [0, 0, 480], sizes = [1, 16, 32], strides = [1, 1, 1]} : vector<1x16x512xf32> to vector<1x16x32xf32>
    %c0_52 = arith.constant 0 : index
    %c16 = arith.constant 16 : index
    %c1_53 = arith.constant 1 : index
    %c0_54 = arith.constant 0 : index
    %66 = vector.load %arg5[%c0_52, %c16, %c1_53, %c0_54] : memref<1x18x18x32xf32, #tpu.memory_space<vmem>>, vector<1x1x16x32xf32>
    %67 = vector.shape_cast %66 : vector<1x1x16x32xf32> to vector<1x16x32xf32>
    %68 = vector.shape_cast %65 : vector<1x16x32xf32> to vector<1x1x16x32xf32>
    tpu.vector_store %arg5[%c0_52, %c16, %c1_53, %c0_54], %68 {strides = array<i32>} : memref<1x18x18x32xf32, #tpu.memory_space<vmem>>, vector<1x1x16x32xf32>,
    %c0_55 = arith.constant 0 : index
    %c0_56 = arith.constant 0 : index
    %c0_57 = arith.constant 0 : index
    %c0_58 = arith.constant 0 : index
    %69 = vector.load %arg5[%c0_55, %c0_56, %c0_57, %c0_58] : memref<1x18x18x32xf32, #tpu.memory_space<vmem>>, vector<1x16x16x32xf32>
    %70 = vector.shape_cast %69 : vector<1x16x16x32xf32> to vector<256x32xf32>
    %c0_59 = arith.constant 0 : index
    %c0_60 = arith.constant 0 : index
    %c0_61 = arith.constant 0 : index
    %c0_62 = arith.constant 0 : index
    %71 = vector.load %arg2[%c0_59, %c0_60, %c0_61, %c0_62] : memref<2x9x32x16xf32, #tpu.memory_space<vmem>>, vector<1x1x32x16xf32>
    %72 = vector.shape_cast %71 : vector<1x1x32x16xf32> to vector<32x16xf32>
    %cst_63 = arith.constant dense<0.000000e+00> : vector<256x16xf32>
    %73 = tpu.matmul %70, %72, %cst_63 {dimension_numbers = #tpu.dot_dimension_numbers<[1], [0], [0], [1], [0, 0, 1, 1], [], []>} : vector<256x32xf32>, vector<32x16xf32>, vector<256x16xf32> -> vector<256x16xf32>
    %c0_64 = arith.constant 0 : index
    %c1_65 = arith.constant 1 : index
    %c0_66 = arith.constant 0 : index
    %c0_67 = arith.constant 0 : index
    %74 = vector.load %arg5[%c0_64, %c1_65, %c0_66, %c0_67] : memref<1x18x18x32xf32, #tpu.memory_space<vmem>>, vector<1x16x16x32xf32>
    %75 = vector.shape_cast %74 : vector<1x16x16x32xf32> to vector<256x32xf32>
    %c0_68 = arith.constant 0 : index
    %c1_69 = arith.constant 1 : index
    %c0_70 = arith.constant 0 : index
    %c0_71 = arith.constant 0 : index
    %76 = vector.load %arg2[%c0_68, %c1_69, %c0_70, %c0_71] : memref<2x9x32x16xf32, #tpu.memory_space<vmem>>, vector<1x1x32x16xf32>
    %77 = vector.shape_cast %76 : vector<1x1x32x16xf32> to vector<32x16xf32>
    %cst_72 = arith.constant dense<0.000000e+00> : vector<256x16xf32>
    %78 = tpu.matmul %75, %77, %cst_72 {dimension_numbers = #tpu.dot_dimension_numbers<[1], [0], [0], [1], [0, 0, 1, 1], [], []>} : vector<256x32xf32>, vector<32x16xf32>, vector<256x16xf32> -> vector<256x16xf32>
    %79 = arith.addf %73, %78 : vector<256x16xf32>
    %c0_73 = arith.constant 0 : index
    %c2_74 = arith.constant 2 : index
    %c0_75 = arith.constant 0 : index
    %c0_76 = arith.constant 0 : index
    %80 = vector.load %arg5[%c0_73, %c2_74, %c0_75, %c0_76] : memref<1x18x18x32xf32, #tpu.memory_space<vmem>>, vector<1x16x16x32xf32>
    %81 = vector.shape_cast %80 : vector<1x16x16x32xf32> to vector<256x32xf32>
    %c0_77 = arith.constant 0 : index
    %c2_78 = arith.constant 2 : index
    %c0_79 = arith.constant 0 : index
    %c0_80 = arith.constant 0 : index
    %82 = vector.load %arg2[%c0_77, %c2_78, %c0_79, %c0_80] : memref<2x9x32x16xf32, #tpu.memory_space<vmem>>, vector<1x1x32x16xf32>
    %83 = vector.shape_cast %82 : vector<1x1x32x16xf32> to vector<32x16xf32>
    %cst_81 = arith.constant dense<0.000000e+00> : vector<256x16xf32>
    %84 = tpu.matmul %81, %83, %cst_81 {dimension_numbers = #tpu.dot_dimension_numbers<[1], [0], [0], [1], [0, 0, 1, 1], [], []>} : vector<256x32xf32>, vector<32x16xf32>, vector<256x16xf32> -> vector<256x16xf32>
    %85 = arith.addf %79, %84 : vector<256x16xf32>
    %c0_82 = arith.constant 0 : index
    %c0_83 = arith.constant 0 : index
    %c1_84 = arith.constant 1 : index
    %c0_85 = arith.constant 0 : index
    %86 = vector.load %arg5[%c0_82, %c0_83, %c1_84, %c0_85] : memref<1x18x18x32xf32, #tpu.memory_space<vmem>>, vector<1x16x16x32xf32>
    %87 = vector.shape_cast %86 : vector<1x16x16x32xf32> to vector<256x32xf32>
    %c0_86 = arith.constant 0 : index
    %c3_87 = arith.constant 3 : index
    %c0_88 = arith.constant 0 : index
    %c0_89 = arith.constant 0 : index
    %88 = vector.load %arg2[%c0_86, %c3_87, %c0_88, %c0_89] : memref<2x9x32x16xf32, #tpu.memory_space<vmem>>, vector<1x1x32x16xf32>
    %89 = vector.shape_cast %88 : vector<1x1x32x16xf32> to vector<32x16xf32>
    %cst_90 = arith.constant dense<0.000000e+00> : vector<256x16xf32>
    %90 = tpu.matmul %87, %89, %cst_90 {dimension_numbers = #tpu.dot_dimension_numbers<[1], [0], [0], [1], [0, 0, 1, 1], [], []>} : vector<256x32xf32>, vector<32x16xf32>, vector<256x16xf32> -> vector<256x16xf32>
    %91 = arith.addf %85, %90 : vector<256x16xf32>
    %c0_91 = arith.constant 0 : index
    %c1_92 = arith.constant 1 : index
    %c1_93 = arith.constant 1 : index
    %c0_94 = arith.constant 0 : index
    %92 = vector.load %arg5[%c0_91, %c1_92, %c1_93, %c0_94] : memref<1x18x18x32xf32, #tpu.memory_space<vmem>>, vector<1x16x16x32xf32>
    %93 = vector.shape_cast %92 : vector<1x16x16x32xf32> to vector<256x32xf32>
    %c0_95 = arith.constant 0 : index
    %c4_96 = arith.constant 4 : index
    %c0_97 = arith.constant 0 : index
    %c0_98 = arith.constant 0 : index
    %94 = vector.load %arg2[%c0_95, %c4_96, %c0_97, %c0_98] : memref<2x9x32x16xf32, #tpu.memory_space<vmem>>, vector<1x1x32x16xf32>
    %95 = vector.shape_cast %94 : vector<1x1x32x16xf32> to vector<32x16xf32>
    %cst_99 = arith.constant dense<0.000000e+00> : vector<256x16xf32>
    %96 = tpu.matmul %93, %95, %cst_99 {dimension_numbers = #tpu.dot_dimension_numbers<[1], [0], [0], [1], [0, 0, 1, 1], [], []>} : vector<256x32xf32>, vector<32x16xf32>, vector<256x16xf32> -> vector<256x16xf32>
    %97 = arith.addf %91, %96 : vector<256x16xf32>
    %c0_100 = arith.constant 0 : index
    %c2_101 = arith.constant 2 : index
    %c1_102 = arith.constant 1 : index
    %c0_103 = arith.constant 0 : index
    %98 = vector.load %arg5[%c0_100, %c2_101, %c1_102, %c0_103] : memref<1x18x18x32xf32, #tpu.memory_space<vmem>>, vector<1x16x16x32xf32>
    %99 = vector.shape_cast %98 : vector<1x16x16x32xf32> to vector<256x32xf32>
    %c0_104 = arith.constant 0 : index
    %c5_105 = arith.constant 5 : index
    %c0_106 = arith.constant 0 : index
    %c0_107 = arith.constant 0 : index
    %100 = vector.load %arg2[%c0_104, %c5_105, %c0_106, %c0_107] : memref<2x9x32x16xf32, #tpu.memory_space<vmem>>, vector<1x1x32x16xf32>
    %101 = vector.shape_cast %100 : vector<1x1x32x16xf32> to vector<32x16xf32>
    %cst_108 = arith.constant dense<0.000000e+00> : vector<256x16xf32>
    %102 = tpu.matmul %99, %101, %cst_108 {dimension_numbers = #tpu.dot_dimension_numbers<[1], [0], [0], [1], [0, 0, 1, 1], [], []>} : vector<256x32xf32>, vector<32x16xf32>, vector<256x16xf32> -> vector<256x16xf32>
    %103 = arith.addf %97, %102 : vector<256x16xf32>
    %c0_109 = arith.constant 0 : index
    %c0_110 = arith.constant 0 : index
    %c2_111 = arith.constant 2 : index
    %c0_112 = arith.constant 0 : index
    %104 = vector.load %arg5[%c0_109, %c0_110, %c2_111, %c0_112] : memref<1x18x18x32xf32, #tpu.memory_space<vmem>>, vector<1x16x16x32xf32>
    %105 = vector.shape_cast %104 : vector<1x16x16x32xf32> to vector<256x32xf32>
    %c0_113 = arith.constant 0 : index
    %c6_114 = arith.constant 6 : index
    %c0_115 = arith.constant 0 : index
    %c0_116 = arith.constant 0 : index
    %106 = vector.load %arg2[%c0_113, %c6_114, %c0_115, %c0_116] : memref<2x9x32x16xf32, #tpu.memory_space<vmem>>, vector<1x1x32x16xf32>
    %107 = vector.shape_cast %106 : vector<1x1x32x16xf32> to vector<32x16xf32>
    %cst_117 = arith.constant dense<0.000000e+00> : vector<256x16xf32>
    %108 = tpu.matmul %105, %107, %cst_117 {dimension_numbers = #tpu.dot_dimension_numbers<[1], [0], [0], [1], [0, 0, 1, 1], [], []>} : vector<256x32xf32>, vector<32x16xf32>, vector<256x16xf32> -> vector<256x16xf32>
    %109 = arith.addf %103, %108 : vector<256x16xf32>
    %c0_118 = arith.constant 0 : index
    %c1_119 = arith.constant 1 : index
    %c2_120 = arith.constant 2 : index
    %c0_121 = arith.constant 0 : index
    %110 = vector.load %arg5[%c0_118, %c1_119, %c2_120, %c0_121] : memref<1x18x18x32xf32, #tpu.memory_space<vmem>>, vector<1x16x16x32xf32>
    %111 = vector.shape_cast %110 : vector<1x16x16x32xf32> to vector<256x32xf32>
    %c0_122 = arith.constant 0 : index
    %c7_123 = arith.constant 7 : index
    %c0_124 = arith.constant 0 : index
    %c0_125 = arith.constant 0 : index
    %112 = vector.load %arg2[%c0_122, %c7_123, %c0_124, %c0_125] : memref<2x9x32x16xf32, #tpu.memory_space<vmem>>, vector<1x1x32x16xf32>
    %113 = vector.shape_cast %112 : vector<1x1x32x16xf32> to vector<32x16xf32>
    %cst_126 = arith.constant dense<0.000000e+00> : vector<256x16xf32>
    %114 = tpu.matmul %111, %113, %cst_126 {dimension_numbers = #tpu.dot_dimension_numbers<[1], [0], [0], [1], [0, 0, 1, 1], [], []>} : vector<256x32xf32>, vector<32x16xf32>, vector<256x16xf32> -> vector<256x16xf32>
    %115 = arith.addf %109, %114 : vector<256x16xf32>
    %c0_127 = arith.constant 0 : index
    %c2_128 = arith.constant 2 : index
    %c2_129 = arith.constant 2 : index
    %c0_130 = arith.constant 0 : index
    %116 = vector.load %arg5[%c0_127, %c2_128, %c2_129, %c0_130] : memref<1x18x18x32xf32, #tpu.memory_space<vmem>>, vector<1x16x16x32xf32>
    %117 = vector.shape_cast %116 : vector<1x16x16x32xf32> to vector<256x32xf32>
    %c0_131 = arith.constant 0 : index
    %c8_132 = arith.constant 8 : index
    %c0_133 = arith.constant 0 : index
    %c0_134 = arith.constant 0 : index
    %118 = vector.load %arg2[%c0_131, %c8_132, %c0_133, %c0_134] : memref<2x9x32x16xf32, #tpu.memory_space<vmem>>, vector<1x1x32x16xf32>
    %119 = vector.shape_cast %118 : vector<1x1x32x16xf32> to vector<32x16xf32>
    %cst_135 = arith.constant dense<0.000000e+00> : vector<256x16xf32>
    %120 = tpu.matmul %117, %119, %cst_135 {dimension_numbers = #tpu.dot_dimension_numbers<[1], [0], [0], [1], [0, 0, 1, 1], [], []>} : vector<256x32xf32>, vector<32x16xf32>, vector<256x16xf32> -> vector<256x16xf32>
    %121 = arith.addf %115, %120 : vector<256x16xf32>
    %cst_136 = arith.constant 0.000000e+00 : f32
    %122 = vector.broadcast %cst_136 : f32 to vector<256x16xf32>
    %123 = arith.maximumf %121, %122 : vector<256x16xf32>
    %c0_137 = arith.constant 0 : index
    %c0_138 = arith.constant 0 : index
    %c0_139 = arith.constant 0 : index
    %124 = vector.load %arg3[%c0_137, %c0_138, %c0_139] : memref<2x16x32xf32, #tpu.memory_space<vmem>>, vector<1x16x32xf32>
    %125 = vector.shape_cast %124 : vector<1x16x32xf32> to vector<16x32xf32>
    %cst_140 = arith.constant dense<0.000000e+00> : vector<256x32xf32>
    %126 = tpu.matmul %123, %125, %cst_140 {dimension_numbers = #tpu.dot_dimension_numbers<[1], [0], [0], [1], [0, 0, 1, 1], [], []>} : vector<256x16xf32>, vector<16x32xf32>, vector<256x32xf32> -> vector<256x32xf32>
    %127 = vector.shape_cast %126 : vector<256x32xf32> to vector<1x16x16x32xf32>
    %128 = vector.extract_strided_slice %127 {offsets = [0, 0, 0, 0], sizes = [1, 1, 16, 32], strides = [1, 1, 1, 1]} : vector<1x16x16x32xf32> to vector<1x1x16x32xf32>
    %129 = vector.shape_cast %128 : vector<1x1x16x32xf32> to vector<1x16x32xf32>
    %c0_141 = arith.constant 0 : index
    %c0_142 = arith.constant 0 : index
    %c0_143 = arith.constant 0 : index
    %130 = vector.load %arg6[%c0_141, %c0_142, %c0_143] : memref<1x16x512xf32, #tpu.memory_space<vmem>>, vector<1x16x32xf32>
    tpu.vector_store %arg6[%c0_141, %c0_142, %c0_143], %129 {strides = array<i32>} : memref<1x16x512xf32, #tpu.memory_space<vmem>>, vector<1x16x32xf32>,
    %131 = vector.extract_strided_slice %127 {offsets = [0, 1, 0, 0], sizes = [1, 1, 16, 32], strides = [1, 1, 1, 1]} : vector<1x16x16x32xf32> to vector<1x1x16x32xf32>
    %132 = vector.shape_cast %131 : vector<1x1x16x32xf32> to vector<1x16x32xf32>
    %c0_144 = arith.constant 0 : index
    %c0_145 = arith.constant 0 : index
    %c32 = arith.constant 32 : index
    %133 = vector.load %arg6[%c0_144, %c0_145, %c32] : memref<1x16x512xf32, #tpu.memory_space<vmem>>, vector<1x16x32xf32>
    tpu.vector_store %arg6[%c0_144, %c0_145, %c32], %132 {strides = array<i32>} : memref<1x16x512xf32, #tpu.memory_space<vmem>>, vector<1x16x32xf32>,
    %134 = vector.extract_strided_slice %127 {offsets = [0, 2, 0, 0], sizes = [1, 1, 16, 32], strides = [1, 1, 1, 1]} : vector<1x16x16x32xf32> to vector<1x1x16x32xf32>
    %135 = vector.shape_cast %134 : vector<1x1x16x32xf32> to vector<1x16x32xf32>
    %c0_146 = arith.constant 0 : index
    %c0_147 = arith.constant 0 : index
    %c64 = arith.constant 64 : index
    %136 = vector.load %arg6[%c0_146, %c0_147, %c64] : memref<1x16x512xf32, #tpu.memory_space<vmem>>, vector<1x16x32xf32>
    tpu.vector_store %arg6[%c0_146, %c0_147, %c64], %135 {strides = array<i32>} : memref<1x16x512xf32, #tpu.memory_space<vmem>>, vector<1x16x32xf32>,
    %137 = vector.extract_strided_slice %127 {offsets = [0, 3, 0, 0], sizes = [1, 1, 16, 32], strides = [1, 1, 1, 1]} : vector<1x16x16x32xf32> to vector<1x1x16x32xf32>
    %138 = vector.shape_cast %137 : vector<1x1x16x32xf32> to vector<1x16x32xf32>
    %c0_148 = arith.constant 0 : index
    %c0_149 = arith.constant 0 : index
    %c96 = arith.constant 96 : index
    %139 = vector.load %arg6[%c0_148, %c0_149, %c96] : memref<1x16x512xf32, #tpu.memory_space<vmem>>, vector<1x16x32xf32>
    tpu.vector_store %arg6[%c0_148, %c0_149, %c96], %138 {strides = array<i32>} : memref<1x16x512xf32, #tpu.memory_space<vmem>>, vector<1x16x32xf32>,
    %140 = vector.extract_strided_slice %127 {offsets = [0, 4, 0, 0], sizes = [1, 1, 16, 32], strides = [1, 1, 1, 1]} : vector<1x16x16x32xf32> to vector<1x1x16x32xf32>
    %141 = vector.shape_cast %140 : vector<1x1x16x32xf32> to vector<1x16x32xf32>
    %c0_150 = arith.constant 0 : index
    %c0_151 = arith.constant 0 : index
    %c128 = arith.constant 128 : index
    %142 = vector.load %arg6[%c0_150, %c0_151, %c128] : memref<1x16x512xf32, #tpu.memory_space<vmem>>, vector<1x16x32xf32>
    tpu.vector_store %arg6[%c0_150, %c0_151, %c128], %141 {strides = array<i32>} : memref<1x16x512xf32, #tpu.memory_space<vmem>>, vector<1x16x32xf32>,
    %143 = vector.extract_strided_slice %127 {offsets = [0, 5, 0, 0], sizes = [1, 1, 16, 32], strides = [1, 1, 1, 1]} : vector<1x16x16x32xf32> to vector<1x1x16x32xf32>
    %144 = vector.shape_cast %143 : vector<1x1x16x32xf32> to vector<1x16x32xf32>
    %c0_152 = arith.constant 0 : index
    %c0_153 = arith.constant 0 : index
    %c160 = arith.constant 160 : index
    %145 = vector.load %arg6[%c0_152, %c0_153, %c160] : memref<1x16x512xf32, #tpu.memory_space<vmem>>, vector<1x16x32xf32>
    tpu.vector_store %arg6[%c0_152, %c0_153, %c160], %144 {strides = array<i32>} : memref<1x16x512xf32, #tpu.memory_space<vmem>>, vector<1x16x32xf32>,
    %146 = vector.extract_strided_slice %127 {offsets = [0, 6, 0, 0], sizes = [1, 1, 16, 32], strides = [1, 1, 1, 1]} : vector<1x16x16x32xf32> to vector<1x1x16x32xf32>
    %147 = vector.shape_cast %146 : vector<1x1x16x32xf32> to vector<1x16x32xf32>
    %c0_154 = arith.constant 0 : index
    %c0_155 = arith.constant 0 : index
    %c192 = arith.constant 192 : index
    %148 = vector.load %arg6[%c0_154, %c0_155, %c192] : memref<1x16x512xf32, #tpu.memory_space<vmem>>, vector<1x16x32xf32>
    tpu.vector_store %arg6[%c0_154, %c0_155, %c192], %147 {strides = array<i32>} : memref<1x16x512xf32, #tpu.memory_space<vmem>>, vector<1x16x32xf32>,
    %149 = vector.extract_strided_slice %127 {offsets = [0, 7, 0, 0], sizes = [1, 1, 16, 32], strides = [1, 1, 1, 1]} : vector<1x16x16x32xf32> to vector<1x1x16x32xf32>
    %150 = vector.shape_cast %149 : vector<1x1x16x32xf32> to vector<1x16x32xf32>
    %c0_156 = arith.constant 0 : index
    %c0_157 = arith.constant 0 : index
    %c224 = arith.constant 224 : index
    %151 = vector.load %arg6[%c0_156, %c0_157, %c224] : memref<1x16x512xf32, #tpu.memory_space<vmem>>, vector<1x16x32xf32>
    tpu.vector_store %arg6[%c0_156, %c0_157, %c224], %150 {strides = array<i32>} : memref<1x16x512xf32, #tpu.memory_space<vmem>>, vector<1x16x32xf32>,
    %152 = vector.extract_strided_slice %127 {offsets = [0, 8, 0, 0], sizes = [1, 1, 16, 32], strides = [1, 1, 1, 1]} : vector<1x16x16x32xf32> to vector<1x1x16x32xf32>
    %153 = vector.shape_cast %152 : vector<1x1x16x32xf32> to vector<1x16x32xf32>
    %c0_158 = arith.constant 0 : index
    %c0_159 = arith.constant 0 : index
    %c256 = arith.constant 256 : index
    %154 = vector.load %arg6[%c0_158, %c0_159, %c256] : memref<1x16x512xf32, #tpu.memory_space<vmem>>, vector<1x16x32xf32>
    tpu.vector_store %arg6[%c0_158, %c0_159, %c256], %153 {strides = array<i32>} : memref<1x16x512xf32, #tpu.memory_space<vmem>>, vector<1x16x32xf32>,
    %155 = vector.extract_strided_slice %127 {offsets = [0, 9, 0, 0], sizes = [1, 1, 16, 32], strides = [1, 1, 1, 1]} : vector<1x16x16x32xf32> to vector<1x1x16x32xf32>
    %156 = vector.shape_cast %155 : vector<1x1x16x32xf32> to vector<1x16x32xf32>
    %c0_160 = arith.constant 0 : index
    %c0_161 = arith.constant 0 : index
    %c288 = arith.constant 288 : index
    %157 = vector.load %arg6[%c0_160, %c0_161, %c288] : memref<1x16x512xf32, #tpu.memory_space<vmem>>, vector<1x16x32xf32>
    tpu.vector_store %arg6[%c0_160, %c0_161, %c288], %156 {strides = array<i32>} : memref<1x16x512xf32, #tpu.memory_space<vmem>>, vector<1x16x32xf32>,
    %158 = vector.extract_strided_slice %127 {offsets = [0, 10, 0, 0], sizes = [1, 1, 16, 32], strides = [1, 1, 1, 1]} : vector<1x16x16x32xf32> to vector<1x1x16x32xf32>
    %159 = vector.shape_cast %158 : vector<1x1x16x32xf32> to vector<1x16x32xf32>
    %c0_162 = arith.constant 0 : index
    %c0_163 = arith.constant 0 : index
    %c320 = arith.constant 320 : index
    %160 = vector.load %arg6[%c0_162, %c0_163, %c320] : memref<1x16x512xf32, #tpu.memory_space<vmem>>, vector<1x16x32xf32>
    tpu.vector_store %arg6[%c0_162, %c0_163, %c320], %159 {strides = array<i32>} : memref<1x16x512xf32, #tpu.memory_space<vmem>>, vector<1x16x32xf32>,
    %161 = vector.extract_strided_slice %127 {offsets = [0, 11, 0, 0], sizes = [1, 1, 16, 32], strides = [1, 1, 1, 1]} : vector<1x16x16x32xf32> to vector<1x1x16x32xf32>
    %162 = vector.shape_cast %161 : vector<1x1x16x32xf32> to vector<1x16x32xf32>
    %c0_164 = arith.constant 0 : index
    %c0_165 = arith.constant 0 : index
    %c352 = arith.constant 352 : index
    %163 = vector.load %arg6[%c0_164, %c0_165, %c352] : memref<1x16x512xf32, #tpu.memory_space<vmem>>, vector<1x16x32xf32>
    tpu.vector_store %arg6[%c0_164, %c0_165, %c352], %162 {strides = array<i32>} : memref<1x16x512xf32, #tpu.memory_space<vmem>>, vector<1x16x32xf32>,
    %164 = vector.extract_strided_slice %127 {offsets = [0, 12, 0, 0], sizes = [1, 1, 16, 32], strides = [1, 1, 1, 1]} : vector<1x16x16x32xf32> to vector<1x1x16x32xf32>
    %165 = vector.shape_cast %164 : vector<1x1x16x32xf32> to vector<1x16x32xf32>
    %c0_166 = arith.constant 0 : index
    %c0_167 = arith.constant 0 : index
    %c384 = arith.constant 384 : index
    %166 = vector.load %arg6[%c0_166, %c0_167, %c384] : memref<1x16x512xf32, #tpu.memory_space<vmem>>, vector<1x16x32xf32>
    tpu.vector_store %arg6[%c0_166, %c0_167, %c384], %165 {strides = array<i32>} : memref<1x16x512xf32, #tpu.memory_space<vmem>>, vector<1x16x32xf32>,
    %167 = vector.extract_strided_slice %127 {offsets = [0, 13, 0, 0], sizes = [1, 1, 16, 32], strides = [1, 1, 1, 1]} : vector<1x16x16x32xf32> to vector<1x1x16x32xf32>
    %168 = vector.shape_cast %167 : vector<1x1x16x32xf32> to vector<1x16x32xf32>
    %c0_168 = arith.constant 0 : index
    %c0_169 = arith.constant 0 : index
    %c416 = arith.constant 416 : index
    %169 = vector.load %arg6[%c0_168, %c0_169, %c416] : memref<1x16x512xf32, #tpu.memory_space<vmem>>, vector<1x16x32xf32>
    tpu.vector_store %arg6[%c0_168, %c0_169, %c416], %168 {strides = array<i32>} : memref<1x16x512xf32, #tpu.memory_space<vmem>>, vector<1x16x32xf32>,
    %170 = vector.extract_strided_slice %127 {offsets = [0, 14, 0, 0], sizes = [1, 1, 16, 32], strides = [1, 1, 1, 1]} : vector<1x16x16x32xf32> to vector<1x1x16x32xf32>
    %171 = vector.shape_cast %170 : vector<1x1x16x32xf32> to vector<1x16x32xf32>
    %c0_170 = arith.constant 0 : index
    %c0_171 = arith.constant 0 : index
    %c448 = arith.constant 448 : index
    %172 = vector.load %arg6[%c0_170, %c0_171, %c448] : memref<1x16x512xf32, #tpu.memory_space<vmem>>, vector<1x16x32xf32>
    tpu.vector_store %arg6[%c0_170, %c0_171, %c448], %171 {strides = array<i32>} : memref<1x16x512xf32, #tpu.memory_space<vmem>>, vector<1x16x32xf32>,
    %173 = vector.extract_strided_slice %127 {offsets = [0, 15, 0, 0], sizes = [1, 1, 16, 32], strides = [1, 1, 1, 1]} : vector<1x16x16x32xf32> to vector<1x1x16x32xf32>
    %174 = vector.shape_cast %173 : vector<1x1x16x32xf32> to vector<1x16x32xf32>
    %c0_172 = arith.constant 0 : index
    %c0_173 = arith.constant 0 : index
    %c480 = arith.constant 480 : index
    %175 = vector.load %arg6[%c0_172, %c0_173, %c480] : memref<1x16x512xf32, #tpu.memory_space<vmem>>, vector<1x16x32xf32>
    tpu.vector_store %arg6[%c0_172, %c0_173, %c480], %174 {strides = array<i32>} : memref<1x16x512xf32, #tpu.memory_space<vmem>>, vector<1x16x32xf32>,
    %c0_174 = arith.constant 0 : index
    %c0_175 = arith.constant 0 : index
    %c0_176 = arith.constant 0 : index
    %176 = vector.load %arg6[%c0_174, %c0_175, %c0_176] : memref<1x16x512xf32, #tpu.memory_space<vmem>>, vector<1x16x512xf32>
    %177 = arith.addf %2, %176 : vector<1x16x512xf32>
    %cst_177 = arith.constant 0.000000e+00 : f32
    %178 = vector.broadcast %cst_177 : f32 to vector<1x16x512xf32>
    %179 = arith.maximumf %177, %178 : vector<1x16x512xf32>
    %180 = vector.extract_strided_slice %179 {offsets = [0, 0, 0], sizes = [1, 16, 32], strides = [1, 1, 1]} : vector<1x16x512xf32> to vector<1x16x32xf32>
    %c0_178 = arith.constant 0 : index
    %c1_179 = arith.constant 1 : index
    %c1_180 = arith.constant 1 : index
    %c0_181 = arith.constant 0 : index
    %181 = vector.load %arg5[%c0_178, %c1_179, %c1_180, %c0_181] : memref<1x18x18x32xf32, #tpu.memory_space<vmem>>, vector<1x1x16x32xf32>
    %182 = vector.shape_cast %181 : vector<1x1x16x32xf32> to vector<1x16x32xf32>
    %183 = vector.shape_cast %180 : vector<1x16x32xf32> to vector<1x1x16x32xf32>
    tpu.vector_store %arg5[%c0_178, %c1_179, %c1_180, %c0_181], %183 {strides = array<i32>} : memref<1x18x18x32xf32, #tpu.memory_space<vmem>>, vector<1x1x16x32xf32>,
    %184 = vector.extract_strided_slice %179 {offsets = [0, 0, 32], sizes = [1, 16, 32], strides = [1, 1, 1]} : vector<1x16x512xf32> to vector<1x16x32xf32>
    %c0_182 = arith.constant 0 : index
    %c2_183 = arith.constant 2 : index
    %c1_184 = arith.constant 1 : index
    %c0_185 = arith.constant 0 : index
    %185 = vector.load %arg5[%c0_182, %c2_183, %c1_184, %c0_185] : memref<1x18x18x32xf32, #tpu.memory_space<vmem>>, vector<1x1x16x32xf32>
    %186 = vector.shape_cast %185 : vector<1x1x16x32xf32> to vector<1x16x32xf32>
    %187 = vector.shape_cast %184 : vector<1x16x32xf32> to vector<1x1x16x32xf32>
    tpu.vector_store %arg5[%c0_182, %c2_183, %c1_184, %c0_185], %187 {strides = array<i32>} : memref<1x18x18x32xf32, #tpu.memory_space<vmem>>, vector<1x1x16x32xf32>,
    %188 = vector.extract_strided_slice %179 {offsets = [0, 0, 64], sizes = [1, 16, 32], strides = [1, 1, 1]} : vector<1x16x512xf32> to vector<1x16x32xf32>
    %c0_186 = arith.constant 0 : index
    %c3_187 = arith.constant 3 : index
    %c1_188 = arith.constant 1 : index
    %c0_189 = arith.constant 0 : index
    %189 = vector.load %arg5[%c0_186, %c3_187, %c1_188, %c0_189] : memref<1x18x18x32xf32, #tpu.memory_space<vmem>>, vector<1x1x16x32xf32>
    %190 = vector.shape_cast %189 : vector<1x1x16x32xf32> to vector<1x16x32xf32>
    %191 = vector.shape_cast %188 : vector<1x16x32xf32> to vector<1x1x16x32xf32>
    tpu.vector_store %arg5[%c0_186, %c3_187, %c1_188, %c0_189], %191 {strides = array<i32>} : memref<1x18x18x32xf32, #tpu.memory_space<vmem>>, vector<1x1x16x32xf32>,
    %192 = vector.extract_strided_slice %179 {offsets = [0, 0, 96], sizes = [1, 16, 32], strides = [1, 1, 1]} : vector<1x16x512xf32> to vector<1x16x32xf32>
    %c0_190 = arith.constant 0 : index
    %c4_191 = arith.constant 4 : index
    %c1_192 = arith.constant 1 : index
    %c0_193 = arith.constant 0 : index
    %193 = vector.load %arg5[%c0_190, %c4_191, %c1_192, %c0_193] : memref<1x18x18x32xf32, #tpu.memory_space<vmem>>, vector<1x1x16x32xf32>
    %194 = vector.shape_cast %193 : vector<1x1x16x32xf32> to vector<1x16x32xf32>
    %195 = vector.shape_cast %192 : vector<1x16x32xf32> to vector<1x1x16x32xf32>
    tpu.vector_store %arg5[%c0_190, %c4_191, %c1_192, %c0_193], %195 {strides = array<i32>} : memref<1x18x18x32xf32, #tpu.memory_space<vmem>>, vector<1x1x16x32xf32>,
    %196 = vector.extract_strided_slice %179 {offsets = [0, 0, 128], sizes = [1, 16, 32], strides = [1, 1, 1]} : vector<1x16x512xf32> to vector<1x16x32xf32>
    %c0_194 = arith.constant 0 : index
    %c5_195 = arith.constant 5 : index
    %c1_196 = arith.constant 1 : index
    %c0_197 = arith.constant 0 : index
    %197 = vector.load %arg5[%c0_194, %c5_195, %c1_196, %c0_197] : memref<1x18x18x32xf32, #tpu.memory_space<vmem>>, vector<1x1x16x32xf32>
    %198 = vector.shape_cast %197 : vector<1x1x16x32xf32> to vector<1x16x32xf32>
    %199 = vector.shape_cast %196 : vector<1x16x32xf32> to vector<1x1x16x32xf32>
    tpu.vector_store %arg5[%c0_194, %c5_195, %c1_196, %c0_197], %199 {strides = array<i32>} : memref<1x18x18x32xf32, #tpu.memory_space<vmem>>, vector<1x1x16x32xf32>,
    %200 = vector.extract_strided_slice %179 {offsets = [0, 0, 160], sizes = [1, 16, 32], strides = [1, 1, 1]} : vector<1x16x512xf32> to vector<1x16x32xf32>
    %c0_198 = arith.constant 0 : index
    %c6_199 = arith.constant 6 : index
    %c1_200 = arith.constant 1 : index
    %c0_201 = arith.constant 0 : index
    %201 = vector.load %arg5[%c0_198, %c6_199, %c1_200, %c0_201] : memref<1x18x18x32xf32, #tpu.memory_space<vmem>>, vector<1x1x16x32xf32>
    %202 = vector.shape_cast %201 : vector<1x1x16x32xf32> to vector<1x16x32xf32>
    %203 = vector.shape_cast %200 : vector<1x16x32xf32> to vector<1x1x16x32xf32>
    tpu.vector_store %arg5[%c0_198, %c6_199, %c1_200, %c0_201], %203 {strides = array<i32>} : memref<1x18x18x32xf32, #tpu.memory_space<vmem>>, vector<1x1x16x32xf32>,
    %204 = vector.extract_strided_slice %179 {offsets = [0, 0, 192], sizes = [1, 16, 32], strides = [1, 1, 1]} : vector<1x16x512xf32> to vector<1x16x32xf32>
    %c0_202 = arith.constant 0 : index
    %c7_203 = arith.constant 7 : index
    %c1_204 = arith.constant 1 : index
    %c0_205 = arith.constant 0 : index
    %205 = vector.load %arg5[%c0_202, %c7_203, %c1_204, %c0_205] : memref<1x18x18x32xf32, #tpu.memory_space<vmem>>, vector<1x1x16x32xf32>
    %206 = vector.shape_cast %205 : vector<1x1x16x32xf32> to vector<1x16x32xf32>
    %207 = vector.shape_cast %204 : vector<1x16x32xf32> to vector<1x1x16x32xf32>
    tpu.vector_store %arg5[%c0_202, %c7_203, %c1_204, %c0_205], %207 {strides = array<i32>} : memref<1x18x18x32xf32, #tpu.memory_space<vmem>>, vector<1x1x16x32xf32>,
    %208 = vector.extract_strided_slice %179 {offsets = [0, 0, 224], sizes = [1, 16, 32], strides = [1, 1, 1]} : vector<1x16x512xf32> to vector<1x16x32xf32>
    %c0_206 = arith.constant 0 : index
    %c8_207 = arith.constant 8 : index
    %c1_208 = arith.constant 1 : index
    %c0_209 = arith.constant 0 : index
    %209 = vector.load %arg5[%c0_206, %c8_207, %c1_208, %c0_209] : memref<1x18x18x32xf32, #tpu.memory_space<vmem>>, vector<1x1x16x32xf32>
    %210 = vector.shape_cast %209 : vector<1x1x16x32xf32> to vector<1x16x32xf32>
    %211 = vector.shape_cast %208 : vector<1x16x32xf32> to vector<1x1x16x32xf32>
    tpu.vector_store %arg5[%c0_206, %c8_207, %c1_208, %c0_209], %211 {strides = array<i32>} : memref<1x18x18x32xf32, #tpu.memory_space<vmem>>, vector<1x1x16x32xf32>,
    %212 = vector.extract_strided_slice %179 {offsets = [0, 0, 256], sizes = [1, 16, 32], strides = [1, 1, 1]} : vector<1x16x512xf32> to vector<1x16x32xf32>
    %c0_210 = arith.constant 0 : index
    %c9_211 = arith.constant 9 : index
    %c1_212 = arith.constant 1 : index
    %c0_213 = arith.constant 0 : index
    %213 = vector.load %arg5[%c0_210, %c9_211, %c1_212, %c0_213] : memref<1x18x18x32xf32, #tpu.memory_space<vmem>>, vector<1x1x16x32xf32>
    %214 = vector.shape_cast %213 : vector<1x1x16x32xf32> to vector<1x16x32xf32>
    %215 = vector.shape_cast %212 : vector<1x16x32xf32> to vector<1x1x16x32xf32>
    tpu.vector_store %arg5[%c0_210, %c9_211, %c1_212, %c0_213], %215 {strides = array<i32>} : memref<1x18x18x32xf32, #tpu.memory_space<vmem>>, vector<1x1x16x32xf32>,
    %216 = vector.extract_strided_slice %179 {offsets = [0, 0, 288], sizes = [1, 16, 32], strides = [1, 1, 1]} : vector<1x16x512xf32> to vector<1x16x32xf32>
    %c0_214 = arith.constant 0 : index
    %c10_215 = arith.constant 10 : index
    %c1_216 = arith.constant 1 : index
    %c0_217 = arith.constant 0 : index
    %217 = vector.load %arg5[%c0_214, %c10_215, %c1_216, %c0_217] : memref<1x18x18x32xf32, #tpu.memory_space<vmem>>, vector<1x1x16x32xf32>
    %218 = vector.shape_cast %217 : vector<1x1x16x32xf32> to vector<1x16x32xf32>
    %219 = vector.shape_cast %216 : vector<1x16x32xf32> to vector<1x1x16x32xf32>
    tpu.vector_store %arg5[%c0_214, %c10_215, %c1_216, %c0_217], %219 {strides = array<i32>} : memref<1x18x18x32xf32, #tpu.memory_space<vmem>>, vector<1x1x16x32xf32>,
    %220 = vector.extract_strided_slice %179 {offsets = [0, 0, 320], sizes = [1, 16, 32], strides = [1, 1, 1]} : vector<1x16x512xf32> to vector<1x16x32xf32>
    %c0_218 = arith.constant 0 : index
    %c11_219 = arith.constant 11 : index
    %c1_220 = arith.constant 1 : index
    %c0_221 = arith.constant 0 : index
    %221 = vector.load %arg5[%c0_218, %c11_219, %c1_220, %c0_221] : memref<1x18x18x32xf32, #tpu.memory_space<vmem>>, vector<1x1x16x32xf32>
    %222 = vector.shape_cast %221 : vector<1x1x16x32xf32> to vector<1x16x32xf32>
    %223 = vector.shape_cast %220 : vector<1x16x32xf32> to vector<1x1x16x32xf32>
    tpu.vector_store %arg5[%c0_218, %c11_219, %c1_220, %c0_221], %223 {strides = array<i32>} : memref<1x18x18x32xf32, #tpu.memory_space<vmem>>, vector<1x1x16x32xf32>,
    %224 = vector.extract_strided_slice %179 {offsets = [0, 0, 352], sizes = [1, 16, 32], strides = [1, 1, 1]} : vector<1x16x512xf32> to vector<1x16x32xf32>
    %c0_222 = arith.constant 0 : index
    %c12_223 = arith.constant 12 : index
    %c1_224 = arith.constant 1 : index
    %c0_225 = arith.constant 0 : index
    %225 = vector.load %arg5[%c0_222, %c12_223, %c1_224, %c0_225] : memref<1x18x18x32xf32, #tpu.memory_space<vmem>>, vector<1x1x16x32xf32>
    %226 = vector.shape_cast %225 : vector<1x1x16x32xf32> to vector<1x16x32xf32>
    %227 = vector.shape_cast %224 : vector<1x16x32xf32> to vector<1x1x16x32xf32>
    tpu.vector_store %arg5[%c0_222, %c12_223, %c1_224, %c0_225], %227 {strides = array<i32>} : memref<1x18x18x32xf32, #tpu.memory_space<vmem>>, vector<1x1x16x32xf32>,
    %228 = vector.extract_strided_slice %179 {offsets = [0, 0, 384], sizes = [1, 16, 32], strides = [1, 1, 1]} : vector<1x16x512xf32> to vector<1x16x32xf32>
    %c0_226 = arith.constant 0 : index
    %c13_227 = arith.constant 13 : index
    %c1_228 = arith.constant 1 : index
    %c0_229 = arith.constant 0 : index
    %229 = vector.load %arg5[%c0_226, %c13_227, %c1_228, %c0_229] : memref<1x18x18x32xf32, #tpu.memory_space<vmem>>, vector<1x1x16x32xf32>
    %230 = vector.shape_cast %229 : vector<1x1x16x32xf32> to vector<1x16x32xf32>
    %231 = vector.shape_cast %228 : vector<1x16x32xf32> to vector<1x1x16x32xf32>
    tpu.vector_store %arg5[%c0_226, %c13_227, %c1_228, %c0_229], %231 {strides = array<i32>} : memref<1x18x18x32xf32, #tpu.memory_space<vmem>>, vector<1x1x16x32xf32>,
    %232 = vector.extract_strided_slice %179 {offsets = [0, 0, 416], sizes = [1, 16, 32], strides = [1, 1, 1]} : vector<1x16x512xf32> to vector<1x16x32xf32>
    %c0_230 = arith.constant 0 : index
    %c14_231 = arith.constant 14 : index
    %c1_232 = arith.constant 1 : index
    %c0_233 = arith.constant 0 : index
    %233 = vector.load %arg5[%c0_230, %c14_231, %c1_232, %c0_233] : memref<1x18x18x32xf32, #tpu.memory_space<vmem>>, vector<1x1x16x32xf32>
    %234 = vector.shape_cast %233 : vector<1x1x16x32xf32> to vector<1x16x32xf32>
    %235 = vector.shape_cast %232 : vector<1x16x32xf32> to vector<1x1x16x32xf32>
    tpu.vector_store %arg5[%c0_230, %c14_231, %c1_232, %c0_233], %235 {strides = array<i32>} : memref<1x18x18x32xf32, #tpu.memory_space<vmem>>, vector<1x1x16x32xf32>,
    %236 = vector.extract_strided_slice %179 {offsets = [0, 0, 448], sizes = [1, 16, 32], strides = [1, 1, 1]} : vector<1x16x512xf32> to vector<1x16x32xf32>
    %c0_234 = arith.constant 0 : index
    %c15_235 = arith.constant 15 : index
    %c1_236 = arith.constant 1 : index
    %c0_237 = arith.constant 0 : index
    %237 = vector.load %arg5[%c0_234, %c15_235, %c1_236, %c0_237] : memref<1x18x18x32xf32, #tpu.memory_space<vmem>>, vector<1x1x16x32xf32>
    %238 = vector.shape_cast %237 : vector<1x1x16x32xf32> to vector<1x16x32xf32>
    %239 = vector.shape_cast %236 : vector<1x16x32xf32> to vector<1x1x16x32xf32>
    tpu.vector_store %arg5[%c0_234, %c15_235, %c1_236, %c0_237], %239 {strides = array<i32>} : memref<1x18x18x32xf32, #tpu.memory_space<vmem>>, vector<1x1x16x32xf32>,
    %240 = vector.extract_strided_slice %179 {offsets = [0, 0, 480], sizes = [1, 16, 32], strides = [1, 1, 1]} : vector<1x16x512xf32> to vector<1x16x32xf32>
    %c0_238 = arith.constant 0 : index
    %c16_239 = arith.constant 16 : index
    %c1_240 = arith.constant 1 : index
    %c0_241 = arith.constant 0 : index
    %241 = vector.load %arg5[%c0_238, %c16_239, %c1_240, %c0_241] : memref<1x18x18x32xf32, #tpu.memory_space<vmem>>, vector<1x1x16x32xf32>
    %242 = vector.shape_cast %241 : vector<1x1x16x32xf32> to vector<1x16x32xf32>
    %243 = vector.shape_cast %240 : vector<1x16x32xf32> to vector<1x1x16x32xf32>
    tpu.vector_store %arg5[%c0_238, %c16_239, %c1_240, %c0_241], %243 {strides = array<i32>} : memref<1x18x18x32xf32, #tpu.memory_space<vmem>>, vector<1x1x16x32xf32>,
    %c0_242 = arith.constant 0 : index
    %c0_243 = arith.constant 0 : index
    %c0_244 = arith.constant 0 : index
    %c0_245 = arith.constant 0 : index
    %244 = vector.load %arg5[%c0_242, %c0_243, %c0_244, %c0_245] : memref<1x18x18x32xf32, #tpu.memory_space<vmem>>, vector<1x16x16x32xf32>
    %245 = vector.shape_cast %244 : vector<1x16x16x32xf32> to vector<256x32xf32>
    %c1_246 = arith.constant 1 : index
    %c0_247 = arith.constant 0 : index
    %c0_248 = arith.constant 0 : index
    %c0_249 = arith.constant 0 : index
    %246 = vector.load %arg2[%c1_246, %c0_247, %c0_248, %c0_249] : memref<2x9x32x16xf32, #tpu.memory_space<vmem>>, vector<1x1x32x16xf32>
    %247 = vector.shape_cast %246 : vector<1x1x32x16xf32> to vector<32x16xf32>
    %cst_250 = arith.constant dense<0.000000e+00> : vector<256x16xf32>
    %248 = tpu.matmul %245, %247, %cst_250 {dimension_numbers = #tpu.dot_dimension_numbers<[1], [0], [0], [1], [0, 0, 1, 1], [], []>} : vector<256x32xf32>, vector<32x16xf32>, vector<256x16xf32> -> vector<256x16xf32>
    %c0_251 = arith.constant 0 : index
    %c1_252 = arith.constant 1 : index
    %c0_253 = arith.constant 0 : index
    %c0_254 = arith.constant 0 : index
    %249 = vector.load %arg5[%c0_251, %c1_252, %c0_253, %c0_254] : memref<1x18x18x32xf32, #tpu.memory_space<vmem>>, vector<1x16x16x32xf32>
    %250 = vector.shape_cast %249 : vector<1x16x16x32xf32> to vector<256x32xf32>
    %c1_255 = arith.constant 1 : index
    %c1_256 = arith.constant 1 : index
    %c0_257 = arith.constant 0 : index
    %c0_258 = arith.constant 0 : index
    %251 = vector.load %arg2[%c1_255, %c1_256, %c0_257, %c0_258] : memref<2x9x32x16xf32, #tpu.memory_space<vmem>>, vector<1x1x32x16xf32>
    %252 = vector.shape_cast %251 : vector<1x1x32x16xf32> to vector<32x16xf32>
    %cst_259 = arith.constant dense<0.000000e+00> : vector<256x16xf32>
    %253 = tpu.matmul %250, %252, %cst_259 {dimension_numbers = #tpu.dot_dimension_numbers<[1], [0], [0], [1], [0, 0, 1, 1], [], []>} : vector<256x32xf32>, vector<32x16xf32>, vector<256x16xf32> -> vector<256x16xf32>
    %254 = arith.addf %248, %253 : vector<256x16xf32>
    %c0_260 = arith.constant 0 : index
    %c2_261 = arith.constant 2 : index
    %c0_262 = arith.constant 0 : index
    %c0_263 = arith.constant 0 : index
    %255 = vector.load %arg5[%c0_260, %c2_261, %c0_262, %c0_263] : memref<1x18x18x32xf32, #tpu.memory_space<vmem>>, vector<1x16x16x32xf32>
    %256 = vector.shape_cast %255 : vector<1x16x16x32xf32> to vector<256x32xf32>
    %c1_264 = arith.constant 1 : index
    %c2_265 = arith.constant 2 : index
    %c0_266 = arith.constant 0 : index
    %c0_267 = arith.constant 0 : index
    %257 = vector.load %arg2[%c1_264, %c2_265, %c0_266, %c0_267] : memref<2x9x32x16xf32, #tpu.memory_space<vmem>>, vector<1x1x32x16xf32>
    %258 = vector.shape_cast %257 : vector<1x1x32x16xf32> to vector<32x16xf32>
    %cst_268 = arith.constant dense<0.000000e+00> : vector<256x16xf32>
    %259 = tpu.matmul %256, %258, %cst_268 {dimension_numbers = #tpu.dot_dimension_numbers<[1], [0], [0], [1], [0, 0, 1, 1], [], []>} : vector<256x32xf32>, vector<32x16xf32>, vector<256x16xf32> -> vector<256x16xf32>
    %260 = arith.addf %254, %259 : vector<256x16xf32>
    %c0_269 = arith.constant 0 : index
    %c0_270 = arith.constant 0 : index
    %c1_271 = arith.constant 1 : index
    %c0_272 = arith.constant 0 : index
    %261 = vector.load %arg5[%c0_269, %c0_270, %c1_271, %c0_272] : memref<1x18x18x32xf32, #tpu.memory_space<vmem>>, vector<1x16x16x32xf32>
    %262 = vector.shape_cast %261 : vector<1x16x16x32xf32> to vector<256x32xf32>
    %c1_273 = arith.constant 1 : index
    %c3_274 = arith.constant 3 : index
    %c0_275 = arith.constant 0 : index
    %c0_276 = arith.constant 0 : index
    %263 = vector.load %arg2[%c1_273, %c3_274, %c0_275, %c0_276] : memref<2x9x32x16xf32, #tpu.memory_space<vmem>>, vector<1x1x32x16xf32>
    %264 = vector.shape_cast %263 : vector<1x1x32x16xf32> to vector<32x16xf32>
    %cst_277 = arith.constant dense<0.000000e+00> : vector<256x16xf32>
    %265 = tpu.matmul %262, %264, %cst_277 {dimension_numbers = #tpu.dot_dimension_numbers<[1], [0], [0], [1], [0, 0, 1, 1], [], []>} : vector<256x32xf32>, vector<32x16xf32>, vector<256x16xf32> -> vector<256x16xf32>
    %266 = arith.addf %260, %265 : vector<256x16xf32>
    %c0_278 = arith.constant 0 : index
    %c1_279 = arith.constant 1 : index
    %c1_280 = arith.constant 1 : index
    %c0_281 = arith.constant 0 : index
    %267 = vector.load %arg5[%c0_278, %c1_279, %c1_280, %c0_281] : memref<1x18x18x32xf32, #tpu.memory_space<vmem>>, vector<1x16x16x32xf32>
    %268 = vector.shape_cast %267 : vector<1x16x16x32xf32> to vector<256x32xf32>
    %c1_282 = arith.constant 1 : index
    %c4_283 = arith.constant 4 : index
    %c0_284 = arith.constant 0 : index
    %c0_285 = arith.constant 0 : index
    %269 = vector.load %arg2[%c1_282, %c4_283, %c0_284, %c0_285] : memref<2x9x32x16xf32, #tpu.memory_space<vmem>>, vector<1x1x32x16xf32>
    %270 = vector.shape_cast %269 : vector<1x1x32x16xf32> to vector<32x16xf32>
    %cst_286 = arith.constant dense<0.000000e+00> : vector<256x16xf32>
    %271 = tpu.matmul %268, %270, %cst_286 {dimension_numbers = #tpu.dot_dimension_numbers<[1], [0], [0], [1], [0, 0, 1, 1], [], []>} : vector<256x32xf32>, vector<32x16xf32>, vector<256x16xf32> -> vector<256x16xf32>
    %272 = arith.addf %266, %271 : vector<256x16xf32>
    %c0_287 = arith.constant 0 : index
    %c2_288 = arith.constant 2 : index
    %c1_289 = arith.constant 1 : index
    %c0_290 = arith.constant 0 : index
    %273 = vector.load %arg5[%c0_287, %c2_288, %c1_289, %c0_290] : memref<1x18x18x32xf32, #tpu.memory_space<vmem>>, vector<1x16x16x32xf32>
    %274 = vector.shape_cast %273 : vector<1x16x16x32xf32> to vector<256x32xf32>
    %c1_291 = arith.constant 1 : index
    %c5_292 = arith.constant 5 : index
    %c0_293 = arith.constant 0 : index
    %c0_294 = arith.constant 0 : index
    %275 = vector.load %arg2[%c1_291, %c5_292, %c0_293, %c0_294] : memref<2x9x32x16xf32, #tpu.memory_space<vmem>>, vector<1x1x32x16xf32>
    %276 = vector.shape_cast %275 : vector<1x1x32x16xf32> to vector<32x16xf32>
    %cst_295 = arith.constant dense<0.000000e+00> : vector<256x16xf32>
    %277 = tpu.matmul %274, %276, %cst_295 {dimension_numbers = #tpu.dot_dimension_numbers<[1], [0], [0], [1], [0, 0, 1, 1], [], []>} : vector<256x32xf32>, vector<32x16xf32>, vector<256x16xf32> -> vector<256x16xf32>
    %278 = arith.addf %272, %277 : vector<256x16xf32>
    %c0_296 = arith.constant 0 : index
    %c0_297 = arith.constant 0 : index
    %c2_298 = arith.constant 2 : index
    %c0_299 = arith.constant 0 : index
    %279 = vector.load %arg5[%c0_296, %c0_297, %c2_298, %c0_299] : memref<1x18x18x32xf32, #tpu.memory_space<vmem>>, vector<1x16x16x32xf32>
    %280 = vector.shape_cast %279 : vector<1x16x16x32xf32> to vector<256x32xf32>
    %c1_300 = arith.constant 1 : index
    %c6_301 = arith.constant 6 : index
    %c0_302 = arith.constant 0 : index
    %c0_303 = arith.constant 0 : index
    %281 = vector.load %arg2[%c1_300, %c6_301, %c0_302, %c0_303] : memref<2x9x32x16xf32, #tpu.memory_space<vmem>>, vector<1x1x32x16xf32>
    %282 = vector.shape_cast %281 : vector<1x1x32x16xf32> to vector<32x16xf32>
    %cst_304 = arith.constant dense<0.000000e+00> : vector<256x16xf32>
    %283 = tpu.matmul %280, %282, %cst_304 {dimension_numbers = #tpu.dot_dimension_numbers<[1], [0], [0], [1], [0, 0, 1, 1], [], []>} : vector<256x32xf32>, vector<32x16xf32>, vector<256x16xf32> -> vector<256x16xf32>
    %284 = arith.addf %278, %283 : vector<256x16xf32>
    %c0_305 = arith.constant 0 : index
    %c1_306 = arith.constant 1 : index
    %c2_307 = arith.constant 2 : index
    %c0_308 = arith.constant 0 : index
    %285 = vector.load %arg5[%c0_305, %c1_306, %c2_307, %c0_308] : memref<1x18x18x32xf32, #tpu.memory_space<vmem>>, vector<1x16x16x32xf32>
    %286 = vector.shape_cast %285 : vector<1x16x16x32xf32> to vector<256x32xf32>
    %c1_309 = arith.constant 1 : index
    %c7_310 = arith.constant 7 : index
    %c0_311 = arith.constant 0 : index
    %c0_312 = arith.constant 0 : index
    %287 = vector.load %arg2[%c1_309, %c7_310, %c0_311, %c0_312] : memref<2x9x32x16xf32, #tpu.memory_space<vmem>>, vector<1x1x32x16xf32>
    %288 = vector.shape_cast %287 : vector<1x1x32x16xf32> to vector<32x16xf32>
    %cst_313 = arith.constant dense<0.000000e+00> : vector<256x16xf32>
    %289 = tpu.matmul %286, %288, %cst_313 {dimension_numbers = #tpu.dot_dimension_numbers<[1], [0], [0], [1], [0, 0, 1, 1], [], []>} : vector<256x32xf32>, vector<32x16xf32>, vector<256x16xf32> -> vector<256x16xf32>
    %290 = arith.addf %284, %289 : vector<256x16xf32>
    %c0_314 = arith.constant 0 : index
    %c2_315 = arith.constant 2 : index
    %c2_316 = arith.constant 2 : index
    %c0_317 = arith.constant 0 : index
    %291 = vector.load %arg5[%c0_314, %c2_315, %c2_316, %c0_317] : memref<1x18x18x32xf32, #tpu.memory_space<vmem>>, vector<1x16x16x32xf32>
    %292 = vector.shape_cast %291 : vector<1x16x16x32xf32> to vector<256x32xf32>
    %c1_318 = arith.constant 1 : index
    %c8_319 = arith.constant 8 : index
    %c0_320 = arith.constant 0 : index
    %c0_321 = arith.constant 0 : index
    %293 = vector.load %arg2[%c1_318, %c8_319, %c0_320, %c0_321] : memref<2x9x32x16xf32, #tpu.memory_space<vmem>>, vector<1x1x32x16xf32>
    %294 = vector.shape_cast %293 : vector<1x1x32x16xf32> to vector<32x16xf32>
    %cst_322 = arith.constant dense<0.000000e+00> : vector<256x16xf32>
    %295 = tpu.matmul %292, %294, %cst_322 {dimension_numbers = #tpu.dot_dimension_numbers<[1], [0], [0], [1], [0, 0, 1, 1], [], []>} : vector<256x32xf32>, vector<32x16xf32>, vector<256x16xf32> -> vector<256x16xf32>
    %296 = arith.addf %290, %295 : vector<256x16xf32>
    %cst_323 = arith.constant 0.000000e+00 : f32
    %297 = vector.broadcast %cst_323 : f32 to vector<256x16xf32>
    %298 = arith.maximumf %296, %297 : vector<256x16xf32>
    %c1_324 = arith.constant 1 : index
    %c0_325 = arith.constant 0 : index
    %c0_326 = arith.constant 0 : index
    %299 = vector.load %arg3[%c1_324, %c0_325, %c0_326] : memref<2x16x32xf32, #tpu.memory_space<vmem>>, vector<1x16x32xf32>
    %300 = vector.shape_cast %299 : vector<1x16x32xf32> to vector<16x32xf32>
    %cst_327 = arith.constant dense<0.000000e+00> : vector<256x32xf32>
    %301 = tpu.matmul %298, %300, %cst_327 {dimension_numbers = #tpu.dot_dimension_numbers<[1], [0], [0], [1], [0, 0, 1, 1], [], []>} : vector<256x16xf32>, vector<16x32xf32>, vector<256x32xf32> -> vector<256x32xf32>
    %302 = vector.shape_cast %301 : vector<256x32xf32> to vector<1x16x16x32xf32>
    %303 = vector.extract_strided_slice %302 {offsets = [0, 0, 0, 0], sizes = [1, 1, 16, 32], strides = [1, 1, 1, 1]} : vector<1x16x16x32xf32> to vector<1x1x16x32xf32>
    %304 = vector.shape_cast %303 : vector<1x1x16x32xf32> to vector<1x16x32xf32>
    %c0_328 = arith.constant 0 : index
    %c0_329 = arith.constant 0 : index
    %c0_330 = arith.constant 0 : index
    %305 = vector.load %arg6[%c0_328, %c0_329, %c0_330] : memref<1x16x512xf32, #tpu.memory_space<vmem>>, vector<1x16x32xf32>
    tpu.vector_store %arg6[%c0_328, %c0_329, %c0_330], %304 {strides = array<i32>} : memref<1x16x512xf32, #tpu.memory_space<vmem>>, vector<1x16x32xf32>,
    %306 = vector.extract_strided_slice %302 {offsets = [0, 1, 0, 0], sizes = [1, 1, 16, 32], strides = [1, 1, 1, 1]} : vector<1x16x16x32xf32> to vector<1x1x16x32xf32>
    %307 = vector.shape_cast %306 : vector<1x1x16x32xf32> to vector<1x16x32xf32>
    %c0_331 = arith.constant 0 : index
    %c0_332 = arith.constant 0 : index
    %c32_333 = arith.constant 32 : index
    %308 = vector.load %arg6[%c0_331, %c0_332, %c32_333] : memref<1x16x512xf32, #tpu.memory_space<vmem>>, vector<1x16x32xf32>
    tpu.vector_store %arg6[%c0_331, %c0_332, %c32_333], %307 {strides = array<i32>} : memref<1x16x512xf32, #tpu.memory_space<vmem>>, vector<1x16x32xf32>,
    %309 = vector.extract_strided_slice %302 {offsets = [0, 2, 0, 0], sizes = [1, 1, 16, 32], strides = [1, 1, 1, 1]} : vector<1x16x16x32xf32> to vector<1x1x16x32xf32>
    %310 = vector.shape_cast %309 : vector<1x1x16x32xf32> to vector<1x16x32xf32>
    %c0_334 = arith.constant 0 : index
    %c0_335 = arith.constant 0 : index
    %c64_336 = arith.constant 64 : index
    %311 = vector.load %arg6[%c0_334, %c0_335, %c64_336] : memref<1x16x512xf32, #tpu.memory_space<vmem>>, vector<1x16x32xf32>
    tpu.vector_store %arg6[%c0_334, %c0_335, %c64_336], %310 {strides = array<i32>} : memref<1x16x512xf32, #tpu.memory_space<vmem>>, vector<1x16x32xf32>,
    %312 = vector.extract_strided_slice %302 {offsets = [0, 3, 0, 0], sizes = [1, 1, 16, 32], strides = [1, 1, 1, 1]} : vector<1x16x16x32xf32> to vector<1x1x16x32xf32>
    %313 = vector.shape_cast %312 : vector<1x1x16x32xf32> to vector<1x16x32xf32>
    %c0_337 = arith.constant 0 : index
    %c0_338 = arith.constant 0 : index
    %c96_339 = arith.constant 96 : index
    %314 = vector.load %arg6[%c0_337, %c0_338, %c96_339] : memref<1x16x512xf32, #tpu.memory_space<vmem>>, vector<1x16x32xf32>
    tpu.vector_store %arg6[%c0_337, %c0_338, %c96_339], %313 {strides = array<i32>} : memref<1x16x512xf32, #tpu.memory_space<vmem>>, vector<1x16x32xf32>,
    %315 = vector.extract_strided_slice %302 {offsets = [0, 4, 0, 0], sizes = [1, 1, 16, 32], strides = [1, 1, 1, 1]} : vector<1x16x16x32xf32> to vector<1x1x16x32xf32>
    %316 = vector.shape_cast %315 : vector<1x1x16x32xf32> to vector<1x16x32xf32>
    %c0_340 = arith.constant 0 : index
    %c0_341 = arith.constant 0 : index
    %c128_342 = arith.constant 128 : index
    %317 = vector.load %arg6[%c0_340, %c0_341, %c128_342] : memref<1x16x512xf32, #tpu.memory_space<vmem>>, vector<1x16x32xf32>
    tpu.vector_store %arg6[%c0_340, %c0_341, %c128_342], %316 {strides = array<i32>} : memref<1x16x512xf32, #tpu.memory_space<vmem>>, vector<1x16x32xf32>,
    %318 = vector.extract_strided_slice %302 {offsets = [0, 5, 0, 0], sizes = [1, 1, 16, 32], strides = [1, 1, 1, 1]} : vector<1x16x16x32xf32> to vector<1x1x16x32xf32>
    %319 = vector.shape_cast %318 : vector<1x1x16x32xf32> to vector<1x16x32xf32>
    %c0_343 = arith.constant 0 : index
    %c0_344 = arith.constant 0 : index
    %c160_345 = arith.constant 160 : index
    %320 = vector.load %arg6[%c0_343, %c0_344, %c160_345] : memref<1x16x512xf32, #tpu.memory_space<vmem>>, vector<1x16x32xf32>
    tpu.vector_store %arg6[%c0_343, %c0_344, %c160_345], %319 {strides = array<i32>} : memref<1x16x512xf32, #tpu.memory_space<vmem>>, vector<1x16x32xf32>,
    %321 = vector.extract_strided_slice %302 {offsets = [0, 6, 0, 0], sizes = [1, 1, 16, 32], strides = [1, 1, 1, 1]} : vector<1x16x16x32xf32> to vector<1x1x16x32xf32>
    %322 = vector.shape_cast %321 : vector<1x1x16x32xf32> to vector<1x16x32xf32>
    %c0_346 = arith.constant 0 : index
    %c0_347 = arith.constant 0 : index
    %c192_348 = arith.constant 192 : index
    %323 = vector.load %arg6[%c0_346, %c0_347, %c192_348] : memref<1x16x512xf32, #tpu.memory_space<vmem>>, vector<1x16x32xf32>
    tpu.vector_store %arg6[%c0_346, %c0_347, %c192_348], %322 {strides = array<i32>} : memref<1x16x512xf32, #tpu.memory_space<vmem>>, vector<1x16x32xf32>,
    %324 = vector.extract_strided_slice %302 {offsets = [0, 7, 0, 0], sizes = [1, 1, 16, 32], strides = [1, 1, 1, 1]} : vector<1x16x16x32xf32> to vector<1x1x16x32xf32>
    %325 = vector.shape_cast %324 : vector<1x1x16x32xf32> to vector<1x16x32xf32>
    %c0_349 = arith.constant 0 : index
    %c0_350 = arith.constant 0 : index
    %c224_351 = arith.constant 224 : index
    %326 = vector.load %arg6[%c0_349, %c0_350, %c224_351] : memref<1x16x512xf32, #tpu.memory_space<vmem>>, vector<1x16x32xf32>
    tpu.vector_store %arg6[%c0_349, %c0_350, %c224_351], %325 {strides = array<i32>} : memref<1x16x512xf32, #tpu.memory_space<vmem>>, vector<1x16x32xf32>,
    %327 = vector.extract_strided_slice %302 {offsets = [0, 8, 0, 0], sizes = [1, 1, 16, 32], strides = [1, 1, 1, 1]} : vector<1x16x16x32xf32> to vector<1x1x16x32xf32>
    %328 = vector.shape_cast %327 : vector<1x1x16x32xf32> to vector<1x16x32xf32>
    %c0_352 = arith.constant 0 : index
    %c0_353 = arith.constant 0 : index
    %c256_354 = arith.constant 256 : index
    %329 = vector.load %arg6[%c0_352, %c0_353, %c256_354] : memref<1x16x512xf32, #tpu.memory_space<vmem>>, vector<1x16x32xf32>
    tpu.vector_store %arg6[%c0_352, %c0_353, %c256_354], %328 {strides = array<i32>} : memref<1x16x512xf32, #tpu.memory_space<vmem>>, vector<1x16x32xf32>,
    %330 = vector.extract_strided_slice %302 {offsets = [0, 9, 0, 0], sizes = [1, 1, 16, 32], strides = [1, 1, 1, 1]} : vector<1x16x16x32xf32> to vector<1x1x16x32xf32>
    %331 = vector.shape_cast %330 : vector<1x1x16x32xf32> to vector<1x16x32xf32>
    %c0_355 = arith.constant 0 : index
    %c0_356 = arith.constant 0 : index
    %c288_357 = arith.constant 288 : index
    %332 = vector.load %arg6[%c0_355, %c0_356, %c288_357] : memref<1x16x512xf32, #tpu.memory_space<vmem>>, vector<1x16x32xf32>
    tpu.vector_store %arg6[%c0_355, %c0_356, %c288_357], %331 {strides = array<i32>} : memref<1x16x512xf32, #tpu.memory_space<vmem>>, vector<1x16x32xf32>,
    %333 = vector.extract_strided_slice %302 {offsets = [0, 10, 0, 0], sizes = [1, 1, 16, 32], strides = [1, 1, 1, 1]} : vector<1x16x16x32xf32> to vector<1x1x16x32xf32>
    %334 = vector.shape_cast %333 : vector<1x1x16x32xf32> to vector<1x16x32xf32>
    %c0_358 = arith.constant 0 : index
    %c0_359 = arith.constant 0 : index
    %c320_360 = arith.constant 320 : index
    %335 = vector.load %arg6[%c0_358, %c0_359, %c320_360] : memref<1x16x512xf32, #tpu.memory_space<vmem>>, vector<1x16x32xf32>
    tpu.vector_store %arg6[%c0_358, %c0_359, %c320_360], %334 {strides = array<i32>} : memref<1x16x512xf32, #tpu.memory_space<vmem>>, vector<1x16x32xf32>,
    %336 = vector.extract_strided_slice %302 {offsets = [0, 11, 0, 0], sizes = [1, 1, 16, 32], strides = [1, 1, 1, 1]} : vector<1x16x16x32xf32> to vector<1x1x16x32xf32>
    %337 = vector.shape_cast %336 : vector<1x1x16x32xf32> to vector<1x16x32xf32>
    %c0_361 = arith.constant 0 : index
    %c0_362 = arith.constant 0 : index
    %c352_363 = arith.constant 352 : index
    %338 = vector.load %arg6[%c0_361, %c0_362, %c352_363] : memref<1x16x512xf32, #tpu.memory_space<vmem>>, vector<1x16x32xf32>
    tpu.vector_store %arg6[%c0_361, %c0_362, %c352_363], %337 {strides = array<i32>} : memref<1x16x512xf32, #tpu.memory_space<vmem>>, vector<1x16x32xf32>,
    %339 = vector.extract_strided_slice %302 {offsets = [0, 12, 0, 0], sizes = [1, 1, 16, 32], strides = [1, 1, 1, 1]} : vector<1x16x16x32xf32> to vector<1x1x16x32xf32>
    %340 = vector.shape_cast %339 : vector<1x1x16x32xf32> to vector<1x16x32xf32>
    %c0_364 = arith.constant 0 : index
    %c0_365 = arith.constant 0 : index
    %c384_366 = arith.constant 384 : index
    %341 = vector.load %arg6[%c0_364, %c0_365, %c384_366] : memref<1x16x512xf32, #tpu.memory_space<vmem>>, vector<1x16x32xf32>
    tpu.vector_store %arg6[%c0_364, %c0_365, %c384_366], %340 {strides = array<i32>} : memref<1x16x512xf32, #tpu.memory_space<vmem>>, vector<1x16x32xf32>,
    %342 = vector.extract_strided_slice %302 {offsets = [0, 13, 0, 0], sizes = [1, 1, 16, 32], strides = [1, 1, 1, 1]} : vector<1x16x16x32xf32> to vector<1x1x16x32xf32>
    %343 = vector.shape_cast %342 : vector<1x1x16x32xf32> to vector<1x16x32xf32>
    %c0_367 = arith.constant 0 : index
    %c0_368 = arith.constant 0 : index
    %c416_369 = arith.constant 416 : index
    %344 = vector.load %arg6[%c0_367, %c0_368, %c416_369] : memref<1x16x512xf32, #tpu.memory_space<vmem>>, vector<1x16x32xf32>
    tpu.vector_store %arg6[%c0_367, %c0_368, %c416_369], %343 {strides = array<i32>} : memref<1x16x512xf32, #tpu.memory_space<vmem>>, vector<1x16x32xf32>,
    %345 = vector.extract_strided_slice %302 {offsets = [0, 14, 0, 0], sizes = [1, 1, 16, 32], strides = [1, 1, 1, 1]} : vector<1x16x16x32xf32> to vector<1x1x16x32xf32>
    %346 = vector.shape_cast %345 : vector<1x1x16x32xf32> to vector<1x16x32xf32>
    %c0_370 = arith.constant 0 : index
    %c0_371 = arith.constant 0 : index
    %c448_372 = arith.constant 448 : index
    %347 = vector.load %arg6[%c0_370, %c0_371, %c448_372] : memref<1x16x512xf32, #tpu.memory_space<vmem>>, vector<1x16x32xf32>
    tpu.vector_store %arg6[%c0_370, %c0_371, %c448_372], %346 {strides = array<i32>} : memref<1x16x512xf32, #tpu.memory_space<vmem>>, vector<1x16x32xf32>,
    %348 = vector.extract_strided_slice %302 {offsets = [0, 15, 0, 0], sizes = [1, 1, 16, 32], strides = [1, 1, 1, 1]} : vector<1x16x16x32xf32> to vector<1x1x16x32xf32>
    %349 = vector.shape_cast %348 : vector<1x1x16x32xf32> to vector<1x16x32xf32>
    %c0_373 = arith.constant 0 : index
    %c0_374 = arith.constant 0 : index
    %c480_375 = arith.constant 480 : index
    %350 = vector.load %arg6[%c0_373, %c0_374, %c480_375] : memref<1x16x512xf32, #tpu.memory_space<vmem>>, vector<1x16x32xf32>
    tpu.vector_store %arg6[%c0_373, %c0_374, %c480_375], %349 {strides = array<i32>} : memref<1x16x512xf32, #tpu.memory_space<vmem>>, vector<1x16x32xf32>,
    %c0_376 = arith.constant 0 : index
    %c0_377 = arith.constant 0 : index
    %c0_378 = arith.constant 0 : index
    %351 = vector.load %arg6[%c0_376, %c0_377, %c0_378] : memref<1x16x512xf32, #tpu.memory_space<vmem>>, vector<1x16x512xf32>
    %352 = arith.addf %177, %351 : vector<1x16x512xf32>
    %cst_379 = arith.constant 0.000000e+00 : f32
    %353 = vector.broadcast %cst_379 : f32 to vector<1x16x512xf32>
    %354 = arith.maximumf %352, %353 : vector<1x16x512xf32>
    %c0_380 = arith.constant 0 : index
    %c0_381 = arith.constant 0 : index
    %c0_382 = arith.constant 0 : index
    %355 = vector.load %arg4[%c0_380, %c0_381, %c0_382] : memref<1x16x512xf32, #tpu.memory_space<vmem>>, vector<1x16x512xf32>
    tpu.vector_store %arg4[%c0_380, %c0_381, %c0_382], %354 {strides = array<i32>} : memref<1x16x512xf32, #tpu.memory_space<vmem>>, vector<1x16x512xf32>,
    return
  }
  func.func @transform_0(%arg0: i32) -> (i32, i32, i32) {
    %c0_i32 = arith.constant 0 : i32
    %c0_i32_0 = arith.constant 0 : i32
    %c0_i32_1 = arith.constant 0 : i32
    return %arg0, %c0_i32, %c0_i32_0 : i32, i32, i32
  }
  func.func @transform_1(%arg0: i32) -> (i32, i32, i32, i32) {
    %c0_i32 = arith.constant 0 : i32
    %c0_i32_0 = arith.constant 0 : i32
    %c0_i32_1 = arith.constant 0 : i32
    %c0_i32_2 = arith.constant 0 : i32
    %c0_i32_3 = arith.constant 0 : i32
    return %c0_i32, %c0_i32_0, %c0_i32_1, %c0_i32_2 : i32, i32, i32, i32
  }
  func.func @transform_2(%arg0: i32) -> (i32, i32, i32) {
    %c0_i32 = arith.constant 0 : i32
    %c0_i32_0 = arith.constant 0 : i32
    %c0_i32_1 = arith.constant 0 : i32
    %c0_i32_2 = arith.constant 0 : i32
    return %c0_i32, %c0_i32_0, %c0_i32_1 : i32, i32, i32
  }
  func.func @transform_3(%arg0: i32) -> (i32, i32, i32) {
    %c0_i32 = arith.constant 0 : i32
    %c0_i32_0 = arith.constant 0 : i32
    %c0_i32_1 = arith.constant 0 : i32
    return %arg0, %c0_i32, %c0_i32_0 : i32, i32, i32
  }
}

</mosaic_0001>

<llo_original>
// kernel: tpu_custom_call.1
$region0: #{tpu_custom_call.1}
  #allocation0 [shape = 'u32[]', space=smem, size = 0x4, offset = 0x4, fixed_abs, tag = 'smem constant byte address 0x4 - core index']
  #allocation1 [shape = 'u32[144,128]{1,0:T(1,128)}', space=vmem, size = 0x12000, scoped, tag = 'internal scratch']
  #allocation2 [shape = 'f32[1,18,18,32]{3,2,1,0:T(8,128)}', space=vmem, size = 0x36000, scoped, tag = 'scratch operand']
  #allocation3 [shape = 'f32[1,16,512]{2,1,0:T(8,128)}', space=vmem, size = 0x8000, scoped, tag = 'scratch operand']
  %s0 = inlined_call_operand.vmem [shape: f32[2,16,512], index: 0, kind: input, shape index: {}]
  %s1 = inlined_call_operand.vmem [shape: f32[2,9,32,16], index: 1, kind: input, shape index: {}]
  %s2 = inlined_call_operand.vmem [shape: f32[2,16,32], index: 2, kind: input, shape index: {}]
  %s3 = inlined_call_operand.hbm [shape: f32[2,16,512], index: 3, kind: output, shape index: {}]
  %s4 = sld [smem:[#allocation0]]
  $region45: #{tpu_custom_call.1} parent=0
    _
  %s6 = ssub.s32 1, %s4
  %s7 = scalar_select 0, %s6, %s4
  $region1: #{tpu_custom_call.1} parent=0
    #allocation4 [shape = 'u8[65536]{0}', space=vmem, size = 0x10000, scoped, tag = 'output window, operand 0']
    #allocation5 [shape = 's32[2]{0}', space=sflag, size = 0x8, scoped, tag = 'scoped memory for tpu_custom_call.1']
    %8 = vsyncpa [#allocation5], 0
    %s9 = scalar_lea.sflag [#allocation5], 1
    %10 = vsyncpa %s9, 0
    loop: start=0, step=1, limit=4
    $region2: #{tpu_custom_call.1} parent=1 // loop_pre_header
      _
    $region3: #{tpu_custom_call.1} parent=1 // loop_header
      %s12 = sphi 0, %s16
      %p13 = scmp.ge.s32.totalorder %s12, 4
      %s22 = sphi 0, %s24
      %s25 = sphi 0, %s22
      %s26 = sphi 0, %s25
      %s42 = sphi 0, %s26
      %s46 = sphi 0, %s46
      %s48 = sphi 0, %s46
      %s49 = sphi 0, %s48
      %s63 = sphi 0, %s49
      %s67 = sphi 0, %s67
      %s69 = sphi 0, %s67
      %s70 = sphi 0, %s69
      %s84 = sphi 0, %s70
      %s90 = sphi 0, %s92
      %s93 = sphi 0, %s90
      %s94 = sphi 0, %s93
      %s110 = sphi 0, %s94
    $region4: #{tpu_custom_call.1} parent=1 // loop_header_branch
      %15 = sbr.rel (%p13) target = $region8
    $region5: #{tpu_custom_call.1} parent=1 // loop_body
      %s17 = ssub.s32 %s12, 1
      %s18 = ssub.s32 %s12, 2
      %s19 = sadd.s32 %s12, 1
      %s20 = ssub.s32 %s12, %s19
      %p21 = scmp.eq.s32.totalorder %s20, 0
      %s23 = sadd.s32 %s22, 1
      %s24 = scalar_select %p21, %s22, %s23
      %p27 = pneg %p21
      %p28 = scmp.eq.s32.totalorder %s12, 1
      %p29 = por %p27, %p28
      %p30 = scmp.ne.s32.totalorder %s22, %s25
      %p31 = scmp.eq.s32.totalorder %s12, 0
      %p32 = por %p30, %p31
      %p33 = scmp.ne.s32.totalorder %s22, %s25
      %p34 = scmp.eq.s32.totalorder %s17, 1
      %p35 = por %p33, %p34
      %p36 = scmp.ne.s32.totalorder %s25, %s26
      %p37 = scmp.eq.s32.totalorder %s17, 0
      %p38 = por %p36, %p37
      %p39 = scmp.ne.s32.totalorder %s25, %s26
      %p40 = scmp.eq.s32.totalorder %s18, 1
      %p41 = por %p39, %p40
      %p43 = scmp.ne.s32.totalorder %s26, %s42
      %p44 = scmp.eq.s32.totalorder %s18, 0
      %p45 = por %p43, %p44
      %s47 = sadd.s32 %s46, 1
      %p50 = scmp.eq.s32.totalorder %s12, 1
      %p51 = scmp.ne.s32.totalorder %s46, %s48
      %p52 = scmp.eq.s32.totalorder %s12, 0
      %p53 = por %p51, %p52
      %p54 = scmp.ne.s32.totalorder %s46, %s48
      %p55 = scmp.eq.s32.totalorder %s17, 1
      %p56 = por %p54, %p55
      %p57 = scmp.ne.s32.totalorder %s48, %s49
      %p58 = scmp.eq.s32.totalorder %s17, 0
      %p59 = por %p57, %p58
      %p60 = scmp.ne.s32.totalorder %s48, %s49
      %p61 = scmp.eq.s32.totalorder %s18, 1
      %p62 = por %p60, %p61
      %p64 = scmp.ne.s32.totalorder %s49, %s63
      %p65 = scmp.eq.s32.totalorder %s18, 0
      %p66 = por %p64, %p65
      %s68 = sadd.s32 %s67, 1
      %p71 = scmp.eq.s32.totalorder %s12, 1
      %p72 = scmp.ne.s32.totalorder %s67, %s69
      %p73 = scmp.eq.s32.totalorder %s12, 0
      %p74 = por %p72, %p73
      %p75 = scmp.ne.s32.totalorder %s67, %s69
      %p76 = scmp.eq.s32.totalorder %s17, 1
      %p77 = por %p75, %p76
      %p78 = scmp.ne.s32.totalorder %s69, %s70
      %p79 = scmp.eq.s32.totalorder %s17, 0
      %p80 = por %p78, %p79
      %p81 = scmp.ne.s32.totalorder %s69, %s70
      %p82 = scmp.eq.s32.totalorder %s18, 1
      %p83 = por %p81, %p82
      %p85 = scmp.ne.s32.totalorder %s70, %s84
      %p86 = scmp.eq.s32.totalorder %s18, 0
      %p87 = por %p85, %p86
      %s88 = ssub.s32 %s12, %s19
      %p89 = scmp.eq.s32.totalorder %s88, 0
      %s91 = sadd.s32 %s90, 1
      %s92 = scalar_select %p89, %s90, %s91
      %p95 = pneg %p89
      %p96 = scmp.eq.s32.totalorder %s12, 1
      %p97 = por %p95, %p96
      %p98 = scmp.ne.s32.totalorder %s90, %s93
      %p99 = scmp.eq.s32.totalorder %s12, 0
      %p100 = por %p98, %p99
      %p101 = scmp.ne.s32.totalorder %s90, %s93
      %p102 = scmp.eq.s32.totalorder %s17, 1
      %p103 = por %p101, %p102
      %p104 = scmp.ne.s32.totalorder %s93, %s94
      %p105 = scmp.eq.s32.totalorder %s17, 0
      %p106 = por %p104, %p105
      %p107 = scmp.ne.s32.totalorder %s93, %s94
      %p108 = scmp.eq.s32.totalorder %s18, 1
      %p109 = por %p107, %p108
      %p111 = scmp.ne.s32.totalorder %s94, %s110
      %p112 = scmp.eq.s32.totalorder %s18, 0
      %p113 = por %p111, %p112
      %p114 = scmp.le.s32.totalorder 1, %s12
      %p115 = scmp.lt.s32.totalorder %s12, 3
      %p116 = pnand %p114, %p115
      %p117 = pneg %p116
      // Predicated region
      $region9: #{tpu_custom_call.1} parent=5 // pred_check
        _
      $region10: #{tpu_custom_call.1} parent=5 // pred_check_branch
        %119 = sbr.rel (%p116) target = $region12
      $region11: #{tpu_custom_call.1} parent=5 // pred_region
        %s120 = ssub.s32 %s12, 1
        // Predicated region
        $region13: #{tpu_custom_call.1} parent=11 // pred_check
          %p121 = pneg %p59
        $region14: #{tpu_custom_call.1} parent=11 // pred_check_branch
          %123 = sbr.rel (%p121) target = $region16
        $region15: #{tpu_custom_call.1} parent=11 // pred_region
          _
        $region16: #{tpu_custom_call.1} parent=11 // pred_fallthru
          _
        // Predicated region
        $region17: #{tpu_custom_call.1} parent=11 // pred_check
          %p124 = pneg %p80
        $region18: #{tpu_custom_call.1} parent=11 // pred_check_branch
          %126 = sbr.rel (%p124) target = $region20
        $region19: #{tpu_custom_call.1} parent=11 // pred_region
          _
        $region20: #{tpu_custom_call.1} parent=11 // pred_fallthru
          _
      $region12: #{tpu_custom_call.1} parent=5 // pred_fallthru
        _
      %p127 = scmp.lt.s32.totalorder %s12, 2
      // Predicated region
      $region21: #{tpu_custom_call.1} parent=5 // pred_check
        %p128 = pneg %p127
      $region22: #{tpu_custom_call.1} parent=5 // pred_check_branch
        %130 = sbr.rel (%p128) target = $region24
      $region23: #{tpu_custom_call.1} parent=5 // pred_region
        // Predicated region
        $region25: #{tpu_custom_call.1} parent=23 // pred_check
          %p131 = pneg %p32
        $region26: #{tpu_custom_call.1} parent=23 // pred_check_branch
          %133 = sbr.rel (%p131) target = $region28
        $region27: #{tpu_custom_call.1} parent=23 // pred_region
          %p134 = scmp.lt.s32.totalorder %s12, 1
          %s135 = scalar_select %p134, %s12, 1
          %s136 = smul.addr %s135, 8
          %s137 = smul.addr %s136, 8
          %s138 = scalar_lea.vmem %s0, %s137
        $region28: #{tpu_custom_call.1} parent=23 // pred_fallthru
          _
      $region24: #{tpu_custom_call.1} parent=5 // pred_fallthru
        _
      %p139 = scmp.le.s32.totalorder 1, %s12
      %p140 = scmp.lt.s32.totalorder %s12, 3
      %p141 = pnand %p139, %p140
      %p142 = pneg %p141
      // Predicated region
      $region29: #{tpu_custom_call.1} parent=5 // pred_check
        _
      $region30: #{tpu_custom_call.1} parent=5 // pred_check_branch
        %144 = sbr.rel (%p141) target = $region32
      $region31: #{tpu_custom_call.1} parent=5 // pred_region
        %s145 = ssub.s32 %s12, 1
        %p146 = scmp.lt.s32.totalorder %s17, 1
        %s147 = scalar_select %p146, %s17, 1
        %s148 = smul.addr %s147, 8
        %s149 = smul.addr %s148, 8
        %s150 = scalar_lea.vmem %s0, %s149
        %p151 = pneg %p38
        %p152 = pneg %p35
        %p153 = pneg %p59
        %p154 = pneg %p56
        %p155 = pneg %p80
        %p156 = pneg %p77
        %p157 = pneg %p106
        %p158 = pneg %p103
        %s159 = sand.u32 %s93, 1
        %s160 = scalar_lea.sflag [#allocation5], %s159
        %s161 = sand.u32 %s93, 1
        %s162 = smul.addr %s161, 64
        %s163 = scalar_lea.vmem [#allocation4], %s162
        %p164 = scmp.lt.s32.totalorder %s17, 1
        %s165 = scalar_select %p164, %s17, 1
        %s166 = smul.addr %s165, 8
        %s167 = smul.addr %s166, 8
        %s168 = scalar_lea.vmem %s0, %s167
        %vm169 = vcmask 261120
        %170 = vst.msk [vmem:[#allocation2] sm:$0xff] %vm169, 0.0
        %171 = vst.msk [vmem:[#allocation2 + $0x8] sm:$0xff] %vm169, 0.0
        %vm172 = vcmask 254976
        %173 = vst.msk [vmem:[#allocation2 + $0x10] sm:$0x3] %vm172, 0.0
        %174 = vst.msk [vmem:[#allocation2 + $0x18] sm:$0xff] %vm169, 0.0
        %175 = vst.msk [vmem:[#allocation2 + $0x20] sm:$0xff] %vm169, 0.0
        %176 = vst.msk [vmem:[#allocation2 + $0x28] sm:$0x3] %vm172, 0.0
        %177 = vst.msk [vmem:[#allocation2 + $0x30] sm:$0xff] %vm169, 0.0
        %178 = vst.msk [vmem:[#allocation2 + $0x38] sm:$0xff] %vm169, 0.0
        %179 = vst.msk [vmem:[#allocation2 + $0x40] sm:$0x3] %vm172, 0.0
        %180 = vst.msk [vmem:[#allocation2 + $0x48] sm:$0xff] %vm169, 0.0
        %181 = vst.msk [vmem:[#allocation2 + $0x50] sm:$0xff] %vm169, 0.0
        %182 = vst.msk [vmem:[#allocation2 + $0x58] sm:$0x3] %vm172, 0.0
        %183 = vst.msk [vmem:[#allocation2 + $0x60] sm:$0xff] %vm169, 0.0
        %184 = vst.msk [vmem:[#allocation2 + $0x68] sm:$0xff] %vm169, 0.0
        %185 = vst.msk [vmem:[#allocation2 + $0x70] sm:$0x3] %vm172, 0.0
        %186 = vst.msk [vmem:[#allocation2 + $0x78] sm:$0xff] %vm169, 0.0
        %187 = vst.msk [vmem:[#allocation2 + $0x80] sm:$0xff] %vm169, 0.0
        %188 = vst.msk [vmem:[#allocation2 + $0x88] sm:$0x3] %vm172, 0.0
        %189 = vst.msk [vmem:[#allocation2 + $0x90] sm:$0xff] %vm169, 0.0
        %190 = vst.msk [vmem:[#allocation2 + $0x98] sm:$0xff] %vm169, 0.0
        %191 = vst.msk [vmem:[#allocation2 + $0xa0] sm:$0x3] %vm172, 0.0
        %192 = vst.msk [vmem:[#allocation2 + $0xa8] sm:$0xff] %vm169, 0.0
        %193 = vst.msk [vmem:[#allocation2 + $0xb0] sm:$0xff] %vm169, 0.0
        %194 = vst.msk [vmem:[#allocation2 + $0xb8] sm:$0x3] %vm172, 0.0
        %195 = vst.msk [vmem:[#allocation2 + $0xc0] sm:$0xff] %vm169, 0.0
        %196 = vst.msk [vmem:[#allocation2 + $0xc8] sm:$0xff] %vm169, 0.0
        %197 = vst.msk [vmem:[#allocation2 + $0xd0] sm:$0x3] %vm172, 0.0
        %198 = vst.msk [vmem:[#allocation2 + $0xd8] sm:$0xff] %vm169, 0.0
        %199 = vst.msk [vmem:[#allocation2 + $0xe0] sm:$0xff] %vm169, 0.0
        %200 = vst.msk [vmem:[#allocation2 + $0xe8] sm:$0x3] %vm172, 0.0
        %201 = vst.msk [vmem:[#allocation2 + $0xf0] sm:$0xff] %vm169, 0.0
        %202 = vst.msk [vmem:[#allocation2 + $0xf8] sm:$0xff] %vm169, 0.0
        %203 = vst.msk [vmem:[#allocation2 + $0x100] sm:$0x3] %vm172, 0.0
        %204 = vst.msk [vmem:[#allocation2 + $0x108] sm:$0xff] %vm169, 0.0
        %205 = vst.msk [vmem:[#allocation2 + $0x110] sm:$0xff] %vm169, 0.0
        %206 = vst.msk [vmem:[#allocation2 + $0x118] sm:$0x3] %vm172, 0.0
        %207 = vst.msk [vmem:[#allocation2 + $0x120] sm:$0xff] %vm169, 0.0
        %208 = vst.msk [vmem:[#allocation2 + $0x128] sm:$0xff] %vm169, 0.0
        %209 = vst.msk [vmem:[#allocation2 + $0x130] sm:$0x3] %vm172, 0.0
        %210 = vst.msk [vmem:[#allocation2 + $0x138] sm:$0xff] %vm169, 0.0
        %211 = vst.msk [vmem:[#allocation2 + $0x140] sm:$0xff] %vm169, 0.0
        %212 = vst.msk [vmem:[#allocation2 + $0x148] sm:$0x3] %vm172, 0.0
        %213 = vst.msk [vmem:[#allocation2 + $0x150] sm:$0xff] %vm169, 0.0
        %214 = vst.msk [vmem:[#allocation2 + $0x158] sm:$0xff] %vm169, 0.0
        %215 = vst.msk [vmem:[#allocation2 + $0x160] sm:$0x3] %vm172, 0.0
        %216 = vst.msk [vmem:[#allocation2 + $0x168] sm:$0xff] %vm169, 0.0
        %217 = vst.msk [vmem:[#allocation2 + $0x170] sm:$0xff] %vm169, 0.0
        %218 = vst.msk [vmem:[#allocation2 + $0x178] sm:$0x3] %vm172, 0.0
        %219 = vst.msk [vmem:[#allocation2 + $0x180] sm:$0xff] %vm169, 0.0
        %220 = vst.msk [vmem:[#allocation2 + $0x188] sm:$0xff] %vm169, 0.0
        %221 = vst.msk [vmem:[#allocation2 + $0x190] sm:$0x3] %vm172, 0.0
        %222 = vst.msk [vmem:[#allocation2 + $0x198] sm:$0xff] %vm169, 0.0
        %223 = vst.msk [vmem:[#allocation2 + $0x1a0] sm:$0xff] %vm169, 0.0
        %224 = vst.msk [vmem:[#allocation2 + $0x1a8] sm:$0x3] %vm172, 0.0
        %v225 = vld [vmem:[%s168] sm:$0xff]
        %v226 = vld [vmem:[%s168 + $0x8] sm:$0xff]
        %v227 = vld [vmem:[%s168 + $0x10] sm:$0xff]
        %v228 = vld [vmem:[%s168 + $0x18] sm:$0xff]
        %v229 = vld [vmem:[%s168 + $0x20] sm:$0xff]
        %v230 = vld [vmem:[%s168 + $0x28] sm:$0xff]
        %v231 = vld [vmem:[%s168 + $0x30] sm:$0xff]
        %v232 = vld [vmem:[%s168 + $0x38] sm:$0xff]
        %v233 = vmax.f32 %v225, 0.0
        %v234 = vmax.f32 %v226, 0.0
        %v235 = vmax.f32 %v227, 0.0
        %v236 = vmax.f32 %v228, 0.0
        %v237 = vmax.f32 %v229, 0.0
        %v238 = vmax.f32 %v230, 0.0
        %v239 = vmax.f32 %v231, 0.0
        %v240 = vmax.f32 %v232, 0.0
        %s241 = scalar_lea.vmem [#allocation2], 24
        %242 = vst.msk [vmem:[%s241 + $0x1] sm:$0xff] %vm169, %v233
        %243 = vst.msk [vmem:[%s241 + $0x9] sm:$0xff] %vm169, %v237
        %246 = vrot.lane.b32.xlu0 %v233, 96
        %v247 = vpop.permute.xlu0 %246
        %248 = vrot.lane.b32.xlu0 %v237, 96
        %v249 = vpop.permute.xlu0 %248
        %s252 = scalar_lea.vmem [#allocation2], 48
        %253 = vst.msk [vmem:[%s252 + $0x1] sm:$0xff] %vm169, %v247
        %254 = vst.msk [vmem:[%s252 + $0x9] sm:$0xff] %vm169, %v249
        %255 = vrot.lane.b32.xlu0 %v233, 64
        %v256 = vpop.permute.xlu0 %255
        %257 = vrot.lane.b32.xlu0 %v237, 64
        %v258 = vpop.permute.xlu0 %257
        %s261 = scalar_lea.vmem [#allocation2], 72
        %262 = vst.msk [vmem:[%s261 + $0x1] sm:$0xff] %vm169, %v256
        %263 = vst.msk [vmem:[%s261 + $0x9] sm:$0xff] %vm169, %v258
        %264 = vrot.lane.b32.xlu0 %v233, 32
        %v265 = vpop.permute.xlu0 %264
        %266 = vrot.lane.b32.xlu0 %v237, 32
        %v267 = vpop.permute.xlu0 %266
        %s270 = scalar_lea.vmem [#allocation2], 96
        %271 = vst.msk [vmem:[%s270 + $0x1] sm:$0xff] %vm169, %v265
        %272 = vst.msk [vmem:[%s270 + $0x9] sm:$0xff] %vm169, %v267
        %s273 = scalar_lea.vmem [#allocation2], 120
        %274 = vst.msk [vmem:[%s273 + $0x1] sm:$0xff] %vm169, %v234
        %275 = vst.msk [vmem:[%s273 + $0x9] sm:$0xff] %vm169, %v238
        %278 = vrot.lane.b32.xlu0 %v234, 96
        %v279 = vpop.permute.xlu0 %278
        %280 = vrot.lane.b32.xlu0 %v238, 96
        %v281 = vpop.permute.xlu0 %280
        %s284 = scalar_lea.vmem [#allocation2], 144
        %285 = vst.msk [vmem:[%s284 + $0x1] sm:$0xff] %vm169, %v279
        %286 = vst.msk [vmem:[%s284 + $0x9] sm:$0xff] %vm169, %v281
        %287 = vrot.lane.b32.xlu0 %v234, 64
        %v288 = vpop.permute.xlu0 %287
        %289 = vrot.lane.b32.xlu0 %v238, 64
        %v290 = vpop.permute.xlu0 %289
        %s293 = scalar_lea.vmem [#allocation2], 168
        %294 = vst.msk [vmem:[%s293 + $0x1] sm:$0xff] %vm169, %v288
        %295 = vst.msk [vmem:[%s293 + $0x9] sm:$0xff] %vm169, %v290
        %296 = vrot.lane.b32.xlu0 %v234, 32
        %v297 = vpop.permute.xlu0 %296
        %298 = vrot.lane.b32.xlu0 %v238, 32
        %v299 = vpop.permute.xlu0 %298
        %s302 = scalar_lea.vmem [#allocation2], 192
        %303 = vst.msk [vmem:[%s302 + $0x1] sm:$0xff] %vm169, %v297
        %304 = vst.msk [vmem:[%s302 + $0x9] sm:$0xff] %vm169, %v299
        %s305 = scalar_lea.vmem [#allocation2], 216
        %306 = vst.msk [vmem:[%s305 + $0x1] sm:$0xff] %vm169, %v235
        %307 = vst.msk [vmem:[%s305 + $0x9] sm:$0xff] %vm169, %v239
        %310 = vrot.lane.b32.xlu0 %v235, 96
        %v311 = vpop.permute.xlu0 %310
        %312 = vrot.lane.b32.xlu0 %v239, 96
        %v313 = vpop.permute.xlu0 %312
        %s316 = scalar_lea.vmem [#allocation2], 240
        %317 = vst.msk [vmem:[%s316 + $0x1] sm:$0xff] %vm169, %v311
        %318 = vst.msk [vmem:[%s316 + $0x9] sm:$0xff] %vm169, %v313
        %319 = vrot.lane.b32.xlu0 %v235, 64
        %v320 = vpop.permute.xlu0 %319
        %321 = vrot.lane.b32.xlu0 %v239, 64
        %v322 = vpop.permute.xlu0 %321
        %s325 = scalar_lea.vmem [#allocation2], 264
        %326 = vst.msk [vmem:[%s325 + $0x1] sm:$0xff] %vm169, %v320
        %327 = vst.msk [vmem:[%s325 + $0x9] sm:$0xff] %vm169, %v322
        %328 = vrot.lane.b32.xlu0 %v235, 32
        %v329 = vpop.permute.xlu0 %328
        %330 = vrot.lane.b32.xlu0 %v239, 32
        %v331 = vpop.permute.xlu0 %330
        %s334 = scalar_lea.vmem [#allocation2], 288
        %335 = vst.msk [vmem:[%s334 + $0x1] sm:$0xff] %vm169, %v329
        %336 = vst.msk [vmem:[%s334 + $0x9] sm:$0xff] %vm169, %v331
        %s337 = scalar_lea.vmem [#allocation2], 312
        %338 = vst.msk [vmem:[%s337 + $0x1] sm:$0xff] %vm169, %v236
        %339 = vst.msk [vmem:[%s337 + $0x9] sm:$0xff] %vm169, %v240
        %342 = vrot.lane.b32.xlu0 %v236, 96
        %v343 = vpop.permute.xlu0 %342
        %344 = vrot.lane.b32.xlu0 %v240, 96
        %v345 = vpop.permute.xlu0 %344
        %s348 = scalar_lea.vmem [#allocation2], 336
        %349 = vst.msk [vmem:[%s348 + $0x1] sm:$0xff] %vm169, %v343
        %350 = vst.msk [vmem:[%s348 + $0x9] sm:$0xff] %vm169, %v345
        %351 = vrot.lane.b32.xlu0 %v236, 64
        %v352 = vpop.permute.xlu0 %351
        %353 = vrot.lane.b32.xlu0 %v240, 64
        %v354 = vpop.permute.xlu0 %353
        %s357 = scalar_lea.vmem [#allocation2], 360
        %358 = vst.msk [vmem:[%s357 + $0x1] sm:$0xff] %vm169, %v352
        %359 = vst.msk [vmem:[%s357 + $0x9] sm:$0xff] %vm169, %v354
        %360 = vrot.lane.b32.xlu0 %v236, 32
        %v361 = vpop.permute.xlu0 %360
        %362 = vrot.lane.b32.xlu0 %v240, 32
        %v363 = vpop.permute.xlu0 %362
        %s366 = scalar_lea.vmem [#allocation2], 384
        %367 = vst.msk [vmem:[%s366 + $0x1] sm:$0xff] %vm169, %v361
        %368 = vst.msk [vmem:[%s366 + $0x9] sm:$0xff] %vm169, %v363
        %v369 = vld [vmem:[#allocation2] sm:$0xff]
        %v370 = vld [vmem:[#allocation2 + $0x8] sm:$0xff]
        %v371 = vld [vmem:[#allocation2 + $0x18] sm:$0xff]
        %v372 = vld [vmem:[#allocation2 + $0x20] sm:$0xff]
        %v373 = vld [vmem:[#allocation2 + $0x30] sm:$0xff]
        %v374 = vld [vmem:[#allocation2 + $0x38] sm:$0xff]
        %v375 = vld [vmem:[#allocation2 + $0x48] sm:$0xff]
        %v376 = vld [vmem:[#allocation2 + $0x50] sm:$0xff]
        %v377 = vld [vmem:[#allocation2 + $0x60] sm:$0xff]
        %v378 = vld [vmem:[#allocation2 + $0x68] sm:$0xff]
        %v379 = vld [vmem:[#allocation2 + $0x78] sm:$0xff]
        %v380 = vld [vmem:[#allocation2 + $0x80] sm:$0xff]
        %v381 = vld [vmem:[#allocation2 + $0x90] sm:$0xff]
        %v382 = vld [vmem:[#allocation2 + $0x98] sm:$0xff]
        %v383 = vld [vmem:[#allocation2 + $0xa8] sm:$0xff]
        %v384 = vld [vmem:[#allocation2 + $0xb0] sm:$0xff]
        %v385 = vld [vmem:[#allocation2 + $0xc0] sm:$0xff]
        %v386 = vld [vmem:[#allocation2 + $0xc8] sm:$0xff]
        %v387 = vld [vmem:[#allocation2 + $0xd8] sm:$0xff]
        %v388 = vld [vmem:[#allocation2 + $0xe0] sm:$0xff]
        %v389 = vld [vmem:[#allocation2 + $0xf0] sm:$0xff]
        %v390 = vld [vmem:[#allocation2 + $0xf8] sm:$0xff]
        %v391 = vld [vmem:[#allocation2 + $0x108] sm:$0xff]
        %v392 = vld [vmem:[#allocation2 + $0x110] sm:$0xff]
        %v393 = vld [vmem:[#allocation2 + $0x120] sm:$0xff]
        %v394 = vld [vmem:[#allocation2 + $0x128] sm:$0xff]
        %v395 = vld [vmem:[#allocation2 + $0x138] sm:$0xff]
        %v396 = vld [vmem:[#allocation2 + $0x140] sm:$0xff]
        %v397 = vld [vmem:[#allocation2 + $0x150] sm:$0xff]
        %v398 = vld [vmem:[#allocation2 + $0x158] sm:$0xff]
        %v399 = vld [vmem:[#allocation2 + $0x168] sm:$0xff]
        %v400 = vld [vmem:[#allocation2 + $0x170] sm:$0xff]
        %v401 = vld [vmem:[%s1] sm:$0xff]
        %v402 = vld [vmem:[%s1 + $0x8] sm:$0xff]
        %v403 = vld [vmem:[%s1 + $0x10] sm:$0xff]
        %v404 = vld [vmem:[%s1 + $0x18] sm:$0xff]
        %v405 = vld [vmem:[%s241] sm:$0xff]
        %v406 = vld [vmem:[%s241 + $0x8] sm:$0xff]
        %v407 = vld [vmem:[%s241 + $0x18] sm:$0xff]
        %v408 = vld [vmem:[%s241 + $0x20] sm:$0xff]
        %v409 = vld [vmem:[%s241 + $0x30] sm:$0xff]
        %v410 = vld [vmem:[%s241 + $0x38] sm:$0xff]
        %v411 = vld [vmem:[%s241 + $0x48] sm:$0xff]
        %v412 = vld [vmem:[%s241 + $0x50] sm:$0xff]
        %v413 = vld [vmem:[%s241 + $0x60] sm:$0xff]
        %v414 = vld [vmem:[%s241 + $0x68] sm:$0xff]
        %v415 = vld [vmem:[%s241 + $0x78] sm:$0xff]
        %v416 = vld [vmem:[%s241 + $0x80] sm:$0xff]
        %v417 = vld [vmem:[%s241 + $0x90] sm:$0xff]
        %v418 = vld [vmem:[%s241 + $0x98] sm:$0xff]
        %v419 = vld [vmem:[%s241 + $0xa8] sm:$0xff]
        %v420 = vld [vmem:[%s241 + $0xb0] sm:$0xff]
        %v421 = vld [vmem:[%s241 + $0xc0] sm:$0xff]
        %v422 = vld [vmem:[%s241 + $0xc8] sm:$0xff]
        %v423 = vld [vmem:[%s241 + $0xd8] sm:$0xff]
        %v424 = vld [vmem:[%s241 + $0xe0] sm:$0xff]
        %v425 = vld [vmem:[%s241 + $0xf0] sm:$0xff]
        %v426 = vld [vmem:[%s241 + $0xf8] sm:$0xff]
        %v427 = vld [vmem:[%s241 + $0x108] sm:$0xff]
        %v428 = vld [vmem:[%s241 + $0x110] sm:$0xff]
        %v429 = vld [vmem:[%s241 + $0x120] sm:$0xff]
        %v430 = vld [vmem:[%s241 + $0x128] sm:$0xff]
        %v431 = vld [vmem:[%s241 + $0x138] sm:$0xff]
        %v432 = vld [vmem:[%s241 + $0x140] sm:$0xff]
        %v433 = vld [vmem:[%s241 + $0x150] sm:$0xff]
        %v434 = vld [vmem:[%s241 + $0x158] sm:$0xff]
        %v435 = vld [vmem:[%s241 + $0x168] sm:$0xff]
        %v436 = vld [vmem:[%s241 + $0x170] sm:$0xff]
        %s437 = scalar_lea.vmem %s1, 32
        %v438 = vld [vmem:[%s437] sm:$0xff]
        %v439 = vld [vmem:[%s437 + $0x8] sm:$0xff]
        %v440 = vld [vmem:[%s437 + $0x10] sm:$0xff]
        %v441 = vld [vmem:[%s437 + $0x18] sm:$0xff]
        %v443 = vsel %vm169, %v405, 0
        %v446 = vsel %vm169, %v406, 0
        %v449 = vsel %vm169, %v407, 0
        %v452 = vsel %vm169, %v408, 0
        %v455 = vsel %vm169, %v409, 0
        %v458 = vsel %vm169, %v410, 0
        %v461 = vsel %vm169, %v411, 0
        %v464 = vsel %vm169, %v412, 0
        %v467 = vsel %vm169, %v413, 0
        %v470 = vsel %vm169, %v414, 0
        %v473 = vsel %vm169, %v415, 0
        %v476 = vsel %vm169, %v416, 0
        %v479 = vsel %vm169, %v417, 0
        %v482 = vsel %vm169, %v418, 0
        %v485 = vsel %vm169, %v419, 0
        %v488 = vsel %vm169, %v420, 0
        %v491 = vsel %vm169, %v421, 0
        %v494 = vsel %vm169, %v422, 0
        %v497 = vsel %vm169, %v423, 0
        %v500 = vsel %vm169, %v424, 0
        %v503 = vsel %vm169, %v425, 0
        %v506 = vsel %vm169, %v426, 0
        %v509 = vsel %vm169, %v427, 0
        %v512 = vsel %vm169, %v428, 0
        %v515 = vsel %vm169, %v429, 0
        %v518 = vsel %vm169, %v430, 0
        %v521 = vsel %vm169, %v431, 0
        %v524 = vsel %vm169, %v432, 0
        %v527 = vsel %vm169, %v433, 0
        %v530 = vsel %vm169, %v434, 0
        %v533 = vsel %vm169, %v435, 0
        %v536 = vsel %vm169, %v436, 0
        %538 = vmatprep.subr.mxu0 0.0
        %539 = vmatpush1.msra.mxu0 %v438
        %540 = vmatprep.subr.mxu0 0.0
        %541 = vmatpush1.msra.mxu0 %v439
        %542 = vmatprep.subr.mxu0 0.0
        %543 = vmatpush1.msra.mxu0 %v440
        %544 = vmatprep.subr.mxu0 0.0
        %545 = vmatpush1.msra.mxu0 %v441
        %546 = vmatprep.subr.mxu0 0.0
        %547 = vmatpush1.msra.mxu0 0.0
        %548 = vmatprep.subr.mxu0 0.0
        %549 = vmatpush1.msra.mxu0 0.0
        %550 = vmatprep.subr.mxu0 0.0
        %551 = vmatpush1.msra.mxu0 0.0
        %552 = vmatprep.subr.mxu0 0.0
        %553 = vmatpush1.msra.mxu0 0.0
        %554 = vmatprep.subr.mxu0 0.0
        %555 = vmatpush1.msra.mxu0 0.0
        %556 = vmatprep.subr.mxu0 0.0
        %557 = vmatpush1.msra.mxu0 0.0
        %558 = vmatprep.subr.mxu0 0.0
        %559 = vmatpush1.msra.mxu0 0.0
        %560 = vmatprep.subr.mxu0 0.0
        %561 = vmatpush1.msra.mxu0 0.0
        %562 = vmatprep.subr.mxu0 0.0
        %563 = vmatpush1.msra.mxu0 0.0
        %564 = vmatprep.subr.mxu0 0.0
        %565 = vmatpush1.msra.mxu0 0.0
        %566 = vmatprep.subr.mxu0 0.0
        %567 = vmatpush1.msra.mxu0 0.0
        %568 = vmatprep.subr.mxu0 0.0
        %569 = vmatpush1.msra.mxu0 0.0
        %570 = vmatprep.subr.mxu0 0.0
        %571 = vmatpush1.msra.mxu0 0.0
        %572 = vmatprep.subr.mxu0 0.0
        %573 = vmatpush1.msra.mxu0 0.0
        %574 = vmatprep.subr.mxu0 0.0
        %575 = vmatpush1.msra.mxu0 0.0
        %576 = vmatprep.subr.mxu0 0.0
        %577 = vmatpush1.msra.mxu0 0.0
        %578 = vmatprep.subr.mxu0 0.0
        %579 = vmatpush1.msra.mxu0 0.0
        %580 = vmatprep.subr.mxu0 0.0
        %581 = vmatpush1.msra.mxu0 0.0
        %582 = vmatprep.subr.mxu0 0.0
        %583 = vmatpush1.msra.mxu0 0.0
        %584 = vmatprep.subr.mxu0 0.0
        %585 = vmatpush1.msra.mxu0 0.0
        %586 = vmatprep.subr.mxu0 0.0
        %587 = vmatpush1.msra.mxu0 0.0
        %588 = vmatprep.subr.mxu0 0.0
        %589 = vmatpush1.msra.mxu0 0.0
        %590 = vmatprep.subr.mxu0 0.0
        %591 = vmatpush1.msra.mxu0 0.0
        %592 = vmatprep.subr.mxu0 0.0
        %593 = vmatpush1.msra.mxu0 0.0
        %594 = vmatprep.subr.mxu0 0.0
        %595 = vmatpush1.msra.mxu0 0.0
        %596 = vmatprep.subr.mxu0 0.0
        %597 = vmatpush1.msra.mxu0 0.0
        %598 = vmatprep.subr.mxu0 0.0
        %599 = vmatpush1.msra.mxu0 0.0
        %600 = vmatprep.subr.mxu0 0.0
        %601 = vmatpush1.msra.mxu0 0.0
        %602 = vmatprep.mubr.f32.mxu0 0.0
        %603 = vmatmul.mubr.f32.gmra.mrb[0].mxu0 %v443
        %v604 = vpop.f32.mrb[0].mxu0
        %v605 = vadd.f32 0.0, %v604
        %v606 = vpop.f32.mrb[0].mxu0
        %607 = vmatprep.mubr.f32.mxu0 0.0
        %608 = vmatmul.mubr.f32.gmra.mrb[0].mxu0 %v446
        %v609 = vpop.f32.mrb[0].mxu0
        %v610 = vadd.f32 0.0, %v609
        %v611 = vpop.f32.mrb[0].mxu0
        %612 = vmatprep.mubr.f32.mxu0 0.0
        %613 = vmatmul.mubr.f32.gmra.mrb[0].mxu0 %v449
        %v614 = vpop.f32.mrb[0].mxu0
        %v615 = vadd.f32 0.0, %v614
        %v616 = vpop.f32.mrb[0].mxu0
        %617 = vmatprep.mubr.f32.mxu0 0.0
        %618 = vmatmul.mubr.f32.gmra.mrb[0].mxu0 %v452
        %v619 = vpop.f32.mrb[0].mxu0
        %v620 = vadd.f32 0.0, %v619
        %v621 = vpop.f32.mrb[0].mxu0
        %622 = vmatprep.mubr.f32.mxu0 0.0
        %623 = vmatmul.mubr.f32.gmra.mrb[0].mxu0 %v455
        %v624 = vpop.f32.mrb[0].mxu0
        %v625 = vadd.f32 0.0, %v624
        %v626 = vpop.f32.mrb[0].mxu0
        %627 = vmatprep.mubr.f32.mxu0 0.0
        %628 = vmatmul.mubr.f32.gmra.mrb[0].mxu0 %v458
        %v629 = vpop.f32.mrb[0].mxu0
        %v630 = vadd.f32 0.0, %v629
        %v631 = vpop.f32.mrb[0].mxu0
        %632 = vmatprep.mubr.f32.mxu0 0.0
        %633 = vmatmul.mubr.f32.gmra.mrb[0].mxu0 %v461
        %v634 = vpop.f32.mrb[0].mxu0
        %v635 = vadd.f32 0.0, %v634
        %v636 = vpop.f32.mrb[0].mxu0
        %637 = vmatprep.mubr.f32.mxu0 0.0
        %638 = vmatmul.mubr.f32.gmra.mrb[0].mxu0 %v464
        %v639 = vpop.f32.mrb[0].mxu0
        %v640 = vadd.f32 0.0, %v639
        %v641 = vpop.f32.mrb[0].mxu0
        %642 = vmatprep.mubr.f32.mxu0 0.0
        %643 = vmatmul.mubr.f32.gmra.mrb[0].mxu0 %v467
        %v644 = vpop.f32.mrb[0].mxu0
        %v645 = vadd.f32 0.0, %v644
        %v646 = vpop.f32.mrb[0].mxu0
        %647 = vmatprep.mubr.f32.mxu0 0.0
        %648 = vmatmul.mubr.f32.gmra.mrb[0].mxu0 %v470
        %v649 = vpop.f32.mrb[0].mxu0
        %v650 = vadd.f32 0.0, %v649
        %v651 = vpop.f32.mrb[0].mxu0
        %652 = vmatprep.mubr.f32.mxu0 0.0
        %653 = vmatmul.mubr.f32.gmra.mrb[0].mxu0 %v473
        %v654 = vpop.f32.mrb[0].mxu0
        %v655 = vadd.f32 0.0, %v654
        %v656 = vpop.f32.mrb[0].mxu0
        %657 = vmatprep.mubr.f32.mxu0 0.0
        %658 = vmatmul.mubr.f32.gmra.mrb[0].mxu0 %v476
        %v659 = vpop.f32.mrb[0].mxu0
        %v660 = vadd.f32 0.0, %v659
        %v661 = vpop.f32.mrb[0].mxu0
        %662 = vmatprep.mubr.f32.mxu0 0.0
        %663 = vmatmul.mubr.f32.gmra.mrb[0].mxu0 %v479
        %v664 = vpop.f32.mrb[0].mxu0
        %v665 = vadd.f32 0.0, %v664
        %v666 = vpop.f32.mrb[0].mxu0
        %667 = vmatprep.mubr.f32.mxu0 0.0
        %668 = vmatmul.mubr.f32.gmra.mrb[0].mxu0 %v482
        %v669 = vpop.f32.mrb[0].mxu0
        %v670 = vadd.f32 0.0, %v669
        %v671 = vpop.f32.mrb[0].mxu0
        %672 = vmatprep.mubr.f32.mxu0 0.0
        %673 = vmatmul.mubr.f32.gmra.mrb[0].mxu0 %v485
        %v674 = vpop.f32.mrb[0].mxu0
        %v675 = vadd.f32 0.0, %v674
        %v676 = vpop.f32.mrb[0].mxu0
        %677 = vmatprep.mubr.f32.mxu0 0.0
        %678 = vmatmul.mubr.f32.gmra.mrb[0].mxu0 %v488
        %v679 = vpop.f32.mrb[0].mxu0
        %v680 = vadd.f32 0.0, %v679
        %v681 = vpop.f32.mrb[0].mxu0
        %682 = vmatprep.mubr.f32.mxu0 0.0
        %683 = vmatmul.mubr.f32.gmra.mrb[0].mxu0 %v491
        %v684 = vpop.f32.mrb[0].mxu0
        %v685 = vadd.f32 0.0, %v684
        %v686 = vpop.f32.mrb[0].mxu0
        %687 = vmatprep.mubr.f32.mxu0 0.0
        %688 = vmatmul.mubr.f32.gmra.mrb[0].mxu0 %v494
        %v689 = vpop.f32.mrb[0].mxu0
        %v690 = vadd.f32 0.0, %v689
        %v691 = vpop.f32.mrb[0].mxu0
        %692 = vmatprep.mubr.f32.mxu0 0.0
        %693 = vmatmul.mubr.f32.gmra.mrb[0].mxu0 %v497
        %v694 = vpop.f32.mrb[0].mxu0
        %v695 = vadd.f32 0.0, %v694
        %v696 = vpop.f32.mrb[0].mxu0
        %697 = vmatprep.mubr.f32.mxu0 0.0
        %698 = vmatmul.mubr.f32.gmra.mrb[0].mxu0 %v500
        %v699 = vpop.f32.mrb[0].mxu0
        %v700 = vadd.f32 0.0, %v699
        %v701 = vpop.f32.mrb[0].mxu0
        %702 = vmatprep.mubr.f32.mxu0 0.0
        %703 = vmatmul.mubr.f32.gmra.mrb[0].mxu0 %v503
        %v704 = vpop.f32.mrb[0].mxu0
        %v705 = vadd.f32 0.0, %v704
        %v706 = vpop.f32.mrb[0].mxu0
        %707 = vmatprep.mubr.f32.mxu0 0.0
        %708 = vmatmul.mubr.f32.gmra.mrb[0].mxu0 %v506
        %v709 = vpop.f32.mrb[0].mxu0
        %v710 = vadd.f32 0.0, %v709
        %v711 = vpop.f32.mrb[0].mxu0
        %712 = vmatprep.mubr.f32.mxu0 0.0
        %713 = vmatmul.mubr.f32.gmra.mrb[0].mxu0 %v509
        %v714 = vpop.f32.mrb[0].mxu0
        %v715 = vadd.f32 0.0, %v714
        %v716 = vpop.f32.mrb[0].mxu0
        %717 = vmatprep.mubr.f32.mxu0 0.0
        %718 = vmatmul.mubr.f32.gmra.mrb[0].mxu0 %v512
        %v719 = vpop.f32.mrb[0].mxu0
        %v720 = vadd.f32 0.0, %v719
        %v721 = vpop.f32.mrb[0].mxu0
        %722 = vmatprep.mubr.f32.mxu0 0.0
        %723 = vmatmul.mubr.f32.gmra.mrb[0].mxu0 %v515
        %v724 = vpop.f32.mrb[0].mxu0
        %v725 = vadd.f32 0.0, %v724
        %v726 = vpop.f32.mrb[0].mxu0
        %727 = vmatprep.mubr.f32.mxu0 0.0
        %728 = vmatmul.mubr.f32.gmra.mrb[0].mxu0 %v518
        %v729 = vpop.f32.mrb[0].mxu0
        %v730 = vadd.f32 0.0, %v729
        %v731 = vpop.f32.mrb[0].mxu0
        %732 = vmatprep.mubr.f32.mxu0 0.0
        %733 = vmatmul.mubr.f32.gmra.mrb[0].mxu0 %v521
        %v734 = vpop.f32.mrb[0].mxu0
        %v735 = vadd.f32 0.0, %v734
        %v736 = vpop.f32.mrb[0].mxu0
        %737 = vmatprep.mubr.f32.mxu0 0.0
        %738 = vmatmul.mubr.f32.gmra.mrb[0].mxu0 %v524
        %v739 = vpop.f32.mrb[0].mxu0
        %v740 = vadd.f32 0.0, %v739
        %v741 = vpop.f32.mrb[0].mxu0
        %742 = vmatprep.mubr.f32.mxu0 0.0
        %743 = vmatmul.mubr.f32.gmra.mrb[0].mxu0 %v527
        %v744 = vpop.f32.mrb[0].mxu0
        %v745 = vadd.f32 0.0, %v744
        %v746 = vpop.f32.mrb[0].mxu0
        %747 = vmatprep.mubr.f32.mxu0 0.0
        %748 = vmatmul.mubr.f32.gmra.mrb[0].mxu0 %v530
        %v749 = vpop.f32.mrb[0].mxu0
        %v750 = vadd.f32 0.0, %v749
        %v751 = vpop.f32.mrb[0].mxu0
        %752 = vmatprep.mubr.f32.mxu0 0.0
        %753 = vmatmul.mubr.f32.gmra.mrb[0].mxu0 %v533
        %v754 = vpop.f32.mrb[0].mxu0
        %v755 = vadd.f32 0.0, %v754
        %v756 = vpop.f32.mrb[0].mxu0
        %757 = vmatprep.mubr.f32.mxu0 0.0
        %758 = vmatmul.mubr.f32.gmra.mrb[0].mxu0 %v536
        %v759 = vpop.f32.mrb[0].mxu0
        %v760 = vadd.f32 0.0, %v759
        %v761 = vpop.f32.mrb[0].mxu0
        %762 = vdwg.mxu0
        %v764 = vsel %vm169, %v369, 0
        %v767 = vsel %vm169, %v370, 0
        %v770 = vsel %vm169, %v371, 0
        %v773 = vsel %vm169, %v372, 0
        %v776 = vsel %vm169, %v373, 0
        %v779 = vsel %vm169, %v374, 0
        %v782 = vsel %vm169, %v375, 0
        %v785 = vsel %vm169, %v376, 0
        %v788 = vsel %vm169, %v377, 0
        %v791 = vsel %vm169, %v378, 0
        %v794 = vsel %vm169, %v379, 0
        %v797 = vsel %vm169, %v380, 0
        %v800 = vsel %vm169, %v381, 0
        %v803 = vsel %vm169, %v382, 0
        %v806 = vsel %vm169, %v383, 0
        %v809 = vsel %vm169, %v384, 0
        %v812 = vsel %vm169, %v385, 0
        %v815 = vsel %vm169, %v386, 0
        %v818 = vsel %vm169, %v387, 0
        %v821 = vsel %vm169, %v388, 0
        %v824 = vsel %vm169, %v389, 0
        %v827 = vsel %vm169, %v390, 0
        %v830 = vsel %vm169, %v391, 0
        %v833 = vsel %vm169, %v392, 0
        %v836 = vsel %vm169, %v393, 0
        %v839 = vsel %vm169, %v394, 0
        %v842 = vsel %vm169, %v395, 0
        %v845 = vsel %vm169, %v396, 0
        %v848 = vsel %vm169, %v397, 0
        %v851 = vsel %vm169, %v398, 0
        %v854 = vsel %vm169, %v399, 0
        %v857 = vsel %vm169, %v400, 0
        %859 = vmatprep.subr.mxu0 0.0
        %860 = vmatpush1.msra.mxu0 %v401
        %861 = vmatprep.subr.mxu0 0.0
        %862 = vmatpush1.msra.mxu0 %v402
        %863 = vmatprep.subr.mxu0 0.0
        %864 = vmatpush1.msra.mxu0 %v403
        %865 = vmatprep.subr.mxu0 0.0
        %866 = vmatpush1.msra.mxu0 %v404
        %867 = vmatprep.subr.mxu0 0.0
        %868 = vmatpush1.msra.mxu0 0.0
        %869 = vmatprep.subr.mxu0 0.0
        %870 = vmatpush1.msra.mxu0 0.0
        %871 = vmatprep.subr.mxu0 0.0
        %872 = vmatpush1.msra.mxu0 0.0
        %873 = vmatprep.subr.mxu0 0.0
        %874 = vmatpush1.msra.mxu0 0.0
        %875 = vmatprep.subr.mxu0 0.0
        %876 = vmatpush1.msra.mxu0 0.0
        %877 = vmatprep.subr.mxu0 0.0
        %878 = vmatpush1.msra.mxu0 0.0
        %879 = vmatprep.subr.mxu0 0.0
        %880 = vmatpush1.msra.mxu0 0.0
        %881 = vmatprep.subr.mxu0 0.0
        %882 = vmatpush1.msra.mxu0 0.0
        %883 = vmatprep.subr.mxu0 0.0
        %884 = vmatpush1.msra.mxu0 0.0
        %885 = vmatprep.subr.mxu0 0.0
        %886 = vmatpush1.msra.mxu0 0.0
        %887 = vmatprep.subr.mxu0 0.0
        %888 = vmatpush1.msra.mxu0 0.0
        %889 = vmatprep.subr.mxu0 0.0
        %890 = vmatpush1.msra.mxu0 0.0
        %891 = vmatprep.subr.mxu0 0.0
        %892 = vmatpush1.msra.mxu0 0.0
        %893 = vmatprep.subr.mxu0 0.0
        %894 = vmatpush1.msra.mxu0 0.0
        %895 = vmatprep.subr.mxu0 0.0
        %896 = vmatpush1.msra.mxu0 0.0
        %897 = vmatprep.subr.mxu0 0.0
        %898 = vmatpush1.msra.mxu0 0.0
        %899 = vmatprep.subr.mxu0 0.0
        %900 = vmatpush1.msra.mxu0 0.0
        %901 = vmatprep.subr.mxu0 0.0
        %902 = vmatpush1.msra.mxu0 0.0
        %903 = vmatprep.subr.mxu0 0.0
        %904 = vmatpush1.msra.mxu0 0.0
        %905 = vmatprep.subr.mxu0 0.0
        %906 = vmatpush1.msra.mxu0 0.0
        %907 = vmatprep.subr.mxu0 0.0
        %908 = vmatpush1.msra.mxu0 0.0
        %909 = vmatprep.subr.mxu0 0.0
        %910 = vmatpush1.msra.mxu0 0.0
        %911 = vmatprep.subr.mxu0 0.0
        %912 = vmatpush1.msra.mxu0 0.0
        %913 = vmatprep.subr.mxu0 0.0
        %914 = vmatpush1.msra.mxu0 0.0
        %915 = vmatprep.subr.mxu0 0.0
        %916 = vmatpush1.msra.mxu0 0.0
        %917 = vmatprep.subr.mxu0 0.0
        %918 = vmatpush1.msra.mxu0 0.0
        %919 = vmatprep.subr.mxu0 0.0
        %920 = vmatpush1.msra.mxu0 0.0
        %921 = vmatprep.subr.mxu0 0.0
        %922 = vmatpush1.msra.mxu0 0.0
        %923 = vmatprep.mubr.f32.mxu0 0.0
        %924 = vmatmul.mubr.f32.gmra.mrb[0].mxu0 %v764
        %v925 = vpop.f32.mrb[0].mxu0
        %v926 = vadd.f32 %v605, %v925
        %v927 = vpop.f32.mrb[0].mxu0
        %928 = vmatprep.mubr.f32.mxu0 0.0
        %929 = vmatmul.mubr.f32.gmra.mrb[0].mxu0 %v767
        %v930 = vpop.f32.mrb[0].mxu0
        %v931 = vadd.f32 %v610, %v930
        %v932 = vpop.f32.mrb[0].mxu0
        %933 = vmatprep.mubr.f32.mxu0 0.0
        %934 = vmatmul.mubr.f32.gmra.mrb[0].mxu0 %v770
        %v935 = vpop.f32.mrb[0].mxu0
        %v936 = vadd.f32 %v615, %v935
        %v937 = vpop.f32.mrb[0].mxu0
        %938 = vmatprep.mubr.f32.mxu0 0.0
        %939 = vmatmul.mubr.f32.gmra.mrb[0].mxu0 %v773
        %v940 = vpop.f32.mrb[0].mxu0
        %v941 = vadd.f32 %v620, %v940
        %v942 = vpop.f32.mrb[0].mxu0
        %943 = vmatprep.mubr.f32.mxu0 0.0
        %944 = vmatmul.mubr.f32.gmra.mrb[0].mxu0 %v776
        %v945 = vpop.f32.mrb[0].mxu0
        %v946 = vadd.f32 %v625, %v945
        %v947 = vpop.f32.mrb[0].mxu0
        %948 = vmatprep.mubr.f32.mxu0 0.0
        %949 = vmatmul.mubr.f32.gmra.mrb[0].mxu0 %v779
        %v950 = vpop.f32.mrb[0].mxu0
        %v951 = vadd.f32 %v630, %v950
        %v952 = vpop.f32.mrb[0].mxu0
        %953 = vmatprep.mubr.f32.mxu0 0.0
        %954 = vmatmul.mubr.f32.gmra.mrb[0].mxu0 %v782
        %v955 = vpop.f32.mrb[0].mxu0
        %v956 = vadd.f32 %v635, %v955
        %v957 = vpop.f32.mrb[0].mxu0
        %958 = vmatprep.mubr.f32.mxu0 0.0
        %959 = vmatmul.mubr.f32.gmra.mrb[0].mxu0 %v785
        %v960 = vpop.f32.mrb[0].mxu0
        %v961 = vadd.f32 %v640, %v960
        %v962 = vpop.f32.mrb[0].mxu0
        %963 = vmatprep.mubr.f32.mxu0 0.0
        %964 = vmatmul.mubr.f32.gmra.mrb[0].mxu0 %v788
        %v965 = vpop.f32.mrb[0].mxu0
        %v966 = vadd.f32 %v645, %v965
        %v967 = vpop.f32.mrb[0].mxu0
        %968 = vmatprep.mubr.f32.mxu0 0.0
        %969 = vmatmul.mubr.f32.gmra.mrb[0].mxu0 %v791
        %v970 = vpop.f32.mrb[0].mxu0
        %v971 = vadd.f32 %v650, %v970
        %v972 = vpop.f32.mrb[0].mxu0
        %973 = vmatprep.mubr.f32.mxu0 0.0
        %974 = vmatmul.mubr.f32.gmra.mrb[0].mxu0 %v794
        %v975 = vpop.f32.mrb[0].mxu0
        %v976 = vadd.f32 %v655, %v975
        %v977 = vpop.f32.mrb[0].mxu0
        %978 = vmatprep.mubr.f32.mxu0 0.0
        %979 = vmatmul.mubr.f32.gmra.mrb[0].mxu0 %v797
        %v980 = vpop.f32.mrb[0].mxu0
        %v981 = vadd.f32 %v660, %v980
        %v982 = vpop.f32.mrb[0].mxu0
        %983 = vmatprep.mubr.f32.mxu0 0.0
        %984 = vmatmul.mubr.f32.gmra.mrb[0].mxu0 %v800
        %v985 = vpop.f32.mrb[0].mxu0
        %v986 = vadd.f32 %v665, %v985
        %v987 = vpop.f32.mrb[0].mxu0
        %988 = vmatprep.mubr.f32.mxu0 0.0
        %989 = vmatmul.mubr.f32.gmra.mrb[0].mxu0 %v803
        %v990 = vpop.f32.mrb[0].mxu0
        %v991 = vadd.f32 %v670, %v990
        %v992 = vpop.f32.mrb[0].mxu0
        %993 = vmatprep.mubr.f32.mxu0 0.0
        %994 = vmatmul.mubr.f32.gmra.mrb[0].mxu0 %v806
        %v995 = vpop.f32.mrb[0].mxu0
        %v996 = vadd.f32 %v675, %v995
        %v997 = vpop.f32.mrb[0].mxu0
        %998 = vmatprep.mubr.f32.mxu0 0.0
        %999 = vmatmul.mubr.f32.gmra.mrb[0].mxu0 %v809
        %v1000 = vpop.f32.mrb[0].mxu0
        %v1001 = vadd.f32 %v680, %v1000
        %v1002 = vpop.f32.mrb[0].mxu0
        %1003 = vmatprep.mubr.f32.mxu0 0.0
        %1004 = vmatmul.mubr.f32.gmra.mrb[0].mxu0 %v812
        %v1005 = vpop.f32.mrb[0].mxu0
        %v1006 = vadd.f32 %v685, %v1005
        %v1007 = vpop.f32.mrb[0].mxu0
        %1008 = vmatprep.mubr.f32.mxu0 0.0
        %1009 = vmatmul.mubr.f32.gmra.mrb[0].mxu0 %v815
        %v1010 = vpop.f32.mrb[0].mxu0
        %v1011 = vadd.f32 %v690, %v1010
        %v1012 = vpop.f32.mrb[0].mxu0
        %1013 = vmatprep.mubr.f32.mxu0 0.0
        %1014 = vmatmul.mubr.f32.gmra.mrb[0].mxu0 %v818
        %v1015 = vpop.f32.mrb[0].mxu0
        %v1016 = vadd.f32 %v695, %v1015
        %v1017 = vpop.f32.mrb[0].mxu0
        %1018 = vmatprep.mubr.f32.mxu0 0.0
        %1019 = vmatmul.mubr.f32.gmra.mrb[0].mxu0 %v821
        %v1020 = vpop.f32.mrb[0].mxu0
        %v1021 = vadd.f32 %v700, %v1020
        %v1022 = vpop.f32.mrb[0].mxu0
        %1023 = vmatprep.mubr.f32.mxu0 0.0
        %1024 = vmatmul.mubr.f32.gmra.mrb[0].mxu0 %v824
        %v1025 = vpop.f32.mrb[0].mxu0
        %v1026 = vadd.f32 %v705, %v1025
        %v1027 = vpop.f32.mrb[0].mxu0
        %1028 = vmatprep.mubr.f32.mxu0 0.0
        %1029 = vmatmul.mubr.f32.gmra.mrb[0].mxu0 %v827
        %v1030 = vpop.f32.mrb[0].mxu0
        %v1031 = vadd.f32 %v710, %v1030
        %v1032 = vpop.f32.mrb[0].mxu0
        %1033 = vmatprep.mubr.f32.mxu0 0.0
        %1034 = vmatmul.mubr.f32.gmra.mrb[0].mxu0 %v830
        %v1035 = vpop.f32.mrb[0].mxu0
        %v1036 = vadd.f32 %v715, %v1035
        %v1037 = vpop.f32.mrb[0].mxu0
        %1038 = vmatprep.mubr.f32.mxu0 0.0
        %1039 = vmatmul.mubr.f32.gmra.mrb[0].mxu0 %v833
        %v1040 = vpop.f32.mrb[0].mxu0
        %v1041 = vadd.f32 %v720, %v1040
        %v1042 = vpop.f32.mrb[0].mxu0
        %1043 = vmatprep.mubr.f32.mxu0 0.0
        %1044 = vmatmul.mubr.f32.gmra.mrb[0].mxu0 %v836
        %v1045 = vpop.f32.mrb[0].mxu0
        %v1046 = vadd.f32 %v725, %v1045
        %v1047 = vpop.f32.mrb[0].mxu0
        %1048 = vmatprep.mubr.f32.mxu0 0.0
        %1049 = vmatmul.mubr.f32.gmra.mrb[0].mxu0 %v839
        %v1050 = vpop.f32.mrb[0].mxu0
        %v1051 = vadd.f32 %v730, %v1050
        %v1052 = vpop.f32.mrb[0].mxu0
        %1053 = vmatprep.mubr.f32.mxu0 0.0
        %1054 = vmatmul.mubr.f32.gmra.mrb[0].mxu0 %v842
        %v1055 = vpop.f32.mrb[0].mxu0
        %v1056 = vadd.f32 %v735, %v1055
        %v1057 = vpop.f32.mrb[0].mxu0
        %1058 = vmatprep.mubr.f32.mxu0 0.0
        %1059 = vmatmul.mubr.f32.gmra.mrb[0].mxu0 %v845
        %v1060 = vpop.f32.mrb[0].mxu0
        %v1061 = vadd.f32 %v740, %v1060
        %v1062 = vpop.f32.mrb[0].mxu0
        %1063 = vmatprep.mubr.f32.mxu0 0.0
        %1064 = vmatmul.mubr.f32.gmra.mrb[0].mxu0 %v848
        %v1065 = vpop.f32.mrb[0].mxu0
        %v1066 = vadd.f32 %v745, %v1065
        %v1067 = vpop.f32.mrb[0].mxu0
        %1068 = vmatprep.mubr.f32.mxu0 0.0
        %1069 = vmatmul.mubr.f32.gmra.mrb[0].mxu0 %v851
        %v1070 = vpop.f32.mrb[0].mxu0
        %v1071 = vadd.f32 %v750, %v1070
        %v1072 = vpop.f32.mrb[0].mxu0
        %1073 = vmatprep.mubr.f32.mxu0 0.0
        %1074 = vmatmul.mubr.f32.gmra.mrb[0].mxu0 %v854
        %v1075 = vpop.f32.mrb[0].mxu0
        %v1076 = vadd.f32 %v755, %v1075
        %v1077 = vpop.f32.mrb[0].mxu0
        %1078 = vmatprep.mubr.f32.mxu0 0.0
        %1079 = vmatmul.mubr.f32.gmra.mrb[0].mxu0 %v857
        %v1080 = vpop.f32.mrb[0].mxu0
        %v1081 = vadd.f32 %v760, %v1080
        %v1082 = vpop.f32.mrb[0].mxu0
        %1083 = vdwg.mxu0
        %v1084 = vld [vmem:[%s252] sm:$0xff]
        %v1085 = vld [vmem:[%s252 + $0x8] sm:$0xff]
        %v1086 = vld [vmem:[%s252 + $0x18] sm:$0xff]
        %v1087 = vld [vmem:[%s252 + $0x20] sm:$0xff]
        %v1088 = vld [vmem:[%s252 + $0x30] sm:$0xff]
        %v1089 = vld [vmem:[%s252 + $0x38] sm:$0xff]
        %v1090 = vld [vmem:[%s252 + $0x48] sm:$0xff]
        %v1091 = vld [vmem:[%s252 + $0x50] sm:$0xff]
        %v1092 = vld [vmem:[%s252 + $0x60] sm:$0xff]
        %v1093 = vld [vmem:[%s252 + $0x68] sm:$0xff]
        %v1094 = vld [vmem:[%s252 + $0x78] sm:$0xff]
        %v1095 = vld [vmem:[%s252 + $0x80] sm:$0xff]
        %v1096 = vld [vmem:[%s252 + $0x90] sm:$0xff]
        %v1097 = vld [vmem:[%s252 + $0x98] sm:$0xff]
        %v1098 = vld [vmem:[%s252 + $0xa8] sm:$0xff]
        %v1099 = vld [vmem:[%s252 + $0xb0] sm:$0xff]
        %v1100 = vld [vmem:[%s252 + $0xc0] sm:$0xff]
        %v1101 = vld [vmem:[%s252 + $0xc8] sm:$0xff]
        %v1102 = vld [vmem:[%s252 + $0xd8] sm:$0xff]
        %v1103 = vld [vmem:[%s252 + $0xe0] sm:$0xff]
        %v1104 = vld [vmem:[%s252 + $0xf0] sm:$0xff]
        %v1105 = vld [vmem:[%s252 + $0xf8] sm:$0xff]
        %v1106 = vld [vmem:[%s252 + $0x108] sm:$0xff]
        %v1107 = vld [vmem:[%s252 + $0x110] sm:$0xff]
        %v1108 = vld [vmem:[%s252 + $0x120] sm:$0xff]
        %v1109 = vld [vmem:[%s252 + $0x128] sm:$0xff]
        %v1110 = vld [vmem:[%s252 + $0x138] sm:$0xff]
        %v1111 = vld [vmem:[%s252 + $0x140] sm:$0xff]
        %v1112 = vld [vmem:[%s252 + $0x150] sm:$0xff]
        %v1113 = vld [vmem:[%s252 + $0x158] sm:$0xff]
        %v1114 = vld [vmem:[%s252 + $0x168] sm:$0xff]
        %v1115 = vld [vmem:[%s252 + $0x170] sm:$0xff]
        %s1116 = scalar_lea.vmem %s1, 64
        %v1117 = vld [vmem:[%s1116] sm:$0xff]
        %v1118 = vld [vmem:[%s1116 + $0x8] sm:$0xff]
        %v1119 = vld [vmem:[%s1116 + $0x10] sm:$0xff]
        %v1120 = vld [vmem:[%s1116 + $0x18] sm:$0xff]
        %v1122 = vsel %vm169, %v1084, 0
        %v1125 = vsel %vm169, %v1085, 0
        %v1128 = vsel %vm169, %v1086, 0
        %v1131 = vsel %vm169, %v1087, 0
        %v1134 = vsel %vm169, %v1088, 0
        %v1137 = vsel %vm169, %v1089, 0
        %v1140 = vsel %vm169, %v1090, 0
        %v1143 = vsel %vm169, %v1091, 0
        %v1146 = vsel %vm169, %v1092, 0
        %v1149 = vsel %vm169, %v1093, 0
        %v1152 = vsel %vm169, %v1094, 0
        %v1155 = vsel %vm169, %v1095, 0
        %v1158 = vsel %vm169, %v1096, 0
        %v1161 = vsel %vm169, %v1097, 0
        %v1164 = vsel %vm169, %v1098, 0
        %v1167 = vsel %vm169, %v1099, 0
        %v1170 = vsel %vm169, %v1100, 0
        %v1173 = vsel %vm169, %v1101, 0
        %v1176 = vsel %vm169, %v1102, 0
        %v1179 = vsel %vm169, %v1103, 0
        %v1182 = vsel %vm169, %v1104, 0
        %v1185 = vsel %vm169, %v1105, 0
        %v1188 = vsel %vm169, %v1106, 0
        %v1191 = vsel %vm169, %v1107, 0
        %v1194 = vsel %vm169, %v1108, 0
        %v1197 = vsel %vm169, %v1109, 0
        %v1200 = vsel %vm169, %v1110, 0
        %v1203 = vsel %vm169, %v1111, 0
        %v1206 = vsel %vm169, %v1112, 0
        %v1209 = vsel %vm169, %v1113, 0
        %v1212 = vsel %vm169, %v1114, 0
        %v1215 = vsel %vm169, %v1115, 0
        %1217 = vmatprep.subr.mxu0 0.0
        %1218 = vmatpush1.msra.mxu0 %v1117
        %1219 = vmatprep.subr.mxu0 0.0
        %1220 = vmatpush1.msra.mxu0 %v1118
        %1221 = vmatprep.subr.mxu0 0.0
        %1222 = vmatpush1.msra.mxu0 %v1119
        %1223 = vmatprep.subr.mxu0 0.0
        %1224 = vmatpush1.msra.mxu0 %v1120
        %1225 = vmatprep.subr.mxu0 0.0
        %1226 = vmatpush1.msra.mxu0 0.0
        %1227 = vmatprep.subr.mxu0 0.0
        %1228 = vmatpush1.msra.mxu0 0.0
        %1229 = vmatprep.subr.mxu0 0.0
        %1230 = vmatpush1.msra.mxu0 0.0
        %1231 = vmatprep.subr.mxu0 0.0
        %1232 = vmatpush1.msra.mxu0 0.0
        %1233 = vmatprep.subr.mxu0 0.0
        %1234 = vmatpush1.msra.mxu0 0.0
        %1235 = vmatprep.subr.mxu0 0.0
        %1236 = vmatpush1.msra.mxu0 0.0
        %1237 = vmatprep.subr.mxu0 0.0
        %1238 = vmatpush1.msra.mxu0 0.0
        %1239 = vmatprep.subr.mxu0 0.0
        %1240 = vmatpush1.msra.mxu0 0.0
        %1241 = vmatprep.subr.mxu0 0.0
        %1242 = vmatpush1.msra.mxu0 0.0
        %1243 = vmatprep.subr.mxu0 0.0
        %1244 = vmatpush1.msra.mxu0 0.0
        %1245 = vmatprep.subr.mxu0 0.0
        %1246 = vmatpush1.msra.mxu0 0.0
        %1247 = vmatprep.subr.mxu0 0.0
        %1248 = vmatpush1.msra.mxu0 0.0
        %1249 = vmatprep.subr.mxu0 0.0
        %1250 = vmatpush1.msra.mxu0 0.0
        %1251 = vmatprep.subr.mxu0 0.0
        %1252 = vmatpush1.msra.mxu0 0.0
        %1253 = vmatprep.subr.mxu0 0.0
        %1254 = vmatpush1.msra.mxu0 0.0
        %1255 = vmatprep.subr.mxu0 0.0
        %1256 = vmatpush1.msra.mxu0 0.0
        %1257 = vmatprep.subr.mxu0 0.0
        %1258 = vmatpush1.msra.mxu0 0.0
        %1259 = vmatprep.subr.mxu0 0.0
        %1260 = vmatpush1.msra.mxu0 0.0
        %1261 = vmatprep.subr.mxu0 0.0
        %1262 = vmatpush1.msra.mxu0 0.0
        %1263 = vmatprep.subr.mxu0 0.0
        %1264 = vmatpush1.msra.mxu0 0.0
        %1265 = vmatprep.subr.mxu0 0.0
        %1266 = vmatpush1.msra.mxu0 0.0
        %1267 = vmatprep.subr.mxu0 0.0
        %1268 = vmatpush1.msra.mxu0 0.0
        %1269 = vmatprep.subr.mxu0 0.0
        %1270 = vmatpush1.msra.mxu0 0.0
        %1271 = vmatprep.subr.mxu0 0.0
        %1272 = vmatpush1.msra.mxu0 0.0
        %1273 = vmatprep.subr.mxu0 0.0
        %1274 = vmatpush1.msra.mxu0 0.0
        %1275 = vmatprep.subr.mxu0 0.0
        %1276 = vmatpush1.msra.mxu0 0.0
        %1277 = vmatprep.subr.mxu0 0.0
        %1278 = vmatpush1.msra.mxu0 0.0
        %1279 = vmatprep.subr.mxu0 0.0
        %1280 = vmatpush1.msra.mxu0 0.0
        %1281 = vmatprep.mubr.f32.mxu0 0.0
        %1282 = vmatmul.mubr.f32.gmra.mrb[0].mxu0 %v1122
        %v1283 = vpop.f32.mrb[0].mxu0
        %v1284 = vadd.f32 0.0, %v1283
        %v1285 = vpop.f32.mrb[0].mxu0
        %1286 = vmatprep.mubr.f32.mxu0 0.0
        %1287 = vmatmul.mubr.f32.gmra.mrb[0].mxu0 %v1125
        %v1288 = vpop.f32.mrb[0].mxu0
        %v1289 = vadd.f32 0.0, %v1288
        %v1290 = vpop.f32.mrb[0].mxu0
        %1291 = vmatprep.mubr.f32.mxu0 0.0
        %1292 = vmatmul.mubr.f32.gmra.mrb[0].mxu0 %v1128
        %v1293 = vpop.f32.mrb[0].mxu0
        %v1294 = vadd.f32 0.0, %v1293
        %v1295 = vpop.f32.mrb[0].mxu0
        %1296 = vmatprep.mubr.f32.mxu0 0.0
        %1297 = vmatmul.mubr.f32.gmra.mrb[0].mxu0 %v1131
        %v1298 = vpop.f32.mrb[0].mxu0
        %v1299 = vadd.f32 0.0, %v1298
        %v1300 = vpop.f32.mrb[0].mxu0
        %1301 = vmatprep.mubr.f32.mxu0 0.0
        %1302 = vmatmul.mubr.f32.gmra.mrb[0].mxu0 %v1134
        %v1303 = vpop.f32.mrb[0].mxu0
        %v1304 = vadd.f32 0.0, %v1303
        %v1305 = vpop.f32.mrb[0].mxu0
        %1306 = vmatprep.mubr.f32.mxu0 0.0
        %1307 = vmatmul.mubr.f32.gmra.mrb[0].mxu0 %v1137
        %v1308 = vpop.f32.mrb[0].mxu0
        %v1309 = vadd.f32 0.0, %v1308
        %v1310 = vpop.f32.mrb[0].mxu0
        %1311 = vmatprep.mubr.f32.mxu0 0.0
        %1312 = vmatmul.mubr.f32.gmra.mrb[0].mxu0 %v1140
        %v1313 = vpop.f32.mrb[0].mxu0
        %v1314 = vadd.f32 0.0, %v1313
        %v1315 = vpop.f32.mrb[0].mxu0
        %1316 = vmatprep.mubr.f32.mxu0 0.0
        %1317 = vmatmul.mubr.f32.gmra.mrb[0].mxu0 %v1143
        %v1318 = vpop.f32.mrb[0].mxu0
        %v1319 = vadd.f32 0.0, %v1318
        %v1320 = vpop.f32.mrb[0].mxu0
        %1321 = vmatprep.mubr.f32.mxu0 0.0
        %1322 = vmatmul.mubr.f32.gmra.mrb[0].mxu0 %v1146
        %v1323 = vpop.f32.mrb[0].mxu0
        %v1324 = vadd.f32 0.0, %v1323
        %v1325 = vpop.f32.mrb[0].mxu0
        %1326 = vmatprep.mubr.f32.mxu0 0.0
        %1327 = vmatmul.mubr.f32.gmra.mrb[0].mxu0 %v1149
        %v1328 = vpop.f32.mrb[0].mxu0
        %v1329 = vadd.f32 0.0, %v1328
        %v1330 = vpop.f32.mrb[0].mxu0
        %1331 = vmatprep.mubr.f32.mxu0 0.0
        %1332 = vmatmul.mubr.f32.gmra.mrb[0].mxu0 %v1152
        %v1333 = vpop.f32.mrb[0].mxu0
        %v1334 = vadd.f32 0.0, %v1333
        %v1335 = vpop.f32.mrb[0].mxu0
        %1336 = vmatprep.mubr.f32.mxu0 0.0
        %1337 = vmatmul.mubr.f32.gmra.mrb[0].mxu0 %v1155
        %v1338 = vpop.f32.mrb[0].mxu0
        %v1339 = vadd.f32 0.0, %v1338
        %v1340 = vpop.f32.mrb[0].mxu0
        %1341 = vmatprep.mubr.f32.mxu0 0.0
        %1342 = vmatmul.mubr.f32.gmra.mrb[0].mxu0 %v1158
        %v1343 = vpop.f32.mrb[0].mxu0
        %v1344 = vadd.f32 0.0, %v1343
        %v1345 = vpop.f32.mrb[0].mxu0
        %1346 = vmatprep.mubr.f32.mxu0 0.0
        %1347 = vmatmul.mubr.f32.gmra.mrb[0].mxu0 %v1161
        %v1348 = vpop.f32.mrb[0].mxu0
        %v1349 = vadd.f32 0.0, %v1348
        %v1350 = vpop.f32.mrb[0].mxu0
        %1351 = vmatprep.mubr.f32.mxu0 0.0
        %1352 = vmatmul.mubr.f32.gmra.mrb[0].mxu0 %v1164
        %v1353 = vpop.f32.mrb[0].mxu0
        %v1354 = vadd.f32 0.0, %v1353
        %v1355 = vpop.f32.mrb[0].mxu0
        %1356 = vmatprep.mubr.f32.mxu0 0.0
        %1357 = vmatmul.mubr.f32.gmra.mrb[0].mxu0 %v1167
        %v1358 = vpop.f32.mrb[0].mxu0
        %v1359 = vadd.f32 0.0, %v1358
        %v1360 = vpop.f32.mrb[0].mxu0
        %1361 = vmatprep.mubr.f32.mxu0 0.0
        %1362 = vmatmul.mubr.f32.gmra.mrb[0].mxu0 %v1170
        %v1363 = vpop.f32.mrb[0].mxu0
        %v1364 = vadd.f32 0.0, %v1363
        %v1365 = vpop.f32.mrb[0].mxu0
        %1366 = vmatprep.mubr.f32.mxu0 0.0
        %1367 = vmatmul.mubr.f32.gmra.mrb[0].mxu0 %v1173
        %v1368 = vpop.f32.mrb[0].mxu0
        %v1369 = vadd.f32 0.0, %v1368
        %v1370 = vpop.f32.mrb[0].mxu0
        %1371 = vmatprep.mubr.f32.mxu0 0.0
        %1372 = vmatmul.mubr.f32.gmra.mrb[0].mxu0 %v1176
        %v1373 = vpop.f32.mrb[0].mxu0
        %v1374 = vadd.f32 0.0, %v1373
        %v1375 = vpop.f32.mrb[0].mxu0
        %1376 = vmatprep.mubr.f32.mxu0 0.0
        %1377 = vmatmul.mubr.f32.gmra.mrb[0].mxu0 %v1179
        %v1378 = vpop.f32.mrb[0].mxu0
        %v1379 = vadd.f32 0.0, %v1378
        %v1380 = vpop.f32.mrb[0].mxu0
        %1381 = vmatprep.mubr.f32.mxu0 0.0
        %1382 = vmatmul.mubr.f32.gmra.mrb[0].mxu0 %v1182
        %v1383 = vpop.f32.mrb[0].mxu0
        %v1384 = vadd.f32 0.0, %v1383
        %v1385 = vpop.f32.mrb[0].mxu0
        %1386 = vmatprep.mubr.f32.mxu0 0.0
        %1387 = vmatmul.mubr.f32.gmra.mrb[0].mxu0 %v1185
        %v1388 = vpop.f32.mrb[0].mxu0
        %v1389 = vadd.f32 0.0, %v1388
        %v1390 = vpop.f32.mrb[0].mxu0
        %1391 = vmatprep.mubr.f32.mxu0 0.0
        %1392 = vmatmul.mubr.f32.gmra.mrb[0].mxu0 %v1188
        %v1393 = vpop.f32.mrb[0].mxu0
        %v1394 = vadd.f32 0.0, %v1393
        %v1395 = vpop.f32.mrb[0].mxu0
        %1396 = vmatprep.mubr.f32.mxu0 0.0
        %1397 = vmatmul.mubr.f32.gmra.mrb[0].mxu0 %v1191
        %v1398 = vpop.f32.mrb[0].mxu0
        %v1399 = vadd.f32 0.0, %v1398
        %v1400 = vpop.f32.mrb[0].mxu0
        %1401 = vmatprep.mubr.f32.mxu0 0.0
        %1402 = vmatmul.mubr.f32.gmra.mrb[0].mxu0 %v1194
        %v1403 = vpop.f32.mrb[0].mxu0
        %v1404 = vadd.f32 0.0, %v1403
        %v1405 = vpop.f32.mrb[0].mxu0
        %1406 = vmatprep.mubr.f32.mxu0 0.0
        %1407 = vmatmul.mubr.f32.gmra.mrb[0].mxu0 %v1197
        %v1408 = vpop.f32.mrb[0].mxu0
        %v1409 = vadd.f32 0.0, %v1408
        %v1410 = vpop.f32.mrb[0].mxu0
        %1411 = vmatprep.mubr.f32.mxu0 0.0
        %1412 = vmatmul.mubr.f32.gmra.mrb[0].mxu0 %v1200
        %v1413 = vpop.f32.mrb[0].mxu0
        %v1414 = vadd.f32 0.0, %v1413
        %v1415 = vpop.f32.mrb[0].mxu0
        %1416 = vmatprep.mubr.f32.mxu0 0.0
        %1417 = vmatmul.mubr.f32.gmra.mrb[0].mxu0 %v1203
        %v1418 = vpop.f32.mrb[0].mxu0
        %v1419 = vadd.f32 0.0, %v1418
        %v1420 = vpop.f32.mrb[0].mxu0
        %1421 = vmatprep.mubr.f32.mxu0 0.0
        %1422 = vmatmul.mubr.f32.gmra.mrb[0].mxu0 %v1206
        %v1423 = vpop.f32.mrb[0].mxu0
        %v1424 = vadd.f32 0.0, %v1423
        %v1425 = vpop.f32.mrb[0].mxu0
        %1426 = vmatprep.mubr.f32.mxu0 0.0
        %1427 = vmatmul.mubr.f32.gmra.mrb[0].mxu0 %v1209
        %v1428 = vpop.f32.mrb[0].mxu0
        %v1429 = vadd.f32 0.0, %v1428
        %v1430 = vpop.f32.mrb[0].mxu0
        %1431 = vmatprep.mubr.f32.mxu0 0.0
        %1432 = vmatmul.mubr.f32.gmra.mrb[0].mxu0 %v1212
        %v1433 = vpop.f32.mrb[0].mxu0
        %v1434 = vadd.f32 0.0, %v1433
        %v1435 = vpop.f32.mrb[0].mxu0
        %1436 = vmatprep.mubr.f32.mxu0 0.0
        %1437 = vmatmul.mubr.f32.gmra.mrb[0].mxu0 %v1215
        %v1438 = vpop.f32.mrb[0].mxu0
        %v1439 = vadd.f32 0.0, %v1438
        %v1440 = vpop.f32.mrb[0].mxu0
        %1441 = vdwg.mxu0
        %v1442 = vadd.f32 %v926, %v1284
        %v1443 = vadd.f32 %v931, %v1289
        %v1444 = vadd.f32 %v936, %v1294
        %v1445 = vadd.f32 %v941, %v1299
        %v1446 = vadd.f32 %v946, %v1304
        %v1447 = vadd.f32 %v951, %v1309
        %v1448 = vadd.f32 %v956, %v1314
        %v1449 = vadd.f32 %v961, %v1319
        %v1450 = vadd.f32 %v966, %v1324
        %v1451 = vadd.f32 %v971, %v1329
        %v1452 = vadd.f32 %v976, %v1334
        %v1453 = vadd.f32 %v981, %v1339
        %v1454 = vadd.f32 %v986, %v1344
        %v1455 = vadd.f32 %v991, %v1349
        %v1456 = vadd.f32 %v996, %v1354
        %v1457 = vadd.f32 %v1001, %v1359
        %v1458 = vadd.f32 %v1006, %v1364
        %v1459 = vadd.f32 %v1011, %v1369
        %v1460 = vadd.f32 %v1016, %v1374
        %v1461 = vadd.f32 %v1021, %v1379
        %v1462 = vadd.f32 %v1026, %v1384
        %v1463 = vadd.f32 %v1031, %v1389
        %v1464 = vadd.f32 %v1036, %v1394
        %v1465 = vadd.f32 %v1041, %v1399
        %v1466 = vadd.f32 %v1046, %v1404
        %v1467 = vadd.f32 %v1051, %v1409
        %v1468 = vadd.f32 %v1056, %v1414
        %v1469 = vadd.f32 %v1061, %v1419
        %v1470 = vadd.f32 %v1066, %v1424
        %v1471 = vadd.f32 %v1071, %v1429
        %v1472 = vadd.f32 %v1076, %v1434
        %v1473 = vadd.f32 %v1081, %v1439
        %v1474 = vld [vmem:[#allocation2 + $0x1] sm:$0xff]
        %v1475 = vld [vmem:[#allocation2 + $0x9] sm:$0xff]
        %v1476 = vld [vmem:[#allocation2 + $0x19] sm:$0xff]
        %v1477 = vld [vmem:[#allocation2 + $0x21] sm:$0xff]
        %v1478 = vld [vmem:[#allocation2 + $0x31] sm:$0xff]
        %v1479 = vld [vmem:[#allocation2 + $0x39] sm:$0xff]
        %v1480 = vld [vmem:[#allocation2 + $0x49] sm:$0xff]
        %v1481 = vld [vmem:[#allocation2 + $0x51] sm:$0xff]
        %v1482 = vld [vmem:[#allocation2 + $0x61] sm:$0xff]
        %v1483 = vld [vmem:[#allocation2 + $0x69] sm:$0xff]
        %v1484 = vld [vmem:[#allocation2 + $0x79] sm:$0xff]
        %v1485 = vld [vmem:[#allocation2 + $0x81] sm:$0xff]
        %v1486 = vld [vmem:[#allocation2 + $0x91] sm:$0xff]
        %v1487 = vld [vmem:[#allocation2 + $0x99] sm:$0xff]
        %v1488 = vld [vmem:[#allocation2 + $0xa9] sm:$0xff]
        %v1489 = vld [vmem:[#allocation2 + $0xb1] sm:$0xff]
        %v1490 = vld [vmem:[#allocation2 + $0xc1] sm:$0xff]
        %v1491 = vld [vmem:[#allocation2 + $0xc9] sm:$0xff]
        %v1492 = vld [vmem:[#allocation2 + $0xd9] sm:$0xff]
        %v1493 = vld [vmem:[#allocation2 + $0xe1] sm:$0xff]
        %v1494 = vld [vmem:[#allocation2 + $0xf1] sm:$0xff]
        %v1495 = vld [vmem:[#allocation2 + $0xf9] sm:$0xff]
        %v1496 = vld [vmem:[#allocation2 + $0x109] sm:$0xff]
        %v1497 = vld [vmem:[#allocation2 + $0x111] sm:$0xff]
        %v1498 = vld [vmem:[#allocation2 + $0x121] sm:$0xff]
        %v1499 = vld [vmem:[#allocation2 + $0x129] sm:$0xff]
        %v1500 = vld [vmem:[#allocation2 + $0x139] sm:$0xff]
        %v1501 = vld [vmem:[#allocation2 + $0x141] sm:$0xff]
        %v1502 = vld [vmem:[#allocation2 + $0x151] sm:$0xff]
        %v1503 = vld [vmem:[#allocation2 + $0x159] sm:$0xff]
        %v1504 = vld [vmem:[#allocation2 + $0x169] sm:$0xff]
        %v1505 = vld [vmem:[#allocation2 + $0x171] sm:$0xff]
        %s1506 = scalar_lea.vmem %s1, 96
        %v1507 = vld [vmem:[%s1506] sm:$0xff]
        %v1508 = vld [vmem:[%s1506 + $0x8] sm:$0xff]
        %v1509 = vld [vmem:[%s1506 + $0x10] sm:$0xff]
        %v1510 = vld [vmem:[%s1506 + $0x18] sm:$0xff]
        %v1512 = vsel %vm169, %v1474, 0
        %v1515 = vsel %vm169, %v1475, 0
        %v1518 = vsel %vm169, %v1476, 0
        %v1521 = vsel %vm169, %v1477, 0
        %v1524 = vsel %vm169, %v1478, 0
        %v1527 = vsel %vm169, %v1479, 0
        %v1530 = vsel %vm169, %v1480, 0
        %v1533 = vsel %vm169, %v1481, 0
        %v1536 = vsel %vm169, %v1482, 0
        %v1539 = vsel %vm169, %v1483, 0
        %v1542 = vsel %vm169, %v1484, 0
        %v1545 = vsel %vm169, %v1485, 0
        %v1548 = vsel %vm169, %v1486, 0
        %v1551 = vsel %vm169, %v1487, 0
        %v1554 = vsel %vm169, %v1488, 0
        %v1557 = vsel %vm169, %v1489, 0
        %v1560 = vsel %vm169, %v1490, 0
        %v1563 = vsel %vm169, %v1491, 0
        %v1566 = vsel %vm169, %v1492, 0
        %v1569 = vsel %vm169, %v1493, 0
        %v1572 = vsel %vm169, %v1494, 0
        %v1575 = vsel %vm169, %v1495, 0
        %v1578 = vsel %vm169, %v1496, 0
        %v1581 = vsel %vm169, %v1497, 0
        %v1584 = vsel %vm169, %v1498, 0
        %v1587 = vsel %vm169, %v1499, 0
        %v1590 = vsel %vm169, %v1500, 0
        %v1593 = vsel %vm169, %v1501, 0
        %v1596 = vsel %vm169, %v1502, 0
        %v1599 = vsel %vm169, %v1503, 0
        %v1602 = vsel %vm169, %v1504, 0
        %v1605 = vsel %vm169, %v1505, 0
        %1607 = vmatprep.subr.mxu0 0.0
        %1608 = vmatpush1.msra.mxu0 %v1507
        %1609 = vmatprep.subr.mxu0 0.0
        %1610 = vmatpush1.msra.mxu0 %v1508
        %1611 = vmatprep.subr.mxu0 0.0
        %1612 = vmatpush1.msra.mxu0 %v1509
        %1613 = vmatprep.subr.mxu0 0.0
        %1614 = vmatpush1.msra.mxu0 %v1510
        %1615 = vmatprep.subr.mxu0 0.0
        %1616 = vmatpush1.msra.mxu0 0.0
        %1617 = vmatprep.subr.mxu0 0.0
        %1618 = vmatpush1.msra.mxu0 0.0
        %1619 = vmatprep.subr.mxu0 0.0
        %1620 = vmatpush1.msra.mxu0 0.0
        %1621 = vmatprep.subr.mxu0 0.0
        %1622 = vmatpush1.msra.mxu0 0.0
        %1623 = vmatprep.subr.mxu0 0.0
        %1624 = vmatpush1.msra.mxu0 0.0
        %1625 = vmatprep.subr.mxu0 0.0
        %1626 = vmatpush1.msra.mxu0 0.0
        %1627 = vmatprep.subr.mxu0 0.0
        %1628 = vmatpush1.msra.mxu0 0.0
        %1629 = vmatprep.subr.mxu0 0.0
        %1630 = vmatpush1.msra.mxu0 0.0
        %1631 = vmatprep.subr.mxu0 0.0
        %1632 = vmatpush1.msra.mxu0 0.0
        %1633 = vmatprep.subr.mxu0 0.0
        %1634 = vmatpush1.msra.mxu0 0.0
        %1635 = vmatprep.subr.mxu0 0.0
        %1636 = vmatpush1.msra.mxu0 0.0
        %1637 = vmatprep.subr.mxu0 0.0
        %1638 = vmatpush1.msra.mxu0 0.0
        %1639 = vmatprep.subr.mxu0 0.0
        %1640 = vmatpush1.msra.mxu0 0.0
        %1641 = vmatprep.subr.mxu0 0.0
        %1642 = vmatpush1.msra.mxu0 0.0
        %1643 = vmatprep.subr.mxu0 0.0
        %1644 = vmatpush1.msra.mxu0 0.0
        %1645 = vmatprep.subr.mxu0 0.0
        %1646 = vmatpush1.msra.mxu0 0.0
        %1647 = vmatprep.subr.mxu0 0.0
        %1648 = vmatpush1.msra.mxu0 0.0
        %1649 = vmatprep.subr.mxu0 0.0
        %1650 = vmatpush1.msra.mxu0 0.0
        %1651 = vmatprep.subr.mxu0 0.0
        %1652 = vmatpush1.msra.mxu0 0.0
        %1653 = vmatprep.subr.mxu0 0.0
        %1654 = vmatpush1.msra.mxu0 0.0
        %1655 = vmatprep.subr.mxu0 0.0
        %1656 = vmatpush1.msra.mxu0 0.0
        %1657 = vmatprep.subr.mxu0 0.0
        %1658 = vmatpush1.msra.mxu0 0.0
        %1659 = vmatprep.subr.mxu0 0.0
        %1660 = vmatpush1.msra.mxu0 0.0
        %1661 = vmatprep.subr.mxu0 0.0
        %1662 = vmatpush1.msra.mxu0 0.0
        %1663 = vmatprep.subr.mxu0 0.0
        %1664 = vmatpush1.msra.mxu0 0.0
        %1665 = vmatprep.subr.mxu0 0.0
        %1666 = vmatpush1.msra.mxu0 0.0
        %1667 = vmatprep.subr.mxu0 0.0
        %1668 = vmatpush1.msra.mxu0 0.0
        %1669 = vmatprep.subr.mxu0 0.0
        %1670 = vmatpush1.msra.mxu0 0.0
        %1671 = vmatprep.mubr.f32.mxu0 0.0
        %1672 = vmatmul.mubr.f32.gmra.mrb[0].mxu0 %v1512
        %v1673 = vpop.f32.mrb[0].mxu0
        %v1674 = vadd.f32 0.0, %v1673
        %v1675 = vpop.f32.mrb[0].mxu0
        %1676 = vmatprep.mubr.f32.mxu0 0.0
        %1677 = vmatmul.mubr.f32.gmra.mrb[0].mxu0 %v1515
        %v1678 = vpop.f32.mrb[0].mxu0
        %v1679 = vadd.f32 0.0, %v1678
        %v1680 = vpop.f32.mrb[0].mxu0
        %1681 = vmatprep.mubr.f32.mxu0 0.0
        %1682 = vmatmul.mubr.f32.gmra.mrb[0].mxu0 %v1518
        %v1683 = vpop.f32.mrb[0].mxu0
        %v1684 = vadd.f32 0.0, %v1683
        %v1685 = vpop.f32.mrb[0].mxu0
        %1686 = vmatprep.mubr.f32.mxu0 0.0
        %1687 = vmatmul.mubr.f32.gmra.mrb[0].mxu0 %v1521
        %v1688 = vpop.f32.mrb[0].mxu0
        %v1689 = vadd.f32 0.0, %v1688
        %v1690 = vpop.f32.mrb[0].mxu0
        %1691 = vmatprep.mubr.f32.mxu0 0.0
        %1692 = vmatmul.mubr.f32.gmra.mrb[0].mxu0 %v1524
        %v1693 = vpop.f32.mrb[0].mxu0
        %v1694 = vadd.f32 0.0, %v1693
        %v1695 = vpop.f32.mrb[0].mxu0
        %1696 = vmatprep.mubr.f32.mxu0 0.0
        %1697 = vmatmul.mubr.f32.gmra.mrb[0].mxu0 %v1527
        %v1698 = vpop.f32.mrb[0].mxu0
        %v1699 = vadd.f32 0.0, %v1698
        %v1700 = vpop.f32.mrb[0].mxu0
        %1701 = vmatprep.mubr.f32.mxu0 0.0
        %1702 = vmatmul.mubr.f32.gmra.mrb[0].mxu0 %v1530
        %v1703 = vpop.f32.mrb[0].mxu0
        %v1704 = vadd.f32 0.0, %v1703
        %v1705 = vpop.f32.mrb[0].mxu0
        %1706 = vmatprep.mubr.f32.mxu0 0.0
        %1707 = vmatmul.mubr.f32.gmra.mrb[0].mxu0 %v1533
        %v1708 = vpop.f32.mrb[0].mxu0
        %v1709 = vadd.f32 0.0, %v1708
        %v1710 = vpop.f32.mrb[0].mxu0
        %1711 = vmatprep.mubr.f32.mxu0 0.0
        %1712 = vmatmul.mubr.f32.gmra.mrb[0].mxu0 %v1536
        %v1713 = vpop.f32.mrb[0].mxu0
        %v1714 = vadd.f32 0.0, %v1713
        %v1715 = vpop.f32.mrb[0].mxu0
        %1716 = vmatprep.mubr.f32.mxu0 0.0
        %1717 = vmatmul.mubr.f32.gmra.mrb[0].mxu0 %v1539
        %v1718 = vpop.f32.mrb[0].mxu0
        %v1719 = vadd.f32 0.0, %v1718
        %v1720 = vpop.f32.mrb[0].mxu0
        %1721 = vmatprep.mubr.f32.mxu0 0.0
        %1722 = vmatmul.mubr.f32.gmra.mrb[0].mxu0 %v1542
        %v1723 = vpop.f32.mrb[0].mxu0
        %v1724 = vadd.f32 0.0, %v1723
        %v1725 = vpop.f32.mrb[0].mxu0
        %1726 = vmatprep.mubr.f32.mxu0 0.0
        %1727 = vmatmul.mubr.f32.gmra.mrb[0].mxu0 %v1545
        %v1728 = vpop.f32.mrb[0].mxu0
        %v1729 = vadd.f32 0.0, %v1728
        %v1730 = vpop.f32.mrb[0].mxu0
        %1731 = vmatprep.mubr.f32.mxu0 0.0
        %1732 = vmatmul.mubr.f32.gmra.mrb[0].mxu0 %v1548
        %v1733 = vpop.f32.mrb[0].mxu0
        %v1734 = vadd.f32 0.0, %v1733
        %v1735 = vpop.f32.mrb[0].mxu0
        %1736 = vmatprep.mubr.f32.mxu0 0.0
        %1737 = vmatmul.mubr.f32.gmra.mrb[0].mxu0 %v1551
        %v1738 = vpop.f32.mrb[0].mxu0
        %v1739 = vadd.f32 0.0, %v1738
        %v1740 = vpop.f32.mrb[0].mxu0
        %1741 = vmatprep.mubr.f32.mxu0 0.0
        %1742 = vmatmul.mubr.f32.gmra.mrb[0].mxu0 %v1554
        %v1743 = vpop.f32.mrb[0].mxu0
        %v1744 = vadd.f32 0.0, %v1743
        %v1745 = vpop.f32.mrb[0].mxu0
        %1746 = vmatprep.mubr.f32.mxu0 0.0
        %1747 = vmatmul.mubr.f32.gmra.mrb[0].mxu0 %v1557
        %v1748 = vpop.f32.mrb[0].mxu0
        %v1749 = vadd.f32 0.0, %v1748
        %v1750 = vpop.f32.mrb[0].mxu0
        %1751 = vmatprep.mubr.f32.mxu0 0.0
        %1752 = vmatmul.mubr.f32.gmra.mrb[0].mxu0 %v1560
        %v1753 = vpop.f32.mrb[0].mxu0
        %v1754 = vadd.f32 0.0, %v1753
        %v1755 = vpop.f32.mrb[0].mxu0
        %1756 = vmatprep.mubr.f32.mxu0 0.0
        %1757 = vmatmul.mubr.f32.gmra.mrb[0].mxu0 %v1563
        %v1758 = vpop.f32.mrb[0].mxu0
        %v1759 = vadd.f32 0.0, %v1758
        %v1760 = vpop.f32.mrb[0].mxu0
        %1761 = vmatprep.mubr.f32.mxu0 0.0
        %1762 = vmatmul.mubr.f32.gmra.mrb[0].mxu0 %v1566
        %v1763 = vpop.f32.mrb[0].mxu0
        %v1764 = vadd.f32 0.0, %v1763
        %v1765 = vpop.f32.mrb[0].mxu0
        %1766 = vmatprep.mubr.f32.mxu0 0.0
        %1767 = vmatmul.mubr.f32.gmra.mrb[0].mxu0 %v1569
        %v1768 = vpop.f32.mrb[0].mxu0
        %v1769 = vadd.f32 0.0, %v1768
        %v1770 = vpop.f32.mrb[0].mxu0
        %1771 = vmatprep.mubr.f32.mxu0 0.0
        %1772 = vmatmul.mubr.f32.gmra.mrb[0].mxu0 %v1572
        %v1773 = vpop.f32.mrb[0].mxu0
        %v1774 = vadd.f32 0.0, %v1773
        %v1775 = vpop.f32.mrb[0].mxu0
        %1776 = vmatprep.mubr.f32.mxu0 0.0
        %1777 = vmatmul.mubr.f32.gmra.mrb[0].mxu0 %v1575
        %v1778 = vpop.f32.mrb[0].mxu0
        %v1779 = vadd.f32 0.0, %v1778
        %v1780 = vpop.f32.mrb[0].mxu0
        %1781 = vmatprep.mubr.f32.mxu0 0.0
        %1782 = vmatmul.mubr.f32.gmra.mrb[0].mxu0 %v1578
        %v1783 = vpop.f32.mrb[0].mxu0
        %v1784 = vadd.f32 0.0, %v1783
        %v1785 = vpop.f32.mrb[0].mxu0
        %1786 = vmatprep.mubr.f32.mxu0 0.0
        %1787 = vmatmul.mubr.f32.gmra.mrb[0].mxu0 %v1581
        %v1788 = vpop.f32.mrb[0].mxu0
        %v1789 = vadd.f32 0.0, %v1788
        %v1790 = vpop.f32.mrb[0].mxu0
        %1791 = vmatprep.mubr.f32.mxu0 0.0
        %1792 = vmatmul.mubr.f32.gmra.mrb[0].mxu0 %v1584
        %v1793 = vpop.f32.mrb[0].mxu0
        %v1794 = vadd.f32 0.0, %v1793
        %v1795 = vpop.f32.mrb[0].mxu0
        %1796 = vmatprep.mubr.f32.mxu0 0.0
        %1797 = vmatmul.mubr.f32.gmra.mrb[0].mxu0 %v1587
        %v1798 = vpop.f32.mrb[0].mxu0
        %v1799 = vadd.f32 0.0, %v1798
        %v1800 = vpop.f32.mrb[0].mxu0
        %1801 = vmatprep.mubr.f32.mxu0 0.0
        %1802 = vmatmul.mubr.f32.gmra.mrb[0].mxu0 %v1590
        %v1803 = vpop.f32.mrb[0].mxu0
        %v1804 = vadd.f32 0.0, %v1803
        %v1805 = vpop.f32.mrb[0].mxu0
        %1806 = vmatprep.mubr.f32.mxu0 0.0
        %1807 = vmatmul.mubr.f32.gmra.mrb[0].mxu0 %v1593
        %v1808 = vpop.f32.mrb[0].mxu0
        %v1809 = vadd.f32 0.0, %v1808
        %v1810 = vpop.f32.mrb[0].mxu0
        %1811 = vmatprep.mubr.f32.mxu0 0.0
        %1812 = vmatmul.mubr.f32.gmra.mrb[0].mxu0 %v1596
        %v1813 = vpop.f32.mrb[0].mxu0
        %v1814 = vadd.f32 0.0, %v1813
        %v1815 = vpop.f32.mrb[0].mxu0
        %1816 = vmatprep.mubr.f32.mxu0 0.0
        %1817 = vmatmul.mubr.f32.gmra.mrb[0].mxu0 %v1599
        %v1818 = vpop.f32.mrb[0].mxu0
        %v1819 = vadd.f32 0.0, %v1818
        %v1820 = vpop.f32.mrb[0].mxu0
        %1821 = vmatprep.mubr.f32.mxu0 0.0
        %1822 = vmatmul.mubr.f32.gmra.mrb[0].mxu0 %v1602
        %v1823 = vpop.f32.mrb[0].mxu0
        %v1824 = vadd.f32 0.0, %v1823
        %v1825 = vpop.f32.mrb[0].mxu0
        %1826 = vmatprep.mubr.f32.mxu0 0.0
        %1827 = vmatmul.mubr.f32.gmra.mrb[0].mxu0 %v1605
        %v1828 = vpop.f32.mrb[0].mxu0
        %v1829 = vadd.f32 0.0, %v1828
        %v1830 = vpop.f32.mrb[0].mxu0
        %1831 = vdwg.mxu0
        %v1832 = vadd.f32 %v1442, %v1674
        %v1833 = vadd.f32 %v1443, %v1679
        %v1834 = vadd.f32 %v1444, %v1684
        %v1835 = vadd.f32 %v1445, %v1689
        %v1836 = vadd.f32 %v1446, %v1694
        %v1837 = vadd.f32 %v1447, %v1699
        %v1838 = vadd.f32 %v1448, %v1704
        %v1839 = vadd.f32 %v1449, %v1709
        %v1840 = vadd.f32 %v1450, %v1714
        %v1841 = vadd.f32 %v1451, %v1719
        %v1842 = vadd.f32 %v1452, %v1724
        %v1843 = vadd.f32 %v1453, %v1729
        %v1844 = vadd.f32 %v1454, %v1734
        %v1845 = vadd.f32 %v1455, %v1739
        %v1846 = vadd.f32 %v1456, %v1744
        %v1847 = vadd.f32 %v1457, %v1749
        %v1848 = vadd.f32 %v1458, %v1754
        %v1849 = vadd.f32 %v1459, %v1759
        %v1850 = vadd.f32 %v1460, %v1764
        %v1851 = vadd.f32 %v1461, %v1769
        %v1852 = vadd.f32 %v1462, %v1774
        %v1853 = vadd.f32 %v1463, %v1779
        %v1854 = vadd.f32 %v1464, %v1784
        %v1855 = vadd.f32 %v1465, %v1789
        %v1856 = vadd.f32 %v1466, %v1794
        %v1857 = vadd.f32 %v1467, %v1799
        %v1858 = vadd.f32 %v1468, %v1804
        %v1859 = vadd.f32 %v1469, %v1809
        %v1860 = vadd.f32 %v1470, %v1814
        %v1861 = vadd.f32 %v1471, %v1819
        %v1862 = vadd.f32 %v1472, %v1824
        %v1863 = vadd.f32 %v1473, %v1829
        %v1864 = vld [vmem:[%s241 + $0x1] sm:$0xff]
        %v1865 = vld [vmem:[%s241 + $0x9] sm:$0xff]
        %v1866 = vld [vmem:[%s241 + $0x19] sm:$0xff]
        %v1867 = vld [vmem:[%s241 + $0x21] sm:$0xff]
        %v1868 = vld [vmem:[%s241 + $0x31] sm:$0xff]
        %v1869 = vld [vmem:[%s241 + $0x39] sm:$0xff]
        %v1870 = vld [vmem:[%s241 + $0x49] sm:$0xff]
        %v1871 = vld [vmem:[%s241 + $0x51] sm:$0xff]
        %v1872 = vld [vmem:[%s241 + $0x61] sm:$0xff]
        %v1873 = vld [vmem:[%s241 + $0x69] sm:$0xff]
        %v1874 = vld [vmem:[%s241 + $0x79] sm:$0xff]
        %v1875 = vld [vmem:[%s241 + $0x81] sm:$0xff]
        %v1876 = vld [vmem:[%s241 + $0x91] sm:$0xff]
        %v1877 = vld [vmem:[%s241 + $0x99] sm:$0xff]
        %v1878 = vld [vmem:[%s241 + $0xa9] sm:$0xff]
        %v1879 = vld [vmem:[%s241 + $0xb1] sm:$0xff]
        %v1880 = vld [vmem:[%s241 + $0xc1] sm:$0xff]
        %v1881 = vld [vmem:[%s241 + $0xc9] sm:$0xff]
        %v1882 = vld [vmem:[%s241 + $0xd9] sm:$0xff]
        %v1883 = vld [vmem:[%s241 + $0xe1] sm:$0xff]
        %v1884 = vld [vmem:[%s241 + $0xf1] sm:$0xff]
        %v1885 = vld [vmem:[%s241 + $0xf9] sm:$0xff]
        %v1886 = vld [vmem:[%s241 + $0x109] sm:$0xff]
        %v1887 = vld [vmem:[%s241 + $0x111] sm:$0xff]
        %v1888 = vld [vmem:[%s241 + $0x121] sm:$0xff]
        %v1889 = vld [vmem:[%s241 + $0x129] sm:$0xff]
        %v1890 = vld [vmem:[%s241 + $0x139] sm:$0xff]
        %v1891 = vld [vmem:[%s241 + $0x141] sm:$0xff]
        %v1892 = vld [vmem:[%s241 + $0x151] sm:$0xff]
        %v1893 = vld [vmem:[%s241 + $0x159] sm:$0xff]
        %v1894 = vld [vmem:[%s241 + $0x169] sm:$0xff]
        %v1895 = vld [vmem:[%s241 + $0x171] sm:$0xff]
        %s1896 = scalar_lea.vmem %s1, 128
        %v1897 = vld [vmem:[%s1896] sm:$0xff]
        %v1898 = vld [vmem:[%s1896 + $0x8] sm:$0xff]
        %v1899 = vld [vmem:[%s1896 + $0x10] sm:$0xff]
        %v1900 = vld [vmem:[%s1896 + $0x18] sm:$0xff]
        %v1902 = vsel %vm169, %v1864, 0
        %v1905 = vsel %vm169, %v1865, 0
        %v1908 = vsel %vm169, %v1866, 0
        %v1911 = vsel %vm169, %v1867, 0
        %v1914 = vsel %vm169, %v1868, 0
        %v1917 = vsel %vm169, %v1869, 0
        %v1920 = vsel %vm169, %v1870, 0
        %v1923 = vsel %vm169, %v1871, 0
        %v1926 = vsel %vm169, %v1872, 0
        %v1929 = vsel %vm169, %v1873, 0
        %v1932 = vsel %vm169, %v1874, 0
        %v1935 = vsel %vm169, %v1875, 0
        %v1938 = vsel %vm169, %v1876, 0
        %v1941 = vsel %vm169, %v1877, 0
        %v1944 = vsel %vm169, %v1878, 0
        %v1947 = vsel %vm169, %v1879, 0
        %v1950 = vsel %vm169, %v1880, 0
        %v1953 = vsel %vm169, %v1881, 0
        %v1956 = vsel %vm169, %v1882, 0
        %v1959 = vsel %vm169, %v1883, 0
        %v1962 = vsel %vm169, %v1884, 0
        %v1965 = vsel %vm169, %v1885, 0
        %v1968 = vsel %vm169, %v1886, 0
        %v1971 = vsel %vm169, %v1887, 0
        %v1974 = vsel %vm169, %v1888, 0
        %v1977 = vsel %vm169, %v1889, 0
        %v1980 = vsel %vm169, %v1890, 0
        %v1983 = vsel %vm169, %v1891, 0
        %v1986 = vsel %vm169, %v1892, 0
        %v1989 = vsel %vm169, %v1893, 0
        %v1992 = vsel %vm169, %v1894, 0
        %v1995 = vsel %vm169, %v1895, 0
        %1997 = vmatprep.subr.mxu0 0.0
        %1998 = vmatpush1.msra.mxu0 %v1897
        %1999 = vmatprep.subr.mxu0 0.0
        %2000 = vmatpush1.msra.mxu0 %v1898
        %2001 = vmatprep.subr.mxu0 0.0
        %2002 = vmatpush1.msra.mxu0 %v1899
        %2003 = vmatprep.subr.mxu0 0.0
        %2004 = vmatpush1.msra.mxu0 %v1900
        %2005 = vmatprep.subr.mxu0 0.0
        %2006 = vmatpush1.msra.mxu0 0.0
        %2007 = vmatprep.subr.mxu0 0.0
        %2008 = vmatpush1.msra.mxu0 0.0
        %2009 = vmatprep.subr.mxu0 0.0
        %2010 = vmatpush1.msra.mxu0 0.0
        %2011 = vmatprep.subr.mxu0 0.0
        %2012 = vmatpush1.msra.mxu0 0.0
        %2013 = vmatprep.subr.mxu0 0.0
        %2014 = vmatpush1.msra.mxu0 0.0
        %2015 = vmatprep.subr.mxu0 0.0
        %2016 = vmatpush1.msra.mxu0 0.0
        %2017 = vmatprep.subr.mxu0 0.0
        %2018 = vmatpush1.msra.mxu0 0.0
        %2019 = vmatprep.subr.mxu0 0.0
        %2020 = vmatpush1.msra.mxu0 0.0
        %2021 = vmatprep.subr.mxu0 0.0
        %2022 = vmatpush1.msra.mxu0 0.0
        %2023 = vmatprep.subr.mxu0 0.0
        %2024 = vmatpush1.msra.mxu0 0.0
        %2025 = vmatprep.subr.mxu0 0.0
        %2026 = vmatpush1.msra.mxu0 0.0
        %2027 = vmatprep.subr.mxu0 0.0
        %2028 = vmatpush1.msra.mxu0 0.0
        %2029 = vmatprep.subr.mxu0 0.0
        %2030 = vmatpush1.msra.mxu0 0.0
        %2031 = vmatprep.subr.mxu0 0.0
        %2032 = vmatpush1.msra.mxu0 0.0
        %2033 = vmatprep.subr.mxu0 0.0
        %2034 = vmatpush1.msra.mxu0 0.0
        %2035 = vmatprep.subr.mxu0 0.0
        %2036 = vmatpush1.msra.mxu0 0.0
        %2037 = vmatprep.subr.mxu0 0.0
        %2038 = vmatpush1.msra.mxu0 0.0
        %2039 = vmatprep.subr.mxu0 0.0
        %2040 = vmatpush1.msra.mxu0 0.0
        %2041 = vmatprep.subr.mxu0 0.0
        %2042 = vmatpush1.msra.mxu0 0.0
        %2043 = vmatprep.subr.mxu0 0.0
        %2044 = vmatpush1.msra.mxu0 0.0
        %2045 = vmatprep.subr.mxu0 0.0
        %2046 = vmatpush1.msra.mxu0 0.0
        %2047 = vmatprep.subr.mxu0 0.0
        %2048 = vmatpush1.msra.mxu0 0.0
        %2049 = vmatprep.subr.mxu0 0.0
        %2050 = vmatpush1.msra.mxu0 0.0
        %2051 = vmatprep.subr.mxu0 0.0
        %2052 = vmatpush1.msra.mxu0 0.0
        %2053 = vmatprep.subr.mxu0 0.0
        %2054 = vmatpush1.msra.mxu0 0.0
        %2055 = vmatprep.subr.mxu0 0.0
        %2056 = vmatpush1.msra.mxu0 0.0
        %2057 = vmatprep.subr.mxu0 0.0
        %2058 = vmatpush1.msra.mxu0 0.0
        %2059 = vmatprep.subr.mxu0 0.0
        %2060 = vmatpush1.msra.mxu0 0.0
        %2061 = vmatprep.mubr.f32.mxu0 0.0
        %2062 = vmatmul.mubr.f32.gmra.mrb[0].mxu0 %v1902
        %v2063 = vpop.f32.mrb[0].mxu0
        %v2064 = vadd.f32 0.0, %v2063
        %v2065 = vpop.f32.mrb[0].mxu0
        %2066 = vmatprep.mubr.f32.mxu0 0.0
        %2067 = vmatmul.mubr.f32.gmra.mrb[0].mxu0 %v1905
        %v2068 = vpop.f32.mrb[0].mxu0
        %v2069 = vadd.f32 0.0, %v2068
        %v2070 = vpop.f32.mrb[0].mxu0
        %2071 = vmatprep.mubr.f32.mxu0 0.0
        %2072 = vmatmul.mubr.f32.gmra.mrb[0].mxu0 %v1908
        %v2073 = vpop.f32.mrb[0].mxu0
        %v2074 = vadd.f32 0.0, %v2073
        %v2075 = vpop.f32.mrb[0].mxu0
        %2076 = vmatprep.mubr.f32.mxu0 0.0
        %2077 = vmatmul.mubr.f32.gmra.mrb[0].mxu0 %v1911
        %v2078 = vpop.f32.mrb[0].mxu0
        %v2079 = vadd.f32 0.0, %v2078
        %v2080 = vpop.f32.mrb[0].mxu0
        %2081 = vmatprep.mubr.f32.mxu0 0.0
        %2082 = vmatmul.mubr.f32.gmra.mrb[0].mxu0 %v1914
        %v2083 = vpop.f32.mrb[0].mxu0
        %v2084 = vadd.f32 0.0, %v2083
        %v2085 = vpop.f32.mrb[0].mxu0
        %2086 = vmatprep.mubr.f32.mxu0 0.0
        %2087 = vmatmul.mubr.f32.gmra.mrb[0].mxu0 %v1917
        %v2088 = vpop.f32.mrb[0].mxu0
        %v2089 = vadd.f32 0.0, %v2088
        %v2090 = vpop.f32.mrb[0].mxu0
        %2091 = vmatprep.mubr.f32.mxu0 0.0
        %2092 = vmatmul.mubr.f32.gmra.mrb[0].mxu0 %v1920
        %v2093 = vpop.f32.mrb[0].mxu0
        %v2094 = vadd.f32 0.0, %v2093
        %v2095 = vpop.f32.mrb[0].mxu0
        %2096 = vmatprep.mubr.f32.mxu0 0.0
        %2097 = vmatmul.mubr.f32.gmra.mrb[0].mxu0 %v1923
        %v2098 = vpop.f32.mrb[0].mxu0
        %v2099 = vadd.f32 0.0, %v2098
        %v2100 = vpop.f32.mrb[0].mxu0
        %2101 = vmatprep.mubr.f32.mxu0 0.0
        %2102 = vmatmul.mubr.f32.gmra.mrb[0].mxu0 %v1926
        %v2103 = vpop.f32.mrb[0].mxu0
        %v2104 = vadd.f32 0.0, %v2103
        %v2105 = vpop.f32.mrb[0].mxu0
        %2106 = vmatprep.mubr.f32.mxu0 0.0
        %2107 = vmatmul.mubr.f32.gmra.mrb[0].mxu0 %v1929
        %v2108 = vpop.f32.mrb[0].mxu0
        %v2109 = vadd.f32 0.0, %v2108
        %v2110 = vpop.f32.mrb[0].mxu0
        %2111 = vmatprep.mubr.f32.mxu0 0.0
        %2112 = vmatmul.mubr.f32.gmra.mrb[0].mxu0 %v1932
        %v2113 = vpop.f32.mrb[0].mxu0
        %v2114 = vadd.f32 0.0, %v2113
        %v2115 = vpop.f32.mrb[0].mxu0
        %2116 = vmatprep.mubr.f32.mxu0 0.0
        %2117 = vmatmul.mubr.f32.gmra.mrb[0].mxu0 %v1935
        %v2118 = vpop.f32.mrb[0].mxu0
        %v2119 = vadd.f32 0.0, %v2118
        %v2120 = vpop.f32.mrb[0].mxu0
        %2121 = vmatprep.mubr.f32.mxu0 0.0
        %2122 = vmatmul.mubr.f32.gmra.mrb[0].mxu0 %v1938
        %v2123 = vpop.f32.mrb[0].mxu0
        %v2124 = vadd.f32 0.0, %v2123
        %v2125 = vpop.f32.mrb[0].mxu0
        %2126 = vmatprep.mubr.f32.mxu0 0.0
        %2127 = vmatmul.mubr.f32.gmra.mrb[0].mxu0 %v1941
        %v2128 = vpop.f32.mrb[0].mxu0
        %v2129 = vadd.f32 0.0, %v2128
        %v2130 = vpop.f32.mrb[0].mxu0
        %2131 = vmatprep.mubr.f32.mxu0 0.0
        %2132 = vmatmul.mubr.f32.gmra.mrb[0].mxu0 %v1944
        %v2133 = vpop.f32.mrb[0].mxu0
        %v2134 = vadd.f32 0.0, %v2133
        %v2135 = vpop.f32.mrb[0].mxu0
        %2136 = vmatprep.mubr.f32.mxu0 0.0
        %2137 = vmatmul.mubr.f32.gmra.mrb[0].mxu0 %v1947
        %v2138 = vpop.f32.mrb[0].mxu0
        %v2139 = vadd.f32 0.0, %v2138
        %v2140 = vpop.f32.mrb[0].mxu0
        %2141 = vmatprep.mubr.f32.mxu0 0.0
        %2142 = vmatmul.mubr.f32.gmra.mrb[0].mxu0 %v1950
        %v2143 = vpop.f32.mrb[0].mxu0
        %v2144 = vadd.f32 0.0, %v2143
        %v2145 = vpop.f32.mrb[0].mxu0
        %2146 = vmatprep.mubr.f32.mxu0 0.0
        %2147 = vmatmul.mubr.f32.gmra.mrb[0].mxu0 %v1953
        %v2148 = vpop.f32.mrb[0].mxu0
        %v2149 = vadd.f32 0.0, %v2148
        %v2150 = vpop.f32.mrb[0].mxu0
        %2151 = vmatprep.mubr.f32.mxu0 0.0
        %2152 = vmatmul.mubr.f32.gmra.mrb[0].mxu0 %v1956
        %v2153 = vpop.f32.mrb[0].mxu0
        %v2154 = vadd.f32 0.0, %v2153
        %v2155 = vpop.f32.mrb[0].mxu0
        %2156 = vmatprep.mubr.f32.mxu0 0.0
        %2157 = vmatmul.mubr.f32.gmra.mrb[0].mxu0 %v1959
        %v2158 = vpop.f32.mrb[0].mxu0
        %v2159 = vadd.f32 0.0, %v2158
        %v2160 = vpop.f32.mrb[0].mxu0
        %2161 = vmatprep.mubr.f32.mxu0 0.0
        %2162 = vmatmul.mubr.f32.gmra.mrb[0].mxu0 %v1962
        %v2163 = vpop.f32.mrb[0].mxu0
        %v2164 = vadd.f32 0.0, %v2163
        %v2165 = vpop.f32.mrb[0].mxu0
        %2166 = vmatprep.mubr.f32.mxu0 0.0
        %2167 = vmatmul.mubr.f32.gmra.mrb[0].mxu0 %v1965
        %v2168 = vpop.f32.mrb[0].mxu0
        %v2169 = vadd.f32 0.0, %v2168
        %v2170 = vpop.f32.mrb[0].mxu0
        %2171 = vmatprep.mubr.f32.mxu0 0.0
        %2172 = vmatmul.mubr.f32.gmra.mrb[0].mxu0 %v1968
        %v2173 = vpop.f32.mrb[0].mxu0
        %v2174 = vadd.f32 0.0, %v2173
        %v2175 = vpop.f32.mrb[0].mxu0
        %2176 = vmatprep.mubr.f32.mxu0 0.0
        %2177 = vmatmul.mubr.f32.gmra.mrb[0].mxu0 %v1971
        %v2178 = vpop.f32.mrb[0].mxu0
        %v2179 = vadd.f32 0.0, %v2178
        %v2180 = vpop.f32.mrb[0].mxu0
        %2181 = vmatprep.mubr.f32.mxu0 0.0
        %2182 = vmatmul.mubr.f32.gmra.mrb[0].mxu0 %v1974
        %v2183 = vpop.f32.mrb[0].mxu0
        %v2184 = vadd.f32 0.0, %v2183
        %v2185 = vpop.f32.mrb[0].mxu0
        %2186 = vmatprep.mubr.f32.mxu0 0.0
        %2187 = vmatmul.mubr.f32.gmra.mrb[0].mxu0 %v1977
        %v2188 = vpop.f32.mrb[0].mxu0
        %v2189 = vadd.f32 0.0, %v2188
        %v2190 = vpop.f32.mrb[0].mxu0
        %2191 = vmatprep.mubr.f32.mxu0 0.0
        %2192 = vmatmul.mubr.f32.gmra.mrb[0].mxu0 %v1980
        %v2193 = vpop.f32.mrb[0].mxu0
        %v2194 = vadd.f32 0.0, %v2193
        %v2195 = vpop.f32.mrb[0].mxu0
        %2196 = vmatprep.mubr.f32.mxu0 0.0
        %2197 = vmatmul.mubr.f32.gmra.mrb[0].mxu0 %v1983
        %v2198 = vpop.f32.mrb[0].mxu0
        %v2199 = vadd.f32 0.0, %v2198
        %v2200 = vpop.f32.mrb[0].mxu0
        %2201 = vmatprep.mubr.f32.mxu0 0.0
        %2202 = vmatmul.mubr.f32.gmra.mrb[0].mxu0 %v1986
        %v2203 = vpop.f32.mrb[0].mxu0
        %v2204 = vadd.f32 0.0, %v2203
        %v2205 = vpop.f32.mrb[0].mxu0
        %2206 = vmatprep.mubr.f32.mxu0 0.0
        %2207 = vmatmul.mubr.f32.gmra.mrb[0].mxu0 %v1989
        %v2208 = vpop.f32.mrb[0].mxu0
        %v2209 = vadd.f32 0.0, %v2208
        %v2210 = vpop.f32.mrb[0].mxu0
        %2211 = vmatprep.mubr.f32.mxu0 0.0
        %2212 = vmatmul.mubr.f32.gmra.mrb[0].mxu0 %v1992
        %v2213 = vpop.f32.mrb[0].mxu0
        %v2214 = vadd.f32 0.0, %v2213
        %v2215 = vpop.f32.mrb[0].mxu0
        %2216 = vmatprep.mubr.f32.mxu0 0.0
        %2217 = vmatmul.mubr.f32.gmra.mrb[0].mxu0 %v1995
        %v2218 = vpop.f32.mrb[0].mxu0
        %v2219 = vadd.f32 0.0, %v2218
        %v2220 = vpop.f32.mrb[0].mxu0
        %2221 = vdwg.mxu0
        %v2222 = vadd.f32 %v1832, %v2064
        %v2223 = vadd.f32 %v1833, %v2069
        %v2224 = vadd.f32 %v1834, %v2074
        %v2225 = vadd.f32 %v1835, %v2079
        %v2226 = vadd.f32 %v1836, %v2084
        %v2227 = vadd.f32 %v1837, %v2089
        %v2228 = vadd.f32 %v1838, %v2094
        %v2229 = vadd.f32 %v1839, %v2099
        %v2230 = vadd.f32 %v1840, %v2104
        %v2231 = vadd.f32 %v1841, %v2109
        %v2232 = vadd.f32 %v1842, %v2114
        %v2233 = vadd.f32 %v1843, %v2119
        %v2234 = vadd.f32 %v1844, %v2124
        %v2235 = vadd.f32 %v1845, %v2129
        %v2236 = vadd.f32 %v1846, %v2134
        %v2237 = vadd.f32 %v1847, %v2139
        %v2238 = vadd.f32 %v1848, %v2144
        %v2239 = vadd.f32 %v1849, %v2149
        %v2240 = vadd.f32 %v1850, %v2154
        %v2241 = vadd.f32 %v1851, %v2159
        %v2242 = vadd.f32 %v1852, %v2164
        %v2243 = vadd.f32 %v1853, %v2169
        %v2244 = vadd.f32 %v1854, %v2174
        %v2245 = vadd.f32 %v1855, %v2179
        %v2246 = vadd.f32 %v1856, %v2184
        %v2247 = vadd.f32 %v1857, %v2189
        %v2248 = vadd.f32 %v1858, %v2194
        %v2249 = vadd.f32 %v1859, %v2199
        %v2250 = vadd.f32 %v1860, %v2204
        %v2251 = vadd.f32 %v1861, %v2209
        %v2252 = vadd.f32 %v1862, %v2214
        %v2253 = vadd.f32 %v1863, %v2219
        %v2254 = vld [vmem:[%s252 + $0x1] sm:$0xff]
        %v2255 = vld [vmem:[%s252 + $0x9] sm:$0xff]
        %v2256 = vld [vmem:[%s252 + $0x19] sm:$0xff]
        %v2257 = vld [vmem:[%s252 + $0x21] sm:$0xff]
        %v2258 = vld [vmem:[%s252 + $0x31] sm:$0xff]
        %v2259 = vld [vmem:[%s252 + $0x39] sm:$0xff]
        %v2260 = vld [vmem:[%s252 + $0x49] sm:$0xff]
        %v2261 = vld [vmem:[%s252 + $0x51] sm:$0xff]
        %v2262 = vld [vmem:[%s252 + $0x61] sm:$0xff]
        %v2263 = vld [vmem:[%s252 + $0x69] sm:$0xff]
        %v2264 = vld [vmem:[%s252 + $0x79] sm:$0xff]
        %v2265 = vld [vmem:[%s252 + $0x81] sm:$0xff]
        %v2266 = vld [vmem:[%s252 + $0x91] sm:$0xff]
        %v2267 = vld [vmem:[%s252 + $0x99] sm:$0xff]
        %v2268 = vld [vmem:[%s252 + $0xa9] sm:$0xff]
        %v2269 = vld [vmem:[%s252 + $0xb1] sm:$0xff]
        %v2270 = vld [vmem:[%s252 + $0xc1] sm:$0xff]
        %v2271 = vld [vmem:[%s252 + $0xc9] sm:$0xff]
        %v2272 = vld [vmem:[%s252 + $0xd9] sm:$0xff]
        %v2273 = vld [vmem:[%s252 + $0xe1] sm:$0xff]
        %v2274 = vld [vmem:[%s252 + $0xf1] sm:$0xff]
        %v2275 = vld [vmem:[%s252 + $0xf9] sm:$0xff]
        %v2276 = vld [vmem:[%s252 + $0x109] sm:$0xff]
        %v2277 = vld [vmem:[%s252 + $0x111] sm:$0xff]
        %v2278 = vld [vmem:[%s252 + $0x121] sm:$0xff]
        %v2279 = vld [vmem:[%s252 + $0x129] sm:$0xff]
        %v2280 = vld [vmem:[%s252 + $0x139] sm:$0xff]
        %v2281 = vld [vmem:[%s252 + $0x141] sm:$0xff]
        %v2282 = vld [vmem:[%s252 + $0x151] sm:$0xff]
        %v2283 = vld [vmem:[%s252 + $0x159] sm:$0xff]
        %v2284 = vld [vmem:[%s252 + $0x169] sm:$0xff]
        %v2285 = vld [vmem:[%s252 + $0x171] sm:$0xff]
        %s2286 = scalar_lea.vmem %s1, 160
        %v2287 = vld [vmem:[%s2286] sm:$0xff]
        %v2288 = vld [vmem:[%s2286 + $0x8] sm:$0xff]
        %v2289 = vld [vmem:[%s2286 + $0x10] sm:$0xff]
        %v2290 = vld [vmem:[%s2286 + $0x18] sm:$0xff]
        %v2292 = vsel %vm169, %v2254, 0
        %v2295 = vsel %vm169, %v2255, 0
        %v2298 = vsel %vm169, %v2256, 0
        %v2301 = vsel %vm169, %v2257, 0
        %v2304 = vsel %vm169, %v2258, 0
        %v2307 = vsel %vm169, %v2259, 0
        %v2310 = vsel %vm169, %v2260, 0
        %v2313 = vsel %vm169, %v2261, 0
        %v2316 = vsel %vm169, %v2262, 0
        %v2319 = vsel %vm169, %v2263, 0
        %v2322 = vsel %vm169, %v2264, 0
        %v2325 = vsel %vm169, %v2265, 0
        %v2328 = vsel %vm169, %v2266, 0
        %v2331 = vsel %vm169, %v2267, 0
        %v2334 = vsel %vm169, %v2268, 0
        %v2337 = vsel %vm169, %v2269, 0
        %v2340 = vsel %vm169, %v2270, 0
        %v2343 = vsel %vm169, %v2271, 0
        %v2346 = vsel %vm169, %v2272, 0
        %v2349 = vsel %vm169, %v2273, 0
        %v2352 = vsel %vm169, %v2274, 0
        %v2355 = vsel %vm169, %v2275, 0
        %v2358 = vsel %vm169, %v2276, 0
        %v2361 = vsel %vm169, %v2277, 0
        %v2364 = vsel %vm169, %v2278, 0
        %v2367 = vsel %vm169, %v2279, 0
        %v2370 = vsel %vm169, %v2280, 0
        %v2373 = vsel %vm169, %v2281, 0
        %v2376 = vsel %vm169, %v2282, 0
        %v2379 = vsel %vm169, %v2283, 0
        %v2382 = vsel %vm169, %v2284, 0
        %v2385 = vsel %vm169, %v2285, 0
        %2387 = vmatprep.subr.mxu0 0.0
        %2388 = vmatpush1.msra.mxu0 %v2287
        %2389 = vmatprep.subr.mxu0 0.0
        %2390 = vmatpush1.msra.mxu0 %v2288
        %2391 = vmatprep.subr.mxu0 0.0
        %2392 = vmatpush1.msra.mxu0 %v2289
        %2393 = vmatprep.subr.mxu0 0.0
        %2394 = vmatpush1.msra.mxu0 %v2290
        %2395 = vmatprep.subr.mxu0 0.0
        %2396 = vmatpush1.msra.mxu0 0.0
        %2397 = vmatprep.subr.mxu0 0.0
        %2398 = vmatpush1.msra.mxu0 0.0
        %2399 = vmatprep.subr.mxu0 0.0
        %2400 = vmatpush1.msra.mxu0 0.0
        %2401 = vmatprep.subr.mxu0 0.0
        %2402 = vmatpush1.msra.mxu0 0.0
        %2403 = vmatprep.subr.mxu0 0.0
        %2404 = vmatpush1.msra.mxu0 0.0
        %2405 = vmatprep.subr.mxu0 0.0
        %2406 = vmatpush1.msra.mxu0 0.0
        %2407 = vmatprep.subr.mxu0 0.0
        %2408 = vmatpush1.msra.mxu0 0.0
        %2409 = vmatprep.subr.mxu0 0.0
        %2410 = vmatpush1.msra.mxu0 0.0
        %2411 = vmatprep.subr.mxu0 0.0
        %2412 = vmatpush1.msra.mxu0 0.0
        %2413 = vmatprep.subr.mxu0 0.0
        %2414 = vmatpush1.msra.mxu0 0.0
        %2415 = vmatprep.subr.mxu0 0.0
        %2416 = vmatpush1.msra.mxu0 0.0
        %2417 = vmatprep.subr.mxu0 0.0
        %2418 = vmatpush1.msra.mxu0 0.0
        %2419 = vmatprep.subr.mxu0 0.0
        %2420 = vmatpush1.msra.mxu0 0.0
        %2421 = vmatprep.subr.mxu0 0.0
        %2422 = vmatpush1.msra.mxu0 0.0
        %2423 = vmatprep.subr.mxu0 0.0
        %2424 = vmatpush1.msra.mxu0 0.0
        %2425 = vmatprep.subr.mxu0 0.0
        %2426 = vmatpush1.msra.mxu0 0.0
        %2427 = vmatprep.subr.mxu0 0.0
        %2428 = vmatpush1.msra.mxu0 0.0
        %2429 = vmatprep.subr.mxu0 0.0
        %2430 = vmatpush1.msra.mxu0 0.0
        %2431 = vmatprep.subr.mxu0 0.0
        %2432 = vmatpush1.msra.mxu0 0.0
        %2433 = vmatprep.subr.mxu0 0.0
        %2434 = vmatpush1.msra.mxu0 0.0
        %2435 = vmatprep.subr.mxu0 0.0
        %2436 = vmatpush1.msra.mxu0 0.0
        %2437 = vmatprep.subr.mxu0 0.0
        %2438 = vmatpush1.msra.mxu0 0.0
        %2439 = vmatprep.subr.mxu0 0.0
        %2440 = vmatpush1.msra.mxu0 0.0
        %2441 = vmatprep.subr.mxu0 0.0
        %2442 = vmatpush1.msra.mxu0 0.0
        %2443 = vmatprep.subr.mxu0 0.0
        %2444 = vmatpush1.msra.mxu0 0.0
        %2445 = vmatprep.subr.mxu0 0.0
        %2446 = vmatpush1.msra.mxu0 0.0
        %2447 = vmatprep.subr.mxu0 0.0
        %2448 = vmatpush1.msra.mxu0 0.0
        %2449 = vmatprep.subr.mxu0 0.0
        %2450 = vmatpush1.msra.mxu0 0.0
        %2451 = vmatprep.mubr.f32.mxu0 0.0
        %2452 = vmatmul.mubr.f32.gmra.mrb[0].mxu0 %v2292
        %v2453 = vpop.f32.mrb[0].mxu0
        %v2454 = vadd.f32 0.0, %v2453
        %v2455 = vpop.f32.mrb[0].mxu0
        %2456 = vmatprep.mubr.f32.mxu0 0.0
        %2457 = vmatmul.mubr.f32.gmra.mrb[0].mxu0 %v2295
        %v2458 = vpop.f32.mrb[0].mxu0
        %v2459 = vadd.f32 0.0, %v2458
        %v2460 = vpop.f32.mrb[0].mxu0
        %2461 = vmatprep.mubr.f32.mxu0 0.0
        %2462 = vmatmul.mubr.f32.gmra.mrb[0].mxu0 %v2298
        %v2463 = vpop.f32.mrb[0].mxu0
        %v2464 = vadd.f32 0.0, %v2463
        %v2465 = vpop.f32.mrb[0].mxu0
        %2466 = vmatprep.mubr.f32.mxu0 0.0
        %2467 = vmatmul.mubr.f32.gmra.mrb[0].mxu0 %v2301
        %v2468 = vpop.f32.mrb[0].mxu0
        %v2469 = vadd.f32 0.0, %v2468
        %v2470 = vpop.f32.mrb[0].mxu0
        %2471 = vmatprep.mubr.f32.mxu0 0.0
        %2472 = vmatmul.mubr.f32.gmra.mrb[0].mxu0 %v2304
        %v2473 = vpop.f32.mrb[0].mxu0
        %v2474 = vadd.f32 0.0, %v2473
        %v2475 = vpop.f32.mrb[0].mxu0
        %2476 = vmatprep.mubr.f32.mxu0 0.0
        %2477 = vmatmul.mubr.f32.gmra.mrb[0].mxu0 %v2307
        %v2478 = vpop.f32.mrb[0].mxu0
        %v2479 = vadd.f32 0.0, %v2478
        %v2480 = vpop.f32.mrb[0].mxu0
        %2481 = vmatprep.mubr.f32.mxu0 0.0
        %2482 = vmatmul.mubr.f32.gmra.mrb[0].mxu0 %v2310
        %v2483 = vpop.f32.mrb[0].mxu0
        %v2484 = vadd.f32 0.0, %v2483
        %v2485 = vpop.f32.mrb[0].mxu0
        %2486 = vmatprep.mubr.f32.mxu0 0.0
        %2487 = vmatmul.mubr.f32.gmra.mrb[0].mxu0 %v2313
        %v2488 = vpop.f32.mrb[0].mxu0
        %v2489 = vadd.f32 0.0, %v2488
        %v2490 = vpop.f32.mrb[0].mxu0
        %2491 = vmatprep.mubr.f32.mxu0 0.0
        %2492 = vmatmul.mubr.f32.gmra.mrb[0].mxu0 %v2316
        %v2493 = vpop.f32.mrb[0].mxu0
        %v2494 = vadd.f32 0.0, %v2493
        %v2495 = vpop.f32.mrb[0].mxu0
        %2496 = vmatprep.mubr.f32.mxu0 0.0
        %2497 = vmatmul.mubr.f32.gmra.mrb[0].mxu0 %v2319
        %v2498 = vpop.f32.mrb[0].mxu0
        %v2499 = vadd.f32 0.0, %v2498
        %v2500 = vpop.f32.mrb[0].mxu0
        %2501 = vmatprep.mubr.f32.mxu0 0.0
        %2502 = vmatmul.mubr.f32.gmra.mrb[0].mxu0 %v2322
        %v2503 = vpop.f32.mrb[0].mxu0
        %v2504 = vadd.f32 0.0, %v2503
        %v2505 = vpop.f32.mrb[0].mxu0
        %2506 = vmatprep.mubr.f32.mxu0 0.0
        %2507 = vmatmul.mubr.f32.gmra.mrb[0].mxu0 %v2325
        %v2508 = vpop.f32.mrb[0].mxu0
        %v2509 = vadd.f32 0.0, %v2508
        %v2510 = vpop.f32.mrb[0].mxu0
        %2511 = vmatprep.mubr.f32.mxu0 0.0
        %2512 = vmatmul.mubr.f32.gmra.mrb[0].mxu0 %v2328
        %v2513 = vpop.f32.mrb[0].mxu0
        %v2514 = vadd.f32 0.0, %v2513
        %v2515 = vpop.f32.mrb[0].mxu0
        %2516 = vmatprep.mubr.f32.mxu0 0.0
        %2517 = vmatmul.mubr.f32.gmra.mrb[0].mxu0 %v2331
        %v2518 = vpop.f32.mrb[0].mxu0
        %v2519 = vadd.f32 0.0, %v2518
        %v2520 = vpop.f32.mrb[0].mxu0
        %2521 = vmatprep.mubr.f32.mxu0 0.0
        %2522 = vmatmul.mubr.f32.gmra.mrb[0].mxu0 %v2334
        %v2523 = vpop.f32.mrb[0].mxu0
        %v2524 = vadd.f32 0.0, %v2523
        %v2525 = vpop.f32.mrb[0].mxu0
        %2526 = vmatprep.mubr.f32.mxu0 0.0
        %2527 = vmatmul.mubr.f32.gmra.mrb[0].mxu0 %v2337
        %v2528 = vpop.f32.mrb[0].mxu0
        %v2529 = vadd.f32 0.0, %v2528
        %v2530 = vpop.f32.mrb[0].mxu0
        %2531 = vmatprep.mubr.f32.mxu0 0.0
        %2532 = vmatmul.mubr.f32.gmra.mrb[0].mxu0 %v2340
        %v2533 = vpop.f32.mrb[0].mxu0
        %v2534 = vadd.f32 0.0, %v2533
        %v2535 = vpop.f32.mrb[0].mxu0
        %2536 = vmatprep.mubr.f32.mxu0 0.0
        %2537 = vmatmul.mubr.f32.gmra.mrb[0].mxu0 %v2343
        %v2538 = vpop.f32.mrb[0].mxu0
        %v2539 = vadd.f32 0.0, %v2538
        %v2540 = vpop.f32.mrb[0].mxu0
        %2541 = vmatprep.mubr.f32.mxu0 0.0
        %2542 = vmatmul.mubr.f32.gmra.mrb[0].mxu0 %v2346
        %v2543 = vpop.f32.mrb[0].mxu0
        %v2544 = vadd.f32 0.0, %v2543
        %v2545 = vpop.f32.mrb[0].mxu0
        %2546 = vmatprep.mubr.f32.mxu0 0.0
        %2547 = vmatmul.mubr.f32.gmra.mrb[0].mxu0 %v2349
        %v2548 = vpop.f32.mrb[0].mxu0
        %v2549 = vadd.f32 0.0, %v2548
        %v2550 = vpop.f32.mrb[0].mxu0
        %2551 = vmatprep.mubr.f32.mxu0 0.0
        %2552 = vmatmul.mubr.f32.gmra.mrb[0].mxu0 %v2352
        %v2553 = vpop.f32.mrb[0].mxu0
        %v2554 = vadd.f32 0.0, %v2553
        %v2555 = vpop.f32.mrb[0].mxu0
        %2556 = vmatprep.mubr.f32.mxu0 0.0
        %2557 = vmatmul.mubr.f32.gmra.mrb[0].mxu0 %v2355
        %v2558 = vpop.f32.mrb[0].mxu0
        %v2559 = vadd.f32 0.0, %v2558
        %v2560 = vpop.f32.mrb[0].mxu0
        %2561 = vmatprep.mubr.f32.mxu0 0.0
        %2562 = vmatmul.mubr.f32.gmra.mrb[0].mxu0 %v2358
        %v2563 = vpop.f32.mrb[0].mxu0
        %v2564 = vadd.f32 0.0, %v2563
        %v2565 = vpop.f32.mrb[0].mxu0
        %2566 = vmatprep.mubr.f32.mxu0 0.0
        %2567 = vmatmul.mubr.f32.gmra.mrb[0].mxu0 %v2361
        %v2568 = vpop.f32.mrb[0].mxu0
        %v2569 = vadd.f32 0.0, %v2568
        %v2570 = vpop.f32.mrb[0].mxu0
        %2571 = vmatprep.mubr.f32.mxu0 0.0
        %2572 = vmatmul.mubr.f32.gmra.mrb[0].mxu0 %v2364
        %v2573 = vpop.f32.mrb[0].mxu0
        %v2574 = vadd.f32 0.0, %v2573
        %v2575 = vpop.f32.mrb[0].mxu0
        %2576 = vmatprep.mubr.f32.mxu0 0.0
        %2577 = vmatmul.mubr.f32.gmra.mrb[0].mxu0 %v2367
        %v2578 = vpop.f32.mrb[0].mxu0
        %v2579 = vadd.f32 0.0, %v2578
        %v2580 = vpop.f32.mrb[0].mxu0
        %2581 = vmatprep.mubr.f32.mxu0 0.0
        %2582 = vmatmul.mubr.f32.gmra.mrb[0].mxu0 %v2370
        %v2583 = vpop.f32.mrb[0].mxu0
        %v2584 = vadd.f32 0.0, %v2583
        %v2585 = vpop.f32.mrb[0].mxu0
        %2586 = vmatprep.mubr.f32.mxu0 0.0
        %2587 = vmatmul.mubr.f32.gmra.mrb[0].mxu0 %v2373
        %v2588 = vpop.f32.mrb[0].mxu0
        %v2589 = vadd.f32 0.0, %v2588
        %v2590 = vpop.f32.mrb[0].mxu0
        %2591 = vmatprep.mubr.f32.mxu0 0.0
        %2592 = vmatmul.mubr.f32.gmra.mrb[0].mxu0 %v2376
        %v2593 = vpop.f32.mrb[0].mxu0
        %v2594 = vadd.f32 0.0, %v2593
        %v2595 = vpop.f32.mrb[0].mxu0
        %2596 = vmatprep.mubr.f32.mxu0 0.0
        %2597 = vmatmul.mubr.f32.gmra.mrb[0].mxu0 %v2379
        %v2598 = vpop.f32.mrb[0].mxu0
        %v2599 = vadd.f32 0.0, %v2598
        %v2600 = vpop.f32.mrb[0].mxu0
        %2601 = vmatprep.mubr.f32.mxu0 0.0
        %2602 = vmatmul.mubr.f32.gmra.mrb[0].mxu0 %v2382
        %v2603 = vpop.f32.mrb[0].mxu0
        %v2604 = vadd.f32 0.0, %v2603
        %v2605 = vpop.f32.mrb[0].mxu0
        %2606 = vmatprep.mubr.f32.mxu0 0.0
        %2607 = vmatmul.mubr.f32.gmra.mrb[0].mxu0 %v2385
        %v2608 = vpop.f32.mrb[0].mxu0
        %v2609 = vadd.f32 0.0, %v2608
        %v2610 = vpop.f32.mrb[0].mxu0
        %2611 = vdwg.mxu0
        %v2612 = vadd.f32 %v2222, %v2454
        %v2613 = vadd.f32 %v2223, %v2459
        %v2614 = vadd.f32 %v2224, %v2464
        %v2615 = vadd.f32 %v2225, %v2469
        %v2616 = vadd.f32 %v2226, %v2474
        %v2617 = vadd.f32 %v2227, %v2479
        %v2618 = vadd.f32 %v2228, %v2484
        %v2619 = vadd.f32 %v2229, %v2489
        %v2620 = vadd.f32 %v2230, %v2494
        %v2621 = vadd.f32 %v2231, %v2499
        %v2622 = vadd.f32 %v2232, %v2504
        %v2623 = vadd.f32 %v2233, %v2509
        %v2624 = vadd.f32 %v2234, %v2514
        %v2625 = vadd.f32 %v2235, %v2519
        %v2626 = vadd.f32 %v2236, %v2524
        %v2627 = vadd.f32 %v2237, %v2529
        %v2628 = vadd.f32 %v2238, %v2534
        %v2629 = vadd.f32 %v2239, %v2539
        %v2630 = vadd.f32 %v2240, %v2544
        %v2631 = vadd.f32 %v2241, %v2549
        %v2632 = vadd.f32 %v2242, %v2554
        %v2633 = vadd.f32 %v2243, %v2559
        %v2634 = vadd.f32 %v2244, %v2564
        %v2635 = vadd.f32 %v2245, %v2569
        %v2636 = vadd.f32 %v2246, %v2574
        %v2637 = vadd.f32 %v2247, %v2579
        %v2638 = vadd.f32 %v2248, %v2584
        %v2639 = vadd.f32 %v2249, %v2589
        %v2640 = vadd.f32 %v2250, %v2594
        %v2641 = vadd.f32 %v2251, %v2599
        %v2642 = vadd.f32 %v2252, %v2604
        %v2643 = vadd.f32 %v2253, %v2609
        %v2644 = vld [vmem:[#allocation2 + $0x2] sm:$0xff]
        %v2645 = vld [vmem:[#allocation2 + $0xa] sm:$0xff]
        %v2646 = vld [vmem:[#allocation2 + $0x1a] sm:$0xff]
        %v2647 = vld [vmem:[#allocation2 + $0x22] sm:$0xff]
        %v2648 = vld [vmem:[#allocation2 + $0x32] sm:$0xff]
        %v2649 = vld [vmem:[#allocation2 + $0x3a] sm:$0xff]
        %v2650 = vld [vmem:[#allocation2 + $0x4a] sm:$0xff]
        %v2651 = vld [vmem:[#allocation2 + $0x52] sm:$0xff]
        %v2652 = vld [vmem:[#allocation2 + $0x62] sm:$0xff]
        %v2653 = vld [vmem:[#allocation2 + $0x6a] sm:$0xff]
        %v2654 = vld [vmem:[#allocation2 + $0x7a] sm:$0xff]
        %v2655 = vld [vmem:[#allocation2 + $0x82] sm:$0xff]
        %v2656 = vld [vmem:[#allocation2 + $0x92] sm:$0xff]
        %v2657 = vld [vmem:[#allocation2 + $0x9a] sm:$0xff]
        %v2658 = vld [vmem:[#allocation2 + $0xaa] sm:$0xff]
        %v2659 = vld [vmem:[#allocation2 + $0xb2] sm:$0xff]
        %v2660 = vld [vmem:[#allocation2 + $0xc2] sm:$0xff]
        %v2661 = vld [vmem:[#allocation2 + $0xca] sm:$0xff]
        %v2662 = vld [vmem:[#allocation2 + $0xda] sm:$0xff]
        %v2663 = vld [vmem:[#allocation2 + $0xe2] sm:$0xff]
        %v2664 = vld [vmem:[#allocation2 + $0xf2] sm:$0xff]
        %v2665 = vld [vmem:[#allocation2 + $0xfa] sm:$0xff]
        %v2666 = vld [vmem:[#allocation2 + $0x10a] sm:$0xff]
        %v2667 = vld [vmem:[#allocation2 + $0x112] sm:$0xff]
        %v2668 = vld [vmem:[#allocation2 + $0x122] sm:$0xff]
        %v2669 = vld [vmem:[#allocation2 + $0x12a] sm:$0xff]
        %v2670 = vld [vmem:[#allocation2 + $0x13a] sm:$0xff]
        %v2671 = vld [vmem:[#allocation2 + $0x142] sm:$0xff]
        %v2672 = vld [vmem:[#allocation2 + $0x152] sm:$0xff]
        %v2673 = vld [vmem:[#allocation2 + $0x15a] sm:$0xff]
        %v2674 = vld [vmem:[#allocation2 + $0x16a] sm:$0xff]
        %v2675 = vld [vmem:[#allocation2 + $0x172] sm:$0xff]
        %s2676 = scalar_lea.vmem %s1, 192
        %v2677 = vld [vmem:[%s2676] sm:$0xff]
        %v2678 = vld [vmem:[%s2676 + $0x8] sm:$0xff]
        %v2679 = vld [vmem:[%s2676 + $0x10] sm:$0xff]
        %v2680 = vld [vmem:[%s2676 + $0x18] sm:$0xff]
        %v2682 = vsel %vm169, %v2644, 0
        %v2685 = vsel %vm169, %v2645, 0
        %v2688 = vsel %vm169, %v2646, 0
        %v2691 = vsel %vm169, %v2647, 0
        %v2694 = vsel %vm169, %v2648, 0
        %v2697 = vsel %vm169, %v2649, 0
        %v2700 = vsel %vm169, %v2650, 0
        %v2703 = vsel %vm169, %v2651, 0
        %v2706 = vsel %vm169, %v2652, 0
        %v2709 = vsel %vm169, %v2653, 0
        %v2712 = vsel %vm169, %v2654, 0
        %v2715 = vsel %vm169, %v2655, 0
        %v2718 = vsel %vm169, %v2656, 0
        %v2721 = vsel %vm169, %v2657, 0
        %v2724 = vsel %vm169, %v2658, 0
        %v2727 = vsel %vm169, %v2659, 0
        %v2730 = vsel %vm169, %v2660, 0
        %v2733 = vsel %vm169, %v2661, 0
        %v2736 = vsel %vm169, %v2662, 0
        %v2739 = vsel %vm169, %v2663, 0
        %v2742 = vsel %vm169, %v2664, 0
        %v2745 = vsel %vm169, %v2665, 0
        %v2748 = vsel %vm169, %v2666, 0
        %v2751 = vsel %vm169, %v2667, 0
        %v2754 = vsel %vm169, %v2668, 0
        %v2757 = vsel %vm169, %v2669, 0
        %v2760 = vsel %vm169, %v2670, 0
        %v2763 = vsel %vm169, %v2671, 0
        %v2766 = vsel %vm169, %v2672, 0
        %v2769 = vsel %vm169, %v2673, 0
        %v2772 = vsel %vm169, %v2674, 0
        %v2775 = vsel %vm169, %v2675, 0
        %2777 = vmatprep.subr.mxu0 0.0
        %2778 = vmatpush1.msra.mxu0 %v2677
        %2779 = vmatprep.subr.mxu0 0.0
        %2780 = vmatpush1.msra.mxu0 %v2678
        %2781 = vmatprep.subr.mxu0 0.0
        %2782 = vmatpush1.msra.mxu0 %v2679
        %2783 = vmatprep.subr.mxu0 0.0
        %2784 = vmatpush1.msra.mxu0 %v2680
        %2785 = vmatprep.subr.mxu0 0.0
        %2786 = vmatpush1.msra.mxu0 0.0
        %2787 = vmatprep.subr.mxu0 0.0
        %2788 = vmatpush1.msra.mxu0 0.0
        %2789 = vmatprep.subr.mxu0 0.0
        %2790 = vmatpush1.msra.mxu0 0.0
        %2791 = vmatprep.subr.mxu0 0.0
        %2792 = vmatpush1.msra.mxu0 0.0
        %2793 = vmatprep.subr.mxu0 0.0
        %2794 = vmatpush1.msra.mxu0 0.0
        %2795 = vmatprep.subr.mxu0 0.0
        %2796 = vmatpush1.msra.mxu0 0.0
        %2797 = vmatprep.subr.mxu0 0.0
        %2798 = vmatpush1.msra.mxu0 0.0
        %2799 = vmatprep.subr.mxu0 0.0
        %2800 = vmatpush1.msra.mxu0 0.0
        %2801 = vmatprep.subr.mxu0 0.0
        %2802 = vmatpush1.msra.mxu0 0.0
        %2803 = vmatprep.subr.mxu0 0.0
        %2804 = vmatpush1.msra.mxu0 0.0
        %2805 = vmatprep.subr.mxu0 0.0
        %2806 = vmatpush1.msra.mxu0 0.0
        %2807 = vmatprep.subr.mxu0 0.0
        %2808 = vmatpush1.msra.mxu0 0.0
        %2809 = vmatprep.subr.mxu0 0.0
        %2810 = vmatpush1.msra.mxu0 0.0
        %2811 = vmatprep.subr.mxu0 0.0
        %2812 = vmatpush1.msra.mxu0 0.0
        %2813 = vmatprep.subr.mxu0 0.0
        %2814 = vmatpush1.msra.mxu0 0.0
        %2815 = vmatprep.subr.mxu0 0.0
        %2816 = vmatpush1.msra.mxu0 0.0
        %2817 = vmatprep.subr.mxu0 0.0
        %2818 = vmatpush1.msra.mxu0 0.0
        %2819 = vmatprep.subr.mxu0 0.0
        %2820 = vmatpush1.msra.mxu0 0.0
        %2821 = vmatprep.subr.mxu0 0.0
        %2822 = vmatpush1.msra.mxu0 0.0
        %2823 = vmatprep.subr.mxu0 0.0
        %2824 = vmatpush1.msra.mxu0 0.0
        %2825 = vmatprep.subr.mxu0 0.0
        %2826 = vmatpush1.msra.mxu0 0.0
        %2827 = vmatprep.subr.mxu0 0.0
        %2828 = vmatpush1.msra.mxu0 0.0
        %2829 = vmatprep.subr.mxu0 0.0
        %2830 = vmatpush1.msra.mxu0 0.0
        %2831 = vmatprep.subr.mxu0 0.0
        %2832 = vmatpush1.msra.mxu0 0.0
        %2833 = vmatprep.subr.mxu0 0.0
        %2834 = vmatpush1.msra.mxu0 0.0
        %2835 = vmatprep.subr.mxu0 0.0
        %2836 = vmatpush1.msra.mxu0 0.0
        %2837 = vmatprep.subr.mxu0 0.0
        %2838 = vmatpush1.msra.mxu0 0.0
        %2839 = vmatprep.subr.mxu0 0.0
        %2840 = vmatpush1.msra.mxu0 0.0
        %2841 = vmatprep.mubr.f32.mxu0 0.0
        %2842 = vmatmul.mubr.f32.gmra.mrb[0].mxu0 %v2682
        %v2843 = vpop.f32.mrb[0].mxu0
        %v2844 = vadd.f32 0.0, %v2843
        %v2845 = vpop.f32.mrb[0].mxu0
        %2846 = vmatprep.mubr.f32.mxu0 0.0
        %2847 = vmatmul.mubr.f32.gmra.mrb[0].mxu0 %v2685
        %v2848 = vpop.f32.mrb[0].mxu0
        %v2849 = vadd.f32 0.0, %v2848
        %v2850 = vpop.f32.mrb[0].mxu0
        %2851 = vmatprep.mubr.f32.mxu0 0.0
        %2852 = vmatmul.mubr.f32.gmra.mrb[0].mxu0 %v2688
        %v2853 = vpop.f32.mrb[0].mxu0
        %v2854 = vadd.f32 0.0, %v2853
        %v2855 = vpop.f32.mrb[0].mxu0
        %2856 = vmatprep.mubr.f32.mxu0 0.0
        %2857 = vmatmul.mubr.f32.gmra.mrb[0].mxu0 %v2691
        %v2858 = vpop.f32.mrb[0].mxu0
        %v2859 = vadd.f32 0.0, %v2858
        %v2860 = vpop.f32.mrb[0].mxu0
        %2861 = vmatprep.mubr.f32.mxu0 0.0
        %2862 = vmatmul.mubr.f32.gmra.mrb[0].mxu0 %v2694
        %v2863 = vpop.f32.mrb[0].mxu0
        %v2864 = vadd.f32 0.0, %v2863
        %v2865 = vpop.f32.mrb[0].mxu0
        %2866 = vmatprep.mubr.f32.mxu0 0.0
        %2867 = vmatmul.mubr.f32.gmra.mrb[0].mxu0 %v2697
        %v2868 = vpop.f32.mrb[0].mxu0
        %v2869 = vadd.f32 0.0, %v2868
        %v2870 = vpop.f32.mrb[0].mxu0
        %2871 = vmatprep.mubr.f32.mxu0 0.0
        %2872 = vmatmul.mubr.f32.gmra.mrb[0].mxu0 %v2700
        %v2873 = vpop.f32.mrb[0].mxu0
        %v2874 = vadd.f32 0.0, %v2873
        %v2875 = vpop.f32.mrb[0].mxu0
        %2876 = vmatprep.mubr.f32.mxu0 0.0
        %2877 = vmatmul.mubr.f32.gmra.mrb[0].mxu0 %v2703
        %v2878 = vpop.f32.mrb[0].mxu0
        %v2879 = vadd.f32 0.0, %v2878
        %v2880 = vpop.f32.mrb[0].mxu0
        %2881 = vmatprep.mubr.f32.mxu0 0.0
        %2882 = vmatmul.mubr.f32.gmra.mrb[0].mxu0 %v2706
        %v2883 = vpop.f32.mrb[0].mxu0
        %v2884 = vadd.f32 0.0, %v2883
        %v2885 = vpop.f32.mrb[0].mxu0
        %2886 = vmatprep.mubr.f32.mxu0 0.0
        %2887 = vmatmul.mubr.f32.gmra.mrb[0].mxu0 %v2709
        %v2888 = vpop.f32.mrb[0].mxu0
        %v2889 = vadd.f32 0.0, %v2888
        %v2890 = vpop.f32.mrb[0].mxu0
        %2891 = vmatprep.mubr.f32.mxu0 0.0
        %2892 = vmatmul.mubr.f32.gmra.mrb[0].mxu0 %v2712
        %v2893 = vpop.f32.mrb[0].mxu0
        %v2894 = vadd.f32 0.0, %v2893
        %v2895 = vpop.f32.mrb[0].mxu0
        %2896 = vmatprep.mubr.f32.mxu0 0.0
        %2897 = vmatmul.mubr.f32.gmra.mrb[0].mxu0 %v2715
        %v2898 = vpop.f32.mrb[0].mxu0
        %v2899 = vadd.f32 0.0, %v2898
        %v2900 = vpop.f32.mrb[0].mxu0
        %2901 = vmatprep.mubr.f32.mxu0 0.0
        %2902 = vmatmul.mubr.f32.gmra.mrb[0].mxu0 %v2718
        %v2903 = vpop.f32.mrb[0].mxu0
        %v2904 = vadd.f32 0.0, %v2903
        %v2905 = vpop.f32.mrb[0].mxu0
        %2906 = vmatprep.mubr.f32.mxu0 0.0
        %2907 = vmatmul.mubr.f32.gmra.mrb[0].mxu0 %v2721
        %v2908 = vpop.f32.mrb[0].mxu0
        %v2909 = vadd.f32 0.0, %v2908
        %v2910 = vpop.f32.mrb[0].mxu0
        %2911 = vmatprep.mubr.f32.mxu0 0.0
        %2912 = vmatmul.mubr.f32.gmra.mrb[0].mxu0 %v2724
        %v2913 = vpop.f32.mrb[0].mxu0
        %v2914 = vadd.f32 0.0, %v2913
        %v2915 = vpop.f32.mrb[0].mxu0
        %2916 = vmatprep.mubr.f32.mxu0 0.0
        %2917 = vmatmul.mubr.f32.gmra.mrb[0].mxu0 %v2727
        %v2918 = vpop.f32.mrb[0].mxu0
        %v2919 = vadd.f32 0.0, %v2918
        %v2920 = vpop.f32.mrb[0].mxu0
        %2921 = vmatprep.mubr.f32.mxu0 0.0
        %2922 = vmatmul.mubr.f32.gmra.mrb[0].mxu0 %v2730
        %v2923 = vpop.f32.mrb[0].mxu0
        %v2924 = vadd.f32 0.0, %v2923
        %v2925 = vpop.f32.mrb[0].mxu0
        %2926 = vmatprep.mubr.f32.mxu0 0.0
        %2927 = vmatmul.mubr.f32.gmra.mrb[0].mxu0 %v2733
        %v2928 = vpop.f32.mrb[0].mxu0
        %v2929 = vadd.f32 0.0, %v2928
        %v2930 = vpop.f32.mrb[0].mxu0
        %2931 = vmatprep.mubr.f32.mxu0 0.0
        %2932 = vmatmul.mubr.f32.gmra.mrb[0].mxu0 %v2736
        %v2933 = vpop.f32.mrb[0].mxu0
        %v2934 = vadd.f32 0.0, %v2933
        %v2935 = vpop.f32.mrb[0].mxu0
        %2936 = vmatprep.mubr.f32.mxu0 0.0
        %2937 = vmatmul.mubr.f32.gmra.mrb[0].mxu0 %v2739
        %v2938 = vpop.f32.mrb[0].mxu0
        %v2939 = vadd.f32 0.0, %v2938
        %v2940 = vpop.f32.mrb[0].mxu0
        %2941 = vmatprep.mubr.f32.mxu0 0.0
        %2942 = vmatmul.mubr.f32.gmra.mrb[0].mxu0 %v2742
        %v2943 = vpop.f32.mrb[0].mxu0
        %v2944 = vadd.f32 0.0, %v2943
        %v2945 = vpop.f32.mrb[0].mxu0
        %2946 = vmatprep.mubr.f32.mxu0 0.0
        %2947 = vmatmul.mubr.f32.gmra.mrb[0].mxu0 %v2745
        %v2948 = vpop.f32.mrb[0].mxu0
        %v2949 = vadd.f32 0.0, %v2948
        %v2950 = vpop.f32.mrb[0].mxu0
        %2951 = vmatprep.mubr.f32.mxu0 0.0
        %2952 = vmatmul.mubr.f32.gmra.mrb[0].mxu0 %v2748
        %v2953 = vpop.f32.mrb[0].mxu0
        %v2954 = vadd.f32 0.0, %v2953
        %v2955 = vpop.f32.mrb[0].mxu0
        %2956 = vmatprep.mubr.f32.mxu0 0.0
        %2957 = vmatmul.mubr.f32.gmra.mrb[0].mxu0 %v2751
        %v2958 = vpop.f32.mrb[0].mxu0
        %v2959 = vadd.f32 0.0, %v2958
        %v2960 = vpop.f32.mrb[0].mxu0
        %2961 = vmatprep.mubr.f32.mxu0 0.0
        %2962 = vmatmul.mubr.f32.gmra.mrb[0].mxu0 %v2754
        %v2963 = vpop.f32.mrb[0].mxu0
        %v2964 = vadd.f32 0.0, %v2963
        %v2965 = vpop.f32.mrb[0].mxu0
        %2966 = vmatprep.mubr.f32.mxu0 0.0
        %2967 = vmatmul.mubr.f32.gmra.mrb[0].mxu0 %v2757
        %v2968 = vpop.f32.mrb[0].mxu0
        %v2969 = vadd.f32 0.0, %v2968
        %v2970 = vpop.f32.mrb[0].mxu0
        %2971 = vmatprep.mubr.f32.mxu0 0.0
        %2972 = vmatmul.mubr.f32.gmra.mrb[0].mxu0 %v2760
        %v2973 = vpop.f32.mrb[0].mxu0
        %v2974 = vadd.f32 0.0, %v2973
        %v2975 = vpop.f32.mrb[0].mxu0
        %2976 = vmatprep.mubr.f32.mxu0 0.0
        %2977 = vmatmul.mubr.f32.gmra.mrb[0].mxu0 %v2763
        %v2978 = vpop.f32.mrb[0].mxu0
        %v2979 = vadd.f32 0.0, %v2978
        %v2980 = vpop.f32.mrb[0].mxu0
        %2981 = vmatprep.mubr.f32.mxu0 0.0
        %2982 = vmatmul.mubr.f32.gmra.mrb[0].mxu0 %v2766
        %v2983 = vpop.f32.mrb[0].mxu0
        %v2984 = vadd.f32 0.0, %v2983
        %v2985 = vpop.f32.mrb[0].mxu0
        %2986 = vmatprep.mubr.f32.mxu0 0.0
        %2987 = vmatmul.mubr.f32.gmra.mrb[0].mxu0 %v2769
        %v2988 = vpop.f32.mrb[0].mxu0
        %v2989 = vadd.f32 0.0, %v2988
        %v2990 = vpop.f32.mrb[0].mxu0
        %2991 = vmatprep.mubr.f32.mxu0 0.0
        %2992 = vmatmul.mubr.f32.gmra.mrb[0].mxu0 %v2772
        %v2993 = vpop.f32.mrb[0].mxu0
        %v2994 = vadd.f32 0.0, %v2993
        %v2995 = vpop.f32.mrb[0].mxu0
        %2996 = vmatprep.mubr.f32.mxu0 0.0
        %2997 = vmatmul.mubr.f32.gmra.mrb[0].mxu0 %v2775
        %v2998 = vpop.f32.mrb[0].mxu0
        %v2999 = vadd.f32 0.0, %v2998
        %v3000 = vpop.f32.mrb[0].mxu0
        %3001 = vdwg.mxu0
        %v3002 = vadd.f32 %v2612, %v2844
        %v3003 = vadd.f32 %v2613, %v2849
        %v3004 = vadd.f32 %v2614, %v2854
        %v3005 = vadd.f32 %v2615, %v2859
        %v3006 = vadd.f32 %v2616, %v2864
        %v3007 = vadd.f32 %v2617, %v2869
        %v3008 = vadd.f32 %v2618, %v2874
        %v3009 = vadd.f32 %v2619, %v2879
        %v3010 = vadd.f32 %v2620, %v2884
        %v3011 = vadd.f32 %v2621, %v2889
        %v3012 = vadd.f32 %v2622, %v2894
        %v3013 = vadd.f32 %v2623, %v2899
        %v3014 = vadd.f32 %v2624, %v2904
        %v3015 = vadd.f32 %v2625, %v2909
        %v3016 = vadd.f32 %v2626, %v2914
        %v3017 = vadd.f32 %v2627, %v2919
        %v3018 = vadd.f32 %v2628, %v2924
        %v3019 = vadd.f32 %v2629, %v2929
        %v3020 = vadd.f32 %v2630, %v2934
        %v3021 = vadd.f32 %v2631, %v2939
        %v3022 = vadd.f32 %v2632, %v2944
        %v3023 = vadd.f32 %v2633, %v2949
        %v3024 = vadd.f32 %v2634, %v2954
        %v3025 = vadd.f32 %v2635, %v2959
        %v3026 = vadd.f32 %v2636, %v2964
        %v3027 = vadd.f32 %v2637, %v2969
        %v3028 = vadd.f32 %v2638, %v2974
        %v3029 = vadd.f32 %v2639, %v2979
        %v3030 = vadd.f32 %v2640, %v2984
        %v3031 = vadd.f32 %v2641, %v2989
        %v3032 = vadd.f32 %v2642, %v2994
        %v3033 = vadd.f32 %v2643, %v2999
        %v3034 = vld [vmem:[%s241 + $0x2] sm:$0xff]
        %v3035 = vld [vmem:[%s241 + $0xa] sm:$0xff]
        %v3036 = vld [vmem:[%s241 + $0x1a] sm:$0xff]
        %v3037 = vld [vmem:[%s241 + $0x22] sm:$0xff]
        %v3038 = vld [vmem:[%s241 + $0x32] sm:$0xff]
        %v3039 = vld [vmem:[%s241 + $0x3a] sm:$0xff]
        %v3040 = vld [vmem:[%s241 + $0x4a] sm:$0xff]
        %v3041 = vld [vmem:[%s241 + $0x52] sm:$0xff]
        %v3042 = vld [vmem:[%s241 + $0x62] sm:$0xff]
        %v3043 = vld [vmem:[%s241 + $0x6a] sm:$0xff]
        %v3044 = vld [vmem:[%s241 + $0x7a] sm:$0xff]
        %v3045 = vld [vmem:[%s241 + $0x82] sm:$0xff]
        %v3046 = vld [vmem:[%s241 + $0x92] sm:$0xff]
        %v3047 = vld [vmem:[%s241 + $0x9a] sm:$0xff]
        %v3048 = vld [vmem:[%s241 + $0xaa] sm:$0xff]
        %v3049 = vld [vmem:[%s241 + $0xb2] sm:$0xff]
        %v3050 = vld [vmem:[%s241 + $0xc2] sm:$0xff]
        %v3051 = vld [vmem:[%s241 + $0xca] sm:$0xff]
        %v3052 = vld [vmem:[%s241 + $0xda] sm:$0xff]
        %v3053 = vld [vmem:[%s241 + $0xe2] sm:$0xff]
        %v3054 = vld [vmem:[%s241 + $0xf2] sm:$0xff]
        %v3055 = vld [vmem:[%s241 + $0xfa] sm:$0xff]
        %v3056 = vld [vmem:[%s241 + $0x10a] sm:$0xff]
        %v3057 = vld [vmem:[%s241 + $0x112] sm:$0xff]
        %v3058 = vld [vmem:[%s241 + $0x122] sm:$0xff]
        %v3059 = vld [vmem:[%s241 + $0x12a] sm:$0xff]
        %v3060 = vld [vmem:[%s241 + $0x13a] sm:$0xff]
        %v3061 = vld [vmem:[%s241 + $0x142] sm:$0xff]
        %v3062 = vld [vmem:[%s241 + $0x152] sm:$0xff]
        %v3063 = vld [vmem:[%s241 + $0x15a] sm:$0xff]
        %v3064 = vld [vmem:[%s241 + $0x16a] sm:$0xff]
        %v3065 = vld [vmem:[%s241 + $0x172] sm:$0xff]
        %s3066 = scalar_lea.vmem %s1, 224
        %v3067 = vld [vmem:[%s3066] sm:$0xff]
        %v3068 = vld [vmem:[%s3066 + $0x8] sm:$0xff]
        %v3069 = vld [vmem:[%s3066 + $0x10] sm:$0xff]
        %v3070 = vld [vmem:[%s3066 + $0x18] sm:$0xff]
        %v3072 = vsel %vm169, %v3034, 0
        %v3075 = vsel %vm169, %v3035, 0
        %v3078 = vsel %vm169, %v3036, 0
        %v3081 = vsel %vm169, %v3037, 0
        %v3084 = vsel %vm169, %v3038, 0
        %v3087 = vsel %vm169, %v3039, 0
        %v3090 = vsel %vm169, %v3040, 0
        %v3093 = vsel %vm169, %v3041, 0
        %v3096 = vsel %vm169, %v3042, 0
        %v3099 = vsel %vm169, %v3043, 0
        %v3102 = vsel %vm169, %v3044, 0
        %v3105 = vsel %vm169, %v3045, 0
        %v3108 = vsel %vm169, %v3046, 0
        %v3111 = vsel %vm169, %v3047, 0
        %v3114 = vsel %vm169, %v3048, 0
        %v3117 = vsel %vm169, %v3049, 0
        %v3120 = vsel %vm169, %v3050, 0
        %v3123 = vsel %vm169, %v3051, 0
        %v3126 = vsel %vm169, %v3052, 0
        %v3129 = vsel %vm169, %v3053, 0
        %v3132 = vsel %vm169, %v3054, 0
        %v3135 = vsel %vm169, %v3055, 0
        %v3138 = vsel %vm169, %v3056, 0
        %v3141 = vsel %vm169, %v3057, 0
        %v3144 = vsel %vm169, %v3058, 0
        %v3147 = vsel %vm169, %v3059, 0
        %v3150 = vsel %vm169, %v3060, 0
        %v3153 = vsel %vm169, %v3061, 0
        %v3156 = vsel %vm169, %v3062, 0
        %v3159 = vsel %vm169, %v3063, 0
        %v3162 = vsel %vm169, %v3064, 0
        %v3165 = vsel %vm169, %v3065, 0
        %3167 = vmatprep.subr.mxu0 0.0
        %3168 = vmatpush1.msra.mxu0 %v3067
        %3169 = vmatprep.subr.mxu0 0.0
        %3170 = vmatpush1.msra.mxu0 %v3068
        %3171 = vmatprep.subr.mxu0 0.0
        %3172 = vmatpush1.msra.mxu0 %v3069
        %3173 = vmatprep.subr.mxu0 0.0
        %3174 = vmatpush1.msra.mxu0 %v3070
        %3175 = vmatprep.subr.mxu0 0.0
        %3176 = vmatpush1.msra.mxu0 0.0
        %3177 = vmatprep.subr.mxu0 0.0
        %3178 = vmatpush1.msra.mxu0 0.0
        %3179 = vmatprep.subr.mxu0 0.0
        %3180 = vmatpush1.msra.mxu0 0.0
        %3181 = vmatprep.subr.mxu0 0.0
        %3182 = vmatpush1.msra.mxu0 0.0
        %3183 = vmatprep.subr.mxu0 0.0
        %3184 = vmatpush1.msra.mxu0 0.0
        %3185 = vmatprep.subr.mxu0 0.0
        %3186 = vmatpush1.msra.mxu0 0.0
        %3187 = vmatprep.subr.mxu0 0.0
        %3188 = vmatpush1.msra.mxu0 0.0
        %3189 = vmatprep.subr.mxu0 0.0
        %3190 = vmatpush1.msra.mxu0 0.0
        %3191 = vmatprep.subr.mxu0 0.0
        %3192 = vmatpush1.msra.mxu0 0.0
        %3193 = vmatprep.subr.mxu0 0.0
        %3194 = vmatpush1.msra.mxu0 0.0
        %3195 = vmatprep.subr.mxu0 0.0
        %3196 = vmatpush1.msra.mxu0 0.0
        %3197 = vmatprep.subr.mxu0 0.0
        %3198 = vmatpush1.msra.mxu0 0.0
        %3199 = vmatprep.subr.mxu0 0.0
        %3200 = vmatpush1.msra.mxu0 0.0
        %3201 = vmatprep.subr.mxu0 0.0
        %3202 = vmatpush1.msra.mxu0 0.0
        %3203 = vmatprep.subr.mxu0 0.0
        %3204 = vmatpush1.msra.mxu0 0.0
        %3205 = vmatprep.subr.mxu0 0.0
        %3206 = vmatpush1.msra.mxu0 0.0
        %3207 = vmatprep.subr.mxu0 0.0
        %3208 = vmatpush1.msra.mxu0 0.0
        %3209 = vmatprep.subr.mxu0 0.0
        %3210 = vmatpush1.msra.mxu0 0.0
        %3211 = vmatprep.subr.mxu0 0.0
        %3212 = vmatpush1.msra.mxu0 0.0
        %3213 = vmatprep.subr.mxu0 0.0
        %3214 = vmatpush1.msra.mxu0 0.0
        %3215 = vmatprep.subr.mxu0 0.0
        %3216 = vmatpush1.msra.mxu0 0.0
        %3217 = vmatprep.subr.mxu0 0.0
        %3218 = vmatpush1.msra.mxu0 0.0
        %3219 = vmatprep.subr.mxu0 0.0
        %3220 = vmatpush1.msra.mxu0 0.0
        %3221 = vmatprep.subr.mxu0 0.0
        %3222 = vmatpush1.msra.mxu0 0.0
        %3223 = vmatprep.subr.mxu0 0.0
        %3224 = vmatpush1.msra.mxu0 0.0
        %3225 = vmatprep.subr.mxu0 0.0
        %3226 = vmatpush1.msra.mxu0 0.0
        %3227 = vmatprep.subr.mxu0 0.0
        %3228 = vmatpush1.msra.mxu0 0.0
        %3229 = vmatprep.subr.mxu0 0.0
        %3230 = vmatpush1.msra.mxu0 0.0
        %3231 = vmatprep.mubr.f32.mxu0 0.0
        %3232 = vmatmul.mubr.f32.gmra.mrb[0].mxu0 %v3072
        %v3233 = vpop.f32.mrb[0].mxu0
        %v3234 = vadd.f32 0.0, %v3233
        %v3235 = vpop.f32.mrb[0].mxu0
        %3236 = vmatprep.mubr.f32.mxu0 0.0
        %3237 = vmatmul.mubr.f32.gmra.mrb[0].mxu0 %v3075
        %v3238 = vpop.f32.mrb[0].mxu0
        %v3239 = vadd.f32 0.0, %v3238
        %v3240 = vpop.f32.mrb[0].mxu0
        %3241 = vmatprep.mubr.f32.mxu0 0.0
        %3242 = vmatmul.mubr.f32.gmra.mrb[0].mxu0 %v3078
        %v3243 = vpop.f32.mrb[0].mxu0
        %v3244 = vadd.f32 0.0, %v3243
        %v3245 = vpop.f32.mrb[0].mxu0
        %3246 = vmatprep.mubr.f32.mxu0 0.0
        %3247 = vmatmul.mubr.f32.gmra.mrb[0].mxu0 %v3081
        %v3248 = vpop.f32.mrb[0].mxu0
        %v3249 = vadd.f32 0.0, %v3248
        %v3250 = vpop.f32.mrb[0].mxu0
        %3251 = vmatprep.mubr.f32.mxu0 0.0
        %3252 = vmatmul.mubr.f32.gmra.mrb[0].mxu0 %v3084
        %v3253 = vpop.f32.mrb[0].mxu0
        %v3254 = vadd.f32 0.0, %v3253
        %v3255 = vpop.f32.mrb[0].mxu0
        %3256 = vmatprep.mubr.f32.mxu0 0.0
        %3257 = vmatmul.mubr.f32.gmra.mrb[0].mxu0 %v3087
        %v3258 = vpop.f32.mrb[0].mxu0
        %v3259 = vadd.f32 0.0, %v3258
        %v3260 = vpop.f32.mrb[0].mxu0
        %3261 = vmatprep.mubr.f32.mxu0 0.0
        %3262 = vmatmul.mubr.f32.gmra.mrb[0].mxu0 %v3090
        %v3263 = vpop.f32.mrb[0].mxu0
        %v3264 = vadd.f32 0.0, %v3263
        %v3265 = vpop.f32.mrb[0].mxu0
        %3266 = vmatprep.mubr.f32.mxu0 0.0
        %3267 = vmatmul.mubr.f32.gmra.mrb[0].mxu0 %v3093
        %v3268 = vpop.f32.mrb[0].mxu0
        %v3269 = vadd.f32 0.0, %v3268
        %v3270 = vpop.f32.mrb[0].mxu0
        %3271 = vmatprep.mubr.f32.mxu0 0.0
        %3272 = vmatmul.mubr.f32.gmra.mrb[0].mxu0 %v3096
        %v3273 = vpop.f32.mrb[0].mxu0
        %v3274 = vadd.f32 0.0, %v3273
        %v3275 = vpop.f32.mrb[0].mxu0
        %3276 = vmatprep.mubr.f32.mxu0 0.0
        %3277 = vmatmul.mubr.f32.gmra.mrb[0].mxu0 %v3099
        %v3278 = vpop.f32.mrb[0].mxu0
        %v3279 = vadd.f32 0.0, %v3278
        %v3280 = vpop.f32.mrb[0].mxu0
        %3281 = vmatprep.mubr.f32.mxu0 0.0
        %3282 = vmatmul.mubr.f32.gmra.mrb[0].mxu0 %v3102
        %v3283 = vpop.f32.mrb[0].mxu0
        %v3284 = vadd.f32 0.0, %v3283
        %v3285 = vpop.f32.mrb[0].mxu0
        %3286 = vmatprep.mubr.f32.mxu0 0.0
        %3287 = vmatmul.mubr.f32.gmra.mrb[0].mxu0 %v3105
        %v3288 = vpop.f32.mrb[0].mxu0
        %v3289 = vadd.f32 0.0, %v3288
        %v3290 = vpop.f32.mrb[0].mxu0
        %3291 = vmatprep.mubr.f32.mxu0 0.0
        %3292 = vmatmul.mubr.f32.gmra.mrb[0].mxu0 %v3108
        %v3293 = vpop.f32.mrb[0].mxu0
        %v3294 = vadd.f32 0.0, %v3293
        %v3295 = vpop.f32.mrb[0].mxu0
        %3296 = vmatprep.mubr.f32.mxu0 0.0
        %3297 = vmatmul.mubr.f32.gmra.mrb[0].mxu0 %v3111
        %v3298 = vpop.f32.mrb[0].mxu0
        %v3299 = vadd.f32 0.0, %v3298
        %v3300 = vpop.f32.mrb[0].mxu0
        %3301 = vmatprep.mubr.f32.mxu0 0.0
        %3302 = vmatmul.mubr.f32.gmra.mrb[0].mxu0 %v3114
        %v3303 = vpop.f32.mrb[0].mxu0
        %v3304 = vadd.f32 0.0, %v3303
        %v3305 = vpop.f32.mrb[0].mxu0
        %3306 = vmatprep.mubr.f32.mxu0 0.0
        %3307 = vmatmul.mubr.f32.gmra.mrb[0].mxu0 %v3117
        %v3308 = vpop.f32.mrb[0].mxu0
        %v3309 = vadd.f32 0.0, %v3308
        %v3310 = vpop.f32.mrb[0].mxu0
        %3311 = vmatprep.mubr.f32.mxu0 0.0
        %3312 = vmatmul.mubr.f32.gmra.mrb[0].mxu0 %v3120
        %v3313 = vpop.f32.mrb[0].mxu0
        %v3314 = vadd.f32 0.0, %v3313
        %v3315 = vpop.f32.mrb[0].mxu0
        %3316 = vmatprep.mubr.f32.mxu0 0.0
        %3317 = vmatmul.mubr.f32.gmra.mrb[0].mxu0 %v3123
        %v3318 = vpop.f32.mrb[0].mxu0
        %v3319 = vadd.f32 0.0, %v3318
        %v3320 = vpop.f32.mrb[0].mxu0
        %3321 = vmatprep.mubr.f32.mxu0 0.0
        %3322 = vmatmul.mubr.f32.gmra.mrb[0].mxu0 %v3126
        %v3323 = vpop.f32.mrb[0].mxu0
        %v3324 = vadd.f32 0.0, %v3323
        %v3325 = vpop.f32.mrb[0].mxu0
        %3326 = vmatprep.mubr.f32.mxu0 0.0
        %3327 = vmatmul.mubr.f32.gmra.mrb[0].mxu0 %v3129
        %v3328 = vpop.f32.mrb[0].mxu0
        %v3329 = vadd.f32 0.0, %v3328
        %v3330 = vpop.f32.mrb[0].mxu0
        %3331 = vmatprep.mubr.f32.mxu0 0.0
        %3332 = vmatmul.mubr.f32.gmra.mrb[0].mxu0 %v3132
        %v3333 = vpop.f32.mrb[0].mxu0
        %v3334 = vadd.f32 0.0, %v3333
        %v3335 = vpop.f32.mrb[0].mxu0
        %3336 = vmatprep.mubr.f32.mxu0 0.0
        %3337 = vmatmul.mubr.f32.gmra.mrb[0].mxu0 %v3135
        %v3338 = vpop.f32.mrb[0].mxu0
        %v3339 = vadd.f32 0.0, %v3338
        %v3340 = vpop.f32.mrb[0].mxu0
        %3341 = vmatprep.mubr.f32.mxu0 0.0
        %3342 = vmatmul.mubr.f32.gmra.mrb[0].mxu0 %v3138
        %v3343 = vpop.f32.mrb[0].mxu0
        %v3344 = vadd.f32 0.0, %v3343
        %v3345 = vpop.f32.mrb[0].mxu0
        %3346 = vmatprep.mubr.f32.mxu0 0.0
        %3347 = vmatmul.mubr.f32.gmra.mrb[0].mxu0 %v3141
        %v3348 = vpop.f32.mrb[0].mxu0
        %v3349 = vadd.f32 0.0, %v3348
        %v3350 = vpop.f32.mrb[0].mxu0
        %3351 = vmatprep.mubr.f32.mxu0 0.0
        %3352 = vmatmul.mubr.f32.gmra.mrb[0].mxu0 %v3144
        %v3353 = vpop.f32.mrb[0].mxu0
        %v3354 = vadd.f32 0.0, %v3353
        %v3355 = vpop.f32.mrb[0].mxu0
        %3356 = vmatprep.mubr.f32.mxu0 0.0
        %3357 = vmatmul.mubr.f32.gmra.mrb[0].mxu0 %v3147
        %v3358 = vpop.f32.mrb[0].mxu0
        %v3359 = vadd.f32 0.0, %v3358
        %v3360 = vpop.f32.mrb[0].mxu0
        %3361 = vmatprep.mubr.f32.mxu0 0.0
        %3362 = vmatmul.mubr.f32.gmra.mrb[0].mxu0 %v3150
        %v3363 = vpop.f32.mrb[0].mxu0
        %v3364 = vadd.f32 0.0, %v3363
        %v3365 = vpop.f32.mrb[0].mxu0
        %3366 = vmatprep.mubr.f32.mxu0 0.0
        %3367 = vmatmul.mubr.f32.gmra.mrb[0].mxu0 %v3153
        %v3368 = vpop.f32.mrb[0].mxu0
        %v3369 = vadd.f32 0.0, %v3368
        %v3370 = vpop.f32.mrb[0].mxu0
        %3371 = vmatprep.mubr.f32.mxu0 0.0
        %3372 = vmatmul.mubr.f32.gmra.mrb[0].mxu0 %v3156
        %v3373 = vpop.f32.mrb[0].mxu0
        %v3374 = vadd.f32 0.0, %v3373
        %v3375 = vpop.f32.mrb[0].mxu0
        %3376 = vmatprep.mubr.f32.mxu0 0.0
        %3377 = vmatmul.mubr.f32.gmra.mrb[0].mxu0 %v3159
        %v3378 = vpop.f32.mrb[0].mxu0
        %v3379 = vadd.f32 0.0, %v3378
        %v3380 = vpop.f32.mrb[0].mxu0
        %3381 = vmatprep.mubr.f32.mxu0 0.0
        %3382 = vmatmul.mubr.f32.gmra.mrb[0].mxu0 %v3162
        %v3383 = vpop.f32.mrb[0].mxu0
        %v3384 = vadd.f32 0.0, %v3383
        %v3385 = vpop.f32.mrb[0].mxu0
        %3386 = vmatprep.mubr.f32.mxu0 0.0
        %3387 = vmatmul.mubr.f32.gmra.mrb[0].mxu0 %v3165
        %v3388 = vpop.f32.mrb[0].mxu0
        %v3389 = vadd.f32 0.0, %v3388
        %v3390 = vpop.f32.mrb[0].mxu0
        %3391 = vdwg.mxu0
        %v3392 = vadd.f32 %v3002, %v3234
        %v3393 = vadd.f32 %v3003, %v3239
        %v3394 = vadd.f32 %v3004, %v3244
        %v3395 = vadd.f32 %v3005, %v3249
        %v3396 = vadd.f32 %v3006, %v3254
        %v3397 = vadd.f32 %v3007, %v3259
        %v3398 = vadd.f32 %v3008, %v3264
        %v3399 = vadd.f32 %v3009, %v3269
        %v3400 = vadd.f32 %v3010, %v3274
        %v3401 = vadd.f32 %v3011, %v3279
        %v3402 = vadd.f32 %v3012, %v3284
        %v3403 = vadd.f32 %v3013, %v3289
        %v3404 = vadd.f32 %v3014, %v3294
        %v3405 = vadd.f32 %v3015, %v3299
        %v3406 = vadd.f32 %v3016, %v3304
        %v3407 = vadd.f32 %v3017, %v3309
        %v3408 = vadd.f32 %v3018, %v3314
        %v3409 = vadd.f32 %v3019, %v3319
        %v3410 = vadd.f32 %v3020, %v3324
        %v3411 = vadd.f32 %v3021, %v3329
        %v3412 = vadd.f32 %v3022, %v3334
        %v3413 = vadd.f32 %v3023, %v3339
        %v3414 = vadd.f32 %v3024, %v3344
        %v3415 = vadd.f32 %v3025, %v3349
        %v3416 = vadd.f32 %v3026, %v3354
        %v3417 = vadd.f32 %v3027, %v3359
        %v3418 = vadd.f32 %v3028, %v3364
        %v3419 = vadd.f32 %v3029, %v3369
        %v3420 = vadd.f32 %v3030, %v3374
        %v3421 = vadd.f32 %v3031, %v3379
        %v3422 = vadd.f32 %v3032, %v3384
        %v3423 = vadd.f32 %v3033, %v3389
        %v3424 = vld [vmem:[%s252 + $0x2] sm:$0xff]
        %v3425 = vld [vmem:[%s252 + $0xa] sm:$0xff]
        %v3426 = vld [vmem:[%s252 + $0x1a] sm:$0xff]
        %v3427 = vld [vmem:[%s252 + $0x22] sm:$0xff]
        %v3428 = vld [vmem:[%s252 + $0x32] sm:$0xff]
        %v3429 = vld [vmem:[%s252 + $0x3a] sm:$0xff]
        %v3430 = vld [vmem:[%s252 + $0x4a] sm:$0xff]
        %v3431 = vld [vmem:[%s252 + $0x52] sm:$0xff]
        %v3432 = vld [vmem:[%s252 + $0x62] sm:$0xff]
        %v3433 = vld [vmem:[%s252 + $0x6a] sm:$0xff]
        %v3434 = vld [vmem:[%s252 + $0x7a] sm:$0xff]
        %v3435 = vld [vmem:[%s252 + $0x82] sm:$0xff]
        %v3436 = vld [vmem:[%s252 + $0x92] sm:$0xff]
        %v3437 = vld [vmem:[%s252 + $0x9a] sm:$0xff]
        %v3438 = vld [vmem:[%s252 + $0xaa] sm:$0xff]
        %v3439 = vld [vmem:[%s252 + $0xb2] sm:$0xff]
        %v3440 = vld [vmem:[%s252 + $0xc2] sm:$0xff]
        %v3441 = vld [vmem:[%s252 + $0xca] sm:$0xff]
        %v3442 = vld [vmem:[%s252 + $0xda] sm:$0xff]
        %v3443 = vld [vmem:[%s252 + $0xe2] sm:$0xff]
        %v3444 = vld [vmem:[%s252 + $0xf2] sm:$0xff]
        %v3445 = vld [vmem:[%s252 + $0xfa] sm:$0xff]
        %v3446 = vld [vmem:[%s252 + $0x10a] sm:$0xff]
        %v3447 = vld [vmem:[%s252 + $0x112] sm:$0xff]
        %v3448 = vld [vmem:[%s252 + $0x122] sm:$0xff]
        %v3449 = vld [vmem:[%s252 + $0x12a] sm:$0xff]
        %v3450 = vld [vmem:[%s252 + $0x13a] sm:$0xff]
        %v3451 = vld [vmem:[%s252 + $0x142] sm:$0xff]
        %v3452 = vld [vmem:[%s252 + $0x152] sm:$0xff]
        %v3453 = vld [vmem:[%s252 + $0x15a] sm:$0xff]
        %v3454 = vld [vmem:[%s252 + $0x16a] sm:$0xff]
        %v3455 = vld [vmem:[%s252 + $0x172] sm:$0xff]
        %s3456 = scalar_lea.vmem %s1, 256
        %v3457 = vld [vmem:[%s3456] sm:$0xff]
        %v3458 = vld [vmem:[%s3456 + $0x8] sm:$0xff]
        %v3459 = vld [vmem:[%s3456 + $0x10] sm:$0xff]
        %v3460 = vld [vmem:[%s3456 + $0x18] sm:$0xff]
        %v3462 = vsel %vm169, %v3424, 0
        %v3465 = vsel %vm169, %v3425, 0
        %v3468 = vsel %vm169, %v3426, 0
        %v3471 = vsel %vm169, %v3427, 0
        %v3474 = vsel %vm169, %v3428, 0
        %v3477 = vsel %vm169, %v3429, 0
        %v3480 = vsel %vm169, %v3430, 0
        %v3483 = vsel %vm169, %v3431, 0
        %v3486 = vsel %vm169, %v3432, 0
        %v3489 = vsel %vm169, %v3433, 0
        %v3492 = vsel %vm169, %v3434, 0
        %v3495 = vsel %vm169, %v3435, 0
        %v3498 = vsel %vm169, %v3436, 0
        %v3501 = vsel %vm169, %v3437, 0
        %v3504 = vsel %vm169, %v3438, 0
        %v3507 = vsel %vm169, %v3439, 0
        %v3510 = vsel %vm169, %v3440, 0
        %v3513 = vsel %vm169, %v3441, 0
        %v3516 = vsel %vm169, %v3442, 0
        %v3519 = vsel %vm169, %v3443, 0
        %v3522 = vsel %vm169, %v3444, 0
        %v3525 = vsel %vm169, %v3445, 0
        %v3528 = vsel %vm169, %v3446, 0
        %v3531 = vsel %vm169, %v3447, 0
        %v3534 = vsel %vm169, %v3448, 0
        %v3537 = vsel %vm169, %v3449, 0
        %v3540 = vsel %vm169, %v3450, 0
        %v3543 = vsel %vm169, %v3451, 0
        %v3546 = vsel %vm169, %v3452, 0
        %v3549 = vsel %vm169, %v3453, 0
        %v3552 = vsel %vm169, %v3454, 0
        %v3555 = vsel %vm169, %v3455, 0
        %3557 = vmatprep.subr.mxu0 0.0
        %3558 = vmatpush1.msra.mxu0 %v3457
        %3559 = vmatprep.subr.mxu0 0.0
        %3560 = vmatpush1.msra.mxu0 %v3458
        %3561 = vmatprep.subr.mxu0 0.0
        %3562 = vmatpush1.msra.mxu0 %v3459
        %3563 = vmatprep.subr.mxu0 0.0
        %3564 = vmatpush1.msra.mxu0 %v3460
        %3565 = vmatprep.subr.mxu0 0.0
        %3566 = vmatpush1.msra.mxu0 0.0
        %3567 = vmatprep.subr.mxu0 0.0
        %3568 = vmatpush1.msra.mxu0 0.0
        %3569 = vmatprep.subr.mxu0 0.0
        %3570 = vmatpush1.msra.mxu0 0.0
        %3571 = vmatprep.subr.mxu0 0.0
        %3572 = vmatpush1.msra.mxu0 0.0
        %3573 = vmatprep.subr.mxu0 0.0
        %3574 = vmatpush1.msra.mxu0 0.0
        %3575 = vmatprep.subr.mxu0 0.0
        %3576 = vmatpush1.msra.mxu0 0.0
        %3577 = vmatprep.subr.mxu0 0.0
        %3578 = vmatpush1.msra.mxu0 0.0
        %3579 = vmatprep.subr.mxu0 0.0
        %3580 = vmatpush1.msra.mxu0 0.0
        %3581 = vmatprep.subr.mxu0 0.0
        %3582 = vmatpush1.msra.mxu0 0.0
        %3583 = vmatprep.subr.mxu0 0.0
        %3584 = vmatpush1.msra.mxu0 0.0
        %3585 = vmatprep.subr.mxu0 0.0
        %3586 = vmatpush1.msra.mxu0 0.0
        %3587 = vmatprep.subr.mxu0 0.0
        %3588 = vmatpush1.msra.mxu0 0.0
        %3589 = vmatprep.subr.mxu0 0.0
        %3590 = vmatpush1.msra.mxu0 0.0
        %3591 = vmatprep.subr.mxu0 0.0
        %3592 = vmatpush1.msra.mxu0 0.0
        %3593 = vmatprep.subr.mxu0 0.0
        %3594 = vmatpush1.msra.mxu0 0.0
        %3595 = vmatprep.subr.mxu0 0.0
        %3596 = vmatpush1.msra.mxu0 0.0
        %3597 = vmatprep.subr.mxu0 0.0
        %3598 = vmatpush1.msra.mxu0 0.0
        %3599 = vmatprep.subr.mxu0 0.0
        %3600 = vmatpush1.msra.mxu0 0.0
        %3601 = vmatprep.subr.mxu0 0.0
        %3602 = vmatpush1.msra.mxu0 0.0
        %3603 = vmatprep.subr.mxu0 0.0
        %3604 = vmatpush1.msra.mxu0 0.0
        %3605 = vmatprep.subr.mxu0 0.0
        %3606 = vmatpush1.msra.mxu0 0.0
        %3607 = vmatprep.subr.mxu0 0.0
        %3608 = vmatpush1.msra.mxu0 0.0
        %3609 = vmatprep.subr.mxu0 0.0
        %3610 = vmatpush1.msra.mxu0 0.0
        %3611 = vmatprep.subr.mxu0 0.0
        %3612 = vmatpush1.msra.mxu0 0.0
        %3613 = vmatprep.subr.mxu0 0.0
        %3614 = vmatpush1.msra.mxu0 0.0
        %3615 = vmatprep.subr.mxu0 0.0
        %3616 = vmatpush1.msra.mxu0 0.0
        %3617 = vmatprep.subr.mxu0 0.0
        %3618 = vmatpush1.msra.mxu0 0.0
        %3619 = vmatprep.subr.mxu0 0.0
        %3620 = vmatpush1.msra.mxu0 0.0
        %3621 = vmatprep.mubr.f32.mxu0 0.0
        %3622 = vmatmul.mubr.f32.gmra.mrb[0].mxu0 %v3462
        %v3623 = vpop.f32.mrb[0].mxu0
        %v3624 = vadd.f32 0.0, %v3623
        %v3625 = vpop.f32.mrb[0].mxu0
        %3626 = vmatprep.mubr.f32.mxu0 0.0
        %3627 = vmatmul.mubr.f32.gmra.mrb[0].mxu0 %v3465
        %v3628 = vpop.f32.mrb[0].mxu0
        %v3629 = vadd.f32 0.0, %v3628
        %v3630 = vpop.f32.mrb[0].mxu0
        %3631 = vmatprep.mubr.f32.mxu0 0.0
        %3632 = vmatmul.mubr.f32.gmra.mrb[0].mxu0 %v3468
        %v3633 = vpop.f32.mrb[0].mxu0
        %v3634 = vadd.f32 0.0, %v3633
        %v3635 = vpop.f32.mrb[0].mxu0
        %3636 = vmatprep.mubr.f32.mxu0 0.0
        %3637 = vmatmul.mubr.f32.gmra.mrb[0].mxu0 %v3471
        %v3638 = vpop.f32.mrb[0].mxu0
        %v3639 = vadd.f32 0.0, %v3638
        %v3640 = vpop.f32.mrb[0].mxu0
        %3641 = vmatprep.mubr.f32.mxu0 0.0
        %3642 = vmatmul.mubr.f32.gmra.mrb[0].mxu0 %v3474
        %v3643 = vpop.f32.mrb[0].mxu0
        %v3644 = vadd.f32 0.0, %v3643
        %v3645 = vpop.f32.mrb[0].mxu0
        %3646 = vmatprep.mubr.f32.mxu0 0.0
        %3647 = vmatmul.mubr.f32.gmra.mrb[0].mxu0 %v3477
        %v3648 = vpop.f32.mrb[0].mxu0
        %v3649 = vadd.f32 0.0, %v3648
        %v3650 = vpop.f32.mrb[0].mxu0
        %3651 = vmatprep.mubr.f32.mxu0 0.0
        %3652 = vmatmul.mubr.f32.gmra.mrb[0].mxu0 %v3480
        %v3653 = vpop.f32.mrb[0].mxu0
        %v3654 = vadd.f32 0.0, %v3653
        %v3655 = vpop.f32.mrb[0].mxu0
        %3656 = vmatprep.mubr.f32.mxu0 0.0
        %3657 = vmatmul.mubr.f32.gmra.mrb[0].mxu0 %v3483
        %v3658 = vpop.f32.mrb[0].mxu0
        %v3659 = vadd.f32 0.0, %v3658
        %v3660 = vpop.f32.mrb[0].mxu0
        %3661 = vmatprep.mubr.f32.mxu0 0.0
        %3662 = vmatmul.mubr.f32.gmra.mrb[0].mxu0 %v3486
        %v3663 = vpop.f32.mrb[0].mxu0
        %v3664 = vadd.f32 0.0, %v3663
        %v3665 = vpop.f32.mrb[0].mxu0
        %3666 = vmatprep.mubr.f32.mxu0 0.0
        %3667 = vmatmul.mubr.f32.gmra.mrb[0].mxu0 %v3489
        %v3668 = vpop.f32.mrb[0].mxu0
        %v3669 = vadd.f32 0.0, %v3668
        %v3670 = vpop.f32.mrb[0].mxu0
        %3671 = vmatprep.mubr.f32.mxu0 0.0
        %3672 = vmatmul.mubr.f32.gmra.mrb[0].mxu0 %v3492
        %v3673 = vpop.f32.mrb[0].mxu0
        %v3674 = vadd.f32 0.0, %v3673
        %v3675 = vpop.f32.mrb[0].mxu0
        %3676 = vmatprep.mubr.f32.mxu0 0.0
        %3677 = vmatmul.mubr.f32.gmra.mrb[0].mxu0 %v3495
        %v3678 = vpop.f32.mrb[0].mxu0
        %v3679 = vadd.f32 0.0, %v3678
        %v3680 = vpop.f32.mrb[0].mxu0
        %3681 = vmatprep.mubr.f32.mxu0 0.0
        %3682 = vmatmul.mubr.f32.gmra.mrb[0].mxu0 %v3498
        %v3683 = vpop.f32.mrb[0].mxu0
        %v3684 = vadd.f32 0.0, %v3683
        %v3685 = vpop.f32.mrb[0].mxu0
        %3686 = vmatprep.mubr.f32.mxu0 0.0
        %3687 = vmatmul.mubr.f32.gmra.mrb[0].mxu0 %v3501
        %v3688 = vpop.f32.mrb[0].mxu0
        %v3689 = vadd.f32 0.0, %v3688
        %v3690 = vpop.f32.mrb[0].mxu0
        %3691 = vmatprep.mubr.f32.mxu0 0.0
        %3692 = vmatmul.mubr.f32.gmra.mrb[0].mxu0 %v3504
        %v3693 = vpop.f32.mrb[0].mxu0
        %v3694 = vadd.f32 0.0, %v3693
        %v3695 = vpop.f32.mrb[0].mxu0
        %3696 = vmatprep.mubr.f32.mxu0 0.0
        %3697 = vmatmul.mubr.f32.gmra.mrb[0].mxu0 %v3507
        %v3698 = vpop.f32.mrb[0].mxu0
        %v3699 = vadd.f32 0.0, %v3698
        %v3700 = vpop.f32.mrb[0].mxu0
        %3701 = vmatprep.mubr.f32.mxu0 0.0
        %3702 = vmatmul.mubr.f32.gmra.mrb[0].mxu0 %v3510
        %v3703 = vpop.f32.mrb[0].mxu0
        %v3704 = vadd.f32 0.0, %v3703
        %v3705 = vpop.f32.mrb[0].mxu0
        %3706 = vmatprep.mubr.f32.mxu0 0.0
        %3707 = vmatmul.mubr.f32.gmra.mrb[0].mxu0 %v3513
        %v3708 = vpop.f32.mrb[0].mxu0
        %v3709 = vadd.f32 0.0, %v3708
        %v3710 = vpop.f32.mrb[0].mxu0
        %3711 = vmatprep.mubr.f32.mxu0 0.0
        %3712 = vmatmul.mubr.f32.gmra.mrb[0].mxu0 %v3516
        %v3713 = vpop.f32.mrb[0].mxu0
        %v3714 = vadd.f32 0.0, %v3713
        %v3715 = vpop.f32.mrb[0].mxu0
        %3716 = vmatprep.mubr.f32.mxu0 0.0
        %3717 = vmatmul.mubr.f32.gmra.mrb[0].mxu0 %v3519
        %v3718 = vpop.f32.mrb[0].mxu0
        %v3719 = vadd.f32 0.0, %v3718
        %v3720 = vpop.f32.mrb[0].mxu0
        %3721 = vmatprep.mubr.f32.mxu0 0.0
        %3722 = vmatmul.mubr.f32.gmra.mrb[0].mxu0 %v3522
        %v3723 = vpop.f32.mrb[0].mxu0
        %v3724 = vadd.f32 0.0, %v3723
        %v3725 = vpop.f32.mrb[0].mxu0
        %3726 = vmatprep.mubr.f32.mxu0 0.0
        %3727 = vmatmul.mubr.f32.gmra.mrb[0].mxu0 %v3525
        %v3728 = vpop.f32.mrb[0].mxu0
        %v3729 = vadd.f32 0.0, %v3728
        %v3730 = vpop.f32.mrb[0].mxu0
        %3731 = vmatprep.mubr.f32.mxu0 0.0
        %3732 = vmatmul.mubr.f32.gmra.mrb[0].mxu0 %v3528
        %v3733 = vpop.f32.mrb[0].mxu0
        %v3734 = vadd.f32 0.0, %v3733
        %v3735 = vpop.f32.mrb[0].mxu0
        %3736 = vmatprep.mubr.f32.mxu0 0.0
        %3737 = vmatmul.mubr.f32.gmra.mrb[0].mxu0 %v3531
        %v3738 = vpop.f32.mrb[0].mxu0
        %v3739 = vadd.f32 0.0, %v3738
        %v3740 = vpop.f32.mrb[0].mxu0
        %3741 = vmatprep.mubr.f32.mxu0 0.0
        %3742 = vmatmul.mubr.f32.gmra.mrb[0].mxu0 %v3534
        %v3743 = vpop.f32.mrb[0].mxu0
        %v3744 = vadd.f32 0.0, %v3743
        %v3745 = vpop.f32.mrb[0].mxu0
        %3746 = vmatprep.mubr.f32.mxu0 0.0
        %3747 = vmatmul.mubr.f32.gmra.mrb[0].mxu0 %v3537
        %v3748 = vpop.f32.mrb[0].mxu0
        %v3749 = vadd.f32 0.0, %v3748
        %v3750 = vpop.f32.mrb[0].mxu0
        %3751 = vmatprep.mubr.f32.mxu0 0.0
        %3752 = vmatmul.mubr.f32.gmra.mrb[0].mxu0 %v3540
        %v3753 = vpop.f32.mrb[0].mxu0
        %v3754 = vadd.f32 0.0, %v3753
        %v3755 = vpop.f32.mrb[0].mxu0
        %3756 = vmatprep.mubr.f32.mxu0 0.0
        %3757 = vmatmul.mubr.f32.gmra.mrb[0].mxu0 %v3543
        %v3758 = vpop.f32.mrb[0].mxu0
        %v3759 = vadd.f32 0.0, %v3758
        %v3760 = vpop.f32.mrb[0].mxu0
        %3761 = vmatprep.mubr.f32.mxu0 0.0
        %3762 = vmatmul.mubr.f32.gmra.mrb[0].mxu0 %v3546
        %v3763 = vpop.f32.mrb[0].mxu0
        %v3764 = vadd.f32 0.0, %v3763
        %v3765 = vpop.f32.mrb[0].mxu0
        %3766 = vmatprep.mubr.f32.mxu0 0.0
        %3767 = vmatmul.mubr.f32.gmra.mrb[0].mxu0 %v3549
        %v3768 = vpop.f32.mrb[0].mxu0
        %v3769 = vadd.f32 0.0, %v3768
        %v3770 = vpop.f32.mrb[0].mxu0
        %3771 = vmatprep.mubr.f32.mxu0 0.0
        %3772 = vmatmul.mubr.f32.gmra.mrb[0].mxu0 %v3552
        %v3773 = vpop.f32.mrb[0].mxu0
        %v3774 = vadd.f32 0.0, %v3773
        %v3775 = vpop.f32.mrb[0].mxu0
        %3776 = vmatprep.mubr.f32.mxu0 0.0
        %3777 = vmatmul.mubr.f32.gmra.mrb[0].mxu0 %v3555
        %v3778 = vpop.f32.mrb[0].mxu0
        %v3779 = vadd.f32 0.0, %v3778
        %v3780 = vpop.f32.mrb[0].mxu0
        %3781 = vdwg.mxu0
        %v3782 = vadd.f32 %v3392, %v3624
        %v3783 = vadd.f32 %v3393, %v3629
        %v3784 = vadd.f32 %v3394, %v3634
        %v3785 = vadd.f32 %v3395, %v3639
        %v3786 = vadd.f32 %v3396, %v3644
        %v3787 = vadd.f32 %v3397, %v3649
        %v3788 = vadd.f32 %v3398, %v3654
        %v3789 = vadd.f32 %v3399, %v3659
        %v3790 = vadd.f32 %v3400, %v3664
        %v3791 = vadd.f32 %v3401, %v3669
        %v3792 = vadd.f32 %v3402, %v3674
        %v3793 = vadd.f32 %v3403, %v3679
        %v3794 = vadd.f32 %v3404, %v3684
        %v3795 = vadd.f32 %v3405, %v3689
        %v3796 = vadd.f32 %v3406, %v3694
        %v3797 = vadd.f32 %v3407, %v3699
        %v3798 = vadd.f32 %v3408, %v3704
        %v3799 = vadd.f32 %v3409, %v3709
        %v3800 = vadd.f32 %v3410, %v3714
        %v3801 = vadd.f32 %v3411, %v3719
        %v3802 = vadd.f32 %v3412, %v3724
        %v3803 = vadd.f32 %v3413, %v3729
        %v3804 = vadd.f32 %v3414, %v3734
        %v3805 = vadd.f32 %v3415, %v3739
        %v3806 = vadd.f32 %v3416, %v3744
        %v3807 = vadd.f32 %v3417, %v3749
        %v3808 = vadd.f32 %v3418, %v3754
        %v3809 = vadd.f32 %v3419, %v3759
        %v3810 = vadd.f32 %v3420, %v3764
        %v3811 = vadd.f32 %v3421, %v3769
        %v3812 = vadd.f32 %v3422, %v3774
        %v3813 = vadd.f32 %v3423, %v3779
        %v3814 = vmax.f32 %v3782, 0.0
        %v3815 = vmax.f32 %v3783, 0.0
        %v3816 = vmax.f32 %v3784, 0.0
        %v3817 = vmax.f32 %v3785, 0.0
        %v3818 = vmax.f32 %v3786, 0.0
        %v3819 = vmax.f32 %v3787, 0.0
        %v3820 = vmax.f32 %v3788, 0.0
        %v3821 = vmax.f32 %v3789, 0.0
        %v3822 = vmax.f32 %v3790, 0.0
        %v3823 = vmax.f32 %v3791, 0.0
        %v3824 = vmax.f32 %v3792, 0.0
        %v3825 = vmax.f32 %v3793, 0.0
        %v3826 = vmax.f32 %v3794, 0.0
        %v3827 = vmax.f32 %v3795, 0.0
        %v3828 = vmax.f32 %v3796, 0.0
        %v3829 = vmax.f32 %v3797, 0.0
        %v3830 = vmax.f32 %v3798, 0.0
        %v3831 = vmax.f32 %v3799, 0.0
        %v3832 = vmax.f32 %v3800, 0.0
        %v3833 = vmax.f32 %v3801, 0.0
        %v3834 = vmax.f32 %v3802, 0.0
        %v3835 = vmax.f32 %v3803, 0.0
        %v3836 = vmax.f32 %v3804, 0.0
        %v3837 = vmax.f32 %v3805, 0.0
        %v3838 = vmax.f32 %v3806, 0.0
        %v3839 = vmax.f32 %v3807, 0.0
        %v3840 = vmax.f32 %v3808, 0.0
        %v3841 = vmax.f32 %v3809, 0.0
        %v3842 = vmax.f32 %v3810, 0.0
        %v3843 = vmax.f32 %v3811, 0.0
        %v3844 = vmax.f32 %v3812, 0.0
        %v3845 = vmax.f32 %v3813, 0.0
        %v3846 = vld [vmem:[%s2] sm:$0xff]
        %v3847 = vld [vmem:[%s2 + $0x8] sm:$0xff]
        %vm3848 = vcmask 130048
        %v3850 = vsel %vm3848, %v3814, 0
        %v3853 = vsel %vm3848, %v3815, 0
        %v3856 = vsel %vm3848, %v3816, 0
        %v3859 = vsel %vm3848, %v3817, 0
        %v3862 = vsel %vm3848, %v3818, 0
        %v3865 = vsel %vm3848, %v3819, 0
        %v3868 = vsel %vm3848, %v3820, 0
        %v3871 = vsel %vm3848, %v3821, 0
        %v3874 = vsel %vm3848, %v3822, 0
        %v3877 = vsel %vm3848, %v3823, 0
        %v3880 = vsel %vm3848, %v3824, 0
        %v3883 = vsel %vm3848, %v3825, 0
        %v3886 = vsel %vm3848, %v3826, 0
        %v3889 = vsel %vm3848, %v3827, 0
        %v3892 = vsel %vm3848, %v3828, 0
        %v3895 = vsel %vm3848, %v3829, 0
        %v3898 = vsel %vm3848, %v3830, 0
        %v3901 = vsel %vm3848, %v3831, 0
        %v3904 = vsel %vm3848, %v3832, 0
        %v3907 = vsel %vm3848, %v3833, 0
        %v3910 = vsel %vm3848, %v3834, 0
        %v3913 = vsel %vm3848, %v3835, 0
        %v3916 = vsel %vm3848, %v3836, 0
        %v3919 = vsel %vm3848, %v3837, 0
        %v3922 = vsel %vm3848, %v3838, 0
        %v3925 = vsel %vm3848, %v3839, 0
        %v3928 = vsel %vm3848, %v3840, 0
        %v3931 = vsel %vm3848, %v3841, 0
        %v3934 = vsel %vm3848, %v3842, 0
        %v3937 = vsel %vm3848, %v3843, 0
        %v3940 = vsel %vm3848, %v3844, 0
        %v3943 = vsel %vm3848, %v3845, 0
        %3945 = vmatprep.subr.mxu0 0.0
        %3946 = vmatpush1.msra.mxu0 %v3846
        %3947 = vmatprep.subr.mxu0 0.0
        %3948 = vmatpush1.msra.mxu0 %v3847
        %3949 = vmatprep.subr.mxu0 0.0
        %3950 = vmatpush1.msra.mxu0 0.0
        %3951 = vmatprep.subr.mxu0 0.0
        %3952 = vmatpush1.msra.mxu0 0.0
        %3953 = vmatprep.subr.mxu0 0.0
        %3954 = vmatpush1.msra.mxu0 0.0
        %3955 = vmatprep.subr.mxu0 0.0
        %3956 = vmatpush1.msra.mxu0 0.0
        %3957 = vmatprep.subr.mxu0 0.0
        %3958 = vmatpush1.msra.mxu0 0.0
        %3959 = vmatprep.subr.mxu0 0.0
        %3960 = vmatpush1.msra.mxu0 0.0
        %3961 = vmatprep.subr.mxu0 0.0
        %3962 = vmatpush1.msra.mxu0 0.0
        %3963 = vmatprep.subr.mxu0 0.0
        %3964 = vmatpush1.msra.mxu0 0.0
        %3965 = vmatprep.subr.mxu0 0.0
        %3966 = vmatpush1.msra.mxu0 0.0
        %3967 = vmatprep.subr.mxu0 0.0
        %3968 = vmatpush1.msra.mxu0 0.0
        %3969 = vmatprep.subr.mxu0 0.0
        %3970 = vmatpush1.msra.mxu0 0.0
        %3971 = vmatprep.subr.mxu0 0.0
        %3972 = vmatpush1.msra.mxu0 0.0
        %3973 = vmatprep.subr.mxu0 0.0
        %3974 = vmatpush1.msra.mxu0 0.0
        %3975 = vmatprep.subr.mxu0 0.0
        %3976 = vmatpush1.msra.mxu0 0.0
        %3977 = vmatprep.subr.mxu0 0.0
        %3978 = vmatpush1.msra.mxu0 0.0
        %3979 = vmatprep.subr.mxu0 0.0
        %3980 = vmatpush1.msra.mxu0 0.0
        %3981 = vmatprep.subr.mxu0 0.0
        %3982 = vmatpush1.msra.mxu0 0.0
        %3983 = vmatprep.subr.mxu0 0.0
        %3984 = vmatpush1.msra.mxu0 0.0
        %3985 = vmatprep.subr.mxu0 0.0
        %3986 = vmatpush1.msra.mxu0 0.0
        %3987 = vmatprep.subr.mxu0 0.0
        %3988 = vmatpush1.msra.mxu0 0.0
        %3989 = vmatprep.subr.mxu0 0.0
        %3990 = vmatpush1.msra.mxu0 0.0
        %3991 = vmatprep.subr.mxu0 0.0
        %3992 = vmatpush1.msra.mxu0 0.0
        %3993 = vmatprep.subr.mxu0 0.0
        %3994 = vmatpush1.msra.mxu0 0.0
        %3995 = vmatprep.subr.mxu0 0.0
        %3996 = vmatpush1.msra.mxu0 0.0
        %3997 = vmatprep.subr.mxu0 0.0
        %3998 = vmatpush1.msra.mxu0 0.0
        %3999 = vmatprep.subr.mxu0 0.0
        %4000 = vmatpush1.msra.mxu0 0.0
        %4001 = vmatprep.subr.mxu0 0.0
        %4002 = vmatpush1.msra.mxu0 0.0
        %4003 = vmatprep.subr.mxu0 0.0
        %4004 = vmatpush1.msra.mxu0 0.0
        %4005 = vmatprep.subr.mxu0 0.0
        %4006 = vmatpush1.msra.mxu0 0.0
        %4007 = vmatprep.subr.mxu0 0.0
        %4008 = vmatpush1.msra.mxu0 0.0
        %4009 = vmatprep.mubr.f32.mxu0 0.0
        %4010 = vmatmul.mubr.f32.gmra.mrb[0].mxu0 %v3850
        %v4011 = vpop.f32.mrb[0].mxu0
        %v4012 = vadd.f32 0.0, %v4011
        %v4013 = vpop.f32.mrb[0].mxu0
        %4014 = vmatprep.mubr.f32.mxu0 0.0
        %4015 = vmatmul.mubr.f32.gmra.mrb[0].mxu0 %v3853
        %v4016 = vpop.f32.mrb[0].mxu0
        %v4017 = vadd.f32 0.0, %v4016
        %v4018 = vpop.f32.mrb[0].mxu0
        %4019 = vmatprep.mubr.f32.mxu0 0.0
        %4020 = vmatmul.mubr.f32.gmra.mrb[0].mxu0 %v3856
        %v4021 = vpop.f32.mrb[0].mxu0
        %v4022 = vadd.f32 0.0, %v4021
        %v4023 = vpop.f32.mrb[0].mxu0
        %4024 = vmatprep.mubr.f32.mxu0 0.0
        %4025 = vmatmul.mubr.f32.gmra.mrb[0].mxu0 %v3859
        %v4026 = vpop.f32.mrb[0].mxu0
        %v4027 = vadd.f32 0.0, %v4026
        %v4028 = vpop.f32.mrb[0].mxu0
        %4029 = vmatprep.mubr.f32.mxu0 0.0
        %4030 = vmatmul.mubr.f32.gmra.mrb[0].mxu0 %v3862
        %v4031 = vpop.f32.mrb[0].mxu0
        %v4032 = vadd.f32 0.0, %v4031
        %v4033 = vpop.f32.mrb[0].mxu0
        %4034 = vmatprep.mubr.f32.mxu0 0.0
        %4035 = vmatmul.mubr.f32.gmra.mrb[0].mxu0 %v3865
        %v4036 = vpop.f32.mrb[0].mxu0
        %v4037 = vadd.f32 0.0, %v4036
        %v4038 = vpop.f32.mrb[0].mxu0
        %4039 = vmatprep.mubr.f32.mxu0 0.0
        %4040 = vmatmul.mubr.f32.gmra.mrb[0].mxu0 %v3868
        %v4041 = vpop.f32.mrb[0].mxu0
        %v4042 = vadd.f32 0.0, %v4041
        %v4043 = vpop.f32.mrb[0].mxu0
        %4044 = vmatprep.mubr.f32.mxu0 0.0
        %4045 = vmatmul.mubr.f32.gmra.mrb[0].mxu0 %v3871
        %v4046 = vpop.f32.mrb[0].mxu0
        %v4047 = vadd.f32 0.0, %v4046
        %v4048 = vpop.f32.mrb[0].mxu0
        %4049 = vmatprep.mubr.f32.mxu0 0.0
        %4050 = vmatmul.mubr.f32.gmra.mrb[0].mxu0 %v3874
        %v4051 = vpop.f32.mrb[0].mxu0
        %v4052 = vadd.f32 0.0, %v4051
        %v4053 = vpop.f32.mrb[0].mxu0
        %4054 = vmatprep.mubr.f32.mxu0 0.0
        %4055 = vmatmul.mubr.f32.gmra.mrb[0].mxu0 %v3877
        %v4056 = vpop.f32.mrb[0].mxu0
        %v4057 = vadd.f32 0.0, %v4056
        %v4058 = vpop.f32.mrb[0].mxu0
        %4059 = vmatprep.mubr.f32.mxu0 0.0
        %4060 = vmatmul.mubr.f32.gmra.mrb[0].mxu0 %v3880
        %v4061 = vpop.f32.mrb[0].mxu0
        %v4062 = vadd.f32 0.0, %v4061
        %v4063 = vpop.f32.mrb[0].mxu0
        %4064 = vmatprep.mubr.f32.mxu0 0.0
        %4065 = vmatmul.mubr.f32.gmra.mrb[0].mxu0 %v3883
        %v4066 = vpop.f32.mrb[0].mxu0
        %v4067 = vadd.f32 0.0, %v4066
        %v4068 = vpop.f32.mrb[0].mxu0
        %4069 = vmatprep.mubr.f32.mxu0 0.0
        %4070 = vmatmul.mubr.f32.gmra.mrb[0].mxu0 %v3886
        %v4071 = vpop.f32.mrb[0].mxu0
        %v4072 = vadd.f32 0.0, %v4071
        %v4073 = vpop.f32.mrb[0].mxu0
        %4074 = vmatprep.mubr.f32.mxu0 0.0
        %4075 = vmatmul.mubr.f32.gmra.mrb[0].mxu0 %v3889
        %v4076 = vpop.f32.mrb[0].mxu0
        %v4077 = vadd.f32 0.0, %v4076
        %v4078 = vpop.f32.mrb[0].mxu0
        %4079 = vmatprep.mubr.f32.mxu0 0.0
        %4080 = vmatmul.mubr.f32.gmra.mrb[0].mxu0 %v3892
        %v4081 = vpop.f32.mrb[0].mxu0
        %v4082 = vadd.f32 0.0, %v4081
        %v4083 = vpop.f32.mrb[0].mxu0
        %4084 = vmatprep.mubr.f32.mxu0 0.0
        %4085 = vmatmul.mubr.f32.gmra.mrb[0].mxu0 %v3895
        %v4086 = vpop.f32.mrb[0].mxu0
        %v4087 = vadd.f32 0.0, %v4086
        %v4088 = vpop.f32.mrb[0].mxu0
        %4089 = vmatprep.mubr.f32.mxu0 0.0
        %4090 = vmatmul.mubr.f32.gmra.mrb[0].mxu0 %v3898
        %v4091 = vpop.f32.mrb[0].mxu0
        %v4092 = vadd.f32 0.0, %v4091
        %v4093 = vpop.f32.mrb[0].mxu0
        %4094 = vmatprep.mubr.f32.mxu0 0.0
        %4095 = vmatmul.mubr.f32.gmra.mrb[0].mxu0 %v3901
        %v4096 = vpop.f32.mrb[0].mxu0
        %v4097 = vadd.f32 0.0, %v4096
        %v4098 = vpop.f32.mrb[0].mxu0
        %4099 = vmatprep.mubr.f32.mxu0 0.0
        %4100 = vmatmul.mubr.f32.gmra.mrb[0].mxu0 %v3904
        %v4101 = vpop.f32.mrb[0].mxu0
        %v4102 = vadd.f32 0.0, %v4101
        %v4103 = vpop.f32.mrb[0].mxu0
        %4104 = vmatprep.mubr.f32.mxu0 0.0
        %4105 = vmatmul.mubr.f32.gmra.mrb[0].mxu0 %v3907
        %v4106 = vpop.f32.mrb[0].mxu0
        %v4107 = vadd.f32 0.0, %v4106
        %v4108 = vpop.f32.mrb[0].mxu0
        %4109 = vmatprep.mubr.f32.mxu0 0.0
        %4110 = vmatmul.mubr.f32.gmra.mrb[0].mxu0 %v3910
        %v4111 = vpop.f32.mrb[0].mxu0
        %v4112 = vadd.f32 0.0, %v4111
        %v4113 = vpop.f32.mrb[0].mxu0
        %4114 = vmatprep.mubr.f32.mxu0 0.0
        %4115 = vmatmul.mubr.f32.gmra.mrb[0].mxu0 %v3913
        %v4116 = vpop.f32.mrb[0].mxu0
        %v4117 = vadd.f32 0.0, %v4116
        %v4118 = vpop.f32.mrb[0].mxu0
        %4119 = vmatprep.mubr.f32.mxu0 0.0
        %4120 = vmatmul.mubr.f32.gmra.mrb[0].mxu0 %v3916
        %v4121 = vpop.f32.mrb[0].mxu0
        %v4122 = vadd.f32 0.0, %v4121
        %v4123 = vpop.f32.mrb[0].mxu0
        %4124 = vmatprep.mubr.f32.mxu0 0.0
        %4125 = vmatmul.mubr.f32.gmra.mrb[0].mxu0 %v3919
        %v4126 = vpop.f32.mrb[0].mxu0
        %v4127 = vadd.f32 0.0, %v4126
        %v4128 = vpop.f32.mrb[0].mxu0
        %4129 = vmatprep.mubr.f32.mxu0 0.0
        %4130 = vmatmul.mubr.f32.gmra.mrb[0].mxu0 %v3922
        %v4131 = vpop.f32.mrb[0].mxu0
        %v4132 = vadd.f32 0.0, %v4131
        %v4133 = vpop.f32.mrb[0].mxu0
        %4134 = vmatprep.mubr.f32.mxu0 0.0
        %4135 = vmatmul.mubr.f32.gmra.mrb[0].mxu0 %v3925
        %v4136 = vpop.f32.mrb[0].mxu0
        %v4137 = vadd.f32 0.0, %v4136
        %v4138 = vpop.f32.mrb[0].mxu0
        %4139 = vmatprep.mubr.f32.mxu0 0.0
        %4140 = vmatmul.mubr.f32.gmra.mrb[0].mxu0 %v3928
        %v4141 = vpop.f32.mrb[0].mxu0
        %v4142 = vadd.f32 0.0, %v4141
        %v4143 = vpop.f32.mrb[0].mxu0
        %4144 = vmatprep.mubr.f32.mxu0 0.0
        %4145 = vmatmul.mubr.f32.gmra.mrb[0].mxu0 %v3931
        %v4146 = vpop.f32.mrb[0].mxu0
        %v4147 = vadd.f32 0.0, %v4146
        %v4148 = vpop.f32.mrb[0].mxu0
        %4149 = vmatprep.mubr.f32.mxu0 0.0
        %4150 = vmatmul.mubr.f32.gmra.mrb[0].mxu0 %v3934
        %v4151 = vpop.f32.mrb[0].mxu0
        %v4152 = vadd.f32 0.0, %v4151
        %v4153 = vpop.f32.mrb[0].mxu0
        %4154 = vmatprep.mubr.f32.mxu0 0.0
        %4155 = vmatmul.mubr.f32.gmra.mrb[0].mxu0 %v3937
        %v4156 = vpop.f32.mrb[0].mxu0
        %v4157 = vadd.f32 0.0, %v4156
        %v4158 = vpop.f32.mrb[0].mxu0
        %4159 = vmatprep.mubr.f32.mxu0 0.0
        %4160 = vmatmul.mubr.f32.gmra.mrb[0].mxu0 %v3940
        %v4161 = vpop.f32.mrb[0].mxu0
        %v4162 = vadd.f32 0.0, %v4161
        %v4163 = vpop.f32.mrb[0].mxu0
        %4164 = vmatprep.mubr.f32.mxu0 0.0
        %4165 = vmatmul.mubr.f32.gmra.mrb[0].mxu0 %v3943
        %v4166 = vpop.f32.mrb[0].mxu0
        %v4167 = vadd.f32 0.0, %v4166
        %v4168 = vpop.f32.mrb[0].mxu0
        %4169 = vdwg.mxu0
        %4170 = vst.msk [vmem:[#allocation3] sm:$0xff] %vm169, %v4012
        %4171 = vst.msk [vmem:[#allocation3 + $0x20] sm:$0xff] %vm169, %v4017
        %4174 = vrot.lane.b32.xlu0 %v4022, 32
        %v4175 = vpop.permute.xlu0 %4174
        %4176 = vrot.lane.b32.xlu0 %v4027, 32
        %v4177 = vpop.permute.xlu0 %4176
        %vm4180 = vcmask 523520
        %4181 = vst.msk [vmem:[#allocation3] sm:$0xff] %vm4180, %v4175
        %4182 = vst.msk [vmem:[#allocation3 + $0x20] sm:$0xff] %vm4180, %v4177
        %4185 = vrot.lane.b32.xlu0 %v4032, 64
        %v4186 = vpop.permute.xlu0 %4185
        %4187 = vrot.lane.b32.xlu0 %v4037, 64
        %v4188 = vpop.permute.xlu0 %4187
        %vm4191 = vcmask 785920
        %4192 = vst.msk [vmem:[#allocation3] sm:$0xff] %vm4191, %v4186
        %4193 = vst.msk [vmem:[#allocation3 + $0x20] sm:$0xff] %vm4191, %v4188
        %4196 = vrot.lane.b32.xlu0 %v4042, 96
        %v4197 = vpop.permute.xlu0 %4196
        %4198 = vrot.lane.b32.xlu0 %v4047, 96
        %v4199 = vpop.permute.xlu0 %4198
        %vm4202 = vcmask 1048320
        %4203 = vst.msk [vmem:[#allocation3] sm:$0xff] %vm4202, %v4197
        %4204 = vst.msk [vmem:[#allocation3 + $0x20] sm:$0xff] %vm4202, %v4199
        %4205 = vst.msk [vmem:[#allocation3 + $0x8] sm:$0xff] %vm169, %v4052
        %4206 = vst.msk [vmem:[#allocation3 + $0x28] sm:$0xff] %vm169, %v4057
        %4209 = vrot.lane.b32.xlu0 %v4062, 32
        %v4210 = vpop.permute.xlu0 %4209
        %4211 = vrot.lane.b32.xlu0 %v4067, 32
        %v4212 = vpop.permute.xlu0 %4211
        %4215 = vst.msk [vmem:[#allocation3 + $0x8] sm:$0xff] %vm4180, %v4210
        %4216 = vst.msk [vmem:[#allocation3 + $0x28] sm:$0xff] %vm4180, %v4212
        %4219 = vrot.lane.b32.xlu0 %v4072, 64
        %v4220 = vpop.permute.xlu0 %4219
        %4221 = vrot.lane.b32.xlu0 %v4077, 64
        %v4222 = vpop.permute.xlu0 %4221
        %4225 = vst.msk [vmem:[#allocation3 + $0x8] sm:$0xff] %vm4191, %v4220
        %4226 = vst.msk [vmem:[#allocation3 + $0x28] sm:$0xff] %vm4191, %v4222
        %4229 = vrot.lane.b32.xlu0 %v4082, 96
        %v4230 = vpop.permute.xlu0 %4229
        %4231 = vrot.lane.b32.xlu0 %v4087, 96
        %v4232 = vpop.permute.xlu0 %4231
        %4235 = vst.msk [vmem:[#allocation3 + $0x8] sm:$0xff] %vm4202, %v4230
        %4236 = vst.msk [vmem:[#allocation3 + $0x28] sm:$0xff] %vm4202, %v4232
        %4237 = vst.msk [vmem:[#allocation3 + $0x10] sm:$0xff] %vm169, %v4092
        %4238 = vst.msk [vmem:[#allocation3 + $0x30] sm:$0xff] %vm169, %v4097
        %4241 = vrot.lane.b32.xlu0 %v4102, 32
        %v4242 = vpop.permute.xlu0 %4241
        %4243 = vrot.lane.b32.xlu0 %v4107, 32
        %v4244 = vpop.permute.xlu0 %4243
        %4247 = vst.msk [vmem:[#allocation3 + $0x10] sm:$0xff] %vm4180, %v4242
        %4248 = vst.msk [vmem:[#allocation3 + $0x30] sm:$0xff] %vm4180, %v4244
        %4251 = vrot.lane.b32.xlu0 %v4112, 64
        %v4252 = vpop.permute.xlu0 %4251
        %4253 = vrot.lane.b32.xlu0 %v4117, 64
        %v4254 = vpop.permute.xlu0 %4253
        %4257 = vst.msk [vmem:[#allocation3 + $0x10] sm:$0xff] %vm4191, %v4252
        %4258 = vst.msk [vmem:[#allocation3 + $0x30] sm:$0xff] %vm4191, %v4254
        %4261 = vrot.lane.b32.xlu0 %v4122, 96
        %v4262 = vpop.permute.xlu0 %4261
        %4263 = vrot.lane.b32.xlu0 %v4127, 96
        %v4264 = vpop.permute.xlu0 %4263
        %4267 = vst.msk [vmem:[#allocation3 + $0x10] sm:$0xff] %vm4202, %v4262
        %4268 = vst.msk [vmem:[#allocation3 + $0x30] sm:$0xff] %vm4202, %v4264
        %4269 = vst.msk [vmem:[#allocation3 + $0x18] sm:$0xff] %vm169, %v4132
        %4270 = vst.msk [vmem:[#allocation3 + $0x38] sm:$0xff] %vm169, %v4137
        %4273 = vrot.lane.b32.xlu0 %v4142, 32
        %v4274 = vpop.permute.xlu0 %4273
        %4275 = vrot.lane.b32.xlu0 %v4147, 32
        %v4276 = vpop.permute.xlu0 %4275
        %4279 = vst.msk [vmem:[#allocation3 + $0x18] sm:$0xff] %vm4180, %v4274
        %4280 = vst.msk [vmem:[#allocation3 + $0x38] sm:$0xff] %vm4180, %v4276
        %4283 = vrot.lane.b32.xlu0 %v4152, 64
        %v4284 = vpop.permute.xlu0 %4283
        %4285 = vrot.lane.b32.xlu0 %v4157, 64
        %v4286 = vpop.permute.xlu0 %4285
        %4289 = vst.msk [vmem:[#allocation3 + $0x18] sm:$0xff] %vm4191, %v4284
        %4290 = vst.msk [vmem:[#allocation3 + $0x38] sm:$0xff] %vm4191, %v4286
        %4293 = vrot.lane.b32.xlu0 %v4162, 96
        %v4294 = vpop.permute.xlu0 %4293
        %4295 = vrot.lane.b32.xlu0 %v4167, 96
        %v4296 = vpop.permute.xlu0 %4295
        %4299 = vst.msk [vmem:[#allocation3 + $0x18] sm:$0xff] %vm4202, %v4294
        %4300 = vst.msk [vmem:[#allocation3 + $0x38] sm:$0xff] %vm4202, %v4296
        %v4301 = vld [vmem:[#allocation3] sm:$0xff]
        %v4302 = vld [vmem:[#allocation3 + $0x8] sm:$0xff]
        %v4303 = vld [vmem:[#allocation3 + $0x10] sm:$0xff]
        %v4304 = vld [vmem:[#allocation3 + $0x18] sm:$0xff]
        %v4305 = vld [vmem:[#allocation3 + $0x20] sm:$0xff]
        %v4306 = vld [vmem:[#allocation3 + $0x28] sm:$0xff]
        %v4307 = vld [vmem:[#allocation3 + $0x30] sm:$0xff]
        %v4308 = vld [vmem:[#allocation3 + $0x38] sm:$0xff]
        %v4309 = vadd.f32 %v225, %v4301
        %v4310 = vadd.f32 %v226, %v4302
        %v4311 = vadd.f32 %v227, %v4303
        %v4312 = vadd.f32 %v228, %v4304
        %v4313 = vadd.f32 %v229, %v4305
        %v4314 = vadd.f32 %v230, %v4306
        %v4315 = vadd.f32 %v231, %v4307
        %v4316 = vadd.f32 %v232, %v4308
        %v4317 = vmax.f32 %v4309, 0.0
        %v4318 = vmax.f32 %v4310, 0.0
        %v4319 = vmax.f32 %v4311, 0.0
        %v4320 = vmax.f32 %v4312, 0.0
        %v4321 = vmax.f32 %v4313, 0.0
        %v4322 = vmax.f32 %v4314, 0.0
        %v4323 = vmax.f32 %v4315, 0.0
        %v4324 = vmax.f32 %v4316, 0.0
        %4325 = vst.msk [vmem:[%s241 + $0x1] sm:$0xff] %vm169, %v4317
        %4326 = vst.msk [vmem:[%s241 + $0x9] sm:$0xff] %vm169, %v4321
        %4329 = vrot.lane.b32.xlu0 %v4317, 96
        %v4330 = vpop.permute.xlu0 %4329
        %4331 = vrot.lane.b32.xlu0 %v4321, 96
        %v4332 = vpop.permute.xlu0 %4331
        %4335 = vst.msk [vmem:[%s252 + $0x1] sm:$0xff] %vm169, %v4330
        %4336 = vst.msk [vmem:[%s252 + $0x9] sm:$0xff] %vm169, %v4332
        %4337 = vrot.lane.b32.xlu0 %v4317, 64
        %v4338 = vpop.permute.xlu0 %4337
        %4339 = vrot.lane.b32.xlu0 %v4321, 64
        %v4340 = vpop.permute.xlu0 %4339
        %4343 = vst.msk [vmem:[%s261 + $0x1] sm:$0xff] %vm169, %v4338
        %4344 = vst.msk [vmem:[%s261 + $0x9] sm:$0xff] %vm169, %v4340
        %4345 = vrot.lane.b32.xlu0 %v4317, 32
        %v4346 = vpop.permute.xlu0 %4345
        %4347 = vrot.lane.b32.xlu0 %v4321, 32
        %v4348 = vpop.permute.xlu0 %4347
        %4351 = vst.msk [vmem:[%s270 + $0x1] sm:$0xff] %vm169, %v4346
        %4352 = vst.msk [vmem:[%s270 + $0x9] sm:$0xff] %vm169, %v4348
        %4353 = vst.msk [vmem:[%s273 + $0x1] sm:$0xff] %vm169, %v4318
        %4354 = vst.msk [vmem:[%s273 + $0x9] sm:$0xff] %vm169, %v4322
        %4357 = vrot.lane.b32.xlu0 %v4318, 96
        %v4358 = vpop.permute.xlu0 %4357
        %4359 = vrot.lane.b32.xlu0 %v4322, 96
        %v4360 = vpop.permute.xlu0 %4359
        %4363 = vst.msk [vmem:[%s284 + $0x1] sm:$0xff] %vm169, %v4358
        %4364 = vst.msk [vmem:[%s284 + $0x9] sm:$0xff] %vm169, %v4360
        %4365 = vrot.lane.b32.xlu0 %v4318, 64
        %v4366 = vpop.permute.xlu0 %4365
        %4367 = vrot.lane.b32.xlu0 %v4322, 64
        %v4368 = vpop.permute.xlu0 %4367
        %4371 = vst.msk [vmem:[%s293 + $0x1] sm:$0xff] %vm169, %v4366
        %4372 = vst.msk [vmem:[%s293 + $0x9] sm:$0xff] %vm169, %v4368
        %4373 = vrot.lane.b32.xlu0 %v4318, 32
        %v4374 = vpop.permute.xlu0 %4373
        %4375 = vrot.lane.b32.xlu0 %v4322, 32
        %v4376 = vpop.permute.xlu0 %4375
        %4379 = vst.msk [vmem:[%s302 + $0x1] sm:$0xff] %vm169, %v4374
        %4380 = vst.msk [vmem:[%s302 + $0x9] sm:$0xff] %vm169, %v4376
        %4381 = vst.msk [vmem:[%s305 + $0x1] sm:$0xff] %vm169, %v4319
        %4382 = vst.msk [vmem:[%s305 + $0x9] sm:$0xff] %vm169, %v4323
        %4385 = vrot.lane.b32.xlu0 %v4319, 96
        %v4386 = vpop.permute.xlu0 %4385
        %4387 = vrot.lane.b32.xlu0 %v4323, 96
        %v4388 = vpop.permute.xlu0 %4387
        %4391 = vst.msk [vmem:[%s316 + $0x1] sm:$0xff] %vm169, %v4386
        %4392 = vst.msk [vmem:[%s316 + $0x9] sm:$0xff] %vm169, %v4388
        %4393 = vrot.lane.b32.xlu0 %v4319, 64
        %v4394 = vpop.permute.xlu0 %4393
        %4395 = vrot.lane.b32.xlu0 %v4323, 64
        %v4396 = vpop.permute.xlu0 %4395
        %4399 = vst.msk [vmem:[%s325 + $0x1] sm:$0xff] %vm169, %v4394
        %4400 = vst.msk [vmem:[%s325 + $0x9] sm:$0xff] %vm169, %v4396
        %4401 = vrot.lane.b32.xlu0 %v4319, 32
        %v4402 = vpop.permute.xlu0 %4401
        %4403 = vrot.lane.b32.xlu0 %v4323, 32
        %v4404 = vpop.permute.xlu0 %4403
        %4407 = vst.msk [vmem:[%s334 + $0x1] sm:$0xff] %vm169, %v4402
        %4408 = vst.msk [vmem:[%s334 + $0x9] sm:$0xff] %vm169, %v4404
        %4409 = vst.msk [vmem:[%s337 + $0x1] sm:$0xff] %vm169, %v4320
        %4410 = vst.msk [vmem:[%s337 + $0x9] sm:$0xff] %vm169, %v4324
        %4413 = vrot.lane.b32.xlu0 %v4320, 96
        %v4414 = vpop.permute.xlu0 %4413
        %4415 = vrot.lane.b32.xlu0 %v4324, 96
        %v4416 = vpop.permute.xlu0 %4415
        %4419 = vst.msk [vmem:[%s348 + $0x1] sm:$0xff] %vm169, %v4414
        %4420 = vst.msk [vmem:[%s348 + $0x9] sm:$0xff] %vm169, %v4416
        %4421 = vrot.lane.b32.xlu0 %v4320, 64
        %v4422 = vpop.permute.xlu0 %4421
        %4423 = vrot.lane.b32.xlu0 %v4324, 64
        %v4424 = vpop.permute.xlu0 %4423
        %4427 = vst.msk [vmem:[%s357 + $0x1] sm:$0xff] %vm169, %v4422
        %4428 = vst.msk [vmem:[%s357 + $0x9] sm:$0xff] %vm169, %v4424
        %4429 = vrot.lane.b32.xlu0 %v4320, 32
        %v4430 = vpop.permute.xlu0 %4429
        %4431 = vrot.lane.b32.xlu0 %v4324, 32
        %v4432 = vpop.permute.xlu0 %4431
        %4435 = vst.msk [vmem:[%s366 + $0x1] sm:$0xff] %vm169, %v4430
        %4436 = vst.msk [vmem:[%s366 + $0x9] sm:$0xff] %vm169, %v4432
        %v4437 = vld [vmem:[#allocation2] sm:$0xff]
        %v4438 = vld [vmem:[#allocation2 + $0x8] sm:$0xff]
        %v4439 = vld [vmem:[#allocation2 + $0x18] sm:$0xff]
        %v4440 = vld [vmem:[#allocation2 + $0x20] sm:$0xff]
        %v4441 = vld [vmem:[#allocation2 + $0x30] sm:$0xff]
        %v4442 = vld [vmem:[#allocation2 + $0x38] sm:$0xff]
        %v4443 = vld [vmem:[#allocation2 + $0x48] sm:$0xff]
        %v4444 = vld [vmem:[#allocation2 + $0x50] sm:$0xff]
        %v4445 = vld [vmem:[#allocation2 + $0x60] sm:$0xff]
        %v4446 = vld [vmem:[#allocation2 + $0x68] sm:$0xff]
        %v4447 = vld [vmem:[#allocation2 + $0x78] sm:$0xff]
        %v4448 = vld [vmem:[#allocation2 + $0x80] sm:$0xff]
        %v4449 = vld [vmem:[#allocation2 + $0x90] sm:$0xff]
        %v4450 = vld [vmem:[#allocation2 + $0x98] sm:$0xff]
        %v4451 = vld [vmem:[#allocation2 + $0xa8] sm:$0xff]
        %v4452 = vld [vmem:[#allocation2 + $0xb0] sm:$0xff]
        %v4453 = vld [vmem:[#allocation2 + $0xc0] sm:$0xff]
        %v4454 = vld [vmem:[#allocation2 + $0xc8] sm:$0xff]
        %v4455 = vld [vmem:[#allocation2 + $0xd8] sm:$0xff]
        %v4456 = vld [vmem:[#allocation2 + $0xe0] sm:$0xff]
        %v4457 = vld [vmem:[#allocation2 + $0xf0] sm:$0xff]
        %v4458 = vld [vmem:[#allocation2 + $0xf8] sm:$0xff]
        %v4459 = vld [vmem:[#allocation2 + $0x108] sm:$0xff]
        %v4460 = vld [vmem:[#allocation2 + $0x110] sm:$0xff]
        %v4461 = vld [vmem:[#allocation2 + $0x120] sm:$0xff]
        %v4462 = vld [vmem:[#allocation2 + $0x128] sm:$0xff]
        %v4463 = vld [vmem:[#allocation2 + $0x138] sm:$0xff]
        %v4464 = vld [vmem:[#allocation2 + $0x140] sm:$0xff]
        %v4465 = vld [vmem:[#allocation2 + $0x150] sm:$0xff]
        %v4466 = vld [vmem:[#allocation2 + $0x158] sm:$0xff]
        %v4467 = vld [vmem:[#allocation2 + $0x168] sm:$0xff]
        %v4468 = vld [vmem:[#allocation2 + $0x170] sm:$0xff]
        %s4469 = scalar_lea.vmem %s1, 288
        %v4470 = vld [vmem:[%s4469] sm:$0xff]
        %v4471 = vld [vmem:[%s4469 + $0x8] sm:$0xff]
        %v4472 = vld [vmem:[%s4469 + $0x10] sm:$0xff]
        %v4473 = vld [vmem:[%s4469 + $0x18] sm:$0xff]
        %v4474 = vld [vmem:[%s241] sm:$0xff]
        %v4475 = vld [vmem:[%s241 + $0x8] sm:$0xff]
        %v4476 = vld [vmem:[%s241 + $0x18] sm:$0xff]
        %v4477 = vld [vmem:[%s241 + $0x20] sm:$0xff]
        %v4478 = vld [vmem:[%s241 + $0x30] sm:$0xff]
        %v4479 = vld [vmem:[%s241 + $0x38] sm:$0xff]
        %v4480 = vld [vmem:[%s241 + $0x48] sm:$0xff]
        %v4481 = vld [vmem:[%s241 + $0x50] sm:$0xff]
        %v4482 = vld [vmem:[%s241 + $0x60] sm:$0xff]
        %v4483 = vld [vmem:[%s241 + $0x68] sm:$0xff]
        %v4484 = vld [vmem:[%s241 + $0x78] sm:$0xff]
        %v4485 = vld [vmem:[%s241 + $0x80] sm:$0xff]
        %v4486 = vld [vmem:[%s241 + $0x90] sm:$0xff]
        %v4487 = vld [vmem:[%s241 + $0x98] sm:$0xff]
        %v4488 = vld [vmem:[%s241 + $0xa8] sm:$0xff]
        %v4489 = vld [vmem:[%s241 + $0xb0] sm:$0xff]
        %v4490 = vld [vmem:[%s241 + $0xc0] sm:$0xff]
        %v4491 = vld [vmem:[%s241 + $0xc8] sm:$0xff]
        %v4492 = vld [vmem:[%s241 + $0xd8] sm:$0xff]
        %v4493 = vld [vmem:[%s241 + $0xe0] sm:$0xff]
        %v4494 = vld [vmem:[%s241 + $0xf0] sm:$0xff]
        %v4495 = vld [vmem:[%s241 + $0xf8] sm:$0xff]
        %v4496 = vld [vmem:[%s241 + $0x108] sm:$0xff]
        %v4497 = vld [vmem:[%s241 + $0x110] sm:$0xff]
        %v4498 = vld [vmem:[%s241 + $0x120] sm:$0xff]
        %v4499 = vld [vmem:[%s241 + $0x128] sm:$0xff]
        %v4500 = vld [vmem:[%s241 + $0x138] sm:$0xff]
        %v4501 = vld [vmem:[%s241 + $0x140] sm:$0xff]
        %v4502 = vld [vmem:[%s241 + $0x150] sm:$0xff]
        %v4503 = vld [vmem:[%s241 + $0x158] sm:$0xff]
        %v4504 = vld [vmem:[%s241 + $0x168] sm:$0xff]
        %v4505 = vld [vmem:[%s241 + $0x170] sm:$0xff]
        %s4506 = scalar_lea.vmem %s1, 320
        %v4507 = vld [vmem:[%s4506] sm:$0xff]
        %v4508 = vld [vmem:[%s4506 + $0x8] sm:$0xff]
        %v4509 = vld [vmem:[%s4506 + $0x10] sm:$0xff]
        %v4510 = vld [vmem:[%s4506 + $0x18] sm:$0xff]
        %v4512 = vsel %vm169, %v4474, 0
        %v4515 = vsel %vm169, %v4475, 0
        %v4518 = vsel %vm169, %v4476, 0
        %v4521 = vsel %vm169, %v4477, 0
        %v4524 = vsel %vm169, %v4478, 0
        %v4527 = vsel %vm169, %v4479, 0
        %v4530 = vsel %vm169, %v4480, 0
        %v4533 = vsel %vm169, %v4481, 0
        %v4536 = vsel %vm169, %v4482, 0
        %v4539 = vsel %vm169, %v4483, 0
        %v4542 = vsel %vm169, %v4484, 0
        %v4545 = vsel %vm169, %v4485, 0
        %v4548 = vsel %vm169, %v4486, 0
        %v4551 = vsel %vm169, %v4487, 0
        %v4554 = vsel %vm169, %v4488, 0
        %v4557 = vsel %vm169, %v4489, 0
        %v4560 = vsel %vm169, %v4490, 0
        %v4563 = vsel %vm169, %v4491, 0
        %v4566 = vsel %vm169, %v4492, 0
        %v4569 = vsel %vm169, %v4493, 0
        %v4572 = vsel %vm169, %v4494, 0
        %v4575 = vsel %vm169, %v4495, 0
        %v4578 = vsel %vm169, %v4496, 0
        %v4581 = vsel %vm169, %v4497, 0
        %v4584 = vsel %vm169, %v4498, 0
        %v4587 = vsel %vm169, %v4499, 0
        %v4590 = vsel %vm169, %v4500, 0
        %v4593 = vsel %vm169, %v4501, 0
        %v4596 = vsel %vm169, %v4502, 0
        %v4599 = vsel %vm169, %v4503, 0
        %v4602 = vsel %vm169, %v4504, 0
        %v4605 = vsel %vm169, %v4505, 0
        %4607 = vmatprep.subr.mxu0 0.0
        %4608 = vmatpush1.msra.mxu0 %v4507
        %4609 = vmatprep.subr.mxu0 0.0
        %4610 = vmatpush1.msra.mxu0 %v4508
        %4611 = vmatprep.subr.mxu0 0.0
        %4612 = vmatpush1.msra.mxu0 %v4509
        %4613 = vmatprep.subr.mxu0 0.0
        %4614 = vmatpush1.msra.mxu0 %v4510
        %4615 = vmatprep.subr.mxu0 0.0
        %4616 = vmatpush1.msra.mxu0 0.0
        %4617 = vmatprep.subr.mxu0 0.0
        %4618 = vmatpush1.msra.mxu0 0.0
        %4619 = vmatprep.subr.mxu0 0.0
        %4620 = vmatpush1.msra.mxu0 0.0
        %4621 = vmatprep.subr.mxu0 0.0
        %4622 = vmatpush1.msra.mxu0 0.0
        %4623 = vmatprep.subr.mxu0 0.0
        %4624 = vmatpush1.msra.mxu0 0.0
        %4625 = vmatprep.subr.mxu0 0.0
        %4626 = vmatpush1.msra.mxu0 0.0
        %4627 = vmatprep.subr.mxu0 0.0
        %4628 = vmatpush1.msra.mxu0 0.0
        %4629 = vmatprep.subr.mxu0 0.0
        %4630 = vmatpush1.msra.mxu0 0.0
        %4631 = vmatprep.subr.mxu0 0.0
        %4632 = vmatpush1.msra.mxu0 0.0
        %4633 = vmatprep.subr.mxu0 0.0
        %4634 = vmatpush1.msra.mxu0 0.0
        %4635 = vmatprep.subr.mxu0 0.0
        %4636 = vmatpush1.msra.mxu0 0.0
        %4637 = vmatprep.subr.mxu0 0.0
        %4638 = vmatpush1.msra.mxu0 0.0
        %4639 = vmatprep.subr.mxu0 0.0
        %4640 = vmatpush1.msra.mxu0 0.0
        %4641 = vmatprep.subr.mxu0 0.0
        %4642 = vmatpush1.msra.mxu0 0.0
        %4643 = vmatprep.subr.mxu0 0.0
        %4644 = vmatpush1.msra.mxu0 0.0
        %4645 = vmatprep.subr.mxu0 0.0
        %4646 = vmatpush1.msra.mxu0 0.0
        %4647 = vmatprep.subr.mxu0 0.0
        %4648 = vmatpush1.msra.mxu0 0.0
        %4649 = vmatprep.subr.mxu0 0.0
        %4650 = vmatpush1.msra.mxu0 0.0
        %4651 = vmatprep.subr.mxu0 0.0
        %4652 = vmatpush1.msra.mxu0 0.0
        %4653 = vmatprep.subr.mxu0 0.0
        %4654 = vmatpush1.msra.mxu0 0.0
        %4655 = vmatprep.subr.mxu0 0.0
        %4656 = vmatpush1.msra.mxu0 0.0
        %4657 = vmatprep.subr.mxu0 0.0
        %4658 = vmatpush1.msra.mxu0 0.0
        %4659 = vmatprep.subr.mxu0 0.0
        %4660 = vmatpush1.msra.mxu0 0.0
        %4661 = vmatprep.subr.mxu0 0.0
        %4662 = vmatpush1.msra.mxu0 0.0
        %4663 = vmatprep.subr.mxu0 0.0
        %4664 = vmatpush1.msra.mxu0 0.0
        %4665 = vmatprep.subr.mxu0 0.0
        %4666 = vmatpush1.msra.mxu0 0.0
        %4667 = vmatprep.subr.mxu0 0.0
        %4668 = vmatpush1.msra.mxu0 0.0
        %4669 = vmatprep.subr.mxu0 0.0
        %4670 = vmatpush1.msra.mxu0 0.0
        %4671 = vmatprep.mubr.f32.mxu0 0.0
        %4672 = vmatmul.mubr.f32.gmra.mrb[0].mxu0 %v4512
        %v4673 = vpop.f32.mrb[0].mxu0
        %v4674 = vadd.f32 0.0, %v4673
        %v4675 = vpop.f32.mrb[0].mxu0
        %4676 = vmatprep.mubr.f32.mxu0 0.0
        %4677 = vmatmul.mubr.f32.gmra.mrb[0].mxu0 %v4515
        %v4678 = vpop.f32.mrb[0].mxu0
        %v4679 = vadd.f32 0.0, %v4678
        %v4680 = vpop.f32.mrb[0].mxu0
        %4681 = vmatprep.mubr.f32.mxu0 0.0
        %4682 = vmatmul.mubr.f32.gmra.mrb[0].mxu0 %v4518
        %v4683 = vpop.f32.mrb[0].mxu0
        %v4684 = vadd.f32 0.0, %v4683
        %v4685 = vpop.f32.mrb[0].mxu0
        %4686 = vmatprep.mubr.f32.mxu0 0.0
        %4687 = vmatmul.mubr.f32.gmra.mrb[0].mxu0 %v4521
        %v4688 = vpop.f32.mrb[0].mxu0
        %v4689 = vadd.f32 0.0, %v4688
        %v4690 = vpop.f32.mrb[0].mxu0
        %4691 = vmatprep.mubr.f32.mxu0 0.0
        %4692 = vmatmul.mubr.f32.gmra.mrb[0].mxu0 %v4524
        %v4693 = vpop.f32.mrb[0].mxu0
        %v4694 = vadd.f32 0.0, %v4693
        %v4695 = vpop.f32.mrb[0].mxu0
        %4696 = vmatprep.mubr.f32.mxu0 0.0
        %4697 = vmatmul.mubr.f32.gmra.mrb[0].mxu0 %v4527
        %v4698 = vpop.f32.mrb[0].mxu0
        %v4699 = vadd.f32 0.0, %v4698
        %v4700 = vpop.f32.mrb[0].mxu0
        %4701 = vmatprep.mubr.f32.mxu0 0.0
        %4702 = vmatmul.mubr.f32.gmra.mrb[0].mxu0 %v4530
        %v4703 = vpop.f32.mrb[0].mxu0
        %v4704 = vadd.f32 0.0, %v4703
        %v4705 = vpop.f32.mrb[0].mxu0
        %4706 = vmatprep.mubr.f32.mxu0 0.0
        %4707 = vmatmul.mubr.f32.gmra.mrb[0].mxu0 %v4533
        %v4708 = vpop.f32.mrb[0].mxu0
        %v4709 = vadd.f32 0.0, %v4708
        %v4710 = vpop.f32.mrb[0].mxu0
        %4711 = vmatprep.mubr.f32.mxu0 0.0
        %4712 = vmatmul.mubr.f32.gmra.mrb[0].mxu0 %v4536
        %v4713 = vpop.f32.mrb[0].mxu0
        %v4714 = vadd.f32 0.0, %v4713
        %v4715 = vpop.f32.mrb[0].mxu0
        %4716 = vmatprep.mubr.f32.mxu0 0.0
        %4717 = vmatmul.mubr.f32.gmra.mrb[0].mxu0 %v4539
        %v4718 = vpop.f32.mrb[0].mxu0
        %v4719 = vadd.f32 0.0, %v4718
        %v4720 = vpop.f32.mrb[0].mxu0
        %4721 = vmatprep.mubr.f32.mxu0 0.0
        %4722 = vmatmul.mubr.f32.gmra.mrb[0].mxu0 %v4542
        %v4723 = vpop.f32.mrb[0].mxu0
        %v4724 = vadd.f32 0.0, %v4723
        %v4725 = vpop.f32.mrb[0].mxu0
        %4726 = vmatprep.mubr.f32.mxu0 0.0
        %4727 = vmatmul.mubr.f32.gmra.mrb[0].mxu0 %v4545
        %v4728 = vpop.f32.mrb[0].mxu0
        %v4729 = vadd.f32 0.0, %v4728
        %v4730 = vpop.f32.mrb[0].mxu0
        %4731 = vmatprep.mubr.f32.mxu0 0.0
        %4732 = vmatmul.mubr.f32.gmra.mrb[0].mxu0 %v4548
        %v4733 = vpop.f32.mrb[0].mxu0
        %v4734 = vadd.f32 0.0, %v4733
        %v4735 = vpop.f32.mrb[0].mxu0
        %4736 = vmatprep.mubr.f32.mxu0 0.0
        %4737 = vmatmul.mubr.f32.gmra.mrb[0].mxu0 %v4551
        %v4738 = vpop.f32.mrb[0].mxu0
        %v4739 = vadd.f32 0.0, %v4738
        %v4740 = vpop.f32.mrb[0].mxu0
        %4741 = vmatprep.mubr.f32.mxu0 0.0
        %4742 = vmatmul.mubr.f32.gmra.mrb[0].mxu0 %v4554
        %v4743 = vpop.f32.mrb[0].mxu0
        %v4744 = vadd.f32 0.0, %v4743
        %v4745 = vpop.f32.mrb[0].mxu0
        %4746 = vmatprep.mubr.f32.mxu0 0.0
        %4747 = vmatmul.mubr.f32.gmra.mrb[0].mxu0 %v4557
        %v4748 = vpop.f32.mrb[0].mxu0
        %v4749 = vadd.f32 0.0, %v4748
        %v4750 = vpop.f32.mrb[0].mxu0
        %4751 = vmatprep.mubr.f32.mxu0 0.0
        %4752 = vmatmul.mubr.f32.gmra.mrb[0].mxu0 %v4560
        %v4753 = vpop.f32.mrb[0].mxu0
        %v4754 = vadd.f32 0.0, %v4753
        %v4755 = vpop.f32.mrb[0].mxu0
        %4756 = vmatprep.mubr.f32.mxu0 0.0
        %4757 = vmatmul.mubr.f32.gmra.mrb[0].mxu0 %v4563
        %v4758 = vpop.f32.mrb[0].mxu0
        %v4759 = vadd.f32 0.0, %v4758
        %v4760 = vpop.f32.mrb[0].mxu0
        %4761 = vmatprep.mubr.f32.mxu0 0.0
        %4762 = vmatmul.mubr.f32.gmra.mrb[0].mxu0 %v4566
        %v4763 = vpop.f32.mrb[0].mxu0
        %v4764 = vadd.f32 0.0, %v4763
        %v4765 = vpop.f32.mrb[0].mxu0
        %4766 = vmatprep.mubr.f32.mxu0 0.0
        %4767 = vmatmul.mubr.f32.gmra.mrb[0].mxu0 %v4569
        %v4768 = vpop.f32.mrb[0].mxu0
        %v4769 = vadd.f32 0.0, %v4768
        %v4770 = vpop.f32.mrb[0].mxu0
        %4771 = vmatprep.mubr.f32.mxu0 0.0
        %4772 = vmatmul.mubr.f32.gmra.mrb[0].mxu0 %v4572
        %v4773 = vpop.f32.mrb[0].mxu0
        %v4774 = vadd.f32 0.0, %v4773
        %v4775 = vpop.f32.mrb[0].mxu0
        %4776 = vmatprep.mubr.f32.mxu0 0.0
        %4777 = vmatmul.mubr.f32.gmra.mrb[0].mxu0 %v4575
        %v4778 = vpop.f32.mrb[0].mxu0
        %v4779 = vadd.f32 0.0, %v4778
        %v4780 = vpop.f32.mrb[0].mxu0
        %4781 = vmatprep.mubr.f32.mxu0 0.0
        %4782 = vmatmul.mubr.f32.gmra.mrb[0].mxu0 %v4578
        %v4783 = vpop.f32.mrb[0].mxu0
        %v4784 = vadd.f32 0.0, %v4783
        %v4785 = vpop.f32.mrb[0].mxu0
        %4786 = vmatprep.mubr.f32.mxu0 0.0
        %4787 = vmatmul.mubr.f32.gmra.mrb[0].mxu0 %v4581
        %v4788 = vpop.f32.mrb[0].mxu0
        %v4789 = vadd.f32 0.0, %v4788
        %v4790 = vpop.f32.mrb[0].mxu0
        %4791 = vmatprep.mubr.f32.mxu0 0.0
        %4792 = vmatmul.mubr.f32.gmra.mrb[0].mxu0 %v4584
        %v4793 = vpop.f32.mrb[0].mxu0
        %v4794 = vadd.f32 0.0, %v4793
        %v4795 = vpop.f32.mrb[0].mxu0
        %4796 = vmatprep.mubr.f32.mxu0 0.0
        %4797 = vmatmul.mubr.f32.gmra.mrb[0].mxu0 %v4587
        %v4798 = vpop.f32.mrb[0].mxu0
        %v4799 = vadd.f32 0.0, %v4798
        %v4800 = vpop.f32.mrb[0].mxu0
        %4801 = vmatprep.mubr.f32.mxu0 0.0
        %4802 = vmatmul.mubr.f32.gmra.mrb[0].mxu0 %v4590
        %v4803 = vpop.f32.mrb[0].mxu0
        %v4804 = vadd.f32 0.0, %v4803
        %v4805 = vpop.f32.mrb[0].mxu0
        %4806 = vmatprep.mubr.f32.mxu0 0.0
        %4807 = vmatmul.mubr.f32.gmra.mrb[0].mxu0 %v4593
        %v4808 = vpop.f32.mrb[0].mxu0
        %v4809 = vadd.f32 0.0, %v4808
        %v4810 = vpop.f32.mrb[0].mxu0
        %4811 = vmatprep.mubr.f32.mxu0 0.0
        %4812 = vmatmul.mubr.f32.gmra.mrb[0].mxu0 %v4596
        %v4813 = vpop.f32.mrb[0].mxu0
        %v4814 = vadd.f32 0.0, %v4813
        %v4815 = vpop.f32.mrb[0].mxu0
        %4816 = vmatprep.mubr.f32.mxu0 0.0
        %4817 = vmatmul.mubr.f32.gmra.mrb[0].mxu0 %v4599
        %v4818 = vpop.f32.mrb[0].mxu0
        %v4819 = vadd.f32 0.0, %v4818
        %v4820 = vpop.f32.mrb[0].mxu0
        %4821 = vmatprep.mubr.f32.mxu0 0.0
        %4822 = vmatmul.mubr.f32.gmra.mrb[0].mxu0 %v4602
        %v4823 = vpop.f32.mrb[0].mxu0
        %v4824 = vadd.f32 0.0, %v4823
        %v4825 = vpop.f32.mrb[0].mxu0
        %4826 = vmatprep.mubr.f32.mxu0 0.0
        %4827 = vmatmul.mubr.f32.gmra.mrb[0].mxu0 %v4605
        %v4828 = vpop.f32.mrb[0].mxu0
        %v4829 = vadd.f32 0.0, %v4828
        %v4830 = vpop.f32.mrb[0].mxu0
        %4831 = vdwg.mxu0
        %v4833 = vsel %vm169, %v4437, 0
        %v4836 = vsel %vm169, %v4438, 0
        %v4839 = vsel %vm169, %v4439, 0
        %v4842 = vsel %vm169, %v4440, 0
        %v4845 = vsel %vm169, %v4441, 0
        %v4848 = vsel %vm169, %v4442, 0
        %v4851 = vsel %vm169, %v4443, 0
        %v4854 = vsel %vm169, %v4444, 0
        %v4857 = vsel %vm169, %v4445, 0
        %v4860 = vsel %vm169, %v4446, 0
        %v4863 = vsel %vm169, %v4447, 0
        %v4866 = vsel %vm169, %v4448, 0
        %v4869 = vsel %vm169, %v4449, 0
        %v4872 = vsel %vm169, %v4450, 0
        %v4875 = vsel %vm169, %v4451, 0
        %v4878 = vsel %vm169, %v4452, 0
        %v4881 = vsel %vm169, %v4453, 0
        %v4884 = vsel %vm169, %v4454, 0
        %v4887 = vsel %vm169, %v4455, 0
        %v4890 = vsel %vm169, %v4456, 0
        %v4893 = vsel %vm169, %v4457, 0
        %v4896 = vsel %vm169, %v4458, 0
        %v4899 = vsel %vm169, %v4459, 0
        %v4902 = vsel %vm169, %v4460, 0
        %v4905 = vsel %vm169, %v4461, 0
        %v4908 = vsel %vm169, %v4462, 0
        %v4911 = vsel %vm169, %v4463, 0
        %v4914 = vsel %vm169, %v4464, 0
        %v4917 = vsel %vm169, %v4465, 0
        %v4920 = vsel %vm169, %v4466, 0
        %v4923 = vsel %vm169, %v4467, 0
        %v4926 = vsel %vm169, %v4468, 0
        %4928 = vmatprep.subr.mxu0 0.0
        %4929 = vmatpush1.msra.mxu0 %v4470
        %4930 = vmatprep.subr.mxu0 0.0
        %4931 = vmatpush1.msra.mxu0 %v4471
        %4932 = vmatprep.subr.mxu0 0.0
        %4933 = vmatpush1.msra.mxu0 %v4472
        %4934 = vmatprep.subr.mxu0 0.0
        %4935 = vmatpush1.msra.mxu0 %v4473
        %4936 = vmatprep.subr.mxu0 0.0
        %4937 = vmatpush1.msra.mxu0 0.0
        %4938 = vmatprep.subr.mxu0 0.0
        %4939 = vmatpush1.msra.mxu0 0.0
        %4940 = vmatprep.subr.mxu0 0.0
        %4941 = vmatpush1.msra.mxu0 0.0
        %4942 = vmatprep.subr.mxu0 0.0
        %4943 = vmatpush1.msra.mxu0 0.0
        %4944 = vmatprep.subr.mxu0 0.0
        %4945 = vmatpush1.msra.mxu0 0.0
        %4946 = vmatprep.subr.mxu0 0.0
        %4947 = vmatpush1.msra.mxu0 0.0
        %4948 = vmatprep.subr.mxu0 0.0
        %4949 = vmatpush1.msra.mxu0 0.0
        %4950 = vmatprep.subr.mxu0 0.0
        %4951 = vmatpush1.msra.mxu0 0.0
        %4952 = vmatprep.subr.mxu0 0.0
        %4953 = vmatpush1.msra.mxu0 0.0
        %4954 = vmatprep.subr.mxu0 0.0
        %4955 = vmatpush1.msra.mxu0 0.0
        %4956 = vmatprep.subr.mxu0 0.0
        %4957 = vmatpush1.msra.mxu0 0.0
        %4958 = vmatprep.subr.mxu0 0.0
        %4959 = vmatpush1.msra.mxu0 0.0
        %4960 = vmatprep.subr.mxu0 0.0
        %4961 = vmatpush1.msra.mxu0 0.0
        %4962 = vmatprep.subr.mxu0 0.0
        %4963 = vmatpush1.msra.mxu0 0.0
        %4964 = vmatprep.subr.mxu0 0.0
        %4965 = vmatpush1.msra.mxu0 0.0
        %4966 = vmatprep.subr.mxu0 0.0
        %4967 = vmatpush1.msra.mxu0 0.0
        %4968 = vmatprep.subr.mxu0 0.0
        %4969 = vmatpush1.msra.mxu0 0.0
        %4970 = vmatprep.subr.mxu0 0.0
        %4971 = vmatpush1.msra.mxu0 0.0
        %4972 = vmatprep.subr.mxu0 0.0
        %4973 = vmatpush1.msra.mxu0 0.0
        %4974 = vmatprep.subr.mxu0 0.0
        %4975 = vmatpush1.msra.mxu0 0.0
        %4976 = vmatprep.subr.mxu0 0.0
        %4977 = vmatpush1.msra.mxu0 0.0
        %4978 = vmatprep.subr.mxu0 0.0
        %4979 = vmatpush1.msra.mxu0 0.0
        %4980 = vmatprep.subr.mxu0 0.0
        %4981 = vmatpush1.msra.mxu0 0.0
        %4982 = vmatprep.subr.mxu0 0.0
        %4983 = vmatpush1.msra.mxu0 0.0
        %4984 = vmatprep.subr.mxu0 0.0
        %4985 = vmatpush1.msra.mxu0 0.0
        %4986 = vmatprep.subr.mxu0 0.0
        %4987 = vmatpush1.msra.mxu0 0.0
        %4988 = vmatprep.subr.mxu0 0.0
        %4989 = vmatpush1.msra.mxu0 0.0
        %4990 = vmatprep.subr.mxu0 0.0
        %4991 = vmatpush1.msra.mxu0 0.0
        %4992 = vmatprep.mubr.f32.mxu0 0.0
        %4993 = vmatmul.mubr.f32.gmra.mrb[0].mxu0 %v4833
        %v4994 = vpop.f32.mrb[0].mxu0
        %v4995 = vadd.f32 %v4674, %v4994
        %v4996 = vpop.f32.mrb[0].mxu0
        %4997 = vmatprep.mubr.f32.mxu0 0.0
        %4998 = vmatmul.mubr.f32.gmra.mrb[0].mxu0 %v4836
        %v4999 = vpop.f32.mrb[0].mxu0
        %v5000 = vadd.f32 %v4679, %v4999
        %v5001 = vpop.f32.mrb[0].mxu0
        %5002 = vmatprep.mubr.f32.mxu0 0.0
        %5003 = vmatmul.mubr.f32.gmra.mrb[0].mxu0 %v4839
        %v5004 = vpop.f32.mrb[0].mxu0
        %v5005 = vadd.f32 %v4684, %v5004
        %v5006 = vpop.f32.mrb[0].mxu0
        %5007 = vmatprep.mubr.f32.mxu0 0.0
        %5008 = vmatmul.mubr.f32.gmra.mrb[0].mxu0 %v4842
        %v5009 = vpop.f32.mrb[0].mxu0
        %v5010 = vadd.f32 %v4689, %v5009
        %v5011 = vpop.f32.mrb[0].mxu0
        %5012 = vmatprep.mubr.f32.mxu0 0.0
        %5013 = vmatmul.mubr.f32.gmra.mrb[0].mxu0 %v4845
        %v5014 = vpop.f32.mrb[0].mxu0
        %v5015 = vadd.f32 %v4694, %v5014
        %v5016 = vpop.f32.mrb[0].mxu0
        %5017 = vmatprep.mubr.f32.mxu0 0.0
        %5018 = vmatmul.mubr.f32.gmra.mrb[0].mxu0 %v4848
        %v5019 = vpop.f32.mrb[0].mxu0
        %v5020 = vadd.f32 %v4699, %v5019
        %v5021 = vpop.f32.mrb[0].mxu0
        %5022 = vmatprep.mubr.f32.mxu0 0.0
        %5023 = vmatmul.mubr.f32.gmra.mrb[0].mxu0 %v4851
        %v5024 = vpop.f32.mrb[0].mxu0
        %v5025 = vadd.f32 %v4704, %v5024
        %v5026 = vpop.f32.mrb[0].mxu0
        %5027 = vmatprep.mubr.f32.mxu0 0.0
        %5028 = vmatmul.mubr.f32.gmra.mrb[0].mxu0 %v4854
        %v5029 = vpop.f32.mrb[0].mxu0
        %v5030 = vadd.f32 %v4709, %v5029
        %v5031 = vpop.f32.mrb[0].mxu0
        %5032 = vmatprep.mubr.f32.mxu0 0.0
        %5033 = vmatmul.mubr.f32.gmra.mrb[0].mxu0 %v4857
        %v5034 = vpop.f32.mrb[0].mxu0
        %v5035 = vadd.f32 %v4714, %v5034
        %v5036 = vpop.f32.mrb[0].mxu0
        %5037 = vmatprep.mubr.f32.mxu0 0.0
        %5038 = vmatmul.mubr.f32.gmra.mrb[0].mxu0 %v4860
        %v5039 = vpop.f32.mrb[0].mxu0
        %v5040 = vadd.f32 %v4719, %v5039
        %v5041 = vpop.f32.mrb[0].mxu0
        %5042 = vmatprep.mubr.f32.mxu0 0.0
        %5043 = vmatmul.mubr.f32.gmra.mrb[0].mxu0 %v4863
        %v5044 = vpop.f32.mrb[0].mxu0
        %v5045 = vadd.f32 %v4724, %v5044
        %v5046 = vpop.f32.mrb[0].mxu0
        %5047 = vmatprep.mubr.f32.mxu0 0.0
        %5048 = vmatmul.mubr.f32.gmra.mrb[0].mxu0 %v4866
        %v5049 = vpop.f32.mrb[0].mxu0
        %v5050 = vadd.f32 %v4729, %v5049
        %v5051 = vpop.f32.mrb[0].mxu0
        %5052 = vmatprep.mubr.f32.mxu0 0.0
        %5053 = vmatmul.mubr.f32.gmra.mrb[0].mxu0 %v4869
        %v5054 = vpop.f32.mrb[0].mxu0
        %v5055 = vadd.f32 %v4734, %v5054
        %v5056 = vpop.f32.mrb[0].mxu0
        %5057 = vmatprep.mubr.f32.mxu0 0.0
        %5058 = vmatmul.mubr.f32.gmra.mrb[0].mxu0 %v4872
        %v5059 = vpop.f32.mrb[0].mxu0
        %v5060 = vadd.f32 %v4739, %v5059
        %v5061 = vpop.f32.mrb[0].mxu0
        %5062 = vmatprep.mubr.f32.mxu0 0.0
        %5063 = vmatmul.mubr.f32.gmra.mrb[0].mxu0 %v4875
        %v5064 = vpop.f32.mrb[0].mxu0
        %v5065 = vadd.f32 %v4744, %v5064
        %v5066 = vpop.f32.mrb[0].mxu0
        %5067 = vmatprep.mubr.f32.mxu0 0.0
        %5068 = vmatmul.mubr.f32.gmra.mrb[0].mxu0 %v4878
        %v5069 = vpop.f32.mrb[0].mxu0
        %v5070 = vadd.f32 %v4749, %v5069
        %v5071 = vpop.f32.mrb[0].mxu0
        %5072 = vmatprep.mubr.f32.mxu0 0.0
        %5073 = vmatmul.mubr.f32.gmra.mrb[0].mxu0 %v4881
        %v5074 = vpop.f32.mrb[0].mxu0
        %v5075 = vadd.f32 %v4754, %v5074
        %v5076 = vpop.f32.mrb[0].mxu0
        %5077 = vmatprep.mubr.f32.mxu0 0.0
        %5078 = vmatmul.mubr.f32.gmra.mrb[0].mxu0 %v4884
        %v5079 = vpop.f32.mrb[0].mxu0
        %v5080 = vadd.f32 %v4759, %v5079
        %v5081 = vpop.f32.mrb[0].mxu0
        %5082 = vmatprep.mubr.f32.mxu0 0.0
        %5083 = vmatmul.mubr.f32.gmra.mrb[0].mxu0 %v4887
        %v5084 = vpop.f32.mrb[0].mxu0
        %v5085 = vadd.f32 %v4764, %v5084
        %v5086 = vpop.f32.mrb[0].mxu0
        %5087 = vmatprep.mubr.f32.mxu0 0.0
        %5088 = vmatmul.mubr.f32.gmra.mrb[0].mxu0 %v4890
        %v5089 = vpop.f32.mrb[0].mxu0
        %v5090 = vadd.f32 %v4769, %v5089
        %v5091 = vpop.f32.mrb[0].mxu0
        %5092 = vmatprep.mubr.f32.mxu0 0.0
        %5093 = vmatmul.mubr.f32.gmra.mrb[0].mxu0 %v4893
        %v5094 = vpop.f32.mrb[0].mxu0
        %v5095 = vadd.f32 %v4774, %v5094
        %v5096 = vpop.f32.mrb[0].mxu0
        %5097 = vmatprep.mubr.f32.mxu0 0.0
        %5098 = vmatmul.mubr.f32.gmra.mrb[0].mxu0 %v4896
        %v5099 = vpop.f32.mrb[0].mxu0
        %v5100 = vadd.f32 %v4779, %v5099
        %v5101 = vpop.f32.mrb[0].mxu0
        %5102 = vmatprep.mubr.f32.mxu0 0.0
        %5103 = vmatmul.mubr.f32.gmra.mrb[0].mxu0 %v4899
        %v5104 = vpop.f32.mrb[0].mxu0
        %v5105 = vadd.f32 %v4784, %v5104
        %v5106 = vpop.f32.mrb[0].mxu0
        %5107 = vmatprep.mubr.f32.mxu0 0.0
        %5108 = vmatmul.mubr.f32.gmra.mrb[0].mxu0 %v4902
        %v5109 = vpop.f32.mrb[0].mxu0
        %v5110 = vadd.f32 %v4789, %v5109
        %v5111 = vpop.f32.mrb[0].mxu0
        %5112 = vmatprep.mubr.f32.mxu0 0.0
        %5113 = vmatmul.mubr.f32.gmra.mrb[0].mxu0 %v4905
        %v5114 = vpop.f32.mrb[0].mxu0
        %v5115 = vadd.f32 %v4794, %v5114
        %v5116 = vpop.f32.mrb[0].mxu0
        %5117 = vmatprep.mubr.f32.mxu0 0.0
        %5118 = vmatmul.mubr.f32.gmra.mrb[0].mxu0 %v4908
        %v5119 = vpop.f32.mrb[0].mxu0
        %v5120 = vadd.f32 %v4799, %v5119
        %v5121 = vpop.f32.mrb[0].mxu0
        %5122 = vmatprep.mubr.f32.mxu0 0.0
        %5123 = vmatmul.mubr.f32.gmra.mrb[0].mxu0 %v4911
        %v5124 = vpop.f32.mrb[0].mxu0
        %v5125 = vadd.f32 %v4804, %v5124
        %v5126 = vpop.f32.mrb[0].mxu0
        %5127 = vmatprep.mubr.f32.mxu0 0.0
        %5128 = vmatmul.mubr.f32.gmra.mrb[0].mxu0 %v4914
        %v5129 = vpop.f32.mrb[0].mxu0
        %v5130 = vadd.f32 %v4809, %v5129
        %v5131 = vpop.f32.mrb[0].mxu0
        %5132 = vmatprep.mubr.f32.mxu0 0.0
        %5133 = vmatmul.mubr.f32.gmra.mrb[0].mxu0 %v4917
        %v5134 = vpop.f32.mrb[0].mxu0
        %v5135 = vadd.f32 %v4814, %v5134
        %v5136 = vpop.f32.mrb[0].mxu0
        %5137 = vmatprep.mubr.f32.mxu0 0.0
        %5138 = vmatmul.mubr.f32.gmra.mrb[0].mxu0 %v4920
        %v5139 = vpop.f32.mrb[0].mxu0
        %v5140 = vadd.f32 %v4819, %v5139
        %v5141 = vpop.f32.mrb[0].mxu0
        %5142 = vmatprep.mubr.f32.mxu0 0.0
        %5143 = vmatmul.mubr.f32.gmra.mrb[0].mxu0 %v4923
        %v5144 = vpop.f32.mrb[0].mxu0
        %v5145 = vadd.f32 %v4824, %v5144
        %v5146 = vpop.f32.mrb[0].mxu0
        %5147 = vmatprep.mubr.f32.mxu0 0.0
        %5148 = vmatmul.mubr.f32.gmra.mrb[0].mxu0 %v4926
        %v5149 = vpop.f32.mrb[0].mxu0
        %v5150 = vadd.f32 %v4829, %v5149
        %v5151 = vpop.f32.mrb[0].mxu0
        %5152 = vdwg.mxu0
        %v5153 = vld [vmem:[%s252] sm:$0xff]
        %v5154 = vld [vmem:[%s252 + $0x8] sm:$0xff]
        %v5155 = vld [vmem:[%s252 + $0x18] sm:$0xff]
        %v5156 = vld [vmem:[%s252 + $0x20] sm:$0xff]
        %v5157 = vld [vmem:[%s252 + $0x30] sm:$0xff]
        %v5158 = vld [vmem:[%s252 + $0x38] sm:$0xff]
        %v5159 = vld [vmem:[%s252 + $0x48] sm:$0xff]
        %v5160 = vld [vmem:[%s252 + $0x50] sm:$0xff]
        %v5161 = vld [vmem:[%s252 + $0x60] sm:$0xff]
        %v5162 = vld [vmem:[%s252 + $0x68] sm:$0xff]
        %v5163 = vld [vmem:[%s252 + $0x78] sm:$0xff]
        %v5164 = vld [vmem:[%s252 + $0x80] sm:$0xff]
        %v5165 = vld [vmem:[%s252 + $0x90] sm:$0xff]
        %v5166 = vld [vmem:[%s252 + $0x98] sm:$0xff]
        %v5167 = vld [vmem:[%s252 + $0xa8] sm:$0xff]
        %v5168 = vld [vmem:[%s252 + $0xb0] sm:$0xff]
        %v5169 = vld [vmem:[%s252 + $0xc0] sm:$0xff]
        %v5170 = vld [vmem:[%s252 + $0xc8] sm:$0xff]
        %v5171 = vld [vmem:[%s252 + $0xd8] sm:$0xff]
        %v5172 = vld [vmem:[%s252 + $0xe0] sm:$0xff]
        %v5173 = vld [vmem:[%s252 + $0xf0] sm:$0xff]
        %v5174 = vld [vmem:[%s252 + $0xf8] sm:$0xff]
        %v5175 = vld [vmem:[%s252 + $0x108] sm:$0xff]
        %v5176 = vld [vmem:[%s252 + $0x110] sm:$0xff]
        %v5177 = vld [vmem:[%s252 + $0x120] sm:$0xff]
        %v5178 = vld [vmem:[%s252 + $0x128] sm:$0xff]
        %v5179 = vld [vmem:[%s252 + $0x138] sm:$0xff]
        %v5180 = vld [vmem:[%s252 + $0x140] sm:$0xff]
        %v5181 = vld [vmem:[%s252 + $0x150] sm:$0xff]
        %v5182 = vld [vmem:[%s252 + $0x158] sm:$0xff]
        %v5183 = vld [vmem:[%s252 + $0x168] sm:$0xff]
        %v5184 = vld [vmem:[%s252 + $0x170] sm:$0xff]
        %s5185 = scalar_lea.vmem %s1, 352
        %v5186 = vld [vmem:[%s5185] sm:$0xff]
        %v5187 = vld [vmem:[%s5185 + $0x8] sm:$0xff]
        %v5188 = vld [vmem:[%s5185 + $0x10] sm:$0xff]
        %v5189 = vld [vmem:[%s5185 + $0x18] sm:$0xff]
        %v5191 = vsel %vm169, %v5153, 0
        %v5194 = vsel %vm169, %v5154, 0
        %v5197 = vsel %vm169, %v5155, 0
        %v5200 = vsel %vm169, %v5156, 0
        %v5203 = vsel %vm169, %v5157, 0
        %v5206 = vsel %vm169, %v5158, 0
        %v5209 = vsel %vm169, %v5159, 0
        %v5212 = vsel %vm169, %v5160, 0
        %v5215 = vsel %vm169, %v5161, 0
        %v5218 = vsel %vm169, %v5162, 0
        %v5221 = vsel %vm169, %v5163, 0
        %v5224 = vsel %vm169, %v5164, 0
        %v5227 = vsel %vm169, %v5165, 0
        %v5230 = vsel %vm169, %v5166, 0
        %v5233 = vsel %vm169, %v5167, 0
        %v5236 = vsel %vm169, %v5168, 0
        %v5239 = vsel %vm169, %v5169, 0
        %v5242 = vsel %vm169, %v5170, 0
        %v5245 = vsel %vm169, %v5171, 0
        %v5248 = vsel %vm169, %v5172, 0
        %v5251 = vsel %vm169, %v5173, 0
        %v5254 = vsel %vm169, %v5174, 0
        %v5257 = vsel %vm169, %v5175, 0
        %v5260 = vsel %vm169, %v5176, 0
        %v5263 = vsel %vm169, %v5177, 0
        %v5266 = vsel %vm169, %v5178, 0
        %v5269 = vsel %vm169, %v5179, 0
        %v5272 = vsel %vm169, %v5180, 0
        %v5275 = vsel %vm169, %v5181, 0
        %v5278 = vsel %vm169, %v5182, 0
        %v5281 = vsel %vm169, %v5183, 0
        %v5284 = vsel %vm169, %v5184, 0
        %5286 = vmatprep.subr.mxu0 0.0
        %5287 = vmatpush1.msra.mxu0 %v5186
        %5288 = vmatprep.subr.mxu0 0.0
        %5289 = vmatpush1.msra.mxu0 %v5187
        %5290 = vmatprep.subr.mxu0 0.0
        %5291 = vmatpush1.msra.mxu0 %v5188
        %5292 = vmatprep.subr.mxu0 0.0
        %5293 = vmatpush1.msra.mxu0 %v5189
        %5294 = vmatprep.subr.mxu0 0.0
        %5295 = vmatpush1.msra.mxu0 0.0
        %5296 = vmatprep.subr.mxu0 0.0
        %5297 = vmatpush1.msra.mxu0 0.0
        %5298 = vmatprep.subr.mxu0 0.0
        %5299 = vmatpush1.msra.mxu0 0.0
        %5300 = vmatprep.subr.mxu0 0.0
        %5301 = vmatpush1.msra.mxu0 0.0
        %5302 = vmatprep.subr.mxu0 0.0
        %5303 = vmatpush1.msra.mxu0 0.0
        %5304 = vmatprep.subr.mxu0 0.0
        %5305 = vmatpush1.msra.mxu0 0.0
        %5306 = vmatprep.subr.mxu0 0.0
        %5307 = vmatpush1.msra.mxu0 0.0
        %5308 = vmatprep.subr.mxu0 0.0
        %5309 = vmatpush1.msra.mxu0 0.0
        %5310 = vmatprep.subr.mxu0 0.0
        %5311 = vmatpush1.msra.mxu0 0.0
        %5312 = vmatprep.subr.mxu0 0.0
        %5313 = vmatpush1.msra.mxu0 0.0
        %5314 = vmatprep.subr.mxu0 0.0
        %5315 = vmatpush1.msra.mxu0 0.0
        %5316 = vmatprep.subr.mxu0 0.0
        %5317 = vmatpush1.msra.mxu0 0.0
        %5318 = vmatprep.subr.mxu0 0.0
        %5319 = vmatpush1.msra.mxu0 0.0
        %5320 = vmatprep.subr.mxu0 0.0
        %5321 = vmatpush1.msra.mxu0 0.0
        %5322 = vmatprep.subr.mxu0 0.0
        %5323 = vmatpush1.msra.mxu0 0.0
        %5324 = vmatprep.subr.mxu0 0.0
        %5325 = vmatpush1.msra.mxu0 0.0
        %5326 = vmatprep.subr.mxu0 0.0
        %5327 = vmatpush1.msra.mxu0 0.0
        %5328 = vmatprep.subr.mxu0 0.0
        %5329 = vmatpush1.msra.mxu0 0.0
        %5330 = vmatprep.subr.mxu0 0.0
        %5331 = vmatpush1.msra.mxu0 0.0
        %5332 = vmatprep.subr.mxu0 0.0
        %5333 = vmatpush1.msra.mxu0 0.0
        %5334 = vmatprep.subr.mxu0 0.0
        %5335 = vmatpush1.msra.mxu0 0.0
        %5336 = vmatprep.subr.mxu0 0.0
        %5337 = vmatpush1.msra.mxu0 0.0
        %5338 = vmatprep.subr.mxu0 0.0
        %5339 = vmatpush1.msra.mxu0 0.0
        %5340 = vmatprep.subr.mxu0 0.0
        %5341 = vmatpush1.msra.mxu0 0.0
        %5342 = vmatprep.subr.mxu0 0.0
        %5343 = vmatpush1.msra.mxu0 0.0
        %5344 = vmatprep.subr.mxu0 0.0
        %5345 = vmatpush1.msra.mxu0 0.0
        %5346 = vmatprep.subr.mxu0 0.0
        %5347 = vmatpush1.msra.mxu0 0.0
        %5348 = vmatprep.subr.mxu0 0.0
        %5349 = vmatpush1.msra.mxu0 0.0
        %5350 = vmatprep.mubr.f32.mxu0 0.0
        %5351 = vmatmul.mubr.f32.gmra.mrb[0].mxu0 %v5191
        %v5352 = vpop.f32.mrb[0].mxu0
        %v5353 = vadd.f32 0.0, %v5352
        %v5354 = vpop.f32.mrb[0].mxu0
        %5355 = vmatprep.mubr.f32.mxu0 0.0
        %5356 = vmatmul.mubr.f32.gmra.mrb[0].mxu0 %v5194
        %v5357 = vpop.f32.mrb[0].mxu0
        %v5358 = vadd.f32 0.0, %v5357
        %v5359 = vpop.f32.mrb[0].mxu0
        %5360 = vmatprep.mubr.f32.mxu0 0.0
        %5361 = vmatmul.mubr.f32.gmra.mrb[0].mxu0 %v5197
        %v5362 = vpop.f32.mrb[0].mxu0
        %v5363 = vadd.f32 0.0, %v5362
        %v5364 = vpop.f32.mrb[0].mxu0
        %5365 = vmatprep.mubr.f32.mxu0 0.0
        %5366 = vmatmul.mubr.f32.gmra.mrb[0].mxu0 %v5200
        %v5367 = vpop.f32.mrb[0].mxu0
        %v5368 = vadd.f32 0.0, %v5367
        %v5369 = vpop.f32.mrb[0].mxu0
        %5370 = vmatprep.mubr.f32.mxu0 0.0
        %5371 = vmatmul.mubr.f32.gmra.mrb[0].mxu0 %v5203
        %v5372 = vpop.f32.mrb[0].mxu0
        %v5373 = vadd.f32 0.0, %v5372
        %v5374 = vpop.f32.mrb[0].mxu0
        %5375 = vmatprep.mubr.f32.mxu0 0.0
        %5376 = vmatmul.mubr.f32.gmra.mrb[0].mxu0 %v5206
        %v5377 = vpop.f32.mrb[0].mxu0
        %v5378 = vadd.f32 0.0, %v5377
        %v5379 = vpop.f32.mrb[0].mxu0
        %5380 = vmatprep.mubr.f32.mxu0 0.0
        %5381 = vmatmul.mubr.f32.gmra.mrb[0].mxu0 %v5209
        %v5382 = vpop.f32.mrb[0].mxu0
        %v5383 = vadd.f32 0.0, %v5382
        %v5384 = vpop.f32.mrb[0].mxu0
        %5385 = vmatprep.mubr.f32.mxu0 0.0
        %5386 = vmatmul.mubr.f32.gmra.mrb[0].mxu0 %v5212
        %v5387 = vpop.f32.mrb[0].mxu0
        %v5388 = vadd.f32 0.0, %v5387
        %v5389 = vpop.f32.mrb[0].mxu0
        %5390 = vmatprep.mubr.f32.mxu0 0.0
        %5391 = vmatmul.mubr.f32.gmra.mrb[0].mxu0 %v5215
        %v5392 = vpop.f32.mrb[0].mxu0
        %v5393 = vadd.f32 0.0, %v5392
        %v5394 = vpop.f32.mrb[0].mxu0
        %5395 = vmatprep.mubr.f32.mxu0 0.0
        %5396 = vmatmul.mubr.f32.gmra.mrb[0].mxu0 %v5218
        %v5397 = vpop.f32.mrb[0].mxu0
        %v5398 = vadd.f32 0.0, %v5397
        %v5399 = vpop.f32.mrb[0].mxu0
        %5400 = vmatprep.mubr.f32.mxu0 0.0
        %5401 = vmatmul.mubr.f32.gmra.mrb[0].mxu0 %v5221
        %v5402 = vpop.f32.mrb[0].mxu0
        %v5403 = vadd.f32 0.0, %v5402
        %v5404 = vpop.f32.mrb[0].mxu0
        %5405 = vmatprep.mubr.f32.mxu0 0.0
        %5406 = vmatmul.mubr.f32.gmra.mrb[0].mxu0 %v5224
        %v5407 = vpop.f32.mrb[0].mxu0
        %v5408 = vadd.f32 0.0, %v5407
        %v5409 = vpop.f32.mrb[0].mxu0
        %5410 = vmatprep.mubr.f32.mxu0 0.0
        %5411 = vmatmul.mubr.f32.gmra.mrb[0].mxu0 %v5227
        %v5412 = vpop.f32.mrb[0].mxu0
        %v5413 = vadd.f32 0.0, %v5412
        %v5414 = vpop.f32.mrb[0].mxu0
        %5415 = vmatprep.mubr.f32.mxu0 0.0
        %5416 = vmatmul.mubr.f32.gmra.mrb[0].mxu0 %v5230
        %v5417 = vpop.f32.mrb[0].mxu0
        %v5418 = vadd.f32 0.0, %v5417
        %v5419 = vpop.f32.mrb[0].mxu0
        %5420 = vmatprep.mubr.f32.mxu0 0.0
        %5421 = vmatmul.mubr.f32.gmra.mrb[0].mxu0 %v5233
        %v5422 = vpop.f32.mrb[0].mxu0
        %v5423 = vadd.f32 0.0, %v5422
        %v5424 = vpop.f32.mrb[0].mxu0
        %5425 = vmatprep.mubr.f32.mxu0 0.0
        %5426 = vmatmul.mubr.f32.gmra.mrb[0].mxu0 %v5236
        %v5427 = vpop.f32.mrb[0].mxu0
        %v5428 = vadd.f32 0.0, %v5427
        %v5429 = vpop.f32.mrb[0].mxu0
        %5430 = vmatprep.mubr.f32.mxu0 0.0
        %5431 = vmatmul.mubr.f32.gmra.mrb[0].mxu0 %v5239
        %v5432 = vpop.f32.mrb[0].mxu0
        %v5433 = vadd.f32 0.0, %v5432
        %v5434 = vpop.f32.mrb[0].mxu0
        %5435 = vmatprep.mubr.f32.mxu0 0.0
        %5436 = vmatmul.mubr.f32.gmra.mrb[0].mxu0 %v5242
        %v5437 = vpop.f32.mrb[0].mxu0
        %v5438 = vadd.f32 0.0, %v5437
        %v5439 = vpop.f32.mrb[0].mxu0
        %5440 = vmatprep.mubr.f32.mxu0 0.0
        %5441 = vmatmul.mubr.f32.gmra.mrb[0].mxu0 %v5245
        %v5442 = vpop.f32.mrb[0].mxu0
        %v5443 = vadd.f32 0.0, %v5442
        %v5444 = vpop.f32.mrb[0].mxu0
        %5445 = vmatprep.mubr.f32.mxu0 0.0
        %5446 = vmatmul.mubr.f32.gmra.mrb[0].mxu0 %v5248
        %v5447 = vpop.f32.mrb[0].mxu0
        %v5448 = vadd.f32 0.0, %v5447
        %v5449 = vpop.f32.mrb[0].mxu0
        %5450 = vmatprep.mubr.f32.mxu0 0.0
        %5451 = vmatmul.mubr.f32.gmra.mrb[0].mxu0 %v5251
        %v5452 = vpop.f32.mrb[0].mxu0
        %v5453 = vadd.f32 0.0, %v5452
        %v5454 = vpop.f32.mrb[0].mxu0
        %5455 = vmatprep.mubr.f32.mxu0 0.0
        %5456 = vmatmul.mubr.f32.gmra.mrb[0].mxu0 %v5254
        %v5457 = vpop.f32.mrb[0].mxu0
        %v5458 = vadd.f32 0.0, %v5457
        %v5459 = vpop.f32.mrb[0].mxu0
        %5460 = vmatprep.mubr.f32.mxu0 0.0
        %5461 = vmatmul.mubr.f32.gmra.mrb[0].mxu0 %v5257
        %v5462 = vpop.f32.mrb[0].mxu0
        %v5463 = vadd.f32 0.0, %v5462
        %v5464 = vpop.f32.mrb[0].mxu0
        %5465 = vmatprep.mubr.f32.mxu0 0.0
        %5466 = vmatmul.mubr.f32.gmra.mrb[0].mxu0 %v5260
        %v5467 = vpop.f32.mrb[0].mxu0
        %v5468 = vadd.f32 0.0, %v5467
        %v5469 = vpop.f32.mrb[0].mxu0
        %5470 = vmatprep.mubr.f32.mxu0 0.0
        %5471 = vmatmul.mubr.f32.gmra.mrb[0].mxu0 %v5263
        %v5472 = vpop.f32.mrb[0].mxu0
        %v5473 = vadd.f32 0.0, %v5472
        %v5474 = vpop.f32.mrb[0].mxu0
        %5475 = vmatprep.mubr.f32.mxu0 0.0
        %5476 = vmatmul.mubr.f32.gmra.mrb[0].mxu0 %v5266
        %v5477 = vpop.f32.mrb[0].mxu0
        %v5478 = vadd.f32 0.0, %v5477
        %v5479 = vpop.f32.mrb[0].mxu0
        %5480 = vmatprep.mubr.f32.mxu0 0.0
        %5481 = vmatmul.mubr.f32.gmra.mrb[0].mxu0 %v5269
        %v5482 = vpop.f32.mrb[0].mxu0
        %v5483 = vadd.f32 0.0, %v5482
        %v5484 = vpop.f32.mrb[0].mxu0
        %5485 = vmatprep.mubr.f32.mxu0 0.0
        %5486 = vmatmul.mubr.f32.gmra.mrb[0].mxu0 %v5272
        %v5487 = vpop.f32.mrb[0].mxu0
        %v5488 = vadd.f32 0.0, %v5487
        %v5489 = vpop.f32.mrb[0].mxu0
        %5490 = vmatprep.mubr.f32.mxu0 0.0
        %5491 = vmatmul.mubr.f32.gmra.mrb[0].mxu0 %v5275
        %v5492 = vpop.f32.mrb[0].mxu0
        %v5493 = vadd.f32 0.0, %v5492
        %v5494 = vpop.f32.mrb[0].mxu0
        %5495 = vmatprep.mubr.f32.mxu0 0.0
        %5496 = vmatmul.mubr.f32.gmra.mrb[0].mxu0 %v5278
        %v5497 = vpop.f32.mrb[0].mxu0
        %v5498 = vadd.f32 0.0, %v5497
        %v5499 = vpop.f32.mrb[0].mxu0
        %5500 = vmatprep.mubr.f32.mxu0 0.0
        %5501 = vmatmul.mubr.f32.gmra.mrb[0].mxu0 %v5281
        %v5502 = vpop.f32.mrb[0].mxu0
        %v5503 = vadd.f32 0.0, %v5502
        %v5504 = vpop.f32.mrb[0].mxu0
        %5505 = vmatprep.mubr.f32.mxu0 0.0
        %5506 = vmatmul.mubr.f32.gmra.mrb[0].mxu0 %v5284
        %v5507 = vpop.f32.mrb[0].mxu0
        %v5508 = vadd.f32 0.0, %v5507
        %v5509 = vpop.f32.mrb[0].mxu0
        %5510 = vdwg.mxu0
        %v5511 = vadd.f32 %v4995, %v5353
        %v5512 = vadd.f32 %v5000, %v5358
        %v5513 = vadd.f32 %v5005, %v5363
        %v5514 = vadd.f32 %v5010, %v5368
        %v5515 = vadd.f32 %v5015, %v5373
        %v5516 = vadd.f32 %v5020, %v5378
        %v5517 = vadd.f32 %v5025, %v5383
        %v5518 = vadd.f32 %v5030, %v5388
        %v5519 = vadd.f32 %v5035, %v5393
        %v5520 = vadd.f32 %v5040, %v5398
        %v5521 = vadd.f32 %v5045, %v5403
        %v5522 = vadd.f32 %v5050, %v5408
        %v5523 = vadd.f32 %v5055, %v5413
        %v5524 = vadd.f32 %v5060, %v5418
        %v5525 = vadd.f32 %v5065, %v5423
        %v5526 = vadd.f32 %v5070, %v5428
        %v5527 = vadd.f32 %v5075, %v5433
        %v5528 = vadd.f32 %v5080, %v5438
        %v5529 = vadd.f32 %v5085, %v5443
        %v5530 = vadd.f32 %v5090, %v5448
        %v5531 = vadd.f32 %v5095, %v5453
        %v5532 = vadd.f32 %v5100, %v5458
        %v5533 = vadd.f32 %v5105, %v5463
        %v5534 = vadd.f32 %v5110, %v5468
        %v5535 = vadd.f32 %v5115, %v5473
        %v5536 = vadd.f32 %v5120, %v5478
        %v5537 = vadd.f32 %v5125, %v5483
        %v5538 = vadd.f32 %v5130, %v5488
        %v5539 = vadd.f32 %v5135, %v5493
        %v5540 = vadd.f32 %v5140, %v5498
        %v5541 = vadd.f32 %v5145, %v5503
        %v5542 = vadd.f32 %v5150, %v5508
        %v5543 = vld [vmem:[#allocation2 + $0x1] sm:$0xff]
        %v5544 = vld [vmem:[#allocation2 + $0x9] sm:$0xff]
        %v5545 = vld [vmem:[#allocation2 + $0x19] sm:$0xff]
        %v5546 = vld [vmem:[#allocation2 + $0x21] sm:$0xff]
        %v5547 = vld [vmem:[#allocation2 + $0x31] sm:$0xff]
        %v5548 = vld [vmem:[#allocation2 + $0x39] sm:$0xff]
        %v5549 = vld [vmem:[#allocation2 + $0x49] sm:$0xff]
        %v5550 = vld [vmem:[#allocation2 + $0x51] sm:$0xff]
        %v5551 = vld [vmem:[#allocation2 + $0x61] sm:$0xff]
        %v5552 = vld [vmem:[#allocation2 + $0x69] sm:$0xff]
        %v5553 = vld [vmem:[#allocation2 + $0x79] sm:$0xff]
        %v5554 = vld [vmem:[#allocation2 + $0x81] sm:$0xff]
        %v5555 = vld [vmem:[#allocation2 + $0x91] sm:$0xff]
        %v5556 = vld [vmem:[#allocation2 + $0x99] sm:$0xff]
        %v5557 = vld [vmem:[#allocation2 + $0xa9] sm:$0xff]
        %v5558 = vld [vmem:[#allocation2 + $0xb1] sm:$0xff]
        %v5559 = vld [vmem:[#allocation2 + $0xc1] sm:$0xff]
        %v5560 = vld [vmem:[#allocation2 + $0xc9] sm:$0xff]
        %v5561 = vld [vmem:[#allocation2 + $0xd9] sm:$0xff]
        %v5562 = vld [vmem:[#allocation2 + $0xe1] sm:$0xff]
        %v5563 = vld [vmem:[#allocation2 + $0xf1] sm:$0xff]
        %v5564 = vld [vmem:[#allocation2 + $0xf9] sm:$0xff]
        %v5565 = vld [vmem:[#allocation2 + $0x109] sm:$0xff]
        %v5566 = vld [vmem:[#allocation2 + $0x111] sm:$0xff]
        %v5567 = vld [vmem:[#allocation2 + $0x121] sm:$0xff]
        %v5568 = vld [vmem:[#allocation2 + $0x129] sm:$0xff]
        %v5569 = vld [vmem:[#allocation2 + $0x139] sm:$0xff]
        %v5570 = vld [vmem:[#allocation2 + $0x141] sm:$0xff]
        %v5571 = vld [vmem:[#allocation2 + $0x151] sm:$0xff]
        %v5572 = vld [vmem:[#allocation2 + $0x159] sm:$0xff]
        %v5573 = vld [vmem:[#allocation2 + $0x169] sm:$0xff]
        %v5574 = vld [vmem:[#allocation2 + $0x171] sm:$0xff]
        %s5575 = scalar_lea.vmem %s1, 384
        %v5576 = vld [vmem:[%s5575] sm:$0xff]
        %v5577 = vld [vmem:[%s5575 + $0x8] sm:$0xff]
        %v5578 = vld [vmem:[%s5575 + $0x10] sm:$0xff]
        %v5579 = vld [vmem:[%s5575 + $0x18] sm:$0xff]
        %v5581 = vsel %vm169, %v5543, 0
        %v5584 = vsel %vm169, %v5544, 0
        %v5587 = vsel %vm169, %v5545, 0
        %v5590 = vsel %vm169, %v5546, 0
        %v5593 = vsel %vm169, %v5547, 0
        %v5596 = vsel %vm169, %v5548, 0
        %v5599 = vsel %vm169, %v5549, 0
        %v5602 = vsel %vm169, %v5550, 0
        %v5605 = vsel %vm169, %v5551, 0
        %v5608 = vsel %vm169, %v5552, 0
        %v5611 = vsel %vm169, %v5553, 0
        %v5614 = vsel %vm169, %v5554, 0
        %v5617 = vsel %vm169, %v5555, 0
        %v5620 = vsel %vm169, %v5556, 0
        %v5623 = vsel %vm169, %v5557, 0
        %v5626 = vsel %vm169, %v5558, 0
        %v5629 = vsel %vm169, %v5559, 0
        %v5632 = vsel %vm169, %v5560, 0
        %v5635 = vsel %vm169, %v5561, 0
        %v5638 = vsel %vm169, %v5562, 0
        %v5641 = vsel %vm169, %v5563, 0
        %v5644 = vsel %vm169, %v5564, 0
        %v5647 = vsel %vm169, %v5565, 0
        %v5650 = vsel %vm169, %v5566, 0
        %v5653 = vsel %vm169, %v5567, 0
        %v5656 = vsel %vm169, %v5568, 0
        %v5659 = vsel %vm169, %v5569, 0
        %v5662 = vsel %vm169, %v5570, 0
        %v5665 = vsel %vm169, %v5571, 0
        %v5668 = vsel %vm169, %v5572, 0
        %v5671 = vsel %vm169, %v5573, 0
        %v5674 = vsel %vm169, %v5574, 0
        %5676 = vmatprep.subr.mxu0 0.0
        %5677 = vmatpush1.msra.mxu0 %v5576
        %5678 = vmatprep.subr.mxu0 0.0
        %5679 = vmatpush1.msra.mxu0 %v5577
        %5680 = vmatprep.subr.mxu0 0.0
        %5681 = vmatpush1.msra.mxu0 %v5578
        %5682 = vmatprep.subr.mxu0 0.0
        %5683 = vmatpush1.msra.mxu0 %v5579
        %5684 = vmatprep.subr.mxu0 0.0
        %5685 = vmatpush1.msra.mxu0 0.0
        %5686 = vmatprep.subr.mxu0 0.0
        %5687 = vmatpush1.msra.mxu0 0.0
        %5688 = vmatprep.subr.mxu0 0.0
        %5689 = vmatpush1.msra.mxu0 0.0
        %5690 = vmatprep.subr.mxu0 0.0
        %5691 = vmatpush1.msra.mxu0 0.0
        %5692 = vmatprep.subr.mxu0 0.0
        %5693 = vmatpush1.msra.mxu0 0.0
        %5694 = vmatprep.subr.mxu0 0.0
        %5695 = vmatpush1.msra.mxu0 0.0
        %5696 = vmatprep.subr.mxu0 0.0
        %5697 = vmatpush1.msra.mxu0 0.0
        %5698 = vmatprep.subr.mxu0 0.0
        %5699 = vmatpush1.msra.mxu0 0.0
        %5700 = vmatprep.subr.mxu0 0.0
        %5701 = vmatpush1.msra.mxu0 0.0
        %5702 = vmatprep.subr.mxu0 0.0
        %5703 = vmatpush1.msra.mxu0 0.0
        %5704 = vmatprep.subr.mxu0 0.0
        %5705 = vmatpush1.msra.mxu0 0.0
        %5706 = vmatprep.subr.mxu0 0.0
        %5707 = vmatpush1.msra.mxu0 0.0
        %5708 = vmatprep.subr.mxu0 0.0
        %5709 = vmatpush1.msra.mxu0 0.0
        %5710 = vmatprep.subr.mxu0 0.0
        %5711 = vmatpush1.msra.mxu0 0.0
        %5712 = vmatprep.subr.mxu0 0.0
        %5713 = vmatpush1.msra.mxu0 0.0
        %5714 = vmatprep.subr.mxu0 0.0
        %5715 = vmatpush1.msra.mxu0 0.0
        %5716 = vmatprep.subr.mxu0 0.0
        %5717 = vmatpush1.msra.mxu0 0.0
        %5718 = vmatprep.subr.mxu0 0.0
        %5719 = vmatpush1.msra.mxu0 0.0
        %5720 = vmatprep.subr.mxu0 0.0
        %5721 = vmatpush1.msra.mxu0 0.0
        %5722 = vmatprep.subr.mxu0 0.0
        %5723 = vmatpush1.msra.mxu0 0.0
        %5724 = vmatprep.subr.mxu0 0.0
        %5725 = vmatpush1.msra.mxu0 0.0
        %5726 = vmatprep.subr.mxu0 0.0
        %5727 = vmatpush1.msra.mxu0 0.0
        %5728 = vmatprep.subr.mxu0 0.0
        %5729 = vmatpush1.msra.mxu0 0.0
        %5730 = vmatprep.subr.mxu0 0.0
        %5731 = vmatpush1.msra.mxu0 0.0
        %5732 = vmatprep.subr.mxu0 0.0
        %5733 = vmatpush1.msra.mxu0 0.0
        %5734 = vmatprep.subr.mxu0 0.0
        %5735 = vmatpush1.msra.mxu0 0.0
        %5736 = vmatprep.subr.mxu0 0.0
        %5737 = vmatpush1.msra.mxu0 0.0
        %5738 = vmatprep.subr.mxu0 0.0
        %5739 = vmatpush1.msra.mxu0 0.0
        %5740 = vmatprep.mubr.f32.mxu0 0.0
        %5741 = vmatmul.mubr.f32.gmra.mrb[0].mxu0 %v5581
        %v5742 = vpop.f32.mrb[0].mxu0
        %v5743 = vadd.f32 0.0, %v5742
        %v5744 = vpop.f32.mrb[0].mxu0
        %5745 = vmatprep.mubr.f32.mxu0 0.0
        %5746 = vmatmul.mubr.f32.gmra.mrb[0].mxu0 %v5584
        %v5747 = vpop.f32.mrb[0].mxu0
        %v5748 = vadd.f32 0.0, %v5747
        %v5749 = vpop.f32.mrb[0].mxu0
        %5750 = vmatprep.mubr.f32.mxu0 0.0
        %5751 = vmatmul.mubr.f32.gmra.mrb[0].mxu0 %v5587
        %v5752 = vpop.f32.mrb[0].mxu0
        %v5753 = vadd.f32 0.0, %v5752
        %v5754 = vpop.f32.mrb[0].mxu0
        %5755 = vmatprep.mubr.f32.mxu0 0.0
        %5756 = vmatmul.mubr.f32.gmra.mrb[0].mxu0 %v5590
        %v5757 = vpop.f32.mrb[0].mxu0
        %v5758 = vadd.f32 0.0, %v5757
        %v5759 = vpop.f32.mrb[0].mxu0
        %5760 = vmatprep.mubr.f32.mxu0 0.0
        %5761 = vmatmul.mubr.f32.gmra.mrb[0].mxu0 %v5593
        %v5762 = vpop.f32.mrb[0].mxu0
        %v5763 = vadd.f32 0.0, %v5762
        %v5764 = vpop.f32.mrb[0].mxu0
        %5765 = vmatprep.mubr.f32.mxu0 0.0
        %5766 = vmatmul.mubr.f32.gmra.mrb[0].mxu0 %v5596
        %v5767 = vpop.f32.mrb[0].mxu0
        %v5768 = vadd.f32 0.0, %v5767
        %v5769 = vpop.f32.mrb[0].mxu0
        %5770 = vmatprep.mubr.f32.mxu0 0.0
        %5771 = vmatmul.mubr.f32.gmra.mrb[0].mxu0 %v5599
        %v5772 = vpop.f32.mrb[0].mxu0
        %v5773 = vadd.f32 0.0, %v5772
        %v5774 = vpop.f32.mrb[0].mxu0
        %5775 = vmatprep.mubr.f32.mxu0 0.0
        %5776 = vmatmul.mubr.f32.gmra.mrb[0].mxu0 %v5602
        %v5777 = vpop.f32.mrb[0].mxu0
        %v5778 = vadd.f32 0.0, %v5777
        %v5779 = vpop.f32.mrb[0].mxu0
        %5780 = vmatprep.mubr.f32.mxu0 0.0
        %5781 = vmatmul.mubr.f32.gmra.mrb[0].mxu0 %v5605
        %v5782 = vpop.f32.mrb[0].mxu0
        %v5783 = vadd.f32 0.0, %v5782
        %v5784 = vpop.f32.mrb[0].mxu0
        %5785 = vmatprep.mubr.f32.mxu0 0.0
        %5786 = vmatmul.mubr.f32.gmra.mrb[0].mxu0 %v5608
        %v5787 = vpop.f32.mrb[0].mxu0
        %v5788 = vadd.f32 0.0, %v5787
        %v5789 = vpop.f32.mrb[0].mxu0
        %5790 = vmatprep.mubr.f32.mxu0 0.0
        %5791 = vmatmul.mubr.f32.gmra.mrb[0].mxu0 %v5611
        %v5792 = vpop.f32.mrb[0].mxu0
        %v5793 = vadd.f32 0.0, %v5792
        %v5794 = vpop.f32.mrb[0].mxu0
        %5795 = vmatprep.mubr.f32.mxu0 0.0
        %5796 = vmatmul.mubr.f32.gmra.mrb[0].mxu0 %v5614
        %v5797 = vpop.f32.mrb[0].mxu0
        %v5798 = vadd.f32 0.0, %v5797
        %v5799 = vpop.f32.mrb[0].mxu0
        %5800 = vmatprep.mubr.f32.mxu0 0.0
        %5801 = vmatmul.mubr.f32.gmra.mrb[0].mxu0 %v5617
        %v5802 = vpop.f32.mrb[0].mxu0
        %v5803 = vadd.f32 0.0, %v5802
        %v5804 = vpop.f32.mrb[0].mxu0
        %5805 = vmatprep.mubr.f32.mxu0 0.0
        %5806 = vmatmul.mubr.f32.gmra.mrb[0].mxu0 %v5620
        %v5807 = vpop.f32.mrb[0].mxu0
        %v5808 = vadd.f32 0.0, %v5807
        %v5809 = vpop.f32.mrb[0].mxu0
        %5810 = vmatprep.mubr.f32.mxu0 0.0
        %5811 = vmatmul.mubr.f32.gmra.mrb[0].mxu0 %v5623
        %v5812 = vpop.f32.mrb[0].mxu0
        %v5813 = vadd.f32 0.0, %v5812
        %v5814 = vpop.f32.mrb[0].mxu0
        %5815 = vmatprep.mubr.f32.mxu0 0.0
        %5816 = vmatmul.mubr.f32.gmra.mrb[0].mxu0 %v5626
        %v5817 = vpop.f32.mrb[0].mxu0
        %v5818 = vadd.f32 0.0, %v5817
        %v5819 = vpop.f32.mrb[0].mxu0
        %5820 = vmatprep.mubr.f32.mxu0 0.0
        %5821 = vmatmul.mubr.f32.gmra.mrb[0].mxu0 %v5629
        %v5822 = vpop.f32.mrb[0].mxu0
        %v5823 = vadd.f32 0.0, %v5822
        %v5824 = vpop.f32.mrb[0].mxu0
        %5825 = vmatprep.mubr.f32.mxu0 0.0
        %5826 = vmatmul.mubr.f32.gmra.mrb[0].mxu0 %v5632
        %v5827 = vpop.f32.mrb[0].mxu0
        %v5828 = vadd.f32 0.0, %v5827
        %v5829 = vpop.f32.mrb[0].mxu0
        %5830 = vmatprep.mubr.f32.mxu0 0.0
        %5831 = vmatmul.mubr.f32.gmra.mrb[0].mxu0 %v5635
        %v5832 = vpop.f32.mrb[0].mxu0
        %v5833 = vadd.f32 0.0, %v5832
        %v5834 = vpop.f32.mrb[0].mxu0
        %5835 = vmatprep.mubr.f32.mxu0 0.0
        %5836 = vmatmul.mubr.f32.gmra.mrb[0].mxu0 %v5638
        %v5837 = vpop.f32.mrb[0].mxu0
        %v5838 = vadd.f32 0.0, %v5837
        %v5839 = vpop.f32.mrb[0].mxu0
        %5840 = vmatprep.mubr.f32.mxu0 0.0
        %5841 = vmatmul.mubr.f32.gmra.mrb[0].mxu0 %v5641
        %v5842 = vpop.f32.mrb[0].mxu0
        %v5843 = vadd.f32 0.0, %v5842
        %v5844 = vpop.f32.mrb[0].mxu0
        %5845 = vmatprep.mubr.f32.mxu0 0.0
        %5846 = vmatmul.mubr.f32.gmra.mrb[0].mxu0 %v5644
        %v5847 = vpop.f32.mrb[0].mxu0
        %v5848 = vadd.f32 0.0, %v5847
        %v5849 = vpop.f32.mrb[0].mxu0
        %5850 = vmatprep.mubr.f32.mxu0 0.0
        %5851 = vmatmul.mubr.f32.gmra.mrb[0].mxu0 %v5647
        %v5852 = vpop.f32.mrb[0].mxu0
        %v5853 = vadd.f32 0.0, %v5852
        %v5854 = vpop.f32.mrb[0].mxu0
        %5855 = vmatprep.mubr.f32.mxu0 0.0
        %5856 = vmatmul.mubr.f32.gmra.mrb[0].mxu0 %v5650
        %v5857 = vpop.f32.mrb[0].mxu0
        %v5858 = vadd.f32 0.0, %v5857
        %v5859 = vpop.f32.mrb[0].mxu0
        %5860 = vmatprep.mubr.f32.mxu0 0.0
        %5861 = vmatmul.mubr.f32.gmra.mrb[0].mxu0 %v5653
        %v5862 = vpop.f32.mrb[0].mxu0
        %v5863 = vadd.f32 0.0, %v5862
        %v5864 = vpop.f32.mrb[0].mxu0
        %5865 = vmatprep.mubr.f32.mxu0 0.0
        %5866 = vmatmul.mubr.f32.gmra.mrb[0].mxu0 %v5656
        %v5867 = vpop.f32.mrb[0].mxu0
        %v5868 = vadd.f32 0.0, %v5867
        %v5869 = vpop.f32.mrb[0].mxu0
        %5870 = vmatprep.mubr.f32.mxu0 0.0
        %5871 = vmatmul.mubr.f32.gmra.mrb[0].mxu0 %v5659
        %v5872 = vpop.f32.mrb[0].mxu0
        %v5873 = vadd.f32 0.0, %v5872
        %v5874 = vpop.f32.mrb[0].mxu0
        %5875 = vmatprep.mubr.f32.mxu0 0.0
        %5876 = vmatmul.mubr.f32.gmra.mrb[0].mxu0 %v5662
        %v5877 = vpop.f32.mrb[0].mxu0
        %v5878 = vadd.f32 0.0, %v5877
        %v5879 = vpop.f32.mrb[0].mxu0
        %5880 = vmatprep.mubr.f32.mxu0 0.0
        %5881 = vmatmul.mubr.f32.gmra.mrb[0].mxu0 %v5665
        %v5882 = vpop.f32.mrb[0].mxu0
        %v5883 = vadd.f32 0.0, %v5882
        %v5884 = vpop.f32.mrb[0].mxu0
        %5885 = vmatprep.mubr.f32.mxu0 0.0
        %5886 = vmatmul.mubr.f32.gmra.mrb[0].mxu0 %v5668
        %v5887 = vpop.f32.mrb[0].mxu0
        %v5888 = vadd.f32 0.0, %v5887
        %v5889 = vpop.f32.mrb[0].mxu0
        %5890 = vmatprep.mubr.f32.mxu0 0.0
        %5891 = vmatmul.mubr.f32.gmra.mrb[0].mxu0 %v5671
        %v5892 = vpop.f32.mrb[0].mxu0
        %v5893 = vadd.f32 0.0, %v5892
        %v5894 = vpop.f32.mrb[0].mxu0
        %5895 = vmatprep.mubr.f32.mxu0 0.0
        %5896 = vmatmul.mubr.f32.gmra.mrb[0].mxu0 %v5674
        %v5897 = vpop.f32.mrb[0].mxu0
        %v5898 = vadd.f32 0.0, %v5897
        %v5899 = vpop.f32.mrb[0].mxu0
        %5900 = vdwg.mxu0
        %v5901 = vadd.f32 %v5511, %v5743
        %v5902 = vadd.f32 %v5512, %v5748
        %v5903 = vadd.f32 %v5513, %v5753
        %v5904 = vadd.f32 %v5514, %v5758
        %v5905 = vadd.f32 %v5515, %v5763
        %v5906 = vadd.f32 %v5516, %v5768
        %v5907 = vadd.f32 %v5517, %v5773
        %v5908 = vadd.f32 %v5518, %v5778
        %v5909 = vadd.f32 %v5519, %v5783
        %v5910 = vadd.f32 %v5520, %v5788
        %v5911 = vadd.f32 %v5521, %v5793
        %v5912 = vadd.f32 %v5522, %v5798
        %v5913 = vadd.f32 %v5523, %v5803
        %v5914 = vadd.f32 %v5524, %v5808
        %v5915 = vadd.f32 %v5525, %v5813
        %v5916 = vadd.f32 %v5526, %v5818
        %v5917 = vadd.f32 %v5527, %v5823
        %v5918 = vadd.f32 %v5528, %v5828
        %v5919 = vadd.f32 %v5529, %v5833
        %v5920 = vadd.f32 %v5530, %v5838
        %v5921 = vadd.f32 %v5531, %v5843
        %v5922 = vadd.f32 %v5532, %v5848
        %v5923 = vadd.f32 %v5533, %v5853
        %v5924 = vadd.f32 %v5534, %v5858
        %v5925 = vadd.f32 %v5535, %v5863
        %v5926 = vadd.f32 %v5536, %v5868
        %v5927 = vadd.f32 %v5537, %v5873
        %v5928 = vadd.f32 %v5538, %v5878
        %v5929 = vadd.f32 %v5539, %v5883
        %v5930 = vadd.f32 %v5540, %v5888
        %v5931 = vadd.f32 %v5541, %v5893
        %v5932 = vadd.f32 %v5542, %v5898
        %v5933 = vld [vmem:[%s241 + $0x1] sm:$0xff]
        %v5934 = vld [vmem:[%s241 + $0x9] sm:$0xff]
        %v5935 = vld [vmem:[%s241 + $0x19] sm:$0xff]
        %v5936 = vld [vmem:[%s241 + $0x21] sm:$0xff]
        %v5937 = vld [vmem:[%s241 + $0x31] sm:$0xff]
        %v5938 = vld [vmem:[%s241 + $0x39] sm:$0xff]
        %v5939 = vld [vmem:[%s241 + $0x49] sm:$0xff]
        %v5940 = vld [vmem:[%s241 + $0x51] sm:$0xff]
        %v5941 = vld [vmem:[%s241 + $0x61] sm:$0xff]
        %v5942 = vld [vmem:[%s241 + $0x69] sm:$0xff]
        %v5943 = vld [vmem:[%s241 + $0x79] sm:$0xff]
        %v5944 = vld [vmem:[%s241 + $0x81] sm:$0xff]
        %v5945 = vld [vmem:[%s241 + $0x91] sm:$0xff]
        %v5946 = vld [vmem:[%s241 + $0x99] sm:$0xff]
        %v5947 = vld [vmem:[%s241 + $0xa9] sm:$0xff]
        %v5948 = vld [vmem:[%s241 + $0xb1] sm:$0xff]
        %v5949 = vld [vmem:[%s241 + $0xc1] sm:$0xff]
        %v5950 = vld [vmem:[%s241 + $0xc9] sm:$0xff]
        %v5951 = vld [vmem:[%s241 + $0xd9] sm:$0xff]
        %v5952 = vld [vmem:[%s241 + $0xe1] sm:$0xff]
        %v5953 = vld [vmem:[%s241 + $0xf1] sm:$0xff]
        %v5954 = vld [vmem:[%s241 + $0xf9] sm:$0xff]
        %v5955 = vld [vmem:[%s241 + $0x109] sm:$0xff]
        %v5956 = vld [vmem:[%s241 + $0x111] sm:$0xff]
        %v5957 = vld [vmem:[%s241 + $0x121] sm:$0xff]
        %v5958 = vld [vmem:[%s241 + $0x129] sm:$0xff]
        %v5959 = vld [vmem:[%s241 + $0x139] sm:$0xff]
        %v5960 = vld [vmem:[%s241 + $0x141] sm:$0xff]
        %v5961 = vld [vmem:[%s241 + $0x151] sm:$0xff]
        %v5962 = vld [vmem:[%s241 + $0x159] sm:$0xff]
        %v5963 = vld [vmem:[%s241 + $0x169] sm:$0xff]
        %v5964 = vld [vmem:[%s241 + $0x171] sm:$0xff]
        %s5965 = scalar_lea.vmem %s1, 416
        %v5966 = vld [vmem:[%s5965] sm:$0xff]
        %v5967 = vld [vmem:[%s5965 + $0x8] sm:$0xff]
        %v5968 = vld [vmem:[%s5965 + $0x10] sm:$0xff]
        %v5969 = vld [vmem:[%s5965 + $0x18] sm:$0xff]
        %v5971 = vsel %vm169, %v5933, 0
        %v5974 = vsel %vm169, %v5934, 0
        %v5977 = vsel %vm169, %v5935, 0
        %v5980 = vsel %vm169, %v5936, 0
        %v5983 = vsel %vm169, %v5937, 0
        %v5986 = vsel %vm169, %v5938, 0
        %v5989 = vsel %vm169, %v5939, 0
        %v5992 = vsel %vm169, %v5940, 0
        %v5995 = vsel %vm169, %v5941, 0
        %v5998 = vsel %vm169, %v5942, 0
        %v6001 = vsel %vm169, %v5943, 0
        %v6004 = vsel %vm169, %v5944, 0
        %v6007 = vsel %vm169, %v5945, 0
        %v6010 = vsel %vm169, %v5946, 0
        %v6013 = vsel %vm169, %v5947, 0
        %v6016 = vsel %vm169, %v5948, 0
        %v6019 = vsel %vm169, %v5949, 0
        %v6022 = vsel %vm169, %v5950, 0
        %v6025 = vsel %vm169, %v5951, 0
        %v6028 = vsel %vm169, %v5952, 0
        %v6031 = vsel %vm169, %v5953, 0
        %v6034 = vsel %vm169, %v5954, 0
        %v6037 = vsel %vm169, %v5955, 0
        %v6040 = vsel %vm169, %v5956, 0
        %v6043 = vsel %vm169, %v5957, 0
        %v6046 = vsel %vm169, %v5958, 0
        %v6049 = vsel %vm169, %v5959, 0
        %v6052 = vsel %vm169, %v5960, 0
        %v6055 = vsel %vm169, %v5961, 0
        %v6058 = vsel %vm169, %v5962, 0
        %v6061 = vsel %vm169, %v5963, 0
        %v6064 = vsel %vm169, %v5964, 0
        %6066 = vmatprep.subr.mxu0 0.0
        %6067 = vmatpush1.msra.mxu0 %v5966
        %6068 = vmatprep.subr.mxu0 0.0
        %6069 = vmatpush1.msra.mxu0 %v5967
        %6070 = vmatprep.subr.mxu0 0.0
        %6071 = vmatpush1.msra.mxu0 %v5968
        %6072 = vmatprep.subr.mxu0 0.0
        %6073 = vmatpush1.msra.mxu0 %v5969
        %6074 = vmatprep.subr.mxu0 0.0
        %6075 = vmatpush1.msra.mxu0 0.0
        %6076 = vmatprep.subr.mxu0 0.0
        %6077 = vmatpush1.msra.mxu0 0.0
        %6078 = vmatprep.subr.mxu0 0.0
        %6079 = vmatpush1.msra.mxu0 0.0
        %6080 = vmatprep.subr.mxu0 0.0
        %6081 = vmatpush1.msra.mxu0 0.0
        %6082 = vmatprep.subr.mxu0 0.0
        %6083 = vmatpush1.msra.mxu0 0.0
        %6084 = vmatprep.subr.mxu0 0.0
        %6085 = vmatpush1.msra.mxu0 0.0
        %6086 = vmatprep.subr.mxu0 0.0
        %6087 = vmatpush1.msra.mxu0 0.0
        %6088 = vmatprep.subr.mxu0 0.0
        %6089 = vmatpush1.msra.mxu0 0.0
        %6090 = vmatprep.subr.mxu0 0.0
        %6091 = vmatpush1.msra.mxu0 0.0
        %6092 = vmatprep.subr.mxu0 0.0
        %6093 = vmatpush1.msra.mxu0 0.0
        %6094 = vmatprep.subr.mxu0 0.0
        %6095 = vmatpush1.msra.mxu0 0.0
        %6096 = vmatprep.subr.mxu0 0.0
        %6097 = vmatpush1.msra.mxu0 0.0
        %6098 = vmatprep.subr.mxu0 0.0
        %6099 = vmatpush1.msra.mxu0 0.0
        %6100 = vmatprep.subr.mxu0 0.0
        %6101 = vmatpush1.msra.mxu0 0.0
        %6102 = vmatprep.subr.mxu0 0.0
        %6103 = vmatpush1.msra.mxu0 0.0
        %6104 = vmatprep.subr.mxu0 0.0
        %6105 = vmatpush1.msra.mxu0 0.0
        %6106 = vmatprep.subr.mxu0 0.0
        %6107 = vmatpush1.msra.mxu0 0.0
        %6108 = vmatprep.subr.mxu0 0.0
        %6109 = vmatpush1.msra.mxu0 0.0
        %6110 = vmatprep.subr.mxu0 0.0
        %6111 = vmatpush1.msra.mxu0 0.0
        %6112 = vmatprep.subr.mxu0 0.0
        %6113 = vmatpush1.msra.mxu0 0.0
        %6114 = vmatprep.subr.mxu0 0.0
        %6115 = vmatpush1.msra.mxu0 0.0
        %6116 = vmatprep.subr.mxu0 0.0
        %6117 = vmatpush1.msra.mxu0 0.0
        %6118 = vmatprep.subr.mxu0 0.0
        %6119 = vmatpush1.msra.mxu0 0.0
        %6120 = vmatprep.subr.mxu0 0.0
        %6121 = vmatpush1.msra.mxu0 0.0
        %6122 = vmatprep.subr.mxu0 0.0
        %6123 = vmatpush1.msra.mxu0 0.0
        %6124 = vmatprep.subr.mxu0 0.0
        %6125 = vmatpush1.msra.mxu0 0.0
        %6126 = vmatprep.subr.mxu0 0.0
        %6127 = vmatpush1.msra.mxu0 0.0
        %6128 = vmatprep.subr.mxu0 0.0
        %6129 = vmatpush1.msra.mxu0 0.0
        %6130 = vmatprep.mubr.f32.mxu0 0.0
        %6131 = vmatmul.mubr.f32.gmra.mrb[0].mxu0 %v5971
        %v6132 = vpop.f32.mrb[0].mxu0
        %v6133 = vadd.f32 0.0, %v6132
        %v6134 = vpop.f32.mrb[0].mxu0
        %6135 = vmatprep.mubr.f32.mxu0 0.0
        %6136 = vmatmul.mubr.f32.gmra.mrb[0].mxu0 %v5974
        %v6137 = vpop.f32.mrb[0].mxu0
        %v6138 = vadd.f32 0.0, %v6137
        %v6139 = vpop.f32.mrb[0].mxu0
        %6140 = vmatprep.mubr.f32.mxu0 0.0
        %6141 = vmatmul.mubr.f32.gmra.mrb[0].mxu0 %v5977
        %v6142 = vpop.f32.mrb[0].mxu0
        %v6143 = vadd.f32 0.0, %v6142
        %v6144 = vpop.f32.mrb[0].mxu0
        %6145 = vmatprep.mubr.f32.mxu0 0.0
        %6146 = vmatmul.mubr.f32.gmra.mrb[0].mxu0 %v5980
        %v6147 = vpop.f32.mrb[0].mxu0
        %v6148 = vadd.f32 0.0, %v6147
        %v6149 = vpop.f32.mrb[0].mxu0
        %6150 = vmatprep.mubr.f32.mxu0 0.0
        %6151 = vmatmul.mubr.f32.gmra.mrb[0].mxu0 %v5983
        %v6152 = vpop.f32.mrb[0].mxu0
        %v6153 = vadd.f32 0.0, %v6152
        %v6154 = vpop.f32.mrb[0].mxu0
        %6155 = vmatprep.mubr.f32.mxu0 0.0
        %6156 = vmatmul.mubr.f32.gmra.mrb[0].mxu0 %v5986
        %v6157 = vpop.f32.mrb[0].mxu0
        %v6158 = vadd.f32 0.0, %v6157
        %v6159 = vpop.f32.mrb[0].mxu0
        %6160 = vmatprep.mubr.f32.mxu0 0.0
        %6161 = vmatmul.mubr.f32.gmra.mrb[0].mxu0 %v5989
        %v6162 = vpop.f32.mrb[0].mxu0
        %v6163 = vadd.f32 0.0, %v6162
        %v6164 = vpop.f32.mrb[0].mxu0
        %6165 = vmatprep.mubr.f32.mxu0 0.0
        %6166 = vmatmul.mubr.f32.gmra.mrb[0].mxu0 %v5992
        %v6167 = vpop.f32.mrb[0].mxu0
        %v6168 = vadd.f32 0.0, %v6167
        %v6169 = vpop.f32.mrb[0].mxu0
        %6170 = vmatprep.mubr.f32.mxu0 0.0
        %6171 = vmatmul.mubr.f32.gmra.mrb[0].mxu0 %v5995
        %v6172 = vpop.f32.mrb[0].mxu0
        %v6173 = vadd.f32 0.0, %v6172
        %v6174 = vpop.f32.mrb[0].mxu0
        %6175 = vmatprep.mubr.f32.mxu0 0.0
        %6176 = vmatmul.mubr.f32.gmra.mrb[0].mxu0 %v5998
        %v6177 = vpop.f32.mrb[0].mxu0
        %v6178 = vadd.f32 0.0, %v6177
        %v6179 = vpop.f32.mrb[0].mxu0
        %6180 = vmatprep.mubr.f32.mxu0 0.0
        %6181 = vmatmul.mubr.f32.gmra.mrb[0].mxu0 %v6001
        %v6182 = vpop.f32.mrb[0].mxu0
        %v6183 = vadd.f32 0.0, %v6182
        %v6184 = vpop.f32.mrb[0].mxu0
        %6185 = vmatprep.mubr.f32.mxu0 0.0
        %6186 = vmatmul.mubr.f32.gmra.mrb[0].mxu0 %v6004
        %v6187 = vpop.f32.mrb[0].mxu0
        %v6188 = vadd.f32 0.0, %v6187
        %v6189 = vpop.f32.mrb[0].mxu0
        %6190 = vmatprep.mubr.f32.mxu0 0.0
        %6191 = vmatmul.mubr.f32.gmra.mrb[0].mxu0 %v6007
        %v6192 = vpop.f32.mrb[0].mxu0
        %v6193 = vadd.f32 0.0, %v6192
        %v6194 = vpop.f32.mrb[0].mxu0
        %6195 = vmatprep.mubr.f32.mxu0 0.0
        %6196 = vmatmul.mubr.f32.gmra.mrb[0].mxu0 %v6010
        %v6197 = vpop.f32.mrb[0].mxu0
        %v6198 = vadd.f32 0.0, %v6197
        %v6199 = vpop.f32.mrb[0].mxu0
        %6200 = vmatprep.mubr.f32.mxu0 0.0
        %6201 = vmatmul.mubr.f32.gmra.mrb[0].mxu0 %v6013
        %v6202 = vpop.f32.mrb[0].mxu0
        %v6203 = vadd.f32 0.0, %v6202
        %v6204 = vpop.f32.mrb[0].mxu0
        %6205 = vmatprep.mubr.f32.mxu0 0.0
        %6206 = vmatmul.mubr.f32.gmra.mrb[0].mxu0 %v6016
        %v6207 = vpop.f32.mrb[0].mxu0
        %v6208 = vadd.f32 0.0, %v6207
        %v6209 = vpop.f32.mrb[0].mxu0
        %6210 = vmatprep.mubr.f32.mxu0 0.0
        %6211 = vmatmul.mubr.f32.gmra.mrb[0].mxu0 %v6019
        %v6212 = vpop.f32.mrb[0].mxu0
        %v6213 = vadd.f32 0.0, %v6212
        %v6214 = vpop.f32.mrb[0].mxu0
        %6215 = vmatprep.mubr.f32.mxu0 0.0
        %6216 = vmatmul.mubr.f32.gmra.mrb[0].mxu0 %v6022
        %v6217 = vpop.f32.mrb[0].mxu0
        %v6218 = vadd.f32 0.0, %v6217
        %v6219 = vpop.f32.mrb[0].mxu0
        %6220 = vmatprep.mubr.f32.mxu0 0.0
        %6221 = vmatmul.mubr.f32.gmra.mrb[0].mxu0 %v6025
        %v6222 = vpop.f32.mrb[0].mxu0
        %v6223 = vadd.f32 0.0, %v6222
        %v6224 = vpop.f32.mrb[0].mxu0
        %6225 = vmatprep.mubr.f32.mxu0 0.0
        %6226 = vmatmul.mubr.f32.gmra.mrb[0].mxu0 %v6028
        %v6227 = vpop.f32.mrb[0].mxu0
        %v6228 = vadd.f32 0.0, %v6227
        %v6229 = vpop.f32.mrb[0].mxu0
        %6230 = vmatprep.mubr.f32.mxu0 0.0
        %6231 = vmatmul.mubr.f32.gmra.mrb[0].mxu0 %v6031
        %v6232 = vpop.f32.mrb[0].mxu0
        %v6233 = vadd.f32 0.0, %v6232
        %v6234 = vpop.f32.mrb[0].mxu0
        %6235 = vmatprep.mubr.f32.mxu0 0.0
        %6236 = vmatmul.mubr.f32.gmra.mrb[0].mxu0 %v6034
        %v6237 = vpop.f32.mrb[0].mxu0
        %v6238 = vadd.f32 0.0, %v6237
        %v6239 = vpop.f32.mrb[0].mxu0
        %6240 = vmatprep.mubr.f32.mxu0 0.0
        %6241 = vmatmul.mubr.f32.gmra.mrb[0].mxu0 %v6037
        %v6242 = vpop.f32.mrb[0].mxu0
        %v6243 = vadd.f32 0.0, %v6242
        %v6244 = vpop.f32.mrb[0].mxu0
        %6245 = vmatprep.mubr.f32.mxu0 0.0
        %6246 = vmatmul.mubr.f32.gmra.mrb[0].mxu0 %v6040
        %v6247 = vpop.f32.mrb[0].mxu0
        %v6248 = vadd.f32 0.0, %v6247
        %v6249 = vpop.f32.mrb[0].mxu0
        %6250 = vmatprep.mubr.f32.mxu0 0.0
        %6251 = vmatmul.mubr.f32.gmra.mrb[0].mxu0 %v6043
        %v6252 = vpop.f32.mrb[0].mxu0
        %v6253 = vadd.f32 0.0, %v6252
        %v6254 = vpop.f32.mrb[0].mxu0
        %6255 = vmatprep.mubr.f32.mxu0 0.0
        %6256 = vmatmul.mubr.f32.gmra.mrb[0].mxu0 %v6046
        %v6257 = vpop.f32.mrb[0].mxu0
        %v6258 = vadd.f32 0.0, %v6257
        %v6259 = vpop.f32.mrb[0].mxu0
        %6260 = vmatprep.mubr.f32.mxu0 0.0
        %6261 = vmatmul.mubr.f32.gmra.mrb[0].mxu0 %v6049
        %v6262 = vpop.f32.mrb[0].mxu0
        %v6263 = vadd.f32 0.0, %v6262
        %v6264 = vpop.f32.mrb[0].mxu0
        %6265 = vmatprep.mubr.f32.mxu0 0.0
        %6266 = vmatmul.mubr.f32.gmra.mrb[0].mxu0 %v6052
        %v6267 = vpop.f32.mrb[0].mxu0
        %v6268 = vadd.f32 0.0, %v6267
        %v6269 = vpop.f32.mrb[0].mxu0
        %6270 = vmatprep.mubr.f32.mxu0 0.0
        %6271 = vmatmul.mubr.f32.gmra.mrb[0].mxu0 %v6055
        %v6272 = vpop.f32.mrb[0].mxu0
        %v6273 = vadd.f32 0.0, %v6272
        %v6274 = vpop.f32.mrb[0].mxu0
        %6275 = vmatprep.mubr.f32.mxu0 0.0
        %6276 = vmatmul.mubr.f32.gmra.mrb[0].mxu0 %v6058
        %v6277 = vpop.f32.mrb[0].mxu0
        %v6278 = vadd.f32 0.0, %v6277
        %v6279 = vpop.f32.mrb[0].mxu0
        %6280 = vmatprep.mubr.f32.mxu0 0.0
        %6281 = vmatmul.mubr.f32.gmra.mrb[0].mxu0 %v6061
        %v6282 = vpop.f32.mrb[0].mxu0
        %v6283 = vadd.f32 0.0, %v6282
        %v6284 = vpop.f32.mrb[0].mxu0
        %6285 = vmatprep.mubr.f32.mxu0 0.0
        %6286 = vmatmul.mubr.f32.gmra.mrb[0].mxu0 %v6064
        %v6287 = vpop.f32.mrb[0].mxu0
        %v6288 = vadd.f32 0.0, %v6287
        %v6289 = vpop.f32.mrb[0].mxu0
        %6290 = vdwg.mxu0
        %v6291 = vadd.f32 %v5901, %v6133
        %v6292 = vadd.f32 %v5902, %v6138
        %v6293 = vadd.f32 %v5903, %v6143
        %v6294 = vadd.f32 %v5904, %v6148
        %v6295 = vadd.f32 %v5905, %v6153
        %v6296 = vadd.f32 %v5906, %v6158
        %v6297 = vadd.f32 %v5907, %v6163
        %v6298 = vadd.f32 %v5908, %v6168
        %v6299 = vadd.f32 %v5909, %v6173
        %v6300 = vadd.f32 %v5910, %v6178
        %v6301 = vadd.f32 %v5911, %v6183
        %v6302 = vadd.f32 %v5912, %v6188
        %v6303 = vadd.f32 %v5913, %v6193
        %v6304 = vadd.f32 %v5914, %v6198
        %v6305 = vadd.f32 %v5915, %v6203
        %v6306 = vadd.f32 %v5916, %v6208
        %v6307 = vadd.f32 %v5917, %v6213
        %v6308 = vadd.f32 %v5918, %v6218
        %v6309 = vadd.f32 %v5919, %v6223
        %v6310 = vadd.f32 %v5920, %v6228
        %v6311 = vadd.f32 %v5921, %v6233
        %v6312 = vadd.f32 %v5922, %v6238
        %v6313 = vadd.f32 %v5923, %v6243
        %v6314 = vadd.f32 %v5924, %v6248
        %v6315 = vadd.f32 %v5925, %v6253
        %v6316 = vadd.f32 %v5926, %v6258
        %v6317 = vadd.f32 %v5927, %v6263
        %v6318 = vadd.f32 %v5928, %v6268
        %v6319 = vadd.f32 %v5929, %v6273
        %v6320 = vadd.f32 %v5930, %v6278
        %v6321 = vadd.f32 %v5931, %v6283
        %v6322 = vadd.f32 %v5932, %v6288
        %v6323 = vld [vmem:[%s252 + $0x1] sm:$0xff]
        %v6324 = vld [vmem:[%s252 + $0x9] sm:$0xff]
        %v6325 = vld [vmem:[%s252 + $0x19] sm:$0xff]
        %v6326 = vld [vmem:[%s252 + $0x21] sm:$0xff]
        %v6327 = vld [vmem:[%s252 + $0x31] sm:$0xff]
        %v6328 = vld [vmem:[%s252 + $0x39] sm:$0xff]
        %v6329 = vld [vmem:[%s252 + $0x49] sm:$0xff]
        %v6330 = vld [vmem:[%s252 + $0x51] sm:$0xff]
        %v6331 = vld [vmem:[%s252 + $0x61] sm:$0xff]
        %v6332 = vld [vmem:[%s252 + $0x69] sm:$0xff]
        %v6333 = vld [vmem:[%s252 + $0x79] sm:$0xff]
        %v6334 = vld [vmem:[%s252 + $0x81] sm:$0xff]
        %v6335 = vld [vmem:[%s252 + $0x91] sm:$0xff]
        %v6336 = vld [vmem:[%s252 + $0x99] sm:$0xff]
        %v6337 = vld [vmem:[%s252 + $0xa9] sm:$0xff]
        %v6338 = vld [vmem:[%s252 + $0xb1] sm:$0xff]
        %v6339 = vld [vmem:[%s252 + $0xc1] sm:$0xff]
        %v6340 = vld [vmem:[%s252 + $0xc9] sm:$0xff]
        %v6341 = vld [vmem:[%s252 + $0xd9] sm:$0xff]
        %v6342 = vld [vmem:[%s252 + $0xe1] sm:$0xff]
        %v6343 = vld [vmem:[%s252 + $0xf1] sm:$0xff]
        %v6344 = vld [vmem:[%s252 + $0xf9] sm:$0xff]
        %v6345 = vld [vmem:[%s252 + $0x109] sm:$0xff]
        %v6346 = vld [vmem:[%s252 + $0x111] sm:$0xff]
        %v6347 = vld [vmem:[%s252 + $0x121] sm:$0xff]
        %v6348 = vld [vmem:[%s252 + $0x129] sm:$0xff]
        %v6349 = vld [vmem:[%s252 + $0x139] sm:$0xff]
        %v6350 = vld [vmem:[%s252 + $0x141] sm:$0xff]
        %v6351 = vld [vmem:[%s252 + $0x151] sm:$0xff]
        %v6352 = vld [vmem:[%s252 + $0x159] sm:$0xff]
        %v6353 = vld [vmem:[%s252 + $0x169] sm:$0xff]
        %v6354 = vld [vmem:[%s252 + $0x171] sm:$0xff]
        %s6355 = scalar_lea.vmem %s1, 448
        %v6356 = vld [vmem:[%s6355] sm:$0xff]
        %v6357 = vld [vmem:[%s6355 + $0x8] sm:$0xff]
        %v6358 = vld [vmem:[%s6355 + $0x10] sm:$0xff]
        %v6359 = vld [vmem:[%s6355 + $0x18] sm:$0xff]
        %v6361 = vsel %vm169, %v6323, 0
        %v6364 = vsel %vm169, %v6324, 0
        %v6367 = vsel %vm169, %v6325, 0
        %v6370 = vsel %vm169, %v6326, 0
        %v6373 = vsel %vm169, %v6327, 0
        %v6376 = vsel %vm169, %v6328, 0
        %v6379 = vsel %vm169, %v6329, 0
        %v6382 = vsel %vm169, %v6330, 0
        %v6385 = vsel %vm169, %v6331, 0
        %v6388 = vsel %vm169, %v6332, 0
        %v6391 = vsel %vm169, %v6333, 0
        %v6394 = vsel %vm169, %v6334, 0
        %v6397 = vsel %vm169, %v6335, 0
        %v6400 = vsel %vm169, %v6336, 0
        %v6403 = vsel %vm169, %v6337, 0
        %v6406 = vsel %vm169, %v6338, 0
        %v6409 = vsel %vm169, %v6339, 0
        %v6412 = vsel %vm169, %v6340, 0
        %v6415 = vsel %vm169, %v6341, 0
        %v6418 = vsel %vm169, %v6342, 0
        %v6421 = vsel %vm169, %v6343, 0
        %v6424 = vsel %vm169, %v6344, 0
        %v6427 = vsel %vm169, %v6345, 0
        %v6430 = vsel %vm169, %v6346, 0
        %v6433 = vsel %vm169, %v6347, 0
        %v6436 = vsel %vm169, %v6348, 0
        %v6439 = vsel %vm169, %v6349, 0
        %v6442 = vsel %vm169, %v6350, 0
        %v6445 = vsel %vm169, %v6351, 0
        %v6448 = vsel %vm169, %v6352, 0
        %v6451 = vsel %vm169, %v6353, 0
        %v6454 = vsel %vm169, %v6354, 0
        %6456 = vmatprep.subr.mxu0 0.0
        %6457 = vmatpush1.msra.mxu0 %v6356
        %6458 = vmatprep.subr.mxu0 0.0
        %6459 = vmatpush1.msra.mxu0 %v6357
        %6460 = vmatprep.subr.mxu0 0.0
        %6461 = vmatpush1.msra.mxu0 %v6358
        %6462 = vmatprep.subr.mxu0 0.0
        %6463 = vmatpush1.msra.mxu0 %v6359
        %6464 = vmatprep.subr.mxu0 0.0
        %6465 = vmatpush1.msra.mxu0 0.0
        %6466 = vmatprep.subr.mxu0 0.0
        %6467 = vmatpush1.msra.mxu0 0.0
        %6468 = vmatprep.subr.mxu0 0.0
        %6469 = vmatpush1.msra.mxu0 0.0
        %6470 = vmatprep.subr.mxu0 0.0
        %6471 = vmatpush1.msra.mxu0 0.0
        %6472 = vmatprep.subr.mxu0 0.0
        %6473 = vmatpush1.msra.mxu0 0.0
        %6474 = vmatprep.subr.mxu0 0.0
        %6475 = vmatpush1.msra.mxu0 0.0
        %6476 = vmatprep.subr.mxu0 0.0
        %6477 = vmatpush1.msra.mxu0 0.0
        %6478 = vmatprep.subr.mxu0 0.0
        %6479 = vmatpush1.msra.mxu0 0.0
        %6480 = vmatprep.subr.mxu0 0.0
        %6481 = vmatpush1.msra.mxu0 0.0
        %6482 = vmatprep.subr.mxu0 0.0
        %6483 = vmatpush1.msra.mxu0 0.0
        %6484 = vmatprep.subr.mxu0 0.0
        %6485 = vmatpush1.msra.mxu0 0.0
        %6486 = vmatprep.subr.mxu0 0.0
        %6487 = vmatpush1.msra.mxu0 0.0
        %6488 = vmatprep.subr.mxu0 0.0
        %6489 = vmatpush1.msra.mxu0 0.0
        %6490 = vmatprep.subr.mxu0 0.0
        %6491 = vmatpush1.msra.mxu0 0.0
        %6492 = vmatprep.subr.mxu0 0.0
        %6493 = vmatpush1.msra.mxu0 0.0
        %6494 = vmatprep.subr.mxu0 0.0
        %6495 = vmatpush1.msra.mxu0 0.0
        %6496 = vmatprep.subr.mxu0 0.0
        %6497 = vmatpush1.msra.mxu0 0.0
        %6498 = vmatprep.subr.mxu0 0.0
        %6499 = vmatpush1.msra.mxu0 0.0
        %6500 = vmatprep.subr.mxu0 0.0
        %6501 = vmatpush1.msra.mxu0 0.0
        %6502 = vmatprep.subr.mxu0 0.0
        %6503 = vmatpush1.msra.mxu0 0.0
        %6504 = vmatprep.subr.mxu0 0.0
        %6505 = vmatpush1.msra.mxu0 0.0
        %6506 = vmatprep.subr.mxu0 0.0
        %6507 = vmatpush1.msra.mxu0 0.0
        %6508 = vmatprep.subr.mxu0 0.0
        %6509 = vmatpush1.msra.mxu0 0.0
        %6510 = vmatprep.subr.mxu0 0.0
        %6511 = vmatpush1.msra.mxu0 0.0
        %6512 = vmatprep.subr.mxu0 0.0
        %6513 = vmatpush1.msra.mxu0 0.0
        %6514 = vmatprep.subr.mxu0 0.0
        %6515 = vmatpush1.msra.mxu0 0.0
        %6516 = vmatprep.subr.mxu0 0.0
        %6517 = vmatpush1.msra.mxu0 0.0
        %6518 = vmatprep.subr.mxu0 0.0
        %6519 = vmatpush1.msra.mxu0 0.0
        %6520 = vmatprep.mubr.f32.mxu0 0.0
        %6521 = vmatmul.mubr.f32.gmra.mrb[0].mxu0 %v6361
        %v6522 = vpop.f32.mrb[0].mxu0
        %v6523 = vadd.f32 0.0, %v6522
        %v6524 = vpop.f32.mrb[0].mxu0
        %6525 = vmatprep.mubr.f32.mxu0 0.0
        %6526 = vmatmul.mubr.f32.gmra.mrb[0].mxu0 %v6364
        %v6527 = vpop.f32.mrb[0].mxu0
        %v6528 = vadd.f32 0.0, %v6527
        %v6529 = vpop.f32.mrb[0].mxu0
        %6530 = vmatprep.mubr.f32.mxu0 0.0
        %6531 = vmatmul.mubr.f32.gmra.mrb[0].mxu0 %v6367
        %v6532 = vpop.f32.mrb[0].mxu0
        %v6533 = vadd.f32 0.0, %v6532
        %v6534 = vpop.f32.mrb[0].mxu0
        %6535 = vmatprep.mubr.f32.mxu0 0.0
        %6536 = vmatmul.mubr.f32.gmra.mrb[0].mxu0 %v6370
        %v6537 = vpop.f32.mrb[0].mxu0
        %v6538 = vadd.f32 0.0, %v6537
        %v6539 = vpop.f32.mrb[0].mxu0
        %6540 = vmatprep.mubr.f32.mxu0 0.0
        %6541 = vmatmul.mubr.f32.gmra.mrb[0].mxu0 %v6373
        %v6542 = vpop.f32.mrb[0].mxu0
        %v6543 = vadd.f32 0.0, %v6542
        %v6544 = vpop.f32.mrb[0].mxu0
        %6545 = vmatprep.mubr.f32.mxu0 0.0
        %6546 = vmatmul.mubr.f32.gmra.mrb[0].mxu0 %v6376
        %v6547 = vpop.f32.mrb[0].mxu0
        %v6548 = vadd.f32 0.0, %v6547
        %v6549 = vpop.f32.mrb[0].mxu0
        %6550 = vmatprep.mubr.f32.mxu0 0.0
        %6551 = vmatmul.mubr.f32.gmra.mrb[0].mxu0 %v6379
        %v6552 = vpop.f32.mrb[0].mxu0
        %v6553 = vadd.f32 0.0, %v6552
        %v6554 = vpop.f32.mrb[0].mxu0
        %6555 = vmatprep.mubr.f32.mxu0 0.0
        %6556 = vmatmul.mubr.f32.gmra.mrb[0].mxu0 %v6382
        %v6557 = vpop.f32.mrb[0].mxu0
        %v6558 = vadd.f32 0.0, %v6557
        %v6559 = vpop.f32.mrb[0].mxu0
        %6560 = vmatprep.mubr.f32.mxu0 0.0
        %6561 = vmatmul.mubr.f32.gmra.mrb[0].mxu0 %v6385
        %v6562 = vpop.f32.mrb[0].mxu0
        %v6563 = vadd.f32 0.0, %v6562
        %v6564 = vpop.f32.mrb[0].mxu0
        %6565 = vmatprep.mubr.f32.mxu0 0.0
        %6566 = vmatmul.mubr.f32.gmra.mrb[0].mxu0 %v6388
        %v6567 = vpop.f32.mrb[0].mxu0
        %v6568 = vadd.f32 0.0, %v6567
        %v6569 = vpop.f32.mrb[0].mxu0
        %6570 = vmatprep.mubr.f32.mxu0 0.0
        %6571 = vmatmul.mubr.f32.gmra.mrb[0].mxu0 %v6391
        %v6572 = vpop.f32.mrb[0].mxu0
        %v6573 = vadd.f32 0.0, %v6572
        %v6574 = vpop.f32.mrb[0].mxu0
        %6575 = vmatprep.mubr.f32.mxu0 0.0
        %6576 = vmatmul.mubr.f32.gmra.mrb[0].mxu0 %v6394
        %v6577 = vpop.f32.mrb[0].mxu0
        %v6578 = vadd.f32 0.0, %v6577
        %v6579 = vpop.f32.mrb[0].mxu0
        %6580 = vmatprep.mubr.f32.mxu0 0.0
        %6581 = vmatmul.mubr.f32.gmra.mrb[0].mxu0 %v6397
        %v6582 = vpop.f32.mrb[0].mxu0
        %v6583 = vadd.f32 0.0, %v6582
        %v6584 = vpop.f32.mrb[0].mxu0
        %6585 = vmatprep.mubr.f32.mxu0 0.0
        %6586 = vmatmul.mubr.f32.gmra.mrb[0].mxu0 %v6400
        %v6587 = vpop.f32.mrb[0].mxu0
        %v6588 = vadd.f32 0.0, %v6587
        %v6589 = vpop.f32.mrb[0].mxu0
        %6590 = vmatprep.mubr.f32.mxu0 0.0
        %6591 = vmatmul.mubr.f32.gmra.mrb[0].mxu0 %v6403
        %v6592 = vpop.f32.mrb[0].mxu0
        %v6593 = vadd.f32 0.0, %v6592
        %v6594 = vpop.f32.mrb[0].mxu0
        %6595 = vmatprep.mubr.f32.mxu0 0.0
        %6596 = vmatmul.mubr.f32.gmra.mrb[0].mxu0 %v6406
        %v6597 = vpop.f32.mrb[0].mxu0
        %v6598 = vadd.f32 0.0, %v6597
        %v6599 = vpop.f32.mrb[0].mxu0
        %6600 = vmatprep.mubr.f32.mxu0 0.0
        %6601 = vmatmul.mubr.f32.gmra.mrb[0].mxu0 %v6409
        %v6602 = vpop.f32.mrb[0].mxu0
        %v6603 = vadd.f32 0.0, %v6602
        %v6604 = vpop.f32.mrb[0].mxu0
        %6605 = vmatprep.mubr.f32.mxu0 0.0
        %6606 = vmatmul.mubr.f32.gmra.mrb[0].mxu0 %v6412
        %v6607 = vpop.f32.mrb[0].mxu0
        %v6608 = vadd.f32 0.0, %v6607
        %v6609 = vpop.f32.mrb[0].mxu0
        %6610 = vmatprep.mubr.f32.mxu0 0.0
        %6611 = vmatmul.mubr.f32.gmra.mrb[0].mxu0 %v6415
        %v6612 = vpop.f32.mrb[0].mxu0
        %v6613 = vadd.f32 0.0, %v6612
        %v6614 = vpop.f32.mrb[0].mxu0
        %6615 = vmatprep.mubr.f32.mxu0 0.0
        %6616 = vmatmul.mubr.f32.gmra.mrb[0].mxu0 %v6418
        %v6617 = vpop.f32.mrb[0].mxu0
        %v6618 = vadd.f32 0.0, %v6617
        %v6619 = vpop.f32.mrb[0].mxu0
        %6620 = vmatprep.mubr.f32.mxu0 0.0
        %6621 = vmatmul.mubr.f32.gmra.mrb[0].mxu0 %v6421
        %v6622 = vpop.f32.mrb[0].mxu0
        %v6623 = vadd.f32 0.0, %v6622
        %v6624 = vpop.f32.mrb[0].mxu0
        %6625 = vmatprep.mubr.f32.mxu0 0.0
        %6626 = vmatmul.mubr.f32.gmra.mrb[0].mxu0 %v6424
        %v6627 = vpop.f32.mrb[0].mxu0
        %v6628 = vadd.f32 0.0, %v6627
        %v6629 = vpop.f32.mrb[0].mxu0
        %6630 = vmatprep.mubr.f32.mxu0 0.0
        %6631 = vmatmul.mubr.f32.gmra.mrb[0].mxu0 %v6427
        %v6632 = vpop.f32.mrb[0].mxu0
        %v6633 = vadd.f32 0.0, %v6632
        %v6634 = vpop.f32.mrb[0].mxu0
        %6635 = vmatprep.mubr.f32.mxu0 0.0
        %6636 = vmatmul.mubr.f32.gmra.mrb[0].mxu0 %v6430
        %v6637 = vpop.f32.mrb[0].mxu0
        %v6638 = vadd.f32 0.0, %v6637
        %v6639 = vpop.f32.mrb[0].mxu0
        %6640 = vmatprep.mubr.f32.mxu0 0.0
        %6641 = vmatmul.mubr.f32.gmra.mrb[0].mxu0 %v6433
        %v6642 = vpop.f32.mrb[0].mxu0
        %v6643 = vadd.f32 0.0, %v6642
        %v6644 = vpop.f32.mrb[0].mxu0
        %6645 = vmatprep.mubr.f32.mxu0 0.0
        %6646 = vmatmul.mubr.f32.gmra.mrb[0].mxu0 %v6436
        %v6647 = vpop.f32.mrb[0].mxu0
        %v6648 = vadd.f32 0.0, %v6647
        %v6649 = vpop.f32.mrb[0].mxu0
        %6650 = vmatprep.mubr.f32.mxu0 0.0
        %6651 = vmatmul.mubr.f32.gmra.mrb[0].mxu0 %v6439
        %v6652 = vpop.f32.mrb[0].mxu0
        %v6653 = vadd.f32 0.0, %v6652
        %v6654 = vpop.f32.mrb[0].mxu0
        %6655 = vmatprep.mubr.f32.mxu0 0.0
        %6656 = vmatmul.mubr.f32.gmra.mrb[0].mxu0 %v6442
        %v6657 = vpop.f32.mrb[0].mxu0
        %v6658 = vadd.f32 0.0, %v6657
        %v6659 = vpop.f32.mrb[0].mxu0
        %6660 = vmatprep.mubr.f32.mxu0 0.0
        %6661 = vmatmul.mubr.f32.gmra.mrb[0].mxu0 %v6445
        %v6662 = vpop.f32.mrb[0].mxu0
        %v6663 = vadd.f32 0.0, %v6662
        %v6664 = vpop.f32.mrb[0].mxu0
        %6665 = vmatprep.mubr.f32.mxu0 0.0
        %6666 = vmatmul.mubr.f32.gmra.mrb[0].mxu0 %v6448
        %v6667 = vpop.f32.mrb[0].mxu0
        %v6668 = vadd.f32 0.0, %v6667
        %v6669 = vpop.f32.mrb[0].mxu0
        %6670 = vmatprep.mubr.f32.mxu0 0.0
        %6671 = vmatmul.mubr.f32.gmra.mrb[0].mxu0 %v6451
        %v6672 = vpop.f32.mrb[0].mxu0
        %v6673 = vadd.f32 0.0, %v6672
        %v6674 = vpop.f32.mrb[0].mxu0
        %6675 = vmatprep.mubr.f32.mxu0 0.0
        %6676 = vmatmul.mubr.f32.gmra.mrb[0].mxu0 %v6454
        %v6677 = vpop.f32.mrb[0].mxu0
        %v6678 = vadd.f32 0.0, %v6677
        %v6679 = vpop.f32.mrb[0].mxu0
        %6680 = vdwg.mxu0
        %v6681 = vadd.f32 %v6291, %v6523
        %v6682 = vadd.f32 %v6292, %v6528
        %v6683 = vadd.f32 %v6293, %v6533
        %v6684 = vadd.f32 %v6294, %v6538
        %v6685 = vadd.f32 %v6295, %v6543
        %v6686 = vadd.f32 %v6296, %v6548
        %v6687 = vadd.f32 %v6297, %v6553
        %v6688 = vadd.f32 %v6298, %v6558
        %v6689 = vadd.f32 %v6299, %v6563
        %v6690 = vadd.f32 %v6300, %v6568
        %v6691 = vadd.f32 %v6301, %v6573
        %v6692 = vadd.f32 %v6302, %v6578
        %v6693 = vadd.f32 %v6303, %v6583
        %v6694 = vadd.f32 %v6304, %v6588
        %v6695 = vadd.f32 %v6305, %v6593
        %v6696 = vadd.f32 %v6306, %v6598
        %v6697 = vadd.f32 %v6307, %v6603
        %v6698 = vadd.f32 %v6308, %v6608
        %v6699 = vadd.f32 %v6309, %v6613
        %v6700 = vadd.f32 %v6310, %v6618
        %v6701 = vadd.f32 %v6311, %v6623
        %v6702 = vadd.f32 %v6312, %v6628
        %v6703 = vadd.f32 %v6313, %v6633
        %v6704 = vadd.f32 %v6314, %v6638
        %v6705 = vadd.f32 %v6315, %v6643
        %v6706 = vadd.f32 %v6316, %v6648
        %v6707 = vadd.f32 %v6317, %v6653
        %v6708 = vadd.f32 %v6318, %v6658
        %v6709 = vadd.f32 %v6319, %v6663
        %v6710 = vadd.f32 %v6320, %v6668
        %v6711 = vadd.f32 %v6321, %v6673
        %v6712 = vadd.f32 %v6322, %v6678
        %v6713 = vld [vmem:[#allocation2 + $0x2] sm:$0xff]
        %v6714 = vld [vmem:[#allocation2 + $0xa] sm:$0xff]
        %v6715 = vld [vmem:[#allocation2 + $0x1a] sm:$0xff]
        %v6716 = vld [vmem:[#allocation2 + $0x22] sm:$0xff]
        %v6717 = vld [vmem:[#allocation2 + $0x32] sm:$0xff]
        %v6718 = vld [vmem:[#allocation2 + $0x3a] sm:$0xff]
        %v6719 = vld [vmem:[#allocation2 + $0x4a] sm:$0xff]
        %v6720 = vld [vmem:[#allocation2 + $0x52] sm:$0xff]
        %v6721 = vld [vmem:[#allocation2 + $0x62] sm:$0xff]
        %v6722 = vld [vmem:[#allocation2 + $0x6a] sm:$0xff]
        %v6723 = vld [vmem:[#allocation2 + $0x7a] sm:$0xff]
        %v6724 = vld [vmem:[#allocation2 + $0x82] sm:$0xff]
        %v6725 = vld [vmem:[#allocation2 + $0x92] sm:$0xff]
        %v6726 = vld [vmem:[#allocation2 + $0x9a] sm:$0xff]
        %v6727 = vld [vmem:[#allocation2 + $0xaa] sm:$0xff]
        %v6728 = vld [vmem:[#allocation2 + $0xb2] sm:$0xff]
        %v6729 = vld [vmem:[#allocation2 + $0xc2] sm:$0xff]
        %v6730 = vld [vmem:[#allocation2 + $0xca] sm:$0xff]
        %v6731 = vld [vmem:[#allocation2 + $0xda] sm:$0xff]
        %v6732 = vld [vmem:[#allocation2 + $0xe2] sm:$0xff]
        %v6733 = vld [vmem:[#allocation2 + $0xf2] sm:$0xff]
        %v6734 = vld [vmem:[#allocation2 + $0xfa] sm:$0xff]
        %v6735 = vld [vmem:[#allocation2 + $0x10a] sm:$0xff]
        %v6736 = vld [vmem:[#allocation2 + $0x112] sm:$0xff]
        %v6737 = vld [vmem:[#allocation2 + $0x122] sm:$0xff]
        %v6738 = vld [vmem:[#allocation2 + $0x12a] sm:$0xff]
        %v6739 = vld [vmem:[#allocation2 + $0x13a] sm:$0xff]
        %v6740 = vld [vmem:[#allocation2 + $0x142] sm:$0xff]
        %v6741 = vld [vmem:[#allocation2 + $0x152] sm:$0xff]
        %v6742 = vld [vmem:[#allocation2 + $0x15a] sm:$0xff]
        %v6743 = vld [vmem:[#allocation2 + $0x16a] sm:$0xff]
        %v6744 = vld [vmem:[#allocation2 + $0x172] sm:$0xff]
        %s6745 = scalar_lea.vmem %s1, 480
        %v6746 = vld [vmem:[%s6745] sm:$0xff]
        %v6747 = vld [vmem:[%s6745 + $0x8] sm:$0xff]
        %v6748 = vld [vmem:[%s6745 + $0x10] sm:$0xff]
        %v6749 = vld [vmem:[%s6745 + $0x18] sm:$0xff]
        %v6751 = vsel %vm169, %v6713, 0
        %v6754 = vsel %vm169, %v6714, 0
        %v6757 = vsel %vm169, %v6715, 0
        %v6760 = vsel %vm169, %v6716, 0
        %v6763 = vsel %vm169, %v6717, 0
        %v6766 = vsel %vm169, %v6718, 0
        %v6769 = vsel %vm169, %v6719, 0
        %v6772 = vsel %vm169, %v6720, 0
        %v6775 = vsel %vm169, %v6721, 0
        %v6778 = vsel %vm169, %v6722, 0
        %v6781 = vsel %vm169, %v6723, 0
        %v6784 = vsel %vm169, %v6724, 0
        %v6787 = vsel %vm169, %v6725, 0
        %v6790 = vsel %vm169, %v6726, 0
        %v6793 = vsel %vm169, %v6727, 0
        %v6796 = vsel %vm169, %v6728, 0
        %v6799 = vsel %vm169, %v6729, 0
        %v6802 = vsel %vm169, %v6730, 0
        %v6805 = vsel %vm169, %v6731, 0
        %v6808 = vsel %vm169, %v6732, 0
        %v6811 = vsel %vm169, %v6733, 0
        %v6814 = vsel %vm169, %v6734, 0
        %v6817 = vsel %vm169, %v6735, 0
        %v6820 = vsel %vm169, %v6736, 0
        %v6823 = vsel %vm169, %v6737, 0
        %v6826 = vsel %vm169, %v6738, 0
        %v6829 = vsel %vm169, %v6739, 0
        %v6832 = vsel %vm169, %v6740, 0
        %v6835 = vsel %vm169, %v6741, 0
        %v6838 = vsel %vm169, %v6742, 0
        %v6841 = vsel %vm169, %v6743, 0
        %v6844 = vsel %vm169, %v6744, 0
        %6846 = vmatprep.subr.mxu0 0.0
        %6847 = vmatpush1.msra.mxu0 %v6746
        %6848 = vmatprep.subr.mxu0 0.0
        %6849 = vmatpush1.msra.mxu0 %v6747
        %6850 = vmatprep.subr.mxu0 0.0
        %6851 = vmatpush1.msra.mxu0 %v6748
        %6852 = vmatprep.subr.mxu0 0.0
        %6853 = vmatpush1.msra.mxu0 %v6749
        %6854 = vmatprep.subr.mxu0 0.0
        %6855 = vmatpush1.msra.mxu0 0.0
        %6856 = vmatprep.subr.mxu0 0.0
        %6857 = vmatpush1.msra.mxu0 0.0
        %6858 = vmatprep.subr.mxu0 0.0
        %6859 = vmatpush1.msra.mxu0 0.0
        %6860 = vmatprep.subr.mxu0 0.0
        %6861 = vmatpush1.msra.mxu0 0.0
        %6862 = vmatprep.subr.mxu0 0.0
        %6863 = vmatpush1.msra.mxu0 0.0
        %6864 = vmatprep.subr.mxu0 0.0
        %6865 = vmatpush1.msra.mxu0 0.0
        %6866 = vmatprep.subr.mxu0 0.0
        %6867 = vmatpush1.msra.mxu0 0.0
        %6868 = vmatprep.subr.mxu0 0.0
        %6869 = vmatpush1.msra.mxu0 0.0
        %6870 = vmatprep.subr.mxu0 0.0
        %6871 = vmatpush1.msra.mxu0 0.0
        %6872 = vmatprep.subr.mxu0 0.0
        %6873 = vmatpush1.msra.mxu0 0.0
        %6874 = vmatprep.subr.mxu0 0.0
        %6875 = vmatpush1.msra.mxu0 0.0
        %6876 = vmatprep.subr.mxu0 0.0
        %6877 = vmatpush1.msra.mxu0 0.0
        %6878 = vmatprep.subr.mxu0 0.0
        %6879 = vmatpush1.msra.mxu0 0.0
        %6880 = vmatprep.subr.mxu0 0.0
        %6881 = vmatpush1.msra.mxu0 0.0
        %6882 = vmatprep.subr.mxu0 0.0
        %6883 = vmatpush1.msra.mxu0 0.0
        %6884 = vmatprep.subr.mxu0 0.0
        %6885 = vmatpush1.msra.mxu0 0.0
        %6886 = vmatprep.subr.mxu0 0.0
        %6887 = vmatpush1.msra.mxu0 0.0
        %6888 = vmatprep.subr.mxu0 0.0
        %6889 = vmatpush1.msra.mxu0 0.0
        %6890 = vmatprep.subr.mxu0 0.0
        %6891 = vmatpush1.msra.mxu0 0.0
        %6892 = vmatprep.subr.mxu0 0.0
        %6893 = vmatpush1.msra.mxu0 0.0
        %6894 = vmatprep.subr.mxu0 0.0
        %6895 = vmatpush1.msra.mxu0 0.0
        %6896 = vmatprep.subr.mxu0 0.0
        %6897 = vmatpush1.msra.mxu0 0.0
        %6898 = vmatprep.subr.mxu0 0.0
        %6899 = vmatpush1.msra.mxu0 0.0
        %6900 = vmatprep.subr.mxu0 0.0
        %6901 = vmatpush1.msra.mxu0 0.0
        %6902 = vmatprep.subr.mxu0 0.0
        %6903 = vmatpush1.msra.mxu0 0.0
        %6904 = vmatprep.subr.mxu0 0.0
        %6905 = vmatpush1.msra.mxu0 0.0
        %6906 = vmatprep.subr.mxu0 0.0
        %6907 = vmatpush1.msra.mxu0 0.0
        %6908 = vmatprep.subr.mxu0 0.0
        %6909 = vmatpush1.msra.mxu0 0.0
        %6910 = vmatprep.mubr.f32.mxu0 0.0
        %6911 = vmatmul.mubr.f32.gmra.mrb[0].mxu0 %v6751
        %v6912 = vpop.f32.mrb[0].mxu0
        %v6913 = vadd.f32 0.0, %v6912
        %v6914 = vpop.f32.mrb[0].mxu0
        %6915 = vmatprep.mubr.f32.mxu0 0.0
        %6916 = vmatmul.mubr.f32.gmra.mrb[0].mxu0 %v6754
        %v6917 = vpop.f32.mrb[0].mxu0
        %v6918 = vadd.f32 0.0, %v6917
        %v6919 = vpop.f32.mrb[0].mxu0
        %6920 = vmatprep.mubr.f32.mxu0 0.0
        %6921 = vmatmul.mubr.f32.gmra.mrb[0].mxu0 %v6757
        %v6922 = vpop.f32.mrb[0].mxu0
        %v6923 = vadd.f32 0.0, %v6922
        %v6924 = vpop.f32.mrb[0].mxu0
        %6925 = vmatprep.mubr.f32.mxu0 0.0
        %6926 = vmatmul.mubr.f32.gmra.mrb[0].mxu0 %v6760
        %v6927 = vpop.f32.mrb[0].mxu0
        %v6928 = vadd.f32 0.0, %v6927
        %v6929 = vpop.f32.mrb[0].mxu0
        %6930 = vmatprep.mubr.f32.mxu0 0.0
        %6931 = vmatmul.mubr.f32.gmra.mrb[0].mxu0 %v6763
        %v6932 = vpop.f32.mrb[0].mxu0
        %v6933 = vadd.f32 0.0, %v6932
        %v6934 = vpop.f32.mrb[0].mxu0
        %6935 = vmatprep.mubr.f32.mxu0 0.0
        %6936 = vmatmul.mubr.f32.gmra.mrb[0].mxu0 %v6766
        %v6937 = vpop.f32.mrb[0].mxu0
        %v6938 = vadd.f32 0.0, %v6937
        %v6939 = vpop.f32.mrb[0].mxu0
        %6940 = vmatprep.mubr.f32.mxu0 0.0
        %6941 = vmatmul.mubr.f32.gmra.mrb[0].mxu0 %v6769
        %v6942 = vpop.f32.mrb[0].mxu0
        %v6943 = vadd.f32 0.0, %v6942
        %v6944 = vpop.f32.mrb[0].mxu0
        %6945 = vmatprep.mubr.f32.mxu0 0.0
        %6946 = vmatmul.mubr.f32.gmra.mrb[0].mxu0 %v6772
        %v6947 = vpop.f32.mrb[0].mxu0
        %v6948 = vadd.f32 0.0, %v6947
        %v6949 = vpop.f32.mrb[0].mxu0
        %6950 = vmatprep.mubr.f32.mxu0 0.0
        %6951 = vmatmul.mubr.f32.gmra.mrb[0].mxu0 %v6775
        %v6952 = vpop.f32.mrb[0].mxu0
        %v6953 = vadd.f32 0.0, %v6952
        %v6954 = vpop.f32.mrb[0].mxu0
        %6955 = vmatprep.mubr.f32.mxu0 0.0
        %6956 = vmatmul.mubr.f32.gmra.mrb[0].mxu0 %v6778
        %v6957 = vpop.f32.mrb[0].mxu0
        %v6958 = vadd.f32 0.0, %v6957
        %v6959 = vpop.f32.mrb[0].mxu0
        %6960 = vmatprep.mubr.f32.mxu0 0.0
        %6961 = vmatmul.mubr.f32.gmra.mrb[0].mxu0 %v6781
        %v6962 = vpop.f32.mrb[0].mxu0
        %v6963 = vadd.f32 0.0, %v6962
        %v6964 = vpop.f32.mrb[0].mxu0
        %6965 = vmatprep.mubr.f32.mxu0 0.0
        %6966 = vmatmul.mubr.f32.gmra.mrb[0].mxu0 %v6784
        %v6967 = vpop.f32.mrb[0].mxu0
        %v6968 = vadd.f32 0.0, %v6967
        %v6969 = vpop.f32.mrb[0].mxu0
        %6970 = vmatprep.mubr.f32.mxu0 0.0
        %6971 = vmatmul.mubr.f32.gmra.mrb[0].mxu0 %v6787
        %v6972 = vpop.f32.mrb[0].mxu0
        %v6973 = vadd.f32 0.0, %v6972
        %v6974 = vpop.f32.mrb[0].mxu0
        %6975 = vmatprep.mubr.f32.mxu0 0.0
        %6976 = vmatmul.mubr.f32.gmra.mrb[0].mxu0 %v6790
        %v6977 = vpop.f32.mrb[0].mxu0
        %v6978 = vadd.f32 0.0, %v6977
        %v6979 = vpop.f32.mrb[0].mxu0
        %6980 = vmatprep.mubr.f32.mxu0 0.0
        %6981 = vmatmul.mubr.f32.gmra.mrb[0].mxu0 %v6793
        %v6982 = vpop.f32.mrb[0].mxu0
        %v6983 = vadd.f32 0.0, %v6982
        %v6984 = vpop.f32.mrb[0].mxu0
        %6985 = vmatprep.mubr.f32.mxu0 0.0
        %6986 = vmatmul.mubr.f32.gmra.mrb[0].mxu0 %v6796
        %v6987 = vpop.f32.mrb[0].mxu0
        %v6988 = vadd.f32 0.0, %v6987
        %v6989 = vpop.f32.mrb[0].mxu0
        %6990 = vmatprep.mubr.f32.mxu0 0.0
        %6991 = vmatmul.mubr.f32.gmra.mrb[0].mxu0 %v6799
        %v6992 = vpop.f32.mrb[0].mxu0
        %v6993 = vadd.f32 0.0, %v6992
        %v6994 = vpop.f32.mrb[0].mxu0
        %6995 = vmatprep.mubr.f32.mxu0 0.0
        %6996 = vmatmul.mubr.f32.gmra.mrb[0].mxu0 %v6802
        %v6997 = vpop.f32.mrb[0].mxu0
        %v6998 = vadd.f32 0.0, %v6997
        %v6999 = vpop.f32.mrb[0].mxu0
        %7000 = vmatprep.mubr.f32.mxu0 0.0
        %7001 = vmatmul.mubr.f32.gmra.mrb[0].mxu0 %v6805
        %v7002 = vpop.f32.mrb[0].mxu0
        %v7003 = vadd.f32 0.0, %v7002
        %v7004 = vpop.f32.mrb[0].mxu0
        %7005 = vmatprep.mubr.f32.mxu0 0.0
        %7006 = vmatmul.mubr.f32.gmra.mrb[0].mxu0 %v6808
        %v7007 = vpop.f32.mrb[0].mxu0
        %v7008 = vadd.f32 0.0, %v7007
        %v7009 = vpop.f32.mrb[0].mxu0
        %7010 = vmatprep.mubr.f32.mxu0 0.0
        %7011 = vmatmul.mubr.f32.gmra.mrb[0].mxu0 %v6811
        %v7012 = vpop.f32.mrb[0].mxu0
        %v7013 = vadd.f32 0.0, %v7012
        %v7014 = vpop.f32.mrb[0].mxu0
        %7015 = vmatprep.mubr.f32.mxu0 0.0
        %7016 = vmatmul.mubr.f32.gmra.mrb[0].mxu0 %v6814
        %v7017 = vpop.f32.mrb[0].mxu0
        %v7018 = vadd.f32 0.0, %v7017
        %v7019 = vpop.f32.mrb[0].mxu0
        %7020 = vmatprep.mubr.f32.mxu0 0.0
        %7021 = vmatmul.mubr.f32.gmra.mrb[0].mxu0 %v6817
        %v7022 = vpop.f32.mrb[0].mxu0
        %v7023 = vadd.f32 0.0, %v7022
        %v7024 = vpop.f32.mrb[0].mxu0
        %7025 = vmatprep.mubr.f32.mxu0 0.0
        %7026 = vmatmul.mubr.f32.gmra.mrb[0].mxu0 %v6820
        %v7027 = vpop.f32.mrb[0].mxu0
        %v7028 = vadd.f32 0.0, %v7027
        %v7029 = vpop.f32.mrb[0].mxu0
        %7030 = vmatprep.mubr.f32.mxu0 0.0
        %7031 = vmatmul.mubr.f32.gmra.mrb[0].mxu0 %v6823
        %v7032 = vpop.f32.mrb[0].mxu0
        %v7033 = vadd.f32 0.0, %v7032
        %v7034 = vpop.f32.mrb[0].mxu0
        %7035 = vmatprep.mubr.f32.mxu0 0.0
        %7036 = vmatmul.mubr.f32.gmra.mrb[0].mxu0 %v6826
        %v7037 = vpop.f32.mrb[0].mxu0
        %v7038 = vadd.f32 0.0, %v7037
        %v7039 = vpop.f32.mrb[0].mxu0
        %7040 = vmatprep.mubr.f32.mxu0 0.0
        %7041 = vmatmul.mubr.f32.gmra.mrb[0].mxu0 %v6829
        %v7042 = vpop.f32.mrb[0].mxu0
        %v7043 = vadd.f32 0.0, %v7042
        %v7044 = vpop.f32.mrb[0].mxu0
        %7045 = vmatprep.mubr.f32.mxu0 0.0
        %7046 = vmatmul.mubr.f32.gmra.mrb[0].mxu0 %v6832
        %v7047 = vpop.f32.mrb[0].mxu0
        %v7048 = vadd.f32 0.0, %v7047
        %v7049 = vpop.f32.mrb[0].mxu0
        %7050 = vmatprep.mubr.f32.mxu0 0.0
        %7051 = vmatmul.mubr.f32.gmra.mrb[0].mxu0 %v6835
        %v7052 = vpop.f32.mrb[0].mxu0
        %v7053 = vadd.f32 0.0, %v7052
        %v7054 = vpop.f32.mrb[0].mxu0
        %7055 = vmatprep.mubr.f32.mxu0 0.0
        %7056 = vmatmul.mubr.f32.gmra.mrb[0].mxu0 %v6838
        %v7057 = vpop.f32.mrb[0].mxu0
        %v7058 = vadd.f32 0.0, %v7057
        %v7059 = vpop.f32.mrb[0].mxu0
        %7060 = vmatprep.mubr.f32.mxu0 0.0
        %7061 = vmatmul.mubr.f32.gmra.mrb[0].mxu0 %v6841
        %v7062 = vpop.f32.mrb[0].mxu0
        %v7063 = vadd.f32 0.0, %v7062
        %v7064 = vpop.f32.mrb[0].mxu0
        %7065 = vmatprep.mubr.f32.mxu0 0.0
        %7066 = vmatmul.mubr.f32.gmra.mrb[0].mxu0 %v6844
        %v7067 = vpop.f32.mrb[0].mxu0
        %v7068 = vadd.f32 0.0, %v7067
        %v7069 = vpop.f32.mrb[0].mxu0
        %7070 = vdwg.mxu0
        %v7071 = vadd.f32 %v6681, %v6913
        %v7072 = vadd.f32 %v6682, %v6918
        %v7073 = vadd.f32 %v6683, %v6923
        %v7074 = vadd.f32 %v6684, %v6928
        %v7075 = vadd.f32 %v6685, %v6933
        %v7076 = vadd.f32 %v6686, %v6938
        %v7077 = vadd.f32 %v6687, %v6943
        %v7078 = vadd.f32 %v6688, %v6948
        %v7079 = vadd.f32 %v6689, %v6953
        %v7080 = vadd.f32 %v6690, %v6958
        %v7081 = vadd.f32 %v6691, %v6963
        %v7082 = vadd.f32 %v6692, %v6968
        %v7083 = vadd.f32 %v6693, %v6973
        %v7084 = vadd.f32 %v6694, %v6978
        %v7085 = vadd.f32 %v6695, %v6983
        %v7086 = vadd.f32 %v6696, %v6988
        %v7087 = vadd.f32 %v6697, %v6993
        %v7088 = vadd.f32 %v6698, %v6998
        %v7089 = vadd.f32 %v6699, %v7003
        %v7090 = vadd.f32 %v6700, %v7008
        %v7091 = vadd.f32 %v6701, %v7013
        %v7092 = vadd.f32 %v6702, %v7018
        %v7093 = vadd.f32 %v6703, %v7023
        %v7094 = vadd.f32 %v6704, %v7028
        %v7095 = vadd.f32 %v6705, %v7033
        %v7096 = vadd.f32 %v6706, %v7038
        %v7097 = vadd.f32 %v6707, %v7043
        %v7098 = vadd.f32 %v6708, %v7048
        %v7099 = vadd.f32 %v6709, %v7053
        %v7100 = vadd.f32 %v6710, %v7058
        %v7101 = vadd.f32 %v6711, %v7063
        %v7102 = vadd.f32 %v6712, %v7068
        %v7103 = vld [vmem:[%s241 + $0x2] sm:$0xff]
        %v7104 = vld [vmem:[%s241 + $0xa] sm:$0xff]
        %v7105 = vld [vmem:[%s241 + $0x1a] sm:$0xff]
        %v7106 = vld [vmem:[%s241 + $0x22] sm:$0xff]
        %v7107 = vld [vmem:[%s241 + $0x32] sm:$0xff]
        %v7108 = vld [vmem:[%s241 + $0x3a] sm:$0xff]
        %v7109 = vld [vmem:[%s241 + $0x4a] sm:$0xff]
        %v7110 = vld [vmem:[%s241 + $0x52] sm:$0xff]
        %v7111 = vld [vmem:[%s241 + $0x62] sm:$0xff]
        %v7112 = vld [vmem:[%s241 + $0x6a] sm:$0xff]
        %v7113 = vld [vmem:[%s241 + $0x7a] sm:$0xff]
        %v7114 = vld [vmem:[%s241 + $0x82] sm:$0xff]
        %v7115 = vld [vmem:[%s241 + $0x92] sm:$0xff]
        %v7116 = vld [vmem:[%s241 + $0x9a] sm:$0xff]
        %v7117 = vld [vmem:[%s241 + $0xaa] sm:$0xff]
        %v7118 = vld [vmem:[%s241 + $0xb2] sm:$0xff]
        %v7119 = vld [vmem:[%s241 + $0xc2] sm:$0xff]
        %v7120 = vld [vmem:[%s241 + $0xca] sm:$0xff]
        %v7121 = vld [vmem:[%s241 + $0xda] sm:$0xff]
        %v7122 = vld [vmem:[%s241 + $0xe2] sm:$0xff]
        %v7123 = vld [vmem:[%s241 + $0xf2] sm:$0xff]
        %v7124 = vld [vmem:[%s241 + $0xfa] sm:$0xff]
        %v7125 = vld [vmem:[%s241 + $0x10a] sm:$0xff]
        %v7126 = vld [vmem:[%s241 + $0x112] sm:$0xff]
        %v7127 = vld [vmem:[%s241 + $0x122] sm:$0xff]
        %v7128 = vld [vmem:[%s241 + $0x12a] sm:$0xff]
        %v7129 = vld [vmem:[%s241 + $0x13a] sm:$0xff]
        %v7130 = vld [vmem:[%s241 + $0x142] sm:$0xff]
        %v7131 = vld [vmem:[%s241 + $0x152] sm:$0xff]
        %v7132 = vld [vmem:[%s241 + $0x15a] sm:$0xff]
        %v7133 = vld [vmem:[%s241 + $0x16a] sm:$0xff]
        %v7134 = vld [vmem:[%s241 + $0x172] sm:$0xff]
        %s7135 = scalar_lea.vmem %s1, 512
        %v7136 = vld [vmem:[%s7135] sm:$0xff]
        %v7137 = vld [vmem:[%s7135 + $0x8] sm:$0xff]
        %v7138 = vld [vmem:[%s7135 + $0x10] sm:$0xff]
        %v7139 = vld [vmem:[%s7135 + $0x18] sm:$0xff]
        %v7141 = vsel %vm169, %v7103, 0
        %v7144 = vsel %vm169, %v7104, 0
        %v7147 = vsel %vm169, %v7105, 0
        %v7150 = vsel %vm169, %v7106, 0
        %v7153 = vsel %vm169, %v7107, 0
        %v7156 = vsel %vm169, %v7108, 0
        %v7159 = vsel %vm169, %v7109, 0
        %v7162 = vsel %vm169, %v7110, 0
        %v7165 = vsel %vm169, %v7111, 0
        %v7168 = vsel %vm169, %v7112, 0
        %v7171 = vsel %vm169, %v7113, 0
        %v7174 = vsel %vm169, %v7114, 0
        %v7177 = vsel %vm169, %v7115, 0
        %v7180 = vsel %vm169, %v7116, 0
        %v7183 = vsel %vm169, %v7117, 0
        %v7186 = vsel %vm169, %v7118, 0
        %v7189 = vsel %vm169, %v7119, 0
        %v7192 = vsel %vm169, %v7120, 0
        %v7195 = vsel %vm169, %v7121, 0
        %v7198 = vsel %vm169, %v7122, 0
        %v7201 = vsel %vm169, %v7123, 0
        %v7204 = vsel %vm169, %v7124, 0
        %v7207 = vsel %vm169, %v7125, 0
        %v7210 = vsel %vm169, %v7126, 0
        %v7213 = vsel %vm169, %v7127, 0
        %v7216 = vsel %vm169, %v7128, 0
        %v7219 = vsel %vm169, %v7129, 0
        %v7222 = vsel %vm169, %v7130, 0
        %v7225 = vsel %vm169, %v7131, 0
        %v7228 = vsel %vm169, %v7132, 0
        %v7231 = vsel %vm169, %v7133, 0
        %v7234 = vsel %vm169, %v7134, 0
        %7236 = vmatprep.subr.mxu0 0.0
        %7237 = vmatpush1.msra.mxu0 %v7136
        %7238 = vmatprep.subr.mxu0 0.0
        %7239 = vmatpush1.msra.mxu0 %v7137
        %7240 = vmatprep.subr.mxu0 0.0
        %7241 = vmatpush1.msra.mxu0 %v7138
        %7242 = vmatprep.subr.mxu0 0.0
        %7243 = vmatpush1.msra.mxu0 %v7139
        %7244 = vmatprep.subr.mxu0 0.0
        %7245 = vmatpush1.msra.mxu0 0.0
        %7246 = vmatprep.subr.mxu0 0.0
        %7247 = vmatpush1.msra.mxu0 0.0
        %7248 = vmatprep.subr.mxu0 0.0
        %7249 = vmatpush1.msra.mxu0 0.0
        %7250 = vmatprep.subr.mxu0 0.0
        %7251 = vmatpush1.msra.mxu0 0.0
        %7252 = vmatprep.subr.mxu0 0.0
        %7253 = vmatpush1.msra.mxu0 0.0
        %7254 = vmatprep.subr.mxu0 0.0
        %7255 = vmatpush1.msra.mxu0 0.0
        %7256 = vmatprep.subr.mxu0 0.0
        %7257 = vmatpush1.msra.mxu0 0.0
        %7258 = vmatprep.subr.mxu0 0.0
        %7259 = vmatpush1.msra.mxu0 0.0
        %7260 = vmatprep.subr.mxu0 0.0
        %7261 = vmatpush1.msra.mxu0 0.0
        %7262 = vmatprep.subr.mxu0 0.0
        %7263 = vmatpush1.msra.mxu0 0.0
        %7264 = vmatprep.subr.mxu0 0.0
        %7265 = vmatpush1.msra.mxu0 0.0
        %7266 = vmatprep.subr.mxu0 0.0
        %7267 = vmatpush1.msra.mxu0 0.0
        %7268 = vmatprep.subr.mxu0 0.0
        %7269 = vmatpush1.msra.mxu0 0.0
        %7270 = vmatprep.subr.mxu0 0.0
        %7271 = vmatpush1.msra.mxu0 0.0
        %7272 = vmatprep.subr.mxu0 0.0
        %7273 = vmatpush1.msra.mxu0 0.0
        %7274 = vmatprep.subr.mxu0 0.0
        %7275 = vmatpush1.msra.mxu0 0.0
        %7276 = vmatprep.subr.mxu0 0.0
        %7277 = vmatpush1.msra.mxu0 0.0
        %7278 = vmatprep.subr.mxu0 0.0
        %7279 = vmatpush1.msra.mxu0 0.0
        %7280 = vmatprep.subr.mxu0 0.0
        %7281 = vmatpush1.msra.mxu0 0.0
        %7282 = vmatprep.subr.mxu0 0.0
        %7283 = vmatpush1.msra.mxu0 0.0
        %7284 = vmatprep.subr.mxu0 0.0
        %7285 = vmatpush1.msra.mxu0 0.0
        %7286 = vmatprep.subr.mxu0 0.0
        %7287 = vmatpush1.msra.mxu0 0.0
        %7288 = vmatprep.subr.mxu0 0.0
        %7289 = vmatpush1.msra.mxu0 0.0
        %7290 = vmatprep.subr.mxu0 0.0
        %7291 = vmatpush1.msra.mxu0 0.0
        %7292 = vmatprep.subr.mxu0 0.0
        %7293 = vmatpush1.msra.mxu0 0.0
        %7294 = vmatprep.subr.mxu0 0.0
        %7295 = vmatpush1.msra.mxu0 0.0
        %7296 = vmatprep.subr.mxu0 0.0
        %7297 = vmatpush1.msra.mxu0 0.0
        %7298 = vmatprep.subr.mxu0 0.0
        %7299 = vmatpush1.msra.mxu0 0.0
        %7300 = vmatprep.mubr.f32.mxu0 0.0
        %7301 = vmatmul.mubr.f32.gmra.mrb[0].mxu0 %v7141
        %v7302 = vpop.f32.mrb[0].mxu0
        %v7303 = vadd.f32 0.0, %v7302
        %v7304 = vpop.f32.mrb[0].mxu0
        %7305 = vmatprep.mubr.f32.mxu0 0.0
        %7306 = vmatmul.mubr.f32.gmra.mrb[0].mxu0 %v7144
        %v7307 = vpop.f32.mrb[0].mxu0
        %v7308 = vadd.f32 0.0, %v7307
        %v7309 = vpop.f32.mrb[0].mxu0
        %7310 = vmatprep.mubr.f32.mxu0 0.0
        %7311 = vmatmul.mubr.f32.gmra.mrb[0].mxu0 %v7147
        %v7312 = vpop.f32.mrb[0].mxu0
        %v7313 = vadd.f32 0.0, %v7312
        %v7314 = vpop.f32.mrb[0].mxu0
        %7315 = vmatprep.mubr.f32.mxu0 0.0
        %7316 = vmatmul.mubr.f32.gmra.mrb[0].mxu0 %v7150
        %v7317 = vpop.f32.mrb[0].mxu0
        %v7318 = vadd.f32 0.0, %v7317
        %v7319 = vpop.f32.mrb[0].mxu0
        %7320 = vmatprep.mubr.f32.mxu0 0.0
        %7321 = vmatmul.mubr.f32.gmra.mrb[0].mxu0 %v7153
        %v7322 = vpop.f32.mrb[0].mxu0
        %v7323 = vadd.f32 0.0, %v7322
        %v7324 = vpop.f32.mrb[0].mxu0
        %7325 = vmatprep.mubr.f32.mxu0 0.0
        %7326 = vmatmul.mubr.f32.gmra.mrb[0].mxu0 %v7156
        %v7327 = vpop.f32.mrb[0].mxu0
        %v7328 = vadd.f32 0.0, %v7327
        %v7329 = vpop.f32.mrb[0].mxu0
        %7330 = vmatprep.mubr.f32.mxu0 0.0
        %7331 = vmatmul.mubr.f32.gmra.mrb[0].mxu0 %v7159
        %v7332 = vpop.f32.mrb[0].mxu0
        %v7333 = vadd.f32 0.0, %v7332
        %v7334 = vpop.f32.mrb[0].mxu0
        %7335 = vmatprep.mubr.f32.mxu0 0.0
        %7336 = vmatmul.mubr.f32.gmra.mrb[0].mxu0 %v7162
        %v7337 = vpop.f32.mrb[0].mxu0
        %v7338 = vadd.f32 0.0, %v7337
        %v7339 = vpop.f32.mrb[0].mxu0
        %7340 = vmatprep.mubr.f32.mxu0 0.0
        %7341 = vmatmul.mubr.f32.gmra.mrb[0].mxu0 %v7165
        %v7342 = vpop.f32.mrb[0].mxu0
        %v7343 = vadd.f32 0.0, %v7342
        %v7344 = vpop.f32.mrb[0].mxu0
        %7345 = vmatprep.mubr.f32.mxu0 0.0
        %7346 = vmatmul.mubr.f32.gmra.mrb[0].mxu0 %v7168
        %v7347 = vpop.f32.mrb[0].mxu0
        %v7348 = vadd.f32 0.0, %v7347
        %v7349 = vpop.f32.mrb[0].mxu0
        %7350 = vmatprep.mubr.f32.mxu0 0.0
        %7351 = vmatmul.mubr.f32.gmra.mrb[0].mxu0 %v7171
        %v7352 = vpop.f32.mrb[0].mxu0
        %v7353 = vadd.f32 0.0, %v7352
        %v7354 = vpop.f32.mrb[0].mxu0
        %7355 = vmatprep.mubr.f32.mxu0 0.0
        %7356 = vmatmul.mubr.f32.gmra.mrb[0].mxu0 %v7174
        %v7357 = vpop.f32.mrb[0].mxu0
        %v7358 = vadd.f32 0.0, %v7357
        %v7359 = vpop.f32.mrb[0].mxu0
        %7360 = vmatprep.mubr.f32.mxu0 0.0
        %7361 = vmatmul.mubr.f32.gmra.mrb[0].mxu0 %v7177
        %v7362 = vpop.f32.mrb[0].mxu0
        %v7363 = vadd.f32 0.0, %v7362
        %v7364 = vpop.f32.mrb[0].mxu0
        %7365 = vmatprep.mubr.f32.mxu0 0.0
        %7366 = vmatmul.mubr.f32.gmra.mrb[0].mxu0 %v7180
        %v7367 = vpop.f32.mrb[0].mxu0
        %v7368 = vadd.f32 0.0, %v7367
        %v7369 = vpop.f32.mrb[0].mxu0
        %7370 = vmatprep.mubr.f32.mxu0 0.0
        %7371 = vmatmul.mubr.f32.gmra.mrb[0].mxu0 %v7183
        %v7372 = vpop.f32.mrb[0].mxu0
        %v7373 = vadd.f32 0.0, %v7372
        %v7374 = vpop.f32.mrb[0].mxu0
        %7375 = vmatprep.mubr.f32.mxu0 0.0
        %7376 = vmatmul.mubr.f32.gmra.mrb[0].mxu0 %v7186
        %v7377 = vpop.f32.mrb[0].mxu0
        %v7378 = vadd.f32 0.0, %v7377
        %v7379 = vpop.f32.mrb[0].mxu0
        %7380 = vmatprep.mubr.f32.mxu0 0.0
        %7381 = vmatmul.mubr.f32.gmra.mrb[0].mxu0 %v7189
        %v7382 = vpop.f32.mrb[0].mxu0
        %v7383 = vadd.f32 0.0, %v7382
        %v7384 = vpop.f32.mrb[0].mxu0
        %7385 = vmatprep.mubr.f32.mxu0 0.0
        %7386 = vmatmul.mubr.f32.gmra.mrb[0].mxu0 %v7192
        %v7387 = vpop.f32.mrb[0].mxu0
        %v7388 = vadd.f32 0.0, %v7387
        %v7389 = vpop.f32.mrb[0].mxu0
        %7390 = vmatprep.mubr.f32.mxu0 0.0
        %7391 = vmatmul.mubr.f32.gmra.mrb[0].mxu0 %v7195
        %v7392 = vpop.f32.mrb[0].mxu0
        %v7393 = vadd.f32 0.0, %v7392
        %v7394 = vpop.f32.mrb[0].mxu0
        %7395 = vmatprep.mubr.f32.mxu0 0.0
        %7396 = vmatmul.mubr.f32.gmra.mrb[0].mxu0 %v7198
        %v7397 = vpop.f32.mrb[0].mxu0
        %v7398 = vadd.f32 0.0, %v7397
        %v7399 = vpop.f32.mrb[0].mxu0
        %7400 = vmatprep.mubr.f32.mxu0 0.0
        %7401 = vmatmul.mubr.f32.gmra.mrb[0].mxu0 %v7201
        %v7402 = vpop.f32.mrb[0].mxu0
        %v7403 = vadd.f32 0.0, %v7402
        %v7404 = vpop.f32.mrb[0].mxu0
        %7405 = vmatprep.mubr.f32.mxu0 0.0
        %7406 = vmatmul.mubr.f32.gmra.mrb[0].mxu0 %v7204
        %v7407 = vpop.f32.mrb[0].mxu0
        %v7408 = vadd.f32 0.0, %v7407
        %v7409 = vpop.f32.mrb[0].mxu0
        %7410 = vmatprep.mubr.f32.mxu0 0.0
        %7411 = vmatmul.mubr.f32.gmra.mrb[0].mxu0 %v7207
        %v7412 = vpop.f32.mrb[0].mxu0
        %v7413 = vadd.f32 0.0, %v7412
        %v7414 = vpop.f32.mrb[0].mxu0
        %7415 = vmatprep.mubr.f32.mxu0 0.0
        %7416 = vmatmul.mubr.f32.gmra.mrb[0].mxu0 %v7210
        %v7417 = vpop.f32.mrb[0].mxu0
        %v7418 = vadd.f32 0.0, %v7417
        %v7419 = vpop.f32.mrb[0].mxu0
        %7420 = vmatprep.mubr.f32.mxu0 0.0
        %7421 = vmatmul.mubr.f32.gmra.mrb[0].mxu0 %v7213
        %v7422 = vpop.f32.mrb[0].mxu0
        %v7423 = vadd.f32 0.0, %v7422
        %v7424 = vpop.f32.mrb[0].mxu0
        %7425 = vmatprep.mubr.f32.mxu0 0.0
        %7426 = vmatmul.mubr.f32.gmra.mrb[0].mxu0 %v7216
        %v7427 = vpop.f32.mrb[0].mxu0
        %v7428 = vadd.f32 0.0, %v7427
        %v7429 = vpop.f32.mrb[0].mxu0
        %7430 = vmatprep.mubr.f32.mxu0 0.0
        %7431 = vmatmul.mubr.f32.gmra.mrb[0].mxu0 %v7219
        %v7432 = vpop.f32.mrb[0].mxu0
        %v7433 = vadd.f32 0.0, %v7432
        %v7434 = vpop.f32.mrb[0].mxu0
        %7435 = vmatprep.mubr.f32.mxu0 0.0
        %7436 = vmatmul.mubr.f32.gmra.mrb[0].mxu0 %v7222
        %v7437 = vpop.f32.mrb[0].mxu0
        %v7438 = vadd.f32 0.0, %v7437
        %v7439 = vpop.f32.mrb[0].mxu0
        %7440 = vmatprep.mubr.f32.mxu0 0.0
        %7441 = vmatmul.mubr.f32.gmra.mrb[0].mxu0 %v7225
        %v7442 = vpop.f32.mrb[0].mxu0
        %v7443 = vadd.f32 0.0, %v7442
        %v7444 = vpop.f32.mrb[0].mxu0
        %7445 = vmatprep.mubr.f32.mxu0 0.0
        %7446 = vmatmul.mubr.f32.gmra.mrb[0].mxu0 %v7228
        %v7447 = vpop.f32.mrb[0].mxu0
        %v7448 = vadd.f32 0.0, %v7447
        %v7449 = vpop.f32.mrb[0].mxu0
        %7450 = vmatprep.mubr.f32.mxu0 0.0
        %7451 = vmatmul.mubr.f32.gmra.mrb[0].mxu0 %v7231
        %v7452 = vpop.f32.mrb[0].mxu0
        %v7453 = vadd.f32 0.0, %v7452
        %v7454 = vpop.f32.mrb[0].mxu0
        %7455 = vmatprep.mubr.f32.mxu0 0.0
        %7456 = vmatmul.mubr.f32.gmra.mrb[0].mxu0 %v7234
        %v7457 = vpop.f32.mrb[0].mxu0
        %v7458 = vadd.f32 0.0, %v7457
        %v7459 = vpop.f32.mrb[0].mxu0
        %7460 = vdwg.mxu0
        %v7461 = vadd.f32 %v7071, %v7303
        %v7462 = vadd.f32 %v7072, %v7308
        %v7463 = vadd.f32 %v7073, %v7313
        %v7464 = vadd.f32 %v7074, %v7318
        %v7465 = vadd.f32 %v7075, %v7323
        %v7466 = vadd.f32 %v7076, %v7328
        %v7467 = vadd.f32 %v7077, %v7333
        %v7468 = vadd.f32 %v7078, %v7338
        %v7469 = vadd.f32 %v7079, %v7343
        %v7470 = vadd.f32 %v7080, %v7348
        %v7471 = vadd.f32 %v7081, %v7353
        %v7472 = vadd.f32 %v7082, %v7358
        %v7473 = vadd.f32 %v7083, %v7363
        %v7474 = vadd.f32 %v7084, %v7368
        %v7475 = vadd.f32 %v7085, %v7373
        %v7476 = vadd.f32 %v7086, %v7378
        %v7477 = vadd.f32 %v7087, %v7383
        %v7478 = vadd.f32 %v7088, %v7388
        %v7479 = vadd.f32 %v7089, %v7393
        %v7480 = vadd.f32 %v7090, %v7398
        %v7481 = vadd.f32 %v7091, %v7403
        %v7482 = vadd.f32 %v7092, %v7408
        %v7483 = vadd.f32 %v7093, %v7413
        %v7484 = vadd.f32 %v7094, %v7418
        %v7485 = vadd.f32 %v7095, %v7423
        %v7486 = vadd.f32 %v7096, %v7428
        %v7487 = vadd.f32 %v7097, %v7433
        %v7488 = vadd.f32 %v7098, %v7438
        %v7489 = vadd.f32 %v7099, %v7443
        %v7490 = vadd.f32 %v7100, %v7448
        %v7491 = vadd.f32 %v7101, %v7453
        %v7492 = vadd.f32 %v7102, %v7458
        %v7493 = vld [vmem:[%s252 + $0x2] sm:$0xff]
        %v7494 = vld [vmem:[%s252 + $0xa] sm:$0xff]
        %v7495 = vld [vmem:[%s252 + $0x1a] sm:$0xff]
        %v7496 = vld [vmem:[%s252 + $0x22] sm:$0xff]
        %v7497 = vld [vmem:[%s252 + $0x32] sm:$0xff]
        %v7498 = vld [vmem:[%s252 + $0x3a] sm:$0xff]
        %v7499 = vld [vmem:[%s252 + $0x4a] sm:$0xff]
        %v7500 = vld [vmem:[%s252 + $0x52] sm:$0xff]
        %v7501 = vld [vmem:[%s252 + $0x62] sm:$0xff]
        %v7502 = vld [vmem:[%s252 + $0x6a] sm:$0xff]
        %v7503 = vld [vmem:[%s252 + $0x7a] sm:$0xff]
        %v7504 = vld [vmem:[%s252 + $0x82] sm:$0xff]
        %v7505 = vld [vmem:[%s252 + $0x92] sm:$0xff]
        %v7506 = vld [vmem:[%s252 + $0x9a] sm:$0xff]
        %v7507 = vld [vmem:[%s252 + $0xaa] sm:$0xff]
        %v7508 = vld [vmem:[%s252 + $0xb2] sm:$0xff]
        %v7509 = vld [vmem:[%s252 + $0xc2] sm:$0xff]
        %v7510 = vld [vmem:[%s252 + $0xca] sm:$0xff]
        %v7511 = vld [vmem:[%s252 + $0xda] sm:$0xff]
        %v7512 = vld [vmem:[%s252 + $0xe2] sm:$0xff]
        %v7513 = vld [vmem:[%s252 + $0xf2] sm:$0xff]
        %v7514 = vld [vmem:[%s252 + $0xfa] sm:$0xff]
        %v7515 = vld [vmem:[%s252 + $0x10a] sm:$0xff]
        %v7516 = vld [vmem:[%s252 + $0x112] sm:$0xff]
        %v7517 = vld [vmem:[%s252 + $0x122] sm:$0xff]
        %v7518 = vld [vmem:[%s252 + $0x12a] sm:$0xff]
        %v7519 = vld [vmem:[%s252 + $0x13a] sm:$0xff]
        %v7520 = vld [vmem:[%s252 + $0x142] sm:$0xff]
        %v7521 = vld [vmem:[%s252 + $0x152] sm:$0xff]
        %v7522 = vld [vmem:[%s252 + $0x15a] sm:$0xff]
        %v7523 = vld [vmem:[%s252 + $0x16a] sm:$0xff]
        %v7524 = vld [vmem:[%s252 + $0x172] sm:$0xff]
        %s7525 = scalar_lea.vmem %s1, 544
        %v7526 = vld [vmem:[%s7525] sm:$0xff]
        %v7527 = vld [vmem:[%s7525 + $0x8] sm:$0xff]
        %v7528 = vld [vmem:[%s7525 + $0x10] sm:$0xff]
        %v7529 = vld [vmem:[%s7525 + $0x18] sm:$0xff]
        %v7531 = vsel %vm169, %v7493, 0
        %v7534 = vsel %vm169, %v7494, 0
        %v7537 = vsel %vm169, %v7495, 0
        %v7540 = vsel %vm169, %v7496, 0
        %v7543 = vsel %vm169, %v7497, 0
        %v7546 = vsel %vm169, %v7498, 0
        %v7549 = vsel %vm169, %v7499, 0
        %v7552 = vsel %vm169, %v7500, 0
        %v7555 = vsel %vm169, %v7501, 0
        %v7558 = vsel %vm169, %v7502, 0
        %v7561 = vsel %vm169, %v7503, 0
        %v7564 = vsel %vm169, %v7504, 0
        %v7567 = vsel %vm169, %v7505, 0
        %v7570 = vsel %vm169, %v7506, 0
        %v7573 = vsel %vm169, %v7507, 0
        %v7576 = vsel %vm169, %v7508, 0
        %v7579 = vsel %vm169, %v7509, 0
        %v7582 = vsel %vm169, %v7510, 0
        %v7585 = vsel %vm169, %v7511, 0
        %v7588 = vsel %vm169, %v7512, 0
        %v7591 = vsel %vm169, %v7513, 0
        %v7594 = vsel %vm169, %v7514, 0
        %v7597 = vsel %vm169, %v7515, 0
        %v7600 = vsel %vm169, %v7516, 0
        %v7603 = vsel %vm169, %v7517, 0
        %v7606 = vsel %vm169, %v7518, 0
        %v7609 = vsel %vm169, %v7519, 0
        %v7612 = vsel %vm169, %v7520, 0
        %v7615 = vsel %vm169, %v7521, 0
        %v7618 = vsel %vm169, %v7522, 0
        %v7621 = vsel %vm169, %v7523, 0
        %v7624 = vsel %vm169, %v7524, 0
        %7626 = vmatprep.subr.mxu0 0.0
        %7627 = vmatpush1.msra.mxu0 %v7526
        %7628 = vmatprep.subr.mxu0 0.0
        %7629 = vmatpush1.msra.mxu0 %v7527
        %7630 = vmatprep.subr.mxu0 0.0
        %7631 = vmatpush1.msra.mxu0 %v7528
        %7632 = vmatprep.subr.mxu0 0.0
        %7633 = vmatpush1.msra.mxu0 %v7529
        %7634 = vmatprep.subr.mxu0 0.0
        %7635 = vmatpush1.msra.mxu0 0.0
        %7636 = vmatprep.subr.mxu0 0.0
        %7637 = vmatpush1.msra.mxu0 0.0
        %7638 = vmatprep.subr.mxu0 0.0
        %7639 = vmatpush1.msra.mxu0 0.0
        %7640 = vmatprep.subr.mxu0 0.0
        %7641 = vmatpush1.msra.mxu0 0.0
        %7642 = vmatprep.subr.mxu0 0.0
        %7643 = vmatpush1.msra.mxu0 0.0
        %7644 = vmatprep.subr.mxu0 0.0
        %7645 = vmatpush1.msra.mxu0 0.0
        %7646 = vmatprep.subr.mxu0 0.0
        %7647 = vmatpush1.msra.mxu0 0.0
        %7648 = vmatprep.subr.mxu0 0.0
        %7649 = vmatpush1.msra.mxu0 0.0
        %7650 = vmatprep.subr.mxu0 0.0
        %7651 = vmatpush1.msra.mxu0 0.0
        %7652 = vmatprep.subr.mxu0 0.0
        %7653 = vmatpush1.msra.mxu0 0.0
        %7654 = vmatprep.subr.mxu0 0.0
        %7655 = vmatpush1.msra.mxu0 0.0
        %7656 = vmatprep.subr.mxu0 0.0
        %7657 = vmatpush1.msra.mxu0 0.0
        %7658 = vmatprep.subr.mxu0 0.0
        %7659 = vmatpush1.msra.mxu0 0.0
        %7660 = vmatprep.subr.mxu0 0.0
        %7661 = vmatpush1.msra.mxu0 0.0
        %7662 = vmatprep.subr.mxu0 0.0
        %7663 = vmatpush1.msra.mxu0 0.0
        %7664 = vmatprep.subr.mxu0 0.0
        %7665 = vmatpush1.msra.mxu0 0.0
        %7666 = vmatprep.subr.mxu0 0.0
        %7667 = vmatpush1.msra.mxu0 0.0
        %7668 = vmatprep.subr.mxu0 0.0
        %7669 = vmatpush1.msra.mxu0 0.0
        %7670 = vmatprep.subr.mxu0 0.0
        %7671 = vmatpush1.msra.mxu0 0.0
        %7672 = vmatprep.subr.mxu0 0.0
        %7673 = vmatpush1.msra.mxu0 0.0
        %7674 = vmatprep.subr.mxu0 0.0
        %7675 = vmatpush1.msra.mxu0 0.0
        %7676 = vmatprep.subr.mxu0 0.0
        %7677 = vmatpush1.msra.mxu0 0.0
        %7678 = vmatprep.subr.mxu0 0.0
        %7679 = vmatpush1.msra.mxu0 0.0
        %7680 = vmatprep.subr.mxu0 0.0
        %7681 = vmatpush1.msra.mxu0 0.0
        %7682 = vmatprep.subr.mxu0 0.0
        %7683 = vmatpush1.msra.mxu0 0.0
        %7684 = vmatprep.subr.mxu0 0.0
        %7685 = vmatpush1.msra.mxu0 0.0
        %7686 = vmatprep.subr.mxu0 0.0
        %7687 = vmatpush1.msra.mxu0 0.0
        %7688 = vmatprep.subr.mxu0 0.0
        %7689 = vmatpush1.msra.mxu0 0.0
        %7690 = vmatprep.mubr.f32.mxu0 0.0
        %7691 = vmatmul.mubr.f32.gmra.mrb[0].mxu0 %v7531
        %v7692 = vpop.f32.mrb[0].mxu0
        %v7693 = vadd.f32 0.0, %v7692
        %v7694 = vpop.f32.mrb[0].mxu0
        %7695 = vmatprep.mubr.f32.mxu0 0.0
        %7696 = vmatmul.mubr.f32.gmra.mrb[0].mxu0 %v7534
        %v7697 = vpop.f32.mrb[0].mxu0
        %v7698 = vadd.f32 0.0, %v7697
        %v7699 = vpop.f32.mrb[0].mxu0
        %7700 = vmatprep.mubr.f32.mxu0 0.0
        %7701 = vmatmul.mubr.f32.gmra.mrb[0].mxu0 %v7537
        %v7702 = vpop.f32.mrb[0].mxu0
        %v7703 = vadd.f32 0.0, %v7702
        %v7704 = vpop.f32.mrb[0].mxu0
        %7705 = vmatprep.mubr.f32.mxu0 0.0
        %7706 = vmatmul.mubr.f32.gmra.mrb[0].mxu0 %v7540
        %v7707 = vpop.f32.mrb[0].mxu0
        %v7708 = vadd.f32 0.0, %v7707
        %v7709 = vpop.f32.mrb[0].mxu0
        %7710 = vmatprep.mubr.f32.mxu0 0.0
        %7711 = vmatmul.mubr.f32.gmra.mrb[0].mxu0 %v7543
        %v7712 = vpop.f32.mrb[0].mxu0
        %v7713 = vadd.f32 0.0, %v7712
        %v7714 = vpop.f32.mrb[0].mxu0
        %7715 = vmatprep.mubr.f32.mxu0 0.0
        %7716 = vmatmul.mubr.f32.gmra.mrb[0].mxu0 %v7546
        %v7717 = vpop.f32.mrb[0].mxu0
        %v7718 = vadd.f32 0.0, %v7717
        %v7719 = vpop.f32.mrb[0].mxu0
        %7720 = vmatprep.mubr.f32.mxu0 0.0
        %7721 = vmatmul.mubr.f32.gmra.mrb[0].mxu0 %v7549
        %v7722 = vpop.f32.mrb[0].mxu0
        %v7723 = vadd.f32 0.0, %v7722
        %v7724 = vpop.f32.mrb[0].mxu0
        %7725 = vmatprep.mubr.f32.mxu0 0.0
        %7726 = vmatmul.mubr.f32.gmra.mrb[0].mxu0 %v7552
        %v7727 = vpop.f32.mrb[0].mxu0
        %v7728 = vadd.f32 0.0, %v7727
        %v7729 = vpop.f32.mrb[0].mxu0
        %7730 = vmatprep.mubr.f32.mxu0 0.0
        %7731 = vmatmul.mubr.f32.gmra.mrb[0].mxu0 %v7555
        %v7732 = vpop.f32.mrb[0].mxu0
        %v7733 = vadd.f32 0.0, %v7732
        %v7734 = vpop.f32.mrb[0].mxu0
        %7735 = vmatprep.mubr.f32.mxu0 0.0
        %7736 = vmatmul.mubr.f32.gmra.mrb[0].mxu0 %v7558
        %v7737 = vpop.f32.mrb[0].mxu0
        %v7738 = vadd.f32 0.0, %v7737
        %v7739 = vpop.f32.mrb[0].mxu0
        %7740 = vmatprep.mubr.f32.mxu0 0.0
        %7741 = vmatmul.mubr.f32.gmra.mrb[0].mxu0 %v7561
        %v7742 = vpop.f32.mrb[0].mxu0
        %v7743 = vadd.f32 0.0, %v7742
        %v7744 = vpop.f32.mrb[0].mxu0
        %7745 = vmatprep.mubr.f32.mxu0 0.0
        %7746 = vmatmul.mubr.f32.gmra.mrb[0].mxu0 %v7564
        %v7747 = vpop.f32.mrb[0].mxu0
        %v7748 = vadd.f32 0.0, %v7747
        %v7749 = vpop.f32.mrb[0].mxu0
        %7750 = vmatprep.mubr.f32.mxu0 0.0
        %7751 = vmatmul.mubr.f32.gmra.mrb[0].mxu0 %v7567
        %v7752 = vpop.f32.mrb[0].mxu0
        %v7753 = vadd.f32 0.0, %v7752
        %v7754 = vpop.f32.mrb[0].mxu0
        %7755 = vmatprep.mubr.f32.mxu0 0.0
        %7756 = vmatmul.mubr.f32.gmra.mrb[0].mxu0 %v7570
        %v7757 = vpop.f32.mrb[0].mxu0
        %v7758 = vadd.f32 0.0, %v7757
        %v7759 = vpop.f32.mrb[0].mxu0
        %7760 = vmatprep.mubr.f32.mxu0 0.0
        %7761 = vmatmul.mubr.f32.gmra.mrb[0].mxu0 %v7573
        %v7762 = vpop.f32.mrb[0].mxu0
        %v7763 = vadd.f32 0.0, %v7762
        %v7764 = vpop.f32.mrb[0].mxu0
        %7765 = vmatprep.mubr.f32.mxu0 0.0
        %7766 = vmatmul.mubr.f32.gmra.mrb[0].mxu0 %v7576
        %v7767 = vpop.f32.mrb[0].mxu0
        %v7768 = vadd.f32 0.0, %v7767
        %v7769 = vpop.f32.mrb[0].mxu0
        %7770 = vmatprep.mubr.f32.mxu0 0.0
        %7771 = vmatmul.mubr.f32.gmra.mrb[0].mxu0 %v7579
        %v7772 = vpop.f32.mrb[0].mxu0
        %v7773 = vadd.f32 0.0, %v7772
        %v7774 = vpop.f32.mrb[0].mxu0
        %7775 = vmatprep.mubr.f32.mxu0 0.0
        %7776 = vmatmul.mubr.f32.gmra.mrb[0].mxu0 %v7582
        %v7777 = vpop.f32.mrb[0].mxu0
        %v7778 = vadd.f32 0.0, %v7777
        %v7779 = vpop.f32.mrb[0].mxu0
        %7780 = vmatprep.mubr.f32.mxu0 0.0
        %7781 = vmatmul.mubr.f32.gmra.mrb[0].mxu0 %v7585
        %v7782 = vpop.f32.mrb[0].mxu0
        %v7783 = vadd.f32 0.0, %v7782
        %v7784 = vpop.f32.mrb[0].mxu0
        %7785 = vmatprep.mubr.f32.mxu0 0.0
        %7786 = vmatmul.mubr.f32.gmra.mrb[0].mxu0 %v7588
        %v7787 = vpop.f32.mrb[0].mxu0
        %v7788 = vadd.f32 0.0, %v7787
        %v7789 = vpop.f32.mrb[0].mxu0
        %7790 = vmatprep.mubr.f32.mxu0 0.0
        %7791 = vmatmul.mubr.f32.gmra.mrb[0].mxu0 %v7591
        %v7792 = vpop.f32.mrb[0].mxu0
        %v7793 = vadd.f32 0.0, %v7792
        %v7794 = vpop.f32.mrb[0].mxu0
        %7795 = vmatprep.mubr.f32.mxu0 0.0
        %7796 = vmatmul.mubr.f32.gmra.mrb[0].mxu0 %v7594
        %v7797 = vpop.f32.mrb[0].mxu0
        %v7798 = vadd.f32 0.0, %v7797
        %v7799 = vpop.f32.mrb[0].mxu0
        %7800 = vmatprep.mubr.f32.mxu0 0.0
        %7801 = vmatmul.mubr.f32.gmra.mrb[0].mxu0 %v7597
        %v7802 = vpop.f32.mrb[0].mxu0
        %v7803 = vadd.f32 0.0, %v7802
        %v7804 = vpop.f32.mrb[0].mxu0
        %7805 = vmatprep.mubr.f32.mxu0 0.0
        %7806 = vmatmul.mubr.f32.gmra.mrb[0].mxu0 %v7600
        %v7807 = vpop.f32.mrb[0].mxu0
        %v7808 = vadd.f32 0.0, %v7807
        %v7809 = vpop.f32.mrb[0].mxu0
        %7810 = vmatprep.mubr.f32.mxu0 0.0
        %7811 = vmatmul.mubr.f32.gmra.mrb[0].mxu0 %v7603
        %v7812 = vpop.f32.mrb[0].mxu0
        %v7813 = vadd.f32 0.0, %v7812
        %v7814 = vpop.f32.mrb[0].mxu0
        %7815 = vmatprep.mubr.f32.mxu0 0.0
        %7816 = vmatmul.mubr.f32.gmra.mrb[0].mxu0 %v7606
        %v7817 = vpop.f32.mrb[0].mxu0
        %v7818 = vadd.f32 0.0, %v7817
        %v7819 = vpop.f32.mrb[0].mxu0
        %7820 = vmatprep.mubr.f32.mxu0 0.0
        %7821 = vmatmul.mubr.f32.gmra.mrb[0].mxu0 %v7609
        %v7822 = vpop.f32.mrb[0].mxu0
        %v7823 = vadd.f32 0.0, %v7822
        %v7824 = vpop.f32.mrb[0].mxu0
        %7825 = vmatprep.mubr.f32.mxu0 0.0
        %7826 = vmatmul.mubr.f32.gmra.mrb[0].mxu0 %v7612
        %v7827 = vpop.f32.mrb[0].mxu0
        %v7828 = vadd.f32 0.0, %v7827
        %v7829 = vpop.f32.mrb[0].mxu0
        %7830 = vmatprep.mubr.f32.mxu0 0.0
        %7831 = vmatmul.mubr.f32.gmra.mrb[0].mxu0 %v7615
        %v7832 = vpop.f32.mrb[0].mxu0
        %v7833 = vadd.f32 0.0, %v7832
        %v7834 = vpop.f32.mrb[0].mxu0
        %7835 = vmatprep.mubr.f32.mxu0 0.0
        %7836 = vmatmul.mubr.f32.gmra.mrb[0].mxu0 %v7618
        %v7837 = vpop.f32.mrb[0].mxu0
        %v7838 = vadd.f32 0.0, %v7837
        %v7839 = vpop.f32.mrb[0].mxu0
        %7840 = vmatprep.mubr.f32.mxu0 0.0
        %7841 = vmatmul.mubr.f32.gmra.mrb[0].mxu0 %v7621
        %v7842 = vpop.f32.mrb[0].mxu0
        %v7843 = vadd.f32 0.0, %v7842
        %v7844 = vpop.f32.mrb[0].mxu0
        %7845 = vmatprep.mubr.f32.mxu0 0.0
        %7846 = vmatmul.mubr.f32.gmra.mrb[0].mxu0 %v7624
        %v7847 = vpop.f32.mrb[0].mxu0
        %v7848 = vadd.f32 0.0, %v7847
        %v7849 = vpop.f32.mrb[0].mxu0
        %7850 = vdwg.mxu0
        %v7851 = vadd.f32 %v7461, %v7693
        %v7852 = vadd.f32 %v7462, %v7698
        %v7853 = vadd.f32 %v7463, %v7703
        %v7854 = vadd.f32 %v7464, %v7708
        %v7855 = vadd.f32 %v7465, %v7713
        %v7856 = vadd.f32 %v7466, %v7718
        %v7857 = vadd.f32 %v7467, %v7723
        %v7858 = vadd.f32 %v7468, %v7728
        %v7859 = vadd.f32 %v7469, %v7733
        %v7860 = vadd.f32 %v7470, %v7738
        %v7861 = vadd.f32 %v7471, %v7743
        %v7862 = vadd.f32 %v7472, %v7748
        %v7863 = vadd.f32 %v7473, %v7753
        %v7864 = vadd.f32 %v7474, %v7758
        %v7865 = vadd.f32 %v7475, %v7763
        %v7866 = vadd.f32 %v7476, %v7768
        %v7867 = vadd.f32 %v7477, %v7773
        %v7868 = vadd.f32 %v7478, %v7778
        %v7869 = vadd.f32 %v7479, %v7783
        %v7870 = vadd.f32 %v7480, %v7788
        %v7871 = vadd.f32 %v7481, %v7793
        %v7872 = vadd.f32 %v7482, %v7798
        %v7873 = vadd.f32 %v7483, %v7803
        %v7874 = vadd.f32 %v7484, %v7808
        %v7875 = vadd.f32 %v7485, %v7813
        %v7876 = vadd.f32 %v7486, %v7818
        %v7877 = vadd.f32 %v7487, %v7823
        %v7878 = vadd.f32 %v7488, %v7828
        %v7879 = vadd.f32 %v7489, %v7833
        %v7880 = vadd.f32 %v7490, %v7838
        %v7881 = vadd.f32 %v7491, %v7843
        %v7882 = vadd.f32 %v7492, %v7848
        %v7883 = vmax.f32 %v7851, 0.0
        %v7884 = vmax.f32 %v7852, 0.0
        %v7885 = vmax.f32 %v7853, 0.0
        %v7886 = vmax.f32 %v7854, 0.0
        %v7887 = vmax.f32 %v7855, 0.0
        %v7888 = vmax.f32 %v7856, 0.0
        %v7889 = vmax.f32 %v7857, 0.0
        %v7890 = vmax.f32 %v7858, 0.0
        %v7891 = vmax.f32 %v7859, 0.0
        %v7892 = vmax.f32 %v7860, 0.0
        %v7893 = vmax.f32 %v7861, 0.0
        %v7894 = vmax.f32 %v7862, 0.0
        %v7895 = vmax.f32 %v7863, 0.0
        %v7896 = vmax.f32 %v7864, 0.0
        %v7897 = vmax.f32 %v7865, 0.0
        %v7898 = vmax.f32 %v7866, 0.0
        %v7899 = vmax.f32 %v7867, 0.0
        %v7900 = vmax.f32 %v7868, 0.0
        %v7901 = vmax.f32 %v7869, 0.0
        %v7902 = vmax.f32 %v7870, 0.0
        %v7903 = vmax.f32 %v7871, 0.0
        %v7904 = vmax.f32 %v7872, 0.0
        %v7905 = vmax.f32 %v7873, 0.0
        %v7906 = vmax.f32 %v7874, 0.0
        %v7907 = vmax.f32 %v7875, 0.0
        %v7908 = vmax.f32 %v7876, 0.0
        %v7909 = vmax.f32 %v7877, 0.0
        %v7910 = vmax.f32 %v7878, 0.0
        %v7911 = vmax.f32 %v7879, 0.0
        %v7912 = vmax.f32 %v7880, 0.0
        %v7913 = vmax.f32 %v7881, 0.0
        %v7914 = vmax.f32 %v7882, 0.0
        %s7915 = scalar_lea.vmem %s2, 16
        %v7916 = vld [vmem:[%s7915] sm:$0xff]
        %v7917 = vld [vmem:[%s7915 + $0x8] sm:$0xff]
        %v7919 = vsel %vm3848, %v7883, 0
        %v7922 = vsel %vm3848, %v7884, 0
        %v7925 = vsel %vm3848, %v7885, 0
        %v7928 = vsel %vm3848, %v7886, 0
        %v7931 = vsel %vm3848, %v7887, 0
        %v7934 = vsel %vm3848, %v7888, 0
        %v7937 = vsel %vm3848, %v7889, 0
        %v7940 = vsel %vm3848, %v7890, 0
        %v7943 = vsel %vm3848, %v7891, 0
        %v7946 = vsel %vm3848, %v7892, 0
        %v7949 = vsel %vm3848, %v7893, 0
        %v7952 = vsel %vm3848, %v7894, 0
        %v7955 = vsel %vm3848, %v7895, 0
        %v7958 = vsel %vm3848, %v7896, 0
        %v7961 = vsel %vm3848, %v7897, 0
        %v7964 = vsel %vm3848, %v7898, 0
        %v7967 = vsel %vm3848, %v7899, 0
        %v7970 = vsel %vm3848, %v7900, 0
        %v7973 = vsel %vm3848, %v7901, 0
        %v7976 = vsel %vm3848, %v7902, 0
        %v7979 = vsel %vm3848, %v7903, 0
        %v7982 = vsel %vm3848, %v7904, 0
        %v7985 = vsel %vm3848, %v7905, 0
        %v7988 = vsel %vm3848, %v7906, 0
        %v7991 = vsel %vm3848, %v7907, 0
        %v7994 = vsel %vm3848, %v7908, 0
        %v7997 = vsel %vm3848, %v7909, 0
        %v8000 = vsel %vm3848, %v7910, 0
        %v8003 = vsel %vm3848, %v7911, 0
        %v8006 = vsel %vm3848, %v7912, 0
        %v8009 = vsel %vm3848, %v7913, 0
        %v8012 = vsel %vm3848, %v7914, 0
        %8014 = vmatprep.subr.mxu0 0.0
        %8015 = vmatpush1.msra.mxu0 %v7916
        %8016 = vmatprep.subr.mxu0 0.0
        %8017 = vmatpush1.msra.mxu0 %v7917
        %8018 = vmatprep.subr.mxu0 0.0
        %8019 = vmatpush1.msra.mxu0 0.0
        %8020 = vmatprep.subr.mxu0 0.0
        %8021 = vmatpush1.msra.mxu0 0.0
        %8022 = vmatprep.subr.mxu0 0.0
        %8023 = vmatpush1.msra.mxu0 0.0
        %8024 = vmatprep.subr.mxu0 0.0
        %8025 = vmatpush1.msra.mxu0 0.0
        %8026 = vmatprep.subr.mxu0 0.0
        %8027 = vmatpush1.msra.mxu0 0.0
        %8028 = vmatprep.subr.mxu0 0.0
        %8029 = vmatpush1.msra.mxu0 0.0
        %8030 = vmatprep.subr.mxu0 0.0
        %8031 = vmatpush1.msra.mxu0 0.0
        %8032 = vmatprep.subr.mxu0 0.0
        %8033 = vmatpush1.msra.mxu0 0.0
        %8034 = vmatprep.subr.mxu0 0.0
        %8035 = vmatpush1.msra.mxu0 0.0
        %8036 = vmatprep.subr.mxu0 0.0
        %8037 = vmatpush1.msra.mxu0 0.0
        %8038 = vmatprep.subr.mxu0 0.0
        %8039 = vmatpush1.msra.mxu0 0.0
        %8040 = vmatprep.subr.mxu0 0.0
        %8041 = vmatpush1.msra.mxu0 0.0
        %8042 = vmatprep.subr.mxu0 0.0
        %8043 = vmatpush1.msra.mxu0 0.0
        %8044 = vmatprep.subr.mxu0 0.0
        %8045 = vmatpush1.msra.mxu0 0.0
        %8046 = vmatprep.subr.mxu0 0.0
        %8047 = vmatpush1.msra.mxu0 0.0
        %8048 = vmatprep.subr.mxu0 0.0
        %8049 = vmatpush1.msra.mxu0 0.0
        %8050 = vmatprep.subr.mxu0 0.0
        %8051 = vmatpush1.msra.mxu0 0.0
        %8052 = vmatprep.subr.mxu0 0.0
        %8053 = vmatpush1.msra.mxu0 0.0
        %8054 = vmatprep.subr.mxu0 0.0
        %8055 = vmatpush1.msra.mxu0 0.0
        %8056 = vmatprep.subr.mxu0 0.0
        %8057 = vmatpush1.msra.mxu0 0.0
        %8058 = vmatprep.subr.mxu0 0.0
        %8059 = vmatpush1.msra.mxu0 0.0
        %8060 = vmatprep.subr.mxu0 0.0
        %8061 = vmatpush1.msra.mxu0 0.0
        %8062 = vmatprep.subr.mxu0 0.0
        %8063 = vmatpush1.msra.mxu0 0.0
        %8064 = vmatprep.subr.mxu0 0.0
        %8065 = vmatpush1.msra.mxu0 0.0
        %8066 = vmatprep.subr.mxu0 0.0
        %8067 = vmatpush1.msra.mxu0 0.0
        %8068 = vmatprep.subr.mxu0 0.0
        %8069 = vmatpush1.msra.mxu0 0.0
        %8070 = vmatprep.subr.mxu0 0.0
        %8071 = vmatpush1.msra.mxu0 0.0
        %8072 = vmatprep.subr.mxu0 0.0
        %8073 = vmatpush1.msra.mxu0 0.0
        %8074 = vmatprep.subr.mxu0 0.0
        %8075 = vmatpush1.msra.mxu0 0.0
        %8076 = vmatprep.subr.mxu0 0.0
        %8077 = vmatpush1.msra.mxu0 0.0
        %8078 = vmatprep.mubr.f32.mxu0 0.0
        %8079 = vmatmul.mubr.f32.gmra.mrb[0].mxu0 %v7919
        %v8080 = vpop.f32.mrb[0].mxu0
        %v8081 = vadd.f32 0.0, %v8080
        %v8082 = vpop.f32.mrb[0].mxu0
        %8083 = vmatprep.mubr.f32.mxu0 0.0
        %8084 = vmatmul.mubr.f32.gmra.mrb[0].mxu0 %v7922
        %v8085 = vpop.f32.mrb[0].mxu0
        %v8086 = vadd.f32 0.0, %v8085
        %v8087 = vpop.f32.mrb[0].mxu0
        %8088 = vmatprep.mubr.f32.mxu0 0.0
        %8089 = vmatmul.mubr.f32.gmra.mrb[0].mxu0 %v7925
        %v8090 = vpop.f32.mrb[0].mxu0
        %v8091 = vadd.f32 0.0, %v8090
        %v8092 = vpop.f32.mrb[0].mxu0
        %8093 = vmatprep.mubr.f32.mxu0 0.0
        %8094 = vmatmul.mubr.f32.gmra.mrb[0].mxu0 %v7928
        %v8095 = vpop.f32.mrb[0].mxu0
        %v8096 = vadd.f32 0.0, %v8095
        %v8097 = vpop.f32.mrb[0].mxu0
        %8098 = vmatprep.mubr.f32.mxu0 0.0
        %8099 = vmatmul.mubr.f32.gmra.mrb[0].mxu0 %v7931
        %v8100 = vpop.f32.mrb[0].mxu0
        %v8101 = vadd.f32 0.0, %v8100
        %v8102 = vpop.f32.mrb[0].mxu0
        %8103 = vmatprep.mubr.f32.mxu0 0.0
        %8104 = vmatmul.mubr.f32.gmra.mrb[0].mxu0 %v7934
        %v8105 = vpop.f32.mrb[0].mxu0
        %v8106 = vadd.f32 0.0, %v8105
        %v8107 = vpop.f32.mrb[0].mxu0
        %8108 = vmatprep.mubr.f32.mxu0 0.0
        %8109 = vmatmul.mubr.f32.gmra.mrb[0].mxu0 %v7937
        %v8110 = vpop.f32.mrb[0].mxu0
        %v8111 = vadd.f32 0.0, %v8110
        %v8112 = vpop.f32.mrb[0].mxu0
        %8113 = vmatprep.mubr.f32.mxu0 0.0
        %8114 = vmatmul.mubr.f32.gmra.mrb[0].mxu0 %v7940
        %v8115 = vpop.f32.mrb[0].mxu0
        %v8116 = vadd.f32 0.0, %v8115
        %v8117 = vpop.f32.mrb[0].mxu0
        %8118 = vmatprep.mubr.f32.mxu0 0.0
        %8119 = vmatmul.mubr.f32.gmra.mrb[0].mxu0 %v7943
        %v8120 = vpop.f32.mrb[0].mxu0
        %v8121 = vadd.f32 0.0, %v8120
        %v8122 = vpop.f32.mrb[0].mxu0
        %8123 = vmatprep.mubr.f32.mxu0 0.0
        %8124 = vmatmul.mubr.f32.gmra.mrb[0].mxu0 %v7946
        %v8125 = vpop.f32.mrb[0].mxu0
        %v8126 = vadd.f32 0.0, %v8125
        %v8127 = vpop.f32.mrb[0].mxu0
        %8128 = vmatprep.mubr.f32.mxu0 0.0
        %8129 = vmatmul.mubr.f32.gmra.mrb[0].mxu0 %v7949
        %v8130 = vpop.f32.mrb[0].mxu0
        %v8131 = vadd.f32 0.0, %v8130
        %v8132 = vpop.f32.mrb[0].mxu0
        %8133 = vmatprep.mubr.f32.mxu0 0.0
        %8134 = vmatmul.mubr.f32.gmra.mrb[0].mxu0 %v7952
        %v8135 = vpop.f32.mrb[0].mxu0
        %v8136 = vadd.f32 0.0, %v8135
        %v8137 = vpop.f32.mrb[0].mxu0
        %8138 = vmatprep.mubr.f32.mxu0 0.0
        %8139 = vmatmul.mubr.f32.gmra.mrb[0].mxu0 %v7955
        %v8140 = vpop.f32.mrb[0].mxu0
        %v8141 = vadd.f32 0.0, %v8140
        %v8142 = vpop.f32.mrb[0].mxu0
        %8143 = vmatprep.mubr.f32.mxu0 0.0
        %8144 = vmatmul.mubr.f32.gmra.mrb[0].mxu0 %v7958
        %v8145 = vpop.f32.mrb[0].mxu0
        %v8146 = vadd.f32 0.0, %v8145
        %v8147 = vpop.f32.mrb[0].mxu0
        %8148 = vmatprep.mubr.f32.mxu0 0.0
        %8149 = vmatmul.mubr.f32.gmra.mrb[0].mxu0 %v7961
        %v8150 = vpop.f32.mrb[0].mxu0
        %v8151 = vadd.f32 0.0, %v8150
        %v8152 = vpop.f32.mrb[0].mxu0
        %8153 = vmatprep.mubr.f32.mxu0 0.0
        %8154 = vmatmul.mubr.f32.gmra.mrb[0].mxu0 %v7964
        %v8155 = vpop.f32.mrb[0].mxu0
        %v8156 = vadd.f32 0.0, %v8155
        %v8157 = vpop.f32.mrb[0].mxu0
        %8158 = vmatprep.mubr.f32.mxu0 0.0
        %8159 = vmatmul.mubr.f32.gmra.mrb[0].mxu0 %v7967
        %v8160 = vpop.f32.mrb[0].mxu0
        %v8161 = vadd.f32 0.0, %v8160
        %v8162 = vpop.f32.mrb[0].mxu0
        %8163 = vmatprep.mubr.f32.mxu0 0.0
        %8164 = vmatmul.mubr.f32.gmra.mrb[0].mxu0 %v7970
        %v8165 = vpop.f32.mrb[0].mxu0
        %v8166 = vadd.f32 0.0, %v8165
        %v8167 = vpop.f32.mrb[0].mxu0
        %8168 = vmatprep.mubr.f32.mxu0 0.0
        %8169 = vmatmul.mubr.f32.gmra.mrb[0].mxu0 %v7973
        %v8170 = vpop.f32.mrb[0].mxu0
        %v8171 = vadd.f32 0.0, %v8170
        %v8172 = vpop.f32.mrb[0].mxu0
        %8173 = vmatprep.mubr.f32.mxu0 0.0
        %8174 = vmatmul.mubr.f32.gmra.mrb[0].mxu0 %v7976
        %v8175 = vpop.f32.mrb[0].mxu0
        %v8176 = vadd.f32 0.0, %v8175
        %v8177 = vpop.f32.mrb[0].mxu0
        %8178 = vmatprep.mubr.f32.mxu0 0.0
        %8179 = vmatmul.mubr.f32.gmra.mrb[0].mxu0 %v7979
        %v8180 = vpop.f32.mrb[0].mxu0
        %v8181 = vadd.f32 0.0, %v8180
        %v8182 = vpop.f32.mrb[0].mxu0
        %8183 = vmatprep.mubr.f32.mxu0 0.0
        %8184 = vmatmul.mubr.f32.gmra.mrb[0].mxu0 %v7982
        %v8185 = vpop.f32.mrb[0].mxu0
        %v8186 = vadd.f32 0.0, %v8185
        %v8187 = vpop.f32.mrb[0].mxu0
        %8188 = vmatprep.mubr.f32.mxu0 0.0
        %8189 = vmatmul.mubr.f32.gmra.mrb[0].mxu0 %v7985
        %v8190 = vpop.f32.mrb[0].mxu0
        %v8191 = vadd.f32 0.0, %v8190
        %v8192 = vpop.f32.mrb[0].mxu0
        %8193 = vmatprep.mubr.f32.mxu0 0.0
        %8194 = vmatmul.mubr.f32.gmra.mrb[0].mxu0 %v7988
        %v8195 = vpop.f32.mrb[0].mxu0
        %v8196 = vadd.f32 0.0, %v8195
        %v8197 = vpop.f32.mrb[0].mxu0
        %8198 = vmatprep.mubr.f32.mxu0 0.0
        %8199 = vmatmul.mubr.f32.gmra.mrb[0].mxu0 %v7991
        %v8200 = vpop.f32.mrb[0].mxu0
        %v8201 = vadd.f32 0.0, %v8200
        %v8202 = vpop.f32.mrb[0].mxu0
        %8203 = vmatprep.mubr.f32.mxu0 0.0
        %8204 = vmatmul.mubr.f32.gmra.mrb[0].mxu0 %v7994
        %v8205 = vpop.f32.mrb[0].mxu0
        %v8206 = vadd.f32 0.0, %v8205
        %v8207 = vpop.f32.mrb[0].mxu0
        %8208 = vmatprep.mubr.f32.mxu0 0.0
        %8209 = vmatmul.mubr.f32.gmra.mrb[0].mxu0 %v7997
        %v8210 = vpop.f32.mrb[0].mxu0
        %v8211 = vadd.f32 0.0, %v8210
        %v8212 = vpop.f32.mrb[0].mxu0
        %8213 = vmatprep.mubr.f32.mxu0 0.0
        %8214 = vmatmul.mubr.f32.gmra.mrb[0].mxu0 %v8000
        %v8215 = vpop.f32.mrb[0].mxu0
        %v8216 = vadd.f32 0.0, %v8215
        %v8217 = vpop.f32.mrb[0].mxu0
        %8218 = vmatprep.mubr.f32.mxu0 0.0
        %8219 = vmatmul.mubr.f32.gmra.mrb[0].mxu0 %v8003
        %v8220 = vpop.f32.mrb[0].mxu0
        %v8221 = vadd.f32 0.0, %v8220
        %v8222 = vpop.f32.mrb[0].mxu0
        %8223 = vmatprep.mubr.f32.mxu0 0.0
        %8224 = vmatmul.mubr.f32.gmra.mrb[0].mxu0 %v8006
        %v8225 = vpop.f32.mrb[0].mxu0
        %v8226 = vadd.f32 0.0, %v8225
        %v8227 = vpop.f32.mrb[0].mxu0
        %8228 = vmatprep.mubr.f32.mxu0 0.0
        %8229 = vmatmul.mubr.f32.gmra.mrb[0].mxu0 %v8009
        %v8230 = vpop.f32.mrb[0].mxu0
        %v8231 = vadd.f32 0.0, %v8230
        %v8232 = vpop.f32.mrb[0].mxu0
        %8233 = vmatprep.mubr.f32.mxu0 0.0
        %8234 = vmatmul.mubr.f32.gmra.mrb[0].mxu0 %v8012
        %v8235 = vpop.f32.mrb[0].mxu0
        %v8236 = vadd.f32 0.0, %v8235
        %v8237 = vpop.f32.mrb[0].mxu0
        %8238 = vdwg.mxu0
        %8239 = vst.msk [vmem:[#allocation3] sm:$0xff] %vm169, %v8081
        %8240 = vst.msk [vmem:[#allocation3 + $0x20] sm:$0xff] %vm169, %v8086
        %8243 = vrot.lane.b32.xlu0 %v8091, 32
        %v8244 = vpop.permute.xlu0 %8243
        %8245 = vrot.lane.b32.xlu0 %v8096, 32
        %v8246 = vpop.permute.xlu0 %8245
        %8249 = vst.msk [vmem:[#allocation3] sm:$0xff] %vm4180, %v8244
        %8250 = vst.msk [vmem:[#allocation3 + $0x20] sm:$0xff] %vm4180, %v8246
        %8253 = vrot.lane.b32.xlu0 %v8101, 64
        %v8254 = vpop.permute.xlu0 %8253
        %8255 = vrot.lane.b32.xlu0 %v8106, 64
        %v8256 = vpop.permute.xlu0 %8255
        %8259 = vst.msk [vmem:[#allocation3] sm:$0xff] %vm4191, %v8254
        %8260 = vst.msk [vmem:[#allocation3 + $0x20] sm:$0xff] %vm4191, %v8256
        %8263 = vrot.lane.b32.xlu0 %v8111, 96
        %v8264 = vpop.permute.xlu0 %8263
        %8265 = vrot.lane.b32.xlu0 %v8116, 96
        %v8266 = vpop.permute.xlu0 %8265
        %8269 = vst.msk [vmem:[#allocation3] sm:$0xff] %vm4202, %v8264
        %8270 = vst.msk [vmem:[#allocation3 + $0x20] sm:$0xff] %vm4202, %v8266
        %8271 = vst.msk [vmem:[#allocation3 + $0x8] sm:$0xff] %vm169, %v8121
        %8272 = vst.msk [vmem:[#allocation3 + $0x28] sm:$0xff] %vm169, %v8126
        %8275 = vrot.lane.b32.xlu0 %v8131, 32
        %v8276 = vpop.permute.xlu0 %8275
        %8277 = vrot.lane.b32.xlu0 %v8136, 32
        %v8278 = vpop.permute.xlu0 %8277
        %8281 = vst.msk [vmem:[#allocation3 + $0x8] sm:$0xff] %vm4180, %v8276
        %8282 = vst.msk [vmem:[#allocation3 + $0x28] sm:$0xff] %vm4180, %v8278
        %8285 = vrot.lane.b32.xlu0 %v8141, 64
        %v8286 = vpop.permute.xlu0 %8285
        %8287 = vrot.lane.b32.xlu0 %v8146, 64
        %v8288 = vpop.permute.xlu0 %8287
        %8291 = vst.msk [vmem:[#allocation3 + $0x8] sm:$0xff] %vm4191, %v8286
        %8292 = vst.msk [vmem:[#allocation3 + $0x28] sm:$0xff] %vm4191, %v8288
        %8295 = vrot.lane.b32.xlu0 %v8151, 96
        %v8296 = vpop.permute.xlu0 %8295
        %8297 = vrot.lane.b32.xlu0 %v8156, 96
        %v8298 = vpop.permute.xlu0 %8297
        %8301 = vst.msk [vmem:[#allocation3 + $0x8] sm:$0xff] %vm4202, %v8296
        %8302 = vst.msk [vmem:[#allocation3 + $0x28] sm:$0xff] %vm4202, %v8298
        %8303 = vst.msk [vmem:[#allocation3 + $0x10] sm:$0xff] %vm169, %v8161
        %8304 = vst.msk [vmem:[#allocation3 + $0x30] sm:$0xff] %vm169, %v8166
        %8307 = vrot.lane.b32.xlu0 %v8171, 32
        %v8308 = vpop.permute.xlu0 %8307
        %8309 = vrot.lane.b32.xlu0 %v8176, 32
        %v8310 = vpop.permute.xlu0 %8309
        %8313 = vst.msk [vmem:[#allocation3 + $0x10] sm:$0xff] %vm4180, %v8308
        %8314 = vst.msk [vmem:[#allocation3 + $0x30] sm:$0xff] %vm4180, %v8310
        %8317 = vrot.lane.b32.xlu0 %v8181, 64
        %v8318 = vpop.permute.xlu0 %8317
        %8319 = vrot.lane.b32.xlu0 %v8186, 64
        %v8320 = vpop.permute.xlu0 %8319
        %8323 = vst.msk [vmem:[#allocation3 + $0x10] sm:$0xff] %vm4191, %v8318
        %8324 = vst.msk [vmem:[#allocation3 + $0x30] sm:$0xff] %vm4191, %v8320
        %8327 = vrot.lane.b32.xlu0 %v8191, 96
        %v8328 = vpop.permute.xlu0 %8327
        %8329 = vrot.lane.b32.xlu0 %v8196, 96
        %v8330 = vpop.permute.xlu0 %8329
        %8333 = vst.msk [vmem:[#allocation3 + $0x10] sm:$0xff] %vm4202, %v8328
        %8334 = vst.msk [vmem:[#allocation3 + $0x30] sm:$0xff] %vm4202, %v8330
        %8335 = vst.msk [vmem:[#allocation3 + $0x18] sm:$0xff] %vm169, %v8201
        %8336 = vst.msk [vmem:[#allocation3 + $0x38] sm:$0xff] %vm169, %v8206
        %8339 = vrot.lane.b32.xlu0 %v8211, 32
        %v8340 = vpop.permute.xlu0 %8339
        %8341 = vrot.lane.b32.xlu0 %v8216, 32
        %v8342 = vpop.permute.xlu0 %8341
        %8345 = vst.msk [vmem:[#allocation3 + $0x18] sm:$0xff] %vm4180, %v8340
        %8346 = vst.msk [vmem:[#allocation3 + $0x38] sm:$0xff] %vm4180, %v8342
        %8349 = vrot.lane.b32.xlu0 %v8221, 64
        %v8350 = vpop.permute.xlu0 %8349
        %8351 = vrot.lane.b32.xlu0 %v8226, 64
        %v8352 = vpop.permute.xlu0 %8351
        %8355 = vst.msk [vmem:[#allocation3 + $0x18] sm:$0xff] %vm4191, %v8350
        %8356 = vst.msk [vmem:[#allocation3 + $0x38] sm:$0xff] %vm4191, %v8352
        %8359 = vrot.lane.b32.xlu0 %v8231, 96
        %v8360 = vpop.permute.xlu0 %8359
        %8361 = vrot.lane.b32.xlu0 %v8236, 96
        %v8362 = vpop.permute.xlu0 %8361
        %8365 = vst.msk [vmem:[#allocation3 + $0x18] sm:$0xff] %vm4202, %v8360
        %8366 = vst.msk [vmem:[#allocation3 + $0x38] sm:$0xff] %vm4202, %v8362
        %v8367 = vld [vmem:[#allocation3] sm:$0xff]
        %v8368 = vld [vmem:[#allocation3 + $0x8] sm:$0xff]
        %v8369 = vld [vmem:[#allocation3 + $0x10] sm:$0xff]
        %v8370 = vld [vmem:[#allocation3 + $0x18] sm:$0xff]
        %v8371 = vld [vmem:[#allocation3 + $0x20] sm:$0xff]
        %v8372 = vld [vmem:[#allocation3 + $0x28] sm:$0xff]
        %v8373 = vld [vmem:[#allocation3 + $0x30] sm:$0xff]
        %v8374 = vld [vmem:[#allocation3 + $0x38] sm:$0xff]
        %v8375 = vadd.f32 %v4309, %v8367
        %v8376 = vadd.f32 %v4310, %v8368
        %v8377 = vadd.f32 %v4311, %v8369
        %v8378 = vadd.f32 %v4312, %v8370
        %v8379 = vadd.f32 %v4313, %v8371
        %v8380 = vadd.f32 %v4314, %v8372
        %v8381 = vadd.f32 %v4315, %v8373
        %v8382 = vadd.f32 %v4316, %v8374
        %v8383 = vmax.f32 %v8375, 0.0
        %v8384 = vmax.f32 %v8376, 0.0
        %v8385 = vmax.f32 %v8377, 0.0
        %v8386 = vmax.f32 %v8378, 0.0
        %v8387 = vmax.f32 %v8379, 0.0
        %v8388 = vmax.f32 %v8380, 0.0
        %v8389 = vmax.f32 %v8381, 0.0
        %v8390 = vmax.f32 %v8382, 0.0
        %8391 = vst [vmem:[%s163] sm:$0xff] %v8383
        %8392 = vst [vmem:[%s163 + $0x8] sm:$0xff] %v8384
        %8393 = vst [vmem:[%s163 + $0x10] sm:$0xff] %v8385
        %8394 = vst [vmem:[%s163 + $0x18] sm:$0xff] %v8386
        %8395 = vst [vmem:[%s163 + $0x20] sm:$0xff] %v8387
        %8396 = vst [vmem:[%s163 + $0x28] sm:$0xff] %v8388
        %8397 = vst [vmem:[%s163 + $0x30] sm:$0xff] %v8389
        %8398 = vst [vmem:[%s163 + $0x38] sm:$0xff] %v8390
        %s8399 = sand.u32 %s93, 1
        %s8400 = scalar_lea.sflag [#allocation5], %s8399
        %s8401 = sand.u32 %s93, 1
        %s8402 = smul.addr %s8401, 64
        %s8403 = scalar_lea.vmem [#allocation4], %s8402
        // Predicated region
        $region33: #{tpu_custom_call.1} parent=31 // pred_check
          %p8404 = pneg %p103
        $region34: #{tpu_custom_call.1} parent=31 // pred_check_branch
          %8406 = sbr.rel (%p8404) target = $region36
        $region35: #{tpu_custom_call.1} parent=31 // pred_region
          %s8408 = ssub.s32 1024, 1024
          %8409 = vsyncadd %s8400, %s8408
          %s8410 = smul.addr %s17, 8
          %s8411 = smul.addr %s8410, 128
          %s8412 = scalar_lea.hbm %s3, %s8411
          %s8413 = sshll.u32 %s8403, 4
          %s8414 = int_to_ptr.vmem [resolvable:$true] %s8413
          %8419 = dma.vmem_to_hbm [thread:$0]  %s8414, 1024, %s8412, %s8400, 512, 512, 32
        $region36: #{tpu_custom_call.1} parent=31 // pred_fallthru
          _
      $region32: #{tpu_custom_call.1} parent=5 // pred_fallthru
        _
      %p8420 = scmp.le.s32.totalorder 2, %s12
      // Predicated region
      $region37: #{tpu_custom_call.1} parent=5 // pred_check
        %p8421 = pneg %p8420
      $region38: #{tpu_custom_call.1} parent=5 // pred_check_branch
        %8423 = sbr.rel (%p8421) target = $region40
      $region39: #{tpu_custom_call.1} parent=5 // pred_region
        %s8424 = ssub.s32 %s12, 2
        // Predicated region
        $region41: #{tpu_custom_call.1} parent=39 // pred_check
          %p8425 = pneg %p109
        $region42: #{tpu_custom_call.1} parent=39 // pred_check_branch
          %8427 = sbr.rel (%p8425) target = $region44
        $region43: #{tpu_custom_call.1} parent=39 // pred_region
          %s8428 = sand.u32 %s94, 1
          %s8429 = scalar_lea.sflag [#allocation5], %s8428
          %s8430 = sand.u32 %s94, 1
          %s8431 = smul.addr %s8430, 64
          %s8432 = scalar_lea.vmem [#allocation4], %s8431
          %8433 = dma.done %s8429, 1024
        $region44: #{tpu_custom_call.1} parent=39 // pred_fallthru
          _
      $region40: #{tpu_custom_call.1} parent=5 // pred_fallthru
        _
    $region6: #{tpu_custom_call.1} parent=1 // loop_footer
      %s16 = sadd.s32 1, %s12
    $region7: #{tpu_custom_call.1} parent=1 // loop_footer_branch
      %11 = sbr.rel target = $region3
    $region8: #{tpu_custom_call.1} parent=1 // loop_exit
      _
    %8434 = vsyncpa [#allocation5], 1
    %s8435 = scalar_lea.sflag [#allocation5], 1
    %8436 = vsyncpa %s8435, 1

</llo_original>
